<compile_context>
chip_gen: v7x
topology: tpu7x:2x2x1
jax: 0.10.0
libtpu: 0.0.40
codegen_flags: <defaults>
</compile_context>

<pallas_src>
import jax
import jax.numpy as jnp
from jax.experimental import pallas as pl
from jax.experimental.pallas import tpu as pltpu

IN_FEATURES = 4096
HIDDEN = 256
NUM_CLASSES = 10
PADDED_CLASSES = 128   # pad classifier output to a full 128-lane vreg


def _obj_cls_kernel(x_ref, w1_ref, b1_ref, w2_ref, cls_bias_ref,
                    out_full_ref, out_ls_ref):
    # ----- Linear(4096 -> 256) with BN(eval) pre-folded, + ReLU -------------
    # bf16 operands, f32 accumulate on the MXU.
    h = jnp.dot(x_ref[...], w1_ref[...],
                preferred_element_type=jnp.float32)            # [TB, 256] f32
    h = jnp.maximum(h + b1_ref[...], jnp.float32(0.0))
    out_full_ref[...] = h.astype(out_full_ref.dtype)           # 'out_full'

    # ----- Linear(256 -> 10, no bias), padded to 128 lanes -------------------
    digits = jnp.dot(h.astype(w2_ref.dtype), w2_ref[...],
                     preferred_element_type=jnp.float32)       # [TB, 128] f32
    # Padded lanes carry a -1e30 additive bias (resident input) so they vanish
    # from the softmax reduction without any per-step iota/compare/where.
    digits = digits + cls_bias_ref[...]

    # ----- Stable log-softmax over the class axis ----------------------------
    m = jnp.max(digits, axis=-1, keepdims=True)
    shifted = digits - m
    lse = jnp.log(jnp.sum(jnp.exp(shifted), axis=-1, keepdims=True))
    out_ls_ref[...] = shifted - lse                            # lane-dense 'out'


def _round_up(v, m):
    return ((v + m - 1) // m) * m


def _has_big_vmem():
    """True on 128-MiB-VMEM generations (v4/v5/v6); conservative otherwise."""
    try:
        kind = jax.devices()[0].device_kind.lower()
    except Exception:
        kind = ""
    return any(tag in kind for tag in ("v4", "v5", "v6"))


def object_classification_net680(x, w1, b1, gamma, beta, running_mean,
                                 running_var, w2, eps=1e-5, tb=None,
                                 out_full_dtype=jnp.float32):
    """Fused forward pass.

    x: [B, 4096] float32. Linear weights are pre-transposed to [in, out].
    Returns {'out_full': [B, 256], 'out': [B, 10]} matching the PyTorch module.
    """
    B = x.shape[0]

    # Fold BatchNorm1d (eval mode) into the first linear (host-side glue),
    # then cast the streamed/MXU operands to bf16.
    scale = gamma.astype(jnp.float32) / jnp.sqrt(running_var.astype(jnp.float32) + eps)
    w1_f = (w1.astype(jnp.float32) * scale[None, :]).astype(jnp.bfloat16)     # [4096, 256]
    b1_f = ((b1 - running_mean) * scale + beta).reshape(1, HIDDEN).astype(jnp.float32)

    x_bf = x.astype(jnp.bfloat16)                                             # [B, 4096]

    # Zero-pad classifier weight to a full 128-lane tile; padded lanes are
    # suppressed via the additive class-bias below.
    w2_p = jnp.zeros((HIDDEN, PADDED_CLASSES), jnp.bfloat16).at[:, :NUM_CLASSES].set(
        w2.astype(jnp.bfloat16))
    cls_bias = jnp.where(jnp.arange(PADDED_CLASSES) < NUM_CLASSES,
                         jnp.float32(0.0), jnp.float32(-1e30)).reshape(1, PADDED_CLASSES)

    # ----- Batch-tile selection (per TPU generation) --------------------------
    big_vmem = _has_big_vmem()
    tb_cap = 2048 if big_vmem else 1024          # bf16 x tiles
    vmem_limit = (96 if big_vmem else 56) * 1024 * 1024
    if tb is None:
        if B <= 256:
            TB = B                               # tiny batch: single tile
        else:
            # v7x (2 TensorCores): force >=2 grid steps so the "parallel"
            # batch axis actually shards across both cores.
            min_steps = 1 if big_vmem else 2
            n_steps = max(min_steps, pl.cdiv(B, tb_cap))
            TB = _round_up(-(-B // n_steps), 8)  # sublane-align
            if TB >= B:
                TB = B
            TB = min(TB, tb_cap)
    else:
        TB = min(tb, B)
        if TB != B:
            TB = _round_up(TB, 8)                # keep the (8, 128) constraint
    grid = (pl.cdiv(B, TB),)

    out_full_bytes = B * HIDDEN * jnp.dtype(out_full_dtype).itemsize
    cost = pl.CostEstimate(
        flops=2 * B * IN_FEATURES * HIDDEN + 2 * B * HIDDEN * PADDED_CLASSES,
        transcendentals=B * (PADDED_CLASSES + 1),
        bytes_accessed=(2 * B * IN_FEATURES            # x (bf16)
                        + 2 * IN_FEATURES * HIDDEN     # w1 (bf16)
                        + 4 * HIDDEN                   # b1 (f32)
                        + 2 * HIDDEN * PADDED_CLASSES  # w2 (bf16)
                        + 4 * PADDED_CLASSES           # class bias (f32)
                        + out_full_bytes
                        + 4 * B * PADDED_CLASSES),
    )

    out_shape = (
        jax.ShapeDtypeStruct((B, HIDDEN), out_full_dtype),
        jax.ShapeDtypeStruct((B, PADDED_CLASSES), jnp.float32),
    )
    out_specs = (
        pl.BlockSpec((TB, HIDDEN), lambda i: (i, 0)),              # out_full (tiled)
        pl.BlockSpec((TB, PADDED_CLASSES), lambda i: (i, 0)),      # lane-dense out
    )
    params = pltpu.CompilerParams(
        dimension_semantics=("parallel",),
        vmem_limit_bytes=vmem_limit,
    )

    def _call(single_buffer_weights):
        resident_kw = ({"pipeline_mode": pl.Buffered(1)}
                       if single_buffer_weights else {})
        in_specs = [
            pl.BlockSpec((TB, IN_FEATURES), lambda i: (i, 0)),                       # x (tiled, pipelined)
            pl.BlockSpec((IN_FEATURES, HIDDEN), lambda i: (0, 0), **resident_kw),    # w1 (resident)
            pl.BlockSpec((1, HIDDEN), lambda i: (0, 0), **resident_kw),              # b1 (resident)
            pl.BlockSpec((HIDDEN, PADDED_CLASSES), lambda i: (0, 0), **resident_kw),  # w2 (resident)
            pl.BlockSpec((1, PADDED_CLASSES), lambda i: (0, 0), **resident_kw),      # class bias (resident)
        ]
        out = pl.pallas_call(
            _obj_cls_kernel,
            out_shape=out_shape,
            grid=grid,
            in_specs=in_specs,
            out_specs=out_specs,
            compiler_params=params,
            cost_estimate=cost,
        )(x_bf, w1_f, b1_f, w2_p, cls_bias)
        return jax.block_until_ready(out)

    try:
        out_full, out_pad = _call(True)
    except Exception:
        # Some jax versions reject Buffered(1); fall back to the default
        # double-buffered resident weights (costs ~2-4 MiB VMEM, same math).
        out_full, out_pad = _call(False)

    return {"out_full": out_full, "out": out_pad[:, :NUM_CLASSES]}


def _reference(x, w1, b1, gamma, beta, running_mean, running_var, w2, eps=1e-5):
    """Plain-JAX reference for correctness checking (eval-mode semantics)."""
    h = x @ w1 + b1
    h = (h - running_mean) / jnp.sqrt(running_var + eps) * gamma + beta
    h = jnp.maximum(h, 0.0)
    digits = h @ w2
    out = digits - jax.scipy.special.logsumexp(digits, axis=-1, keepdims=True)
    return {"out_full": h, "out": out}


if __name__ == "__main__":
    key = jax.random.PRNGKey(0)
    k_x, k_w1, k_b1, k_g, k_b, k_rm, k_rv, k_w2 = jax.random.split(key, 8)

    # Small batch; tb=8 forces a 3-step grid (including a partial last tile)
    # to exercise the batch-tiled / pipelined path.
    B = 20

    x = jax.random.normal(k_x, (B, IN_FEATURES), dtype=jnp.float32)
    # Linear weights stored as [in, out] (pre-transposed vs. PyTorch [out, in]).
    w1 = jax.random.normal(k_w1, (IN_FEATURES, HIDDEN), dtype=jnp.float32) * 0.02
    b1 = jax.random.normal(k_b1, (HIDDEN,), dtype=jnp.float32) * 0.1
    gamma = 1.0 + 0.1 * jax.random.normal(k_g, (HIDDEN,), dtype=jnp.float32)
    beta = 0.1 * jax.random.normal(k_b, (HIDDEN,), dtype=jnp.float32)
    running_mean = 0.1 * jax.random.normal(k_rm, (HIDDEN,), dtype=jnp.float32)
    running_var = jnp.abs(1.0 + 0.1 * jax.random.normal(k_rv, (HIDDEN,), dtype=jnp.float32))
    w2 = jax.random.normal(k_w2, (HIDDEN, NUM_CLASSES), dtype=jnp.float32) * 0.05

    out = object_classification_net680(
        x, w1, b1, gamma, beta, running_mean, running_var, w2, tb=8)
    jax.block_until_ready(out)

    ref = _reference(x, w1, b1, gamma, beta, running_mean, running_var, w2)
    assert out["out_full"].shape == (B, HIDDEN)
    assert out["out"].shape == (B, NUM_CLASSES)
    # bf16 MXU operands (the TPU default anyway) -> compare at bf16-appropriate
    # tolerances against the plain-JAX f32 reference.
    assert jnp.allclose(out["out_full"], ref["out_full"], atol=2e-2, rtol=2e-2)
    assert jnp.allclose(out["out"], ref["out"], atol=2e-2, rtol=2e-2)
    assert jnp.all(jnp.isfinite(out["out"]))

    # Also exercise the default (auto tile-size) path at a tiny batch.
    out_small = object_classification_net680(
        x[:8], w1, b1, gamma, beta, running_mean, running_var, w2)
    jax.block_until_ready(out_small)
    assert jnp.allclose(out_small["out"], ref["out"][:8], atol=2e-2, rtol=2e-2)

    print("KERNEL_OK")
</pallas_src>

<mosaic_0001>
module attributes {stable_mosaic.version = 11 : i64} {
  func.func @_obj_cls_kernel(%arg0: i32, %arg1: memref<8x4096xbf16, #tpu.memory_space<vmem>>, %arg2: memref<4096x256xbf16, #tpu.memory_space<vmem>>, %arg3: memref<1x256xf32, #tpu.memory_space<vmem>>, %arg4: memref<256x128xbf16, #tpu.memory_space<vmem>>, %arg5: memref<1x128xf32, #tpu.memory_space<vmem>>, %arg6: memref<8x256xf32, #tpu.memory_space<vmem>>, %arg7: memref<8x128xf32, #tpu.memory_space<vmem>>) attributes {dimension_semantics = [#tpu.dimension_semantics<parallel>], iteration_bounds = array<i64: 3>, scalar_prefetch = 0 : i64, scratch_operands = 0 : i64, tpu.core_type = #tpu.core_type<tc>, window_params = [{transform_indices = @transform_0, window_bounds = array<i64: 8, 4096>}, {pipeline_mode = #tpu.pipeline_mode<synchronous>, transform_indices = @transform_1, window_bounds = array<i64: 4096, 256>}, {pipeline_mode = #tpu.pipeline_mode<synchronous>, transform_indices = @transform_2, window_bounds = array<i64: 1, 256>}, {pipeline_mode = #tpu.pipeline_mode<synchronous>, transform_indices = @transform_3, window_bounds = array<i64: 256, 128>}, {pipeline_mode = #tpu.pipeline_mode<synchronous>, transform_indices = @transform_4, window_bounds = array<i64: 1, 128>}, {transform_indices = @transform_5, window_bounds = array<i64: 8, 256>}, {transform_indices = @transform_6, window_bounds = array<i64: 8, 128>}]} {
    %c0 = arith.constant 0 : index
    %c0_0 = arith.constant 0 : index
    %0 = vector.load %arg1[%c0, %c0_0] : memref<8x4096xbf16, #tpu.memory_space<vmem>>, vector<8x4096xbf16>
    %c0_1 = arith.constant 0 : index
    %c0_2 = arith.constant 0 : index
    %1 = vector.load %arg2[%c0_1, %c0_2] : memref<4096x256xbf16, #tpu.memory_space<vmem>>, vector<4096x256xbf16>
    %cst = arith.constant dense<0.000000e+00> : vector<8x256xf32>
    %2 = tpu.matmul %0, %1, %cst {dimension_numbers = #tpu.dot_dimension_numbers<[1], [0], [0], [1], [0, 0, 1, 1], [], []>} : vector<8x4096xbf16>, vector<4096x256xbf16>, vector<8x256xf32> -> vector<8x256xf32>
    %c0_3 = arith.constant 0 : index
    %c0_4 = arith.constant 0 : index
    %3 = vector.load %arg3[%c0_3, %c0_4] : memref<1x256xf32, #tpu.memory_space<vmem>>, vector<1x256xf32>
    %4 = vector.broadcast %3 : vector<1x256xf32> to vector<8x256xf32>
    %5 = arith.addf %2, %4 : vector<8x256xf32>
    %cst_5 = arith.constant 0.000000e+00 : f32
    %6 = vector.broadcast %cst_5 : f32 to vector<8x256xf32>
    %7 = arith.maximumf %5, %6 : vector<8x256xf32>
    %c0_6 = arith.constant 0 : index
    %c0_7 = arith.constant 0 : index
    %8 = vector.load %arg6[%c0_6, %c0_7] : memref<8x256xf32, #tpu.memory_space<vmem>>, vector<8x256xf32>
    tpu.vector_store %arg6[%c0_6, %c0_7], %7 {strides = array<i32>} : memref<8x256xf32, #tpu.memory_space<vmem>>, vector<8x256xf32>,
    %9 = arith.truncf %7 : vector<8x256xf32> to vector<8x256xbf16>
    %c0_8 = arith.constant 0 : index
    %c0_9 = arith.constant 0 : index
    %10 = vector.load %arg4[%c0_8, %c0_9] : memref<256x128xbf16, #tpu.memory_space<vmem>>, vector<256x128xbf16>
    %cst_10 = arith.constant dense<0.000000e+00> : vector<8x128xf32>
    %11 = tpu.matmul %9, %10, %cst_10 {dimension_numbers = #tpu.dot_dimension_numbers<[1], [0], [0], [1], [0, 0, 1, 1], [], []>} : vector<8x256xbf16>, vector<256x128xbf16>, vector<8x128xf32> -> vector<8x128xf32>
    %c0_11 = arith.constant 0 : index
    %c0_12 = arith.constant 0 : index
    %12 = vector.load %arg5[%c0_11, %c0_12] : memref<1x128xf32, #tpu.memory_space<vmem>>, vector<1x128xf32>
    %13 = vector.broadcast %12 : vector<1x128xf32> to vector<8x128xf32>
    %14 = arith.addf %11, %13 : vector<8x128xf32>
    %cst_13 = arith.constant dense<0xFF800000> : vector<8xf32>
    %15 = vector.multi_reduction <maximumf>, %14, %cst_13 [1] : vector<8x128xf32> to vector<8xf32>
    %16 = vector.shape_cast %15 : vector<8xf32> to vector<8x1xf32>
    %17 = vector.broadcast %16 : vector<8x1xf32> to vector<8x128xf32>
    %18 = arith.subf %14, %17 : vector<8x128xf32>
    %19 = math.exp %18 : vector<8x128xf32>
    %cst_14 = arith.constant dense<0.000000e+00> : vector<8xf32>
    %20 = vector.multi_reduction <add>, %19, %cst_14 [1] : vector<8x128xf32> to vector<8xf32>
    %21 = vector.shape_cast %20 : vector<8xf32> to vector<8x1xf32>
    %22 = math.log %21 : vector<8x1xf32>
    %23 = vector.broadcast %22 : vector<8x1xf32> to vector<8x128xf32>
    %24 = arith.subf %18, %23 : vector<8x128xf32>
    %c0_15 = arith.constant 0 : index
    %c0_16 = arith.constant 0 : index
    %25 = vector.load %arg7[%c0_15, %c0_16] : memref<8x128xf32, #tpu.memory_space<vmem>>, vector<8x128xf32>
    tpu.vector_store %arg7[%c0_15, %c0_16], %24 {strides = array<i32>} : memref<8x128xf32, #tpu.memory_space<vmem>>, vector<8x128xf32>,
    return
  }
  func.func @transform_0(%arg0: i32) -> (i32, i32) {
    %c0_i32 = arith.constant 0 : i32
    %c0_i32_0 = arith.constant 0 : i32
    return %arg0, %c0_i32 : i32, i32
  }
  func.func @transform_1(%arg0: i32) -> (i32, i32) {
    %c0_i32 = arith.constant 0 : i32
    %c0_i32_0 = arith.constant 0 : i32
    %c0_i32_1 = arith.constant 0 : i32
    return %c0_i32, %c0_i32_0 : i32, i32
  }
  func.func @transform_2(%arg0: i32) -> (i32, i32) {
    %c0_i32 = arith.constant 0 : i32
    %c0_i32_0 = arith.constant 0 : i32
    %c0_i32_1 = arith.constant 0 : i32
    return %c0_i32, %c0_i32_0 : i32, i32
  }
  func.func @transform_3(%arg0: i32) -> (i32, i32) {
    %c0_i32 = arith.constant 0 : i32
    %c0_i32_0 = arith.constant 0 : i32
    %c0_i32_1 = arith.constant 0 : i32
    return %c0_i32, %c0_i32_0 : i32, i32
  }
  func.func @transform_4(%arg0: i32) -> (i32, i32) {
    %c0_i32 = arith.constant 0 : i32
    %c0_i32_0 = arith.constant 0 : i32
    %c0_i32_1 = arith.constant 0 : i32
    return %c0_i32, %c0_i32_0 : i32, i32
  }
  func.func @transform_5(%arg0: i32) -> (i32, i32) {
    %c0_i32 = arith.constant 0 : i32
    %c0_i32_0 = arith.constant 0 : i32
    return %arg0, %c0_i32 : i32, i32
  }
  func.func @transform_6(%arg0: i32) -> (i32, i32) {
    %c0_i32 = arith.constant 0 : i32
    %c0_i32_0 = arith.constant 0 : i32
    return %arg0, %c0_i32 : i32, i32
  }
}

module attributes {stable_mosaic.version = 11 : i64} {
  func.func @_obj_cls_kernel(%arg0: i32, %arg1: memref<8x4096xbf16, #tpu.memory_space<vmem>>, %arg2: memref<4096x256xbf16, #tpu.memory_space<vmem>>, %arg3: memref<1x256xf32, #tpu.memory_space<vmem>>, %arg4: memref<256x128xbf16, #tpu.memory_space<vmem>>, %arg5: memref<1x128xf32, #tpu.memory_space<vmem>>, %arg6: memref<8x256xf32, #tpu.memory_space<vmem>>, %arg7: memref<8x128xf32, #tpu.memory_space<vmem>>) attributes {dimension_semantics = [#tpu.dimension_semantics<parallel>], iteration_bounds = array<i64: 3>, scalar_prefetch = 0 : i64, scratch_operands = 0 : i64, tpu.core_type = #tpu.core_type<tc>, window_params = [{transform_indices = @transform_0, window_bounds = array<i64: 8, 4096>}, {pipeline_mode = #tpu.pipeline_mode<synchronous>, transform_indices = @transform_1, window_bounds = array<i64: 4096, 256>}, {pipeline_mode = #tpu.pipeline_mode<synchronous>, transform_indices = @transform_2, window_bounds = array<i64: 1, 256>}, {pipeline_mode = #tpu.pipeline_mode<synchronous>, transform_indices = @transform_3, window_bounds = array<i64: 256, 128>}, {pipeline_mode = #tpu.pipeline_mode<synchronous>, transform_indices = @transform_4, window_bounds = array<i64: 1, 128>}, {transform_indices = @transform_5, window_bounds = array<i64: 8, 256>}, {transform_indices = @transform_6, window_bounds = array<i64: 8, 128>}]} {
    %c0 = arith.constant 0 : index
    %c0_0 = arith.constant 0 : index
    %0 = vector.load %arg1[%c0, %c0_0] : memref<8x4096xbf16, #tpu.memory_space<vmem>>, vector<8x4096xbf16>
    %c0_1 = arith.constant 0 : index
    %c0_2 = arith.constant 0 : index
    %1 = vector.load %arg2[%c0_1, %c0_2] : memref<4096x256xbf16, #tpu.memory_space<vmem>>, vector<4096x256xbf16>
    %cst = arith.constant dense<0.000000e+00> : vector<8x256xf32>
    %2 = tpu.matmul %0, %1, %cst {dimension_numbers = #tpu.dot_dimension_numbers<[1], [0], [0], [1], [0, 0, 1, 1], [], []>} : vector<8x4096xbf16>, vector<4096x256xbf16>, vector<8x256xf32> -> vector<8x256xf32>
    %c0_3 = arith.constant 0 : index
    %c0_4 = arith.constant 0 : index
    %3 = vector.load %arg3[%c0_3, %c0_4] : memref<1x256xf32, #tpu.memory_space<vmem>>, vector<1x256xf32>
    %4 = vector.broadcast %3 : vector<1x256xf32> to vector<8x256xf32>
    %5 = arith.addf %2, %4 : vector<8x256xf32>
    %cst_5 = arith.constant 0.000000e+00 : f32
    %6 = vector.broadcast %cst_5 : f32 to vector<8x256xf32>
    %7 = arith.maximumf %5, %6 : vector<8x256xf32>
    %c0_6 = arith.constant 0 : index
    %c0_7 = arith.constant 0 : index
    %8 = vector.load %arg6[%c0_6, %c0_7] : memref<8x256xf32, #tpu.memory_space<vmem>>, vector<8x256xf32>
    tpu.vector_store %arg6[%c0_6, %c0_7], %7 {strides = array<i32>} : memref<8x256xf32, #tpu.memory_space<vmem>>, vector<8x256xf32>,
    %9 = arith.truncf %7 : vector<8x256xf32> to vector<8x256xbf16>
    %c0_8 = arith.constant 0 : index
    %c0_9 = arith.constant 0 : index
    %10 = vector.load %arg4[%c0_8, %c0_9] : memref<256x128xbf16, #tpu.memory_space<vmem>>, vector<256x128xbf16>
    %cst_10 = arith.constant dense<0.000000e+00> : vector<8x128xf32>
    %11 = tpu.matmul %9, %10, %cst_10 {dimension_numbers = #tpu.dot_dimension_numbers<[1], [0], [0], [1], [0, 0, 1, 1], [], []>} : vector<8x256xbf16>, vector<256x128xbf16>, vector<8x128xf32> -> vector<8x128xf32>
    %c0_11 = arith.constant 0 : index
    %c0_12 = arith.constant 0 : index
    %12 = vector.load %arg5[%c0_11, %c0_12] : memref<1x128xf32, #tpu.memory_space<vmem>>, vector<1x128xf32>
    %13 = vector.broadcast %12 : vector<1x128xf32> to vector<8x128xf32>
    %14 = arith.addf %11, %13 : vector<8x128xf32>
    %cst_13 = arith.constant dense<0xFF800000> : vector<8xf32>
    %15 = vector.multi_reduction <maximumf>, %14, %cst_13 [1] : vector<8x128xf32> to vector<8xf32>
    %16 = vector.shape_cast %15 : vector<8xf32> to vector<8x1xf32>
    %17 = vector.broadcast %16 : vector<8x1xf32> to vector<8x128xf32>
    %18 = arith.subf %14, %17 : vector<8x128xf32>
    %19 = math.exp %18 : vector<8x128xf32>
    %cst_14 = arith.constant dense<0.000000e+00> : vector<8xf32>
    %20 = vector.multi_reduction <add>, %19, %cst_14 [1] : vector<8x128xf32> to vector<8xf32>
    %21 = vector.shape_cast %20 : vector<8xf32> to vector<8x1xf32>
    %22 = math.log %21 : vector<8x1xf32>
    %23 = vector.broadcast %22 : vector<8x1xf32> to vector<8x128xf32>
    %24 = arith.subf %18, %23 : vector<8x128xf32>
    %c0_15 = arith.constant 0 : index
    %c0_16 = arith.constant 0 : index
    %25 = vector.load %arg7[%c0_15, %c0_16] : memref<8x128xf32, #tpu.memory_space<vmem>>, vector<8x128xf32>
    tpu.vector_store %arg7[%c0_15, %c0_16], %24 {strides = array<i32>} : memref<8x128xf32, #tpu.memory_space<vmem>>, vector<8x128xf32>,
    return
  }
  func.func @transform_0(%arg0: i32) -> (i32, i32) {
    %c0_i32 = arith.constant 0 : i32
    %c0_i32_0 = arith.constant 0 : i32
    return %arg0, %c0_i32 : i32, i32
  }
  func.func @transform_1(%arg0: i32) -> (i32, i32) {
    %c0_i32 = arith.constant 0 : i32
    %c0_i32_0 = arith.constant 0 : i32
    %c0_i32_1 = arith.constant 0 : i32
    return %c0_i32, %c0_i32_0 : i32, i32
  }
  func.func @transform_2(%arg0: i32) -> (i32, i32) {
    %c0_i32 = arith.constant 0 : i32
    %c0_i32_0 = arith.constant 0 : i32
    %c0_i32_1 = arith.constant 0 : i32
    return %c0_i32, %c0_i32_0 : i32, i32
  }
  func.func @transform_3(%arg0: i32) -> (i32, i32) {
    %c0_i32 = arith.constant 0 : i32
    %c0_i32_0 = arith.constant 0 : i32
    %c0_i32_1 = arith.constant 0 : i32
    return %c0_i32, %c0_i32_0 : i32, i32
  }
  func.func @transform_4(%arg0: i32) -> (i32, i32) {
    %c0_i32 = arith.constant 0 : i32
    %c0_i32_0 = arith.constant 0 : i32
    %c0_i32_1 = arith.constant 0 : i32
    return %c0_i32, %c0_i32_0 : i32, i32
  }
  func.func @transform_5(%arg0: i32) -> (i32, i32) {
    %c0_i32 = arith.constant 0 : i32
    %c0_i32_0 = arith.constant 0 : i32
    return %arg0, %c0_i32 : i32, i32
  }
  func.func @transform_6(%arg0: i32) -> (i32, i32) {
    %c0_i32 = arith.constant 0 : i32
    %c0_i32_0 = arith.constant 0 : i32
    return %arg0, %c0_i32 : i32, i32
  }
}

</mosaic_0001>

<llo_original>
// kernel: tpu_custom_call.1
$region0: #{tpu_custom_call.1}
  #allocation0 [shape = 'u32[]', space=smem, size = 0x4, offset = 0x4, fixed_abs, tag = 'smem constant byte address 0x4 - core index']
  #allocation1 [shape = 'u32[144,128]{1,0:T(1,128)}', space=vmem, size = 0x12000, scoped, tag = 'internal scratch']
  %s0 = inlined_call_operand.hbm [shape: bf16[20,4096], index: 0, kind: input, shape index: {}]
  %s1 = inlined_call_operand.hbm [shape: bf16[4096,256], index: 1, kind: input, shape index: {}]
  %s2 = inlined_call_operand.hbm [shape: f32[1,256], index: 2, kind: input, shape index: {}]
  %s3 = inlined_call_operand.hbm [shape: bf16[256,128], index: 3, kind: input, shape index: {}]
  %s4 = inlined_call_operand.hbm [shape: f32[1,128], index: 4, kind: input, shape index: {}]
  %s5 = inlined_call_operand.hbm [shape: f32[20,256], index: 5, kind: output, shape index: {0}]
  %s6 = inlined_call_operand.hbm [shape: f32[20,128], index: 6, kind: output, shape index: {1}]
  %7 = xla_tuple %s5, %s6
  %s8 = sld [smem:[#allocation0]]
  $region81: #{tpu_custom_call.1} parent=0
    _
  %s10 = ssub.s32 1, %s8
  %s11 = scalar_select 0, %s10, %s8
  $region1: #{tpu_custom_call.1} parent=0
    #allocation2 [shape = 'u8[131072]{0}', space=vmem, size = 0x20000, scoped, tag = 'input window, operand 0']
    #allocation3 [shape = 's32[2]{0}', space=sflag, size = 0x8, scoped, tag = 'scoped memory for tpu_custom_call.1']
    #allocation4 [shape = 's32[2]{0}', space=sflag, size = 0x8, scoped, tag = 'scoped memory for tpu_custom_call.1']
    #allocation5 [shape = 'u8[2097152]{0}', space=vmem, size = 0x200000, scoped, tag = 'input window, operand 1, single buffered']
    #allocation6 [shape = 's32[1]{0}', space=sflag, size = 0x4, scoped, tag = 'scoped memory for tpu_custom_call.1']
    #allocation7 [shape = 'u8[1024]{0}', space=vmem, size = 0x400, scoped, tag = 'input window, operand 2, single buffered']
    #allocation8 [shape = 'u8[65536]{0}', space=vmem, size = 0x10000, scoped, tag = 'input window, operand 3, single buffered']
    #allocation9 [shape = 's32[1]{0}', space=sflag, size = 0x4, scoped, tag = 'scoped memory for tpu_custom_call.1']
    #allocation10 [shape = 'u8[512]{0}', space=vmem, size = 0x400, scoped, tag = 'input window, operand 4, single buffered']
    #allocation11 [shape = 'u8[16384]{0}', space=vmem, size = 0x4000, scoped, tag = 'output window, operand 0']
    #allocation12 [shape = 'u8[8192]{0}', space=vmem, size = 0x2000, scoped, tag = 'output window, operand 1']
    #allocation13 [shape = 's32[2]{0}', space=sflag, size = 0x8, scoped, tag = 'scoped memory for tpu_custom_call.1']
    %12 = vsyncpa [#allocation3], 0
    %s13 = scalar_lea.sflag [#allocation3], 1
    %14 = vsyncpa %s13, 0
    %15 = vsyncpa [#allocation6], 0
    %16 = vsyncpa [#allocation9], 0
    %17 = vsyncpa [#allocation4], 0
    %s18 = scalar_lea.sflag [#allocation4], 1
    %19 = vsyncpa %s18, 0
    %20 = vsyncpa [#allocation13], 0
    %s21 = scalar_lea.sflag [#allocation13], 1
    %22 = vsyncpa %s21, 0
    loop: start=0, step=1, limit=5
    $region2: #{tpu_custom_call.1} parent=1 // loop_pre_header
      _
    $region3: #{tpu_custom_call.1} parent=1 // loop_header
      %s24 = sphi 0, %s28
      %p25 = scmp.ge.s32.totalorder %s24, 5
      %s34 = sphi 0, %s36
      %s37 = sphi 0, %s34
      %s38 = sphi 0, %s37
      %s54 = sphi 0, %s38
      %s58 = sphi 0, %s58
      %s60 = sphi 0, %s58
      %s61 = sphi 0, %s60
      %s75 = sphi 0, %s61
      %s79 = sphi 0, %s79
      %s81 = sphi 0, %s79
      %s82 = sphi 0, %s81
      %s96 = sphi 0, %s82
      %s100 = sphi 0, %s100
      %s102 = sphi 0, %s100
      %s103 = sphi 0, %s102
      %s117 = sphi 0, %s103
      %s121 = sphi 0, %s121
      %s123 = sphi 0, %s121
      %s124 = sphi 0, %s123
      %s138 = sphi 0, %s124
      %s144 = sphi 0, %s146
      %s147 = sphi 0, %s144
      %s148 = sphi 0, %s147
      %s164 = sphi 0, %s148
      %s170 = sphi 0, %s172
      %s173 = sphi 0, %s170
      %s174 = sphi 0, %s173
      %s190 = sphi 0, %s174
    $region4: #{tpu_custom_call.1} parent=1 // loop_header_branch
      %27 = sbr.rel (%p25) target = $region8
    $region5: #{tpu_custom_call.1} parent=1 // loop_body
      %s29 = ssub.s32 %s24, 1
      %s30 = ssub.s32 %s24, 2
      %s31 = sadd.s32 %s24, 1
      %s32 = ssub.s32 %s24, %s31
      %p33 = scmp.eq.s32.totalorder %s32, 0
      %s35 = sadd.s32 %s34, 1
      %s36 = scalar_select %p33, %s34, %s35
      %p39 = pneg %p33
      %p40 = scmp.eq.s32.totalorder %s24, 2
      %p41 = por %p39, %p40
      %p42 = scmp.ne.s32.totalorder %s34, %s37
      %p43 = scmp.eq.s32.totalorder %s24, 0
      %p44 = por %p42, %p43
      %p45 = scmp.ne.s32.totalorder %s34, %s37
      %p46 = scmp.eq.s32.totalorder %s29, 2
      %p47 = por %p45, %p46
      %p48 = scmp.ne.s32.totalorder %s37, %s38
      %p49 = scmp.eq.s32.totalorder %s29, 0
      %p50 = por %p48, %p49
      %p51 = scmp.ne.s32.totalorder %s37, %s38
      %p52 = scmp.eq.s32.totalorder %s30, 2
      %p53 = por %p51, %p52
      %p55 = scmp.ne.s32.totalorder %s38, %s54
      %p56 = scmp.eq.s32.totalorder %s30, 0
      %p57 = por %p55, %p56
      %s59 = sadd.s32 %s58, 1
      %p62 = scmp.eq.s32.totalorder %s24, 2
      %p63 = scmp.ne.s32.totalorder %s58, %s60
      %p64 = scmp.eq.s32.totalorder %s24, 0
      %p65 = por %p63, %p64
      %p66 = scmp.ne.s32.totalorder %s58, %s60
      %p67 = scmp.eq.s32.totalorder %s29, 2
      %p68 = por %p66, %p67
      %p69 = scmp.ne.s32.totalorder %s60, %s61
      %p70 = scmp.eq.s32.totalorder %s29, 0
      %p71 = por %p69, %p70
      %p72 = scmp.ne.s32.totalorder %s60, %s61
      %p73 = scmp.eq.s32.totalorder %s30, 2
      %p74 = por %p72, %p73
      %p76 = scmp.ne.s32.totalorder %s61, %s75
      %p77 = scmp.eq.s32.totalorder %s30, 0
      %p78 = por %p76, %p77
      %s80 = sadd.s32 %s79, 1
      %p83 = scmp.eq.s32.totalorder %s24, 2
      %p84 = scmp.ne.s32.totalorder %s79, %s81
      %p85 = scmp.eq.s32.totalorder %s24, 0
      %p86 = por %p84, %p85
      %p87 = scmp.ne.s32.totalorder %s79, %s81
      %p88 = scmp.eq.s32.totalorder %s29, 2
      %p89 = por %p87, %p88
      %p90 = scmp.ne.s32.totalorder %s81, %s82
      %p91 = scmp.eq.s32.totalorder %s29, 0
      %p92 = por %p90, %p91
      %p93 = scmp.ne.s32.totalorder %s81, %s82
      %p94 = scmp.eq.s32.totalorder %s30, 2
      %p95 = por %p93, %p94
      %p97 = scmp.ne.s32.totalorder %s82, %s96
      %p98 = scmp.eq.s32.totalorder %s30, 0
      %p99 = por %p97, %p98
      %s101 = sadd.s32 %s100, 1
      %p104 = scmp.eq.s32.totalorder %s24, 2
      %p105 = scmp.ne.s32.totalorder %s100, %s102
      %p106 = scmp.eq.s32.totalorder %s24, 0
      %p107 = por %p105, %p106
      %p108 = scmp.ne.s32.totalorder %s100, %s102
      %p109 = scmp.eq.s32.totalorder %s29, 2
      %p110 = por %p108, %p109
      %p111 = scmp.ne.s32.totalorder %s102, %s103
      %p112 = scmp.eq.s32.totalorder %s29, 0
      %p113 = por %p111, %p112
      %p114 = scmp.ne.s32.totalorder %s102, %s103
      %p115 = scmp.eq.s32.totalorder %s30, 2
      %p116 = por %p114, %p115
      %p118 = scmp.ne.s32.totalorder %s103, %s117
      %p119 = scmp.eq.s32.totalorder %s30, 0
      %p120 = por %p118, %p119
      %s122 = sadd.s32 %s121, 1
      %p125 = scmp.eq.s32.totalorder %s24, 2
      %p126 = scmp.ne.s32.totalorder %s121, %s123
      %p127 = scmp.eq.s32.totalorder %s24, 0
      %p128 = por %p126, %p127
      %p129 = scmp.ne.s32.totalorder %s121, %s123
      %p130 = scmp.eq.s32.totalorder %s29, 2
      %p131 = por %p129, %p130
      %p132 = scmp.ne.s32.totalorder %s123, %s124
      %p133 = scmp.eq.s32.totalorder %s29, 0
      %p134 = por %p132, %p133
      %p135 = scmp.ne.s32.totalorder %s123, %s124
      %p136 = scmp.eq.s32.totalorder %s30, 2
      %p137 = por %p135, %p136
      %p139 = scmp.ne.s32.totalorder %s124, %s138
      %p140 = scmp.eq.s32.totalorder %s30, 0
      %p141 = por %p139, %p140
      %s142 = ssub.s32 %s24, %s31
      %p143 = scmp.eq.s32.totalorder %s142, 0
      %s145 = sadd.s32 %s144, 1
      %s146 = scalar_select %p143, %s144, %s145
      %p149 = pneg %p143
      %p150 = scmp.eq.s32.totalorder %s24, 2
      %p151 = por %p149, %p150
      %p152 = scmp.ne.s32.totalorder %s144, %s147
      %p153 = scmp.eq.s32.totalorder %s24, 0
      %p154 = por %p152, %p153
      %p155 = scmp.ne.s32.totalorder %s144, %s147
      %p156 = scmp.eq.s32.totalorder %s29, 2
      %p157 = por %p155, %p156
      %p158 = scmp.ne.s32.totalorder %s147, %s148
      %p159 = scmp.eq.s32.totalorder %s29, 0
      %p160 = por %p158, %p159
      %p161 = scmp.ne.s32.totalorder %s147, %s148
      %p162 = scmp.eq.s32.totalorder %s30, 2
      %p163 = por %p161, %p162
      %p165 = scmp.ne.s32.totalorder %s148, %s164
      %p166 = scmp.eq.s32.totalorder %s30, 0
      %p167 = por %p165, %p166
      %s168 = ssub.s32 %s24, %s31
      %p169 = scmp.eq.s32.totalorder %s168, 0
      %s171 = sadd.s32 %s170, 1
      %s172 = scalar_select %p169, %s170, %s171
      %p175 = pneg %p169
      %p176 = scmp.eq.s32.totalorder %s24, 2
      %p177 = por %p175, %p176
      %p178 = scmp.ne.s32.totalorder %s170, %s173
      %p179 = scmp.eq.s32.totalorder %s24, 0
      %p180 = por %p178, %p179
      %p181 = scmp.ne.s32.totalorder %s170, %s173
      %p182 = scmp.eq.s32.totalorder %s29, 2
      %p183 = por %p181, %p182
      %p184 = scmp.ne.s32.totalorder %s173, %s174
      %p185 = scmp.eq.s32.totalorder %s29, 0
      %p186 = por %p184, %p185
      %p187 = scmp.ne.s32.totalorder %s173, %s174
      %p188 = scmp.eq.s32.totalorder %s30, 2
      %p189 = por %p187, %p188
      %p191 = scmp.ne.s32.totalorder %s174, %s190
      %p192 = scmp.eq.s32.totalorder %s30, 0
      %p193 = por %p191, %p192
      %p194 = scmp.le.s32.totalorder 1, %s24
      %p195 = scmp.lt.s32.totalorder %s24, 4
      %p196 = pnand %p194, %p195
      %p197 = pneg %p196
      // Predicated region
      $region9: #{tpu_custom_call.1} parent=5 // pred_check
        _
      $region10: #{tpu_custom_call.1} parent=5 // pred_check_branch
        %199 = sbr.rel (%p196) target = $region12
      $region11: #{tpu_custom_call.1} parent=5 // pred_region
        %s200 = ssub.s32 %s24, 1
        // Predicated region
        $region13: #{tpu_custom_call.1} parent=11 // pred_check
          %p201 = pneg %p71
        $region14: #{tpu_custom_call.1} parent=11 // pred_check_branch
          %203 = sbr.rel (%p201) target = $region16
        $region15: #{tpu_custom_call.1} parent=11 // pred_region
          %s205 = ssub.s32 65536, 65536
          %206 = vsyncadd [#allocation6], %s205
          %s207 = sshll.u32 [#allocation5], 4
          %s208 = int_to_ptr.vmem [resolvable:$true] %s207
          %213 = dma.hbm_to_vmem [thread:$0]  %s1, 65536, %s208, [#allocation6], 128, 128, 8
        $region16: #{tpu_custom_call.1} parent=11 // pred_fallthru
          _
        // Predicated region
        $region17: #{tpu_custom_call.1} parent=11 // pred_check
          %p214 = pneg %p92
        $region18: #{tpu_custom_call.1} parent=11 // pred_check_branch
          %216 = sbr.rel (%p214) target = $region20
        $region19: #{tpu_custom_call.1} parent=11 // pred_region
          %s218 = ssub.s32 32, 32
          %219 = vsyncadd [#allocation6], %s218
          %s221 = sshll.u32 [#allocation7], 4
          %s222 = int_to_ptr.vmem [resolvable:$true] %s221
          %224 = dma.hbm_to_vmem [thread:$0]  %s2, 32, %s222, [#allocation6]
        $region20: #{tpu_custom_call.1} parent=11 // pred_fallthru
          _
        // Predicated region
        $region21: #{tpu_custom_call.1} parent=11 // pred_check
          %p225 = pneg %p113
        $region22: #{tpu_custom_call.1} parent=11 // pred_check_branch
          %227 = sbr.rel (%p225) target = $region24
        $region23: #{tpu_custom_call.1} parent=11 // pred_region
          %s229 = ssub.s32 2048, 2048
          %230 = vsyncadd [#allocation9], %s229
          %s231 = sshll.u32 [#allocation8], 4
          %s232 = int_to_ptr.vmem [resolvable:$true] %s231
          %237 = dma.hbm_to_vmem [thread:$0]  %s3, 2048, %s232, [#allocation9], 64, 64, 4
        $region24: #{tpu_custom_call.1} parent=11 // pred_fallthru
          _
        // Predicated region
        $region25: #{tpu_custom_call.1} parent=11 // pred_check
          %p238 = pneg %p134
        $region26: #{tpu_custom_call.1} parent=11 // pred_check_branch
          %240 = sbr.rel (%p238) target = $region28
        $region27: #{tpu_custom_call.1} parent=11 // pred_region
          %s242 = ssub.s32 16, 16
          %243 = vsyncadd [#allocation9], %s242
          %s245 = sshll.u32 [#allocation10], 4
          %s246 = int_to_ptr.vmem [resolvable:$true] %s245
          %248 = dma.hbm_to_vmem [thread:$0]  %s4, 16, %s246, [#allocation9]
        $region28: #{tpu_custom_call.1} parent=11 // pred_fallthru
          _
      $region12: #{tpu_custom_call.1} parent=5 // pred_fallthru
        _
      %p249 = scmp.lt.s32.totalorder %s24, 3
      // Predicated region
      $region29: #{tpu_custom_call.1} parent=5 // pred_check
        %p250 = pneg %p249
      $region30: #{tpu_custom_call.1} parent=5 // pred_check_branch
        %252 = sbr.rel (%p250) target = $region32
      $region31: #{tpu_custom_call.1} parent=5 // pred_region
        // Predicated region
        $region33: #{tpu_custom_call.1} parent=31 // pred_check
          %p253 = pneg %p44
        $region34: #{tpu_custom_call.1} parent=31 // pred_check_branch
          %255 = sbr.rel (%p253) target = $region36
        $region35: #{tpu_custom_call.1} parent=31 // pred_region
          %s256 = sand.u32 %s34, 1
          %s257 = scalar_lea.sflag [#allocation3], %s256
          %s258 = sand.u32 %s34, 1
          %s259 = smul.addr %s258, 128
          %s260 = scalar_lea.vmem [#allocation2], %s259
          %s262 = ssub.s32 2048, 2048
          %263 = vsyncadd %s257, %s262
          %s264 = smul.addr %s24, 32
          %s265 = smul.addr %s264, 64
          %s266 = scalar_lea.hbm %s0, %s265
          %s268 = sshll.u32 %s260, 4
          %s269 = int_to_ptr.vmem [resolvable:$true] %s268
          %271 = dma.hbm_to_vmem [thread:$0]  %s266, 2048, %s269, %s257
        $region36: #{tpu_custom_call.1} parent=31 // pred_fallthru
          _
      $region32: #{tpu_custom_call.1} parent=5 // pred_fallthru
        _
      %p272 = scmp.le.s32.totalorder 1, %s24
      %p273 = scmp.lt.s32.totalorder %s24, 4
      %p274 = pnand %p272, %p273
      %p275 = pneg %p274
      // Predicated region
      $region37: #{tpu_custom_call.1} parent=5 // pred_check
        _
      $region38: #{tpu_custom_call.1} parent=5 // pred_check_branch
        %277 = sbr.rel (%p274) target = $region40
      $region39: #{tpu_custom_call.1} parent=5 // pred_region
        %s278 = ssub.s32 %s24, 1
        %s279 = sand.u32 %s37, 1
        %s280 = scalar_lea.sflag [#allocation3], %s279
        %s281 = sand.u32 %s37, 1
        %s282 = smul.addr %s281, 128
        %s283 = scalar_lea.vmem [#allocation2], %s282
        // Predicated region
        $region41: #{tpu_custom_call.1} parent=39 // pred_check
          %p284 = pneg %p50
        $region42: #{tpu_custom_call.1} parent=39 // pred_check_branch
          %286 = sbr.rel (%p284) target = $region44
        $region43: #{tpu_custom_call.1} parent=39 // pred_region
          %287 = dma.done %s280, 2048
        $region44: #{tpu_custom_call.1} parent=39 // pred_fallthru
          _
        // Predicated region
        $region45: #{tpu_custom_call.1} parent=39 // pred_check
          %p288 = pneg %p71
        $region46: #{tpu_custom_call.1} parent=39 // pred_check_branch
          %290 = sbr.rel (%p288) target = $region48
        $region47: #{tpu_custom_call.1} parent=39 // pred_region
          %291 = dma.done [#allocation6], 65536
        $region48: #{tpu_custom_call.1} parent=39 // pred_fallthru
          _
        // Predicated region
        $region49: #{tpu_custom_call.1} parent=39 // pred_check
          %p292 = pneg %p92
        $region50: #{tpu_custom_call.1} parent=39 // pred_check_branch
          %294 = sbr.rel (%p292) target = $region52
        $region51: #{tpu_custom_call.1} parent=39 // pred_region
          %295 = dma.done [#allocation6], 32
        $region52: #{tpu_custom_call.1} parent=39 // pred_fallthru
          _
        // Predicated region
        $region53: #{tpu_custom_call.1} parent=39 // pred_check
          %p296 = pneg %p113
        $region54: #{tpu_custom_call.1} parent=39 // pred_check_branch
          %298 = sbr.rel (%p296) target = $region56
        $region55: #{tpu_custom_call.1} parent=39 // pred_region
          %299 = dma.done [#allocation9], 2048
        $region56: #{tpu_custom_call.1} parent=39 // pred_fallthru
          _
        // Predicated region
        $region57: #{tpu_custom_call.1} parent=39 // pred_check
          %p300 = pneg %p134
        $region58: #{tpu_custom_call.1} parent=39 // pred_check_branch
          %302 = sbr.rel (%p300) target = $region60
        $region59: #{tpu_custom_call.1} parent=39 // pred_region
          %303 = dma.done [#allocation9], 16
        $region60: #{tpu_custom_call.1} parent=39 // pred_fallthru
          _
        %s304 = sand.u32 %s37, 1
        %s305 = scalar_lea.sflag [#allocation3], %s304
        %s306 = sand.u32 %s37, 1
        %s307 = smul.addr %s306, 128
        %s308 = scalar_lea.vmem [#allocation2], %s307
        %p309 = pneg %p50
        %p310 = pneg %p47
        %p311 = pneg %p71
        %p312 = pneg %p68
        %p313 = pneg %p92
        %p314 = pneg %p89
        %p315 = pneg %p113
        %p316 = pneg %p110
        %p317 = pneg %p134
        %p318 = pneg %p131
        %p319 = pneg %p160
        %p320 = pneg %p157
        %s321 = sand.u32 %s147, 1
        %s322 = scalar_lea.sflag [#allocation4], %s321
        %s323 = sand.u32 %s147, 1
        %s324 = smul.addr %s323, 16
        %s325 = scalar_lea.vmem [#allocation11], %s324
        %p326 = pneg %p186
        %p327 = pneg %p183
        %s328 = sand.u32 %s173, 1
        %s329 = scalar_lea.sflag [#allocation13], %s328
        %s330 = sand.u32 %s173, 1
        %s331 = smul.addr %s330, 8
        %s332 = scalar_lea.vmem [#allocation12], %s331
        %v334 = vld [vmem:[%s283] sm:$0xff]
        %v335 = vld [vmem:[%s283 + $0x8] sm:$0xff]
        %v336 = vld [vmem:[%s283 + $0x10] sm:$0xff]
        %v337 = vld [vmem:[%s283 + $0x18] sm:$0xff]
        %v338 = vld [vmem:[%s283 + $0x20] sm:$0xff]
        %v339 = vld [vmem:[%s283 + $0x28] sm:$0xff]
        %v340 = vld [vmem:[%s283 + $0x30] sm:$0xff]
        %v341 = vld [vmem:[%s283 + $0x38] sm:$0xff]
        %v342 = vld [vmem:[%s283 + $0x40] sm:$0xff]
        %v343 = vld [vmem:[%s283 + $0x48] sm:$0xff]
        %v344 = vld [vmem:[%s283 + $0x50] sm:$0xff]
        %v345 = vld [vmem:[%s283 + $0x58] sm:$0xff]
        %v346 = vld [vmem:[%s283 + $0x60] sm:$0xff]
        %v347 = vld [vmem:[%s283 + $0x68] sm:$0xff]
        %v348 = vld [vmem:[%s283 + $0x70] sm:$0xff]
        %v349 = vld [vmem:[%s283 + $0x78] sm:$0xff]
        %v350 = vld [vmem:[#allocation5] sm:$0xff]
        %v351 = vld [vmem:[#allocation5 + $0x8] sm:$0xff]
        %v352 = vld [vmem:[#allocation5 + $0x10] sm:$0xff]
        %v353 = vld [vmem:[#allocation5 + $0x18] sm:$0xff]
        %v354 = vld [vmem:[#allocation5 + $0x20] sm:$0xff]
        %v355 = vld [vmem:[#allocation5 + $0x28] sm:$0xff]
        %v356 = vld [vmem:[#allocation5 + $0x30] sm:$0xff]
        %v357 = vld [vmem:[#allocation5 + $0x38] sm:$0xff]
        %v358 = vld [vmem:[#allocation5 + $0x40] sm:$0xff]
        %v359 = vld [vmem:[#allocation5 + $0x48] sm:$0xff]
        %v360 = vld [vmem:[#allocation5 + $0x50] sm:$0xff]
        %v361 = vld [vmem:[#allocation5 + $0x58] sm:$0xff]
        %v362 = vld [vmem:[#allocation5 + $0x60] sm:$0xff]
        %v363 = vld [vmem:[#allocation5 + $0x68] sm:$0xff]
        %v364 = vld [vmem:[#allocation5 + $0x70] sm:$0xff]
        %v365 = vld [vmem:[#allocation5 + $0x78] sm:$0xff]
        %v366 = vld [vmem:[#allocation5 + $0x80] sm:$0xff]
        %v367 = vld [vmem:[#allocation5 + $0x88] sm:$0xff]
        %v368 = vld [vmem:[#allocation5 + $0x90] sm:$0xff]
        %v369 = vld [vmem:[#allocation5 + $0x98] sm:$0xff]
        %v370 = vld [vmem:[#allocation5 + $0xa0] sm:$0xff]
        %v371 = vld [vmem:[#allocation5 + $0xa8] sm:$0xff]
        %v372 = vld [vmem:[#allocation5 + $0xb0] sm:$0xff]
        %v373 = vld [vmem:[#allocation5 + $0xb8] sm:$0xff]
        %v374 = vld [vmem:[#allocation5 + $0xc0] sm:$0xff]
        %v375 = vld [vmem:[#allocation5 + $0xc8] sm:$0xff]
        %v376 = vld [vmem:[#allocation5 + $0xd0] sm:$0xff]
        %v377 = vld [vmem:[#allocation5 + $0xd8] sm:$0xff]
        %v378 = vld [vmem:[#allocation5 + $0xe0] sm:$0xff]
        %v379 = vld [vmem:[#allocation5 + $0xe8] sm:$0xff]
        %v380 = vld [vmem:[#allocation5 + $0xf0] sm:$0xff]
        %v381 = vld [vmem:[#allocation5 + $0xf8] sm:$0xff]
        %v382 = vld [vmem:[#allocation5 + $0x100] sm:$0xff]
        %v383 = vld [vmem:[#allocation5 + $0x108] sm:$0xff]
        %v384 = vld [vmem:[#allocation5 + $0x110] sm:$0xff]
        %v385 = vld [vmem:[#allocation5 + $0x118] sm:$0xff]
        %v386 = vld [vmem:[#allocation5 + $0x120] sm:$0xff]
        %v387 = vld [vmem:[#allocation5 + $0x128] sm:$0xff]
        %v388 = vld [vmem:[#allocation5 + $0x130] sm:$0xff]
        %v389 = vld [vmem:[#allocation5 + $0x138] sm:$0xff]
        %v390 = vld [vmem:[#allocation5 + $0x140] sm:$0xff]
        %v391 = vld [vmem:[#allocation5 + $0x148] sm:$0xff]
        %v392 = vld [vmem:[#allocation5 + $0x150] sm:$0xff]
        %v393 = vld [vmem:[#allocation5 + $0x158] sm:$0xff]
        %v394 = vld [vmem:[#allocation5 + $0x160] sm:$0xff]
        %v395 = vld [vmem:[#allocation5 + $0x168] sm:$0xff]
        %v396 = vld [vmem:[#allocation5 + $0x170] sm:$0xff]
        %v397 = vld [vmem:[#allocation5 + $0x178] sm:$0xff]
        %v398 = vld [vmem:[#allocation5 + $0x180] sm:$0xff]
        %v399 = vld [vmem:[#allocation5 + $0x188] sm:$0xff]
        %v400 = vld [vmem:[#allocation5 + $0x190] sm:$0xff]
        %v401 = vld [vmem:[#allocation5 + $0x198] sm:$0xff]
        %v402 = vld [vmem:[#allocation5 + $0x1a0] sm:$0xff]
        %v403 = vld [vmem:[#allocation5 + $0x1a8] sm:$0xff]
        %v404 = vld [vmem:[#allocation5 + $0x1b0] sm:$0xff]
        %v405 = vld [vmem:[#allocation5 + $0x1b8] sm:$0xff]
        %v406 = vld [vmem:[#allocation5 + $0x1c0] sm:$0xff]
        %v407 = vld [vmem:[#allocation5 + $0x1c8] sm:$0xff]
        %v408 = vld [vmem:[#allocation5 + $0x1d0] sm:$0xff]
        %v409 = vld [vmem:[#allocation5 + $0x1d8] sm:$0xff]
        %v410 = vld [vmem:[#allocation5 + $0x1e0] sm:$0xff]
        %v411 = vld [vmem:[#allocation5 + $0x1e8] sm:$0xff]
        %v412 = vld [vmem:[#allocation5 + $0x1f0] sm:$0xff]
        %v413 = vld [vmem:[#allocation5 + $0x1f8] sm:$0xff]
        %v414 = vld [vmem:[#allocation5 + $0x200] sm:$0xff]
        %v415 = vld [vmem:[#allocation5 + $0x208] sm:$0xff]
        %v416 = vld [vmem:[#allocation5 + $0x210] sm:$0xff]
        %v417 = vld [vmem:[#allocation5 + $0x218] sm:$0xff]
        %v418 = vld [vmem:[#allocation5 + $0x220] sm:$0xff]
        %v419 = vld [vmem:[#allocation5 + $0x228] sm:$0xff]
        %v420 = vld [vmem:[#allocation5 + $0x230] sm:$0xff]
        %v421 = vld [vmem:[#allocation5 + $0x238] sm:$0xff]
        %v422 = vld [vmem:[#allocation5 + $0x240] sm:$0xff]
        %v423 = vld [vmem:[#allocation5 + $0x248] sm:$0xff]
        %v424 = vld [vmem:[#allocation5 + $0x250] sm:$0xff]
        %v425 = vld [vmem:[#allocation5 + $0x258] sm:$0xff]
        %v426 = vld [vmem:[#allocation5 + $0x260] sm:$0xff]
        %v427 = vld [vmem:[#allocation5 + $0x268] sm:$0xff]
        %v428 = vld [vmem:[#allocation5 + $0x270] sm:$0xff]
        %v429 = vld [vmem:[#allocation5 + $0x278] sm:$0xff]
        %v430 = vld [vmem:[#allocation5 + $0x280] sm:$0xff]
        %v431 = vld [vmem:[#allocation5 + $0x288] sm:$0xff]
        %v432 = vld [vmem:[#allocation5 + $0x290] sm:$0xff]
        %v433 = vld [vmem:[#allocation5 + $0x298] sm:$0xff]
        %v434 = vld [vmem:[#allocation5 + $0x2a0] sm:$0xff]
        %v435 = vld [vmem:[#allocation5 + $0x2a8] sm:$0xff]
        %v436 = vld [vmem:[#allocation5 + $0x2b0] sm:$0xff]
        %v437 = vld [vmem:[#allocation5 + $0x2b8] sm:$0xff]
        %v438 = vld [vmem:[#allocation5 + $0x2c0] sm:$0xff]
        %v439 = vld [vmem:[#allocation5 + $0x2c8] sm:$0xff]
        %v440 = vld [vmem:[#allocation5 + $0x2d0] sm:$0xff]
        %v441 = vld [vmem:[#allocation5 + $0x2d8] sm:$0xff]
        %v442 = vld [vmem:[#allocation5 + $0x2e0] sm:$0xff]
        %v443 = vld [vmem:[#allocation5 + $0x2e8] sm:$0xff]
        %v444 = vld [vmem:[#allocation5 + $0x2f0] sm:$0xff]
        %v445 = vld [vmem:[#allocation5 + $0x2f8] sm:$0xff]
        %v446 = vld [vmem:[#allocation5 + $0x300] sm:$0xff]
        %v447 = vld [vmem:[#allocation5 + $0x308] sm:$0xff]
        %v448 = vld [vmem:[#allocation5 + $0x310] sm:$0xff]
        %v449 = vld [vmem:[#allocation5 + $0x318] sm:$0xff]
        %v450 = vld [vmem:[#allocation5 + $0x320] sm:$0xff]
        %v451 = vld [vmem:[#allocation5 + $0x328] sm:$0xff]
        %v452 = vld [vmem:[#allocation5 + $0x330] sm:$0xff]
        %v453 = vld [vmem:[#allocation5 + $0x338] sm:$0xff]
        %v454 = vld [vmem:[#allocation5 + $0x340] sm:$0xff]
        %v455 = vld [vmem:[#allocation5 + $0x348] sm:$0xff]
        %v456 = vld [vmem:[#allocation5 + $0x350] sm:$0xff]
        %v457 = vld [vmem:[#allocation5 + $0x358] sm:$0xff]
        %v458 = vld [vmem:[#allocation5 + $0x360] sm:$0xff]
        %v459 = vld [vmem:[#allocation5 + $0x368] sm:$0xff]
        %v460 = vld [vmem:[#allocation5 + $0x370] sm:$0xff]
        %v461 = vld [vmem:[#allocation5 + $0x378] sm:$0xff]
        %v462 = vld [vmem:[#allocation5 + $0x380] sm:$0xff]
        %v463 = vld [vmem:[#allocation5 + $0x388] sm:$0xff]
        %v464 = vld [vmem:[#allocation5 + $0x390] sm:$0xff]
        %v465 = vld [vmem:[#allocation5 + $0x398] sm:$0xff]
        %v466 = vld [vmem:[#allocation5 + $0x3a0] sm:$0xff]
        %v467 = vld [vmem:[#allocation5 + $0x3a8] sm:$0xff]
        %v468 = vld [vmem:[#allocation5 + $0x3b0] sm:$0xff]
        %v469 = vld [vmem:[#allocation5 + $0x3b8] sm:$0xff]
        %v470 = vld [vmem:[#allocation5 + $0x3c0] sm:$0xff]
        %v471 = vld [vmem:[#allocation5 + $0x3c8] sm:$0xff]
        %v472 = vld [vmem:[#allocation5 + $0x3d0] sm:$0xff]
        %v473 = vld [vmem:[#allocation5 + $0x3d8] sm:$0xff]
        %v474 = vld [vmem:[#allocation5 + $0x3e0] sm:$0xff]
        %v475 = vld [vmem:[#allocation5 + $0x3e8] sm:$0xff]
        %v476 = vld [vmem:[#allocation5 + $0x3f0] sm:$0xff]
        %v477 = vld [vmem:[#allocation5 + $0x3f8] sm:$0xff]
        %v478 = vld [vmem:[#allocation5 + $0x400] sm:$0xff]
        %v479 = vld [vmem:[#allocation5 + $0x408] sm:$0xff]
        %v480 = vld [vmem:[#allocation5 + $0x410] sm:$0xff]
        %v481 = vld [vmem:[#allocation5 + $0x418] sm:$0xff]
        %v482 = vld [vmem:[#allocation5 + $0x420] sm:$0xff]
        %v483 = vld [vmem:[#allocation5 + $0x428] sm:$0xff]
        %v484 = vld [vmem:[#allocation5 + $0x430] sm:$0xff]
        %v485 = vld [vmem:[#allocation5 + $0x438] sm:$0xff]
        %v486 = vld [vmem:[#allocation5 + $0x440] sm:$0xff]
        %v487 = vld [vmem:[#allocation5 + $0x448] sm:$0xff]
        %v488 = vld [vmem:[#allocation5 + $0x450] sm:$0xff]
        %v489 = vld [vmem:[#allocation5 + $0x458] sm:$0xff]
        %v490 = vld [vmem:[#allocation5 + $0x460] sm:$0xff]
        %v491 = vld [vmem:[#allocation5 + $0x468] sm:$0xff]
        %v492 = vld [vmem:[#allocation5 + $0x470] sm:$0xff]
        %v493 = vld [vmem:[#allocation5 + $0x478] sm:$0xff]
        %v494 = vld [vmem:[#allocation5 + $0x480] sm:$0xff]
        %v495 = vld [vmem:[#allocation5 + $0x488] sm:$0xff]
        %v496 = vld [vmem:[#allocation5 + $0x490] sm:$0xff]
        %v497 = vld [vmem:[#allocation5 + $0x498] sm:$0xff]
        %v498 = vld [vmem:[#allocation5 + $0x4a0] sm:$0xff]
        %v499 = vld [vmem:[#allocation5 + $0x4a8] sm:$0xff]
        %v500 = vld [vmem:[#allocation5 + $0x4b0] sm:$0xff]
        %v501 = vld [vmem:[#allocation5 + $0x4b8] sm:$0xff]
        %v502 = vld [vmem:[#allocation5 + $0x4c0] sm:$0xff]
        %v503 = vld [vmem:[#allocation5 + $0x4c8] sm:$0xff]
        %v504 = vld [vmem:[#allocation5 + $0x4d0] sm:$0xff]
        %v505 = vld [vmem:[#allocation5 + $0x4d8] sm:$0xff]
        %v506 = vld [vmem:[#allocation5 + $0x4e0] sm:$0xff]
        %v507 = vld [vmem:[#allocation5 + $0x4e8] sm:$0xff]
        %v508 = vld [vmem:[#allocation5 + $0x4f0] sm:$0xff]
        %v509 = vld [vmem:[#allocation5 + $0x4f8] sm:$0xff]
        %v510 = vld [vmem:[#allocation5 + $0x500] sm:$0xff]
        %v511 = vld [vmem:[#allocation5 + $0x508] sm:$0xff]
        %v512 = vld [vmem:[#allocation5 + $0x510] sm:$0xff]
        %v513 = vld [vmem:[#allocation5 + $0x518] sm:$0xff]
        %v514 = vld [vmem:[#allocation5 + $0x520] sm:$0xff]
        %v515 = vld [vmem:[#allocation5 + $0x528] sm:$0xff]
        %v516 = vld [vmem:[#allocation5 + $0x530] sm:$0xff]
        %v517 = vld [vmem:[#allocation5 + $0x538] sm:$0xff]
        %v518 = vld [vmem:[#allocation5 + $0x540] sm:$0xff]
        %v519 = vld [vmem:[#allocation5 + $0x548] sm:$0xff]
        %v520 = vld [vmem:[#allocation5 + $0x550] sm:$0xff]
        %v521 = vld [vmem:[#allocation5 + $0x558] sm:$0xff]
        %v522 = vld [vmem:[#allocation5 + $0x560] sm:$0xff]
        %v523 = vld [vmem:[#allocation5 + $0x568] sm:$0xff]
        %v524 = vld [vmem:[#allocation5 + $0x570] sm:$0xff]
        %v525 = vld [vmem:[#allocation5 + $0x578] sm:$0xff]
        %v526 = vld [vmem:[#allocation5 + $0x580] sm:$0xff]
        %v527 = vld [vmem:[#allocation5 + $0x588] sm:$0xff]
        %v528 = vld [vmem:[#allocation5 + $0x590] sm:$0xff]
        %v529 = vld [vmem:[#allocation5 + $0x598] sm:$0xff]
        %v530 = vld [vmem:[#allocation5 + $0x5a0] sm:$0xff]
        %v531 = vld [vmem:[#allocation5 + $0x5a8] sm:$0xff]
        %v532 = vld [vmem:[#allocation5 + $0x5b0] sm:$0xff]
        %v533 = vld [vmem:[#allocation5 + $0x5b8] sm:$0xff]
        %v534 = vld [vmem:[#allocation5 + $0x5c0] sm:$0xff]
        %v535 = vld [vmem:[#allocation5 + $0x5c8] sm:$0xff]
        %v536 = vld [vmem:[#allocation5 + $0x5d0] sm:$0xff]
        %v537 = vld [vmem:[#allocation5 + $0x5d8] sm:$0xff]
        %v538 = vld [vmem:[#allocation5 + $0x5e0] sm:$0xff]
        %v539 = vld [vmem:[#allocation5 + $0x5e8] sm:$0xff]
        %v540 = vld [vmem:[#allocation5 + $0x5f0] sm:$0xff]
        %v541 = vld [vmem:[#allocation5 + $0x5f8] sm:$0xff]
        %v542 = vld [vmem:[#allocation5 + $0x600] sm:$0xff]
        %v543 = vld [vmem:[#allocation5 + $0x608] sm:$0xff]
        %v544 = vld [vmem:[#allocation5 + $0x610] sm:$0xff]
        %v545 = vld [vmem:[#allocation5 + $0x618] sm:$0xff]
        %v546 = vld [vmem:[#allocation5 + $0x620] sm:$0xff]
        %v547 = vld [vmem:[#allocation5 + $0x628] sm:$0xff]
        %v548 = vld [vmem:[#allocation5 + $0x630] sm:$0xff]
        %v549 = vld [vmem:[#allocation5 + $0x638] sm:$0xff]
        %v550 = vld [vmem:[#allocation5 + $0x640] sm:$0xff]
        %v551 = vld [vmem:[#allocation5 + $0x648] sm:$0xff]
        %v552 = vld [vmem:[#allocation5 + $0x650] sm:$0xff]
        %v553 = vld [vmem:[#allocation5 + $0x658] sm:$0xff]
        %v554 = vld [vmem:[#allocation5 + $0x660] sm:$0xff]
        %v555 = vld [vmem:[#allocation5 + $0x668] sm:$0xff]
        %v556 = vld [vmem:[#allocation5 + $0x670] sm:$0xff]
        %v557 = vld [vmem:[#allocation5 + $0x678] sm:$0xff]
        %v558 = vld [vmem:[#allocation5 + $0x680] sm:$0xff]
        %v559 = vld [vmem:[#allocation5 + $0x688] sm:$0xff]
        %v560 = vld [vmem:[#allocation5 + $0x690] sm:$0xff]
        %v561 = vld [vmem:[#allocation5 + $0x698] sm:$0xff]
        %v562 = vld [vmem:[#allocation5 + $0x6a0] sm:$0xff]
        %v563 = vld [vmem:[#allocation5 + $0x6a8] sm:$0xff]
        %v564 = vld [vmem:[#allocation5 + $0x6b0] sm:$0xff]
        %v565 = vld [vmem:[#allocation5 + $0x6b8] sm:$0xff]
        %v566 = vld [vmem:[#allocation5 + $0x6c0] sm:$0xff]
        %v567 = vld [vmem:[#allocation5 + $0x6c8] sm:$0xff]
        %v568 = vld [vmem:[#allocation5 + $0x6d0] sm:$0xff]
        %v569 = vld [vmem:[#allocation5 + $0x6d8] sm:$0xff]
        %v570 = vld [vmem:[#allocation5 + $0x6e0] sm:$0xff]
        %v571 = vld [vmem:[#allocation5 + $0x6e8] sm:$0xff]
        %v572 = vld [vmem:[#allocation5 + $0x6f0] sm:$0xff]
        %v573 = vld [vmem:[#allocation5 + $0x6f8] sm:$0xff]
        %v574 = vld [vmem:[#allocation5 + $0x700] sm:$0xff]
        %v575 = vld [vmem:[#allocation5 + $0x708] sm:$0xff]
        %v576 = vld [vmem:[#allocation5 + $0x710] sm:$0xff]
        %v577 = vld [vmem:[#allocation5 + $0x718] sm:$0xff]
        %v578 = vld [vmem:[#allocation5 + $0x720] sm:$0xff]
        %v579 = vld [vmem:[#allocation5 + $0x728] sm:$0xff]
        %v580 = vld [vmem:[#allocation5 + $0x730] sm:$0xff]
        %v581 = vld [vmem:[#allocation5 + $0x738] sm:$0xff]
        %v582 = vld [vmem:[#allocation5 + $0x740] sm:$0xff]
        %v583 = vld [vmem:[#allocation5 + $0x748] sm:$0xff]
        %v584 = vld [vmem:[#allocation5 + $0x750] sm:$0xff]
        %v585 = vld [vmem:[#allocation5 + $0x758] sm:$0xff]
        %v586 = vld [vmem:[#allocation5 + $0x760] sm:$0xff]
        %v587 = vld [vmem:[#allocation5 + $0x768] sm:$0xff]
        %v588 = vld [vmem:[#allocation5 + $0x770] sm:$0xff]
        %v589 = vld [vmem:[#allocation5 + $0x778] sm:$0xff]
        %v590 = vld [vmem:[#allocation5 + $0x780] sm:$0xff]
        %v591 = vld [vmem:[#allocation5 + $0x788] sm:$0xff]
        %v592 = vld [vmem:[#allocation5 + $0x790] sm:$0xff]
        %v593 = vld [vmem:[#allocation5 + $0x798] sm:$0xff]
        %v594 = vld [vmem:[#allocation5 + $0x7a0] sm:$0xff]
        %v595 = vld [vmem:[#allocation5 + $0x7a8] sm:$0xff]
        %v596 = vld [vmem:[#allocation5 + $0x7b0] sm:$0xff]
        %v597 = vld [vmem:[#allocation5 + $0x7b8] sm:$0xff]
        %v598 = vld [vmem:[#allocation5 + $0x7c0] sm:$0xff]
        %v599 = vld [vmem:[#allocation5 + $0x7c8] sm:$0xff]
        %v600 = vld [vmem:[#allocation5 + $0x7d0] sm:$0xff]
        %v601 = vld [vmem:[#allocation5 + $0x7d8] sm:$0xff]
        %v602 = vld [vmem:[#allocation5 + $0x7e0] sm:$0xff]
        %v603 = vld [vmem:[#allocation5 + $0x7e8] sm:$0xff]
        %v604 = vld [vmem:[#allocation5 + $0x7f0] sm:$0xff]
        %v605 = vld [vmem:[#allocation5 + $0x7f8] sm:$0xff]
        %v606 = vld [vmem:[#allocation5 + $0x800] sm:$0xff]
        %v607 = vld [vmem:[#allocation5 + $0x808] sm:$0xff]
        %v608 = vld [vmem:[#allocation5 + $0x810] sm:$0xff]
        %v609 = vld [vmem:[#allocation5 + $0x818] sm:$0xff]
        %v610 = vld [vmem:[#allocation5 + $0x820] sm:$0xff]
        %v611 = vld [vmem:[#allocation5 + $0x828] sm:$0xff]
        %v612 = vld [vmem:[#allocation5 + $0x830] sm:$0xff]
        %v613 = vld [vmem:[#allocation5 + $0x838] sm:$0xff]
        %v614 = vld [vmem:[#allocation5 + $0x840] sm:$0xff]
        %v615 = vld [vmem:[#allocation5 + $0x848] sm:$0xff]
        %v616 = vld [vmem:[#allocation5 + $0x850] sm:$0xff]
        %v617 = vld [vmem:[#allocation5 + $0x858] sm:$0xff]
        %v618 = vld [vmem:[#allocation5 + $0x860] sm:$0xff]
        %v619 = vld [vmem:[#allocation5 + $0x868] sm:$0xff]
        %v620 = vld [vmem:[#allocation5 + $0x870] sm:$0xff]
        %v621 = vld [vmem:[#allocation5 + $0x878] sm:$0xff]
        %v622 = vld [vmem:[#allocation5 + $0x880] sm:$0xff]
        %v623 = vld [vmem:[#allocation5 + $0x888] sm:$0xff]
        %v624 = vld [vmem:[#allocation5 + $0x890] sm:$0xff]
        %v625 = vld [vmem:[#allocation5 + $0x898] sm:$0xff]
        %v626 = vld [vmem:[#allocation5 + $0x8a0] sm:$0xff]
        %v627 = vld [vmem:[#allocation5 + $0x8a8] sm:$0xff]
        %v628 = vld [vmem:[#allocation5 + $0x8b0] sm:$0xff]
        %v629 = vld [vmem:[#allocation5 + $0x8b8] sm:$0xff]
        %v630 = vld [vmem:[#allocation5 + $0x8c0] sm:$0xff]
        %v631 = vld [vmem:[#allocation5 + $0x8c8] sm:$0xff]
        %v632 = vld [vmem:[#allocation5 + $0x8d0] sm:$0xff]
        %v633 = vld [vmem:[#allocation5 + $0x8d8] sm:$0xff]
        %v634 = vld [vmem:[#allocation5 + $0x8e0] sm:$0xff]
        %v635 = vld [vmem:[#allocation5 + $0x8e8] sm:$0xff]
        %v636 = vld [vmem:[#allocation5 + $0x8f0] sm:$0xff]
        %v637 = vld [vmem:[#allocation5 + $0x8f8] sm:$0xff]
        %v638 = vld [vmem:[#allocation5 + $0x900] sm:$0xff]
        %v639 = vld [vmem:[#allocation5 + $0x908] sm:$0xff]
        %v640 = vld [vmem:[#allocation5 + $0x910] sm:$0xff]
        %v641 = vld [vmem:[#allocation5 + $0x918] sm:$0xff]
        %v642 = vld [vmem:[#allocation5 + $0x920] sm:$0xff]
        %v643 = vld [vmem:[#allocation5 + $0x928] sm:$0xff]
        %v644 = vld [vmem:[#allocation5 + $0x930] sm:$0xff]
        %v645 = vld [vmem:[#allocation5 + $0x938] sm:$0xff]
        %v646 = vld [vmem:[#allocation5 + $0x940] sm:$0xff]
        %v647 = vld [vmem:[#allocation5 + $0x948] sm:$0xff]
        %v648 = vld [vmem:[#allocation5 + $0x950] sm:$0xff]
        %v649 = vld [vmem:[#allocation5 + $0x958] sm:$0xff]
        %v650 = vld [vmem:[#allocation5 + $0x960] sm:$0xff]
        %v651 = vld [vmem:[#allocation5 + $0x968] sm:$0xff]
        %v652 = vld [vmem:[#allocation5 + $0x970] sm:$0xff]
        %v653 = vld [vmem:[#allocation5 + $0x978] sm:$0xff]
        %v654 = vld [vmem:[#allocation5 + $0x980] sm:$0xff]
        %v655 = vld [vmem:[#allocation5 + $0x988] sm:$0xff]
        %v656 = vld [vmem:[#allocation5 + $0x990] sm:$0xff]
        %v657 = vld [vmem:[#allocation5 + $0x998] sm:$0xff]
        %v658 = vld [vmem:[#allocation5 + $0x9a0] sm:$0xff]
        %v659 = vld [vmem:[#allocation5 + $0x9a8] sm:$0xff]
        %v660 = vld [vmem:[#allocation5 + $0x9b0] sm:$0xff]
        %v661 = vld [vmem:[#allocation5 + $0x9b8] sm:$0xff]
        %v662 = vld [vmem:[#allocation5 + $0x9c0] sm:$0xff]
        %v663 = vld [vmem:[#allocation5 + $0x9c8] sm:$0xff]
        %v664 = vld [vmem:[#allocation5 + $0x9d0] sm:$0xff]
        %v665 = vld [vmem:[#allocation5 + $0x9d8] sm:$0xff]
        %v666 = vld [vmem:[#allocation5 + $0x9e0] sm:$0xff]
        %v667 = vld [vmem:[#allocation5 + $0x9e8] sm:$0xff]
        %v668 = vld [vmem:[#allocation5 + $0x9f0] sm:$0xff]
        %v669 = vld [vmem:[#allocation5 + $0x9f8] sm:$0xff]
        %v670 = vld [vmem:[#allocation5 + $0xa00] sm:$0xff]
        %v671 = vld [vmem:[#allocation5 + $0xa08] sm:$0xff]
        %v672 = vld [vmem:[#allocation5 + $0xa10] sm:$0xff]
        %v673 = vld [vmem:[#allocation5 + $0xa18] sm:$0xff]
        %v674 = vld [vmem:[#allocation5 + $0xa20] sm:$0xff]
        %v675 = vld [vmem:[#allocation5 + $0xa28] sm:$0xff]
        %v676 = vld [vmem:[#allocation5 + $0xa30] sm:$0xff]
        %v677 = vld [vmem:[#allocation5 + $0xa38] sm:$0xff]
        %v678 = vld [vmem:[#allocation5 + $0xa40] sm:$0xff]
        %v679 = vld [vmem:[#allocation5 + $0xa48] sm:$0xff]
        %v680 = vld [vmem:[#allocation5 + $0xa50] sm:$0xff]
        %v681 = vld [vmem:[#allocation5 + $0xa58] sm:$0xff]
        %v682 = vld [vmem:[#allocation5 + $0xa60] sm:$0xff]
        %v683 = vld [vmem:[#allocation5 + $0xa68] sm:$0xff]
        %v684 = vld [vmem:[#allocation5 + $0xa70] sm:$0xff]
        %v685 = vld [vmem:[#allocation5 + $0xa78] sm:$0xff]
        %v686 = vld [vmem:[#allocation5 + $0xa80] sm:$0xff]
        %v687 = vld [vmem:[#allocation5 + $0xa88] sm:$0xff]
        %v688 = vld [vmem:[#allocation5 + $0xa90] sm:$0xff]
        %v689 = vld [vmem:[#allocation5 + $0xa98] sm:$0xff]
        %v690 = vld [vmem:[#allocation5 + $0xaa0] sm:$0xff]
        %v691 = vld [vmem:[#allocation5 + $0xaa8] sm:$0xff]
        %v692 = vld [vmem:[#allocation5 + $0xab0] sm:$0xff]
        %v693 = vld [vmem:[#allocation5 + $0xab8] sm:$0xff]
        %v694 = vld [vmem:[#allocation5 + $0xac0] sm:$0xff]
        %v695 = vld [vmem:[#allocation5 + $0xac8] sm:$0xff]
        %v696 = vld [vmem:[#allocation5 + $0xad0] sm:$0xff]
        %v697 = vld [vmem:[#allocation5 + $0xad8] sm:$0xff]
        %v698 = vld [vmem:[#allocation5 + $0xae0] sm:$0xff]
        %v699 = vld [vmem:[#allocation5 + $0xae8] sm:$0xff]
        %v700 = vld [vmem:[#allocation5 + $0xaf0] sm:$0xff]
        %v701 = vld [vmem:[#allocation5 + $0xaf8] sm:$0xff]
        %v702 = vld [vmem:[#allocation5 + $0xb00] sm:$0xff]
        %v703 = vld [vmem:[#allocation5 + $0xb08] sm:$0xff]
        %v704 = vld [vmem:[#allocation5 + $0xb10] sm:$0xff]
        %v705 = vld [vmem:[#allocation5 + $0xb18] sm:$0xff]
        %v706 = vld [vmem:[#allocation5 + $0xb20] sm:$0xff]
        %v707 = vld [vmem:[#allocation5 + $0xb28] sm:$0xff]
        %v708 = vld [vmem:[#allocation5 + $0xb30] sm:$0xff]
        %v709 = vld [vmem:[#allocation5 + $0xb38] sm:$0xff]
        %v710 = vld [vmem:[#allocation5 + $0xb40] sm:$0xff]
        %v711 = vld [vmem:[#allocation5 + $0xb48] sm:$0xff]
        %v712 = vld [vmem:[#allocation5 + $0xb50] sm:$0xff]
        %v713 = vld [vmem:[#allocation5 + $0xb58] sm:$0xff]
        %v714 = vld [vmem:[#allocation5 + $0xb60] sm:$0xff]
        %v715 = vld [vmem:[#allocation5 + $0xb68] sm:$0xff]
        %v716 = vld [vmem:[#allocation5 + $0xb70] sm:$0xff]
        %v717 = vld [vmem:[#allocation5 + $0xb78] sm:$0xff]
        %v718 = vld [vmem:[#allocation5 + $0xb80] sm:$0xff]
        %v719 = vld [vmem:[#allocation5 + $0xb88] sm:$0xff]
        %v720 = vld [vmem:[#allocation5 + $0xb90] sm:$0xff]
        %v721 = vld [vmem:[#allocation5 + $0xb98] sm:$0xff]
        %v722 = vld [vmem:[#allocation5 + $0xba0] sm:$0xff]
        %v723 = vld [vmem:[#allocation5 + $0xba8] sm:$0xff]
        %v724 = vld [vmem:[#allocation5 + $0xbb0] sm:$0xff]
        %v725 = vld [vmem:[#allocation5 + $0xbb8] sm:$0xff]
        %v726 = vld [vmem:[#allocation5 + $0xbc0] sm:$0xff]
        %v727 = vld [vmem:[#allocation5 + $0xbc8] sm:$0xff]
        %v728 = vld [vmem:[#allocation5 + $0xbd0] sm:$0xff]
        %v729 = vld [vmem:[#allocation5 + $0xbd8] sm:$0xff]
        %v730 = vld [vmem:[#allocation5 + $0xbe0] sm:$0xff]
        %v731 = vld [vmem:[#allocation5 + $0xbe8] sm:$0xff]
        %v732 = vld [vmem:[#allocation5 + $0xbf0] sm:$0xff]
        %v733 = vld [vmem:[#allocation5 + $0xbf8] sm:$0xff]
        %v734 = vld [vmem:[#allocation5 + $0xc00] sm:$0xff]
        %v735 = vld [vmem:[#allocation5 + $0xc08] sm:$0xff]
        %v736 = vld [vmem:[#allocation5 + $0xc10] sm:$0xff]
        %v737 = vld [vmem:[#allocation5 + $0xc18] sm:$0xff]
        %v738 = vld [vmem:[#allocation5 + $0xc20] sm:$0xff]
        %v739 = vld [vmem:[#allocation5 + $0xc28] sm:$0xff]
        %v740 = vld [vmem:[#allocation5 + $0xc30] sm:$0xff]
        %v741 = vld [vmem:[#allocation5 + $0xc38] sm:$0xff]
        %v742 = vld [vmem:[#allocation5 + $0xc40] sm:$0xff]
        %v743 = vld [vmem:[#allocation5 + $0xc48] sm:$0xff]
        %v744 = vld [vmem:[#allocation5 + $0xc50] sm:$0xff]
        %v745 = vld [vmem:[#allocation5 + $0xc58] sm:$0xff]
        %v746 = vld [vmem:[#allocation5 + $0xc60] sm:$0xff]
        %v747 = vld [vmem:[#allocation5 + $0xc68] sm:$0xff]
        %v748 = vld [vmem:[#allocation5 + $0xc70] sm:$0xff]
        %v749 = vld [vmem:[#allocation5 + $0xc78] sm:$0xff]
        %v750 = vld [vmem:[#allocation5 + $0xc80] sm:$0xff]
        %v751 = vld [vmem:[#allocation5 + $0xc88] sm:$0xff]
        %v752 = vld [vmem:[#allocation5 + $0xc90] sm:$0xff]
        %v753 = vld [vmem:[#allocation5 + $0xc98] sm:$0xff]
        %v754 = vld [vmem:[#allocation5 + $0xca0] sm:$0xff]
        %v755 = vld [vmem:[#allocation5 + $0xca8] sm:$0xff]
        %v756 = vld [vmem:[#allocation5 + $0xcb0] sm:$0xff]
        %v757 = vld [vmem:[#allocation5 + $0xcb8] sm:$0xff]
        %v758 = vld [vmem:[#allocation5 + $0xcc0] sm:$0xff]
        %v759 = vld [vmem:[#allocation5 + $0xcc8] sm:$0xff]
        %v760 = vld [vmem:[#allocation5 + $0xcd0] sm:$0xff]
        %v761 = vld [vmem:[#allocation5 + $0xcd8] sm:$0xff]
        %v762 = vld [vmem:[#allocation5 + $0xce0] sm:$0xff]
        %v763 = vld [vmem:[#allocation5 + $0xce8] sm:$0xff]
        %v764 = vld [vmem:[#allocation5 + $0xcf0] sm:$0xff]
        %v765 = vld [vmem:[#allocation5 + $0xcf8] sm:$0xff]
        %v766 = vld [vmem:[#allocation5 + $0xd00] sm:$0xff]
        %v767 = vld [vmem:[#allocation5 + $0xd08] sm:$0xff]
        %v768 = vld [vmem:[#allocation5 + $0xd10] sm:$0xff]
        %v769 = vld [vmem:[#allocation5 + $0xd18] sm:$0xff]
        %v770 = vld [vmem:[#allocation5 + $0xd20] sm:$0xff]
        %v771 = vld [vmem:[#allocation5 + $0xd28] sm:$0xff]
        %v772 = vld [vmem:[#allocation5 + $0xd30] sm:$0xff]
        %v773 = vld [vmem:[#allocation5 + $0xd38] sm:$0xff]
        %v774 = vld [vmem:[#allocation5 + $0xd40] sm:$0xff]
        %v775 = vld [vmem:[#allocation5 + $0xd48] sm:$0xff]
        %v776 = vld [vmem:[#allocation5 + $0xd50] sm:$0xff]
        %v777 = vld [vmem:[#allocation5 + $0xd58] sm:$0xff]
        %v778 = vld [vmem:[#allocation5 + $0xd60] sm:$0xff]
        %v779 = vld [vmem:[#allocation5 + $0xd68] sm:$0xff]
        %v780 = vld [vmem:[#allocation5 + $0xd70] sm:$0xff]
        %v781 = vld [vmem:[#allocation5 + $0xd78] sm:$0xff]
        %v782 = vld [vmem:[#allocation5 + $0xd80] sm:$0xff]
        %v783 = vld [vmem:[#allocation5 + $0xd88] sm:$0xff]
        %v784 = vld [vmem:[#allocation5 + $0xd90] sm:$0xff]
        %v785 = vld [vmem:[#allocation5 + $0xd98] sm:$0xff]
        %v786 = vld [vmem:[#allocation5 + $0xda0] sm:$0xff]
        %v787 = vld [vmem:[#allocation5 + $0xda8] sm:$0xff]
        %v788 = vld [vmem:[#allocation5 + $0xdb0] sm:$0xff]
        %v789 = vld [vmem:[#allocation5 + $0xdb8] sm:$0xff]
        %v790 = vld [vmem:[#allocation5 + $0xdc0] sm:$0xff]
        %v791 = vld [vmem:[#allocation5 + $0xdc8] sm:$0xff]
        %v792 = vld [vmem:[#allocation5 + $0xdd0] sm:$0xff]
        %v793 = vld [vmem:[#allocation5 + $0xdd8] sm:$0xff]
        %v794 = vld [vmem:[#allocation5 + $0xde0] sm:$0xff]
        %v795 = vld [vmem:[#allocation5 + $0xde8] sm:$0xff]
        %v796 = vld [vmem:[#allocation5 + $0xdf0] sm:$0xff]
        %v797 = vld [vmem:[#allocation5 + $0xdf8] sm:$0xff]
        %v798 = vld [vmem:[#allocation5 + $0xe00] sm:$0xff]
        %v799 = vld [vmem:[#allocation5 + $0xe08] sm:$0xff]
        %v800 = vld [vmem:[#allocation5 + $0xe10] sm:$0xff]
        %v801 = vld [vmem:[#allocation5 + $0xe18] sm:$0xff]
        %v802 = vld [vmem:[#allocation5 + $0xe20] sm:$0xff]
        %v803 = vld [vmem:[#allocation5 + $0xe28] sm:$0xff]
        %v804 = vld [vmem:[#allocation5 + $0xe30] sm:$0xff]
        %v805 = vld [vmem:[#allocation5 + $0xe38] sm:$0xff]
        %v806 = vld [vmem:[#allocation5 + $0xe40] sm:$0xff]
        %v807 = vld [vmem:[#allocation5 + $0xe48] sm:$0xff]
        %v808 = vld [vmem:[#allocation5 + $0xe50] sm:$0xff]
        %v809 = vld [vmem:[#allocation5 + $0xe58] sm:$0xff]
        %v810 = vld [vmem:[#allocation5 + $0xe60] sm:$0xff]
        %v811 = vld [vmem:[#allocation5 + $0xe68] sm:$0xff]
        %v812 = vld [vmem:[#allocation5 + $0xe70] sm:$0xff]
        %v813 = vld [vmem:[#allocation5 + $0xe78] sm:$0xff]
        %v814 = vld [vmem:[#allocation5 + $0xe80] sm:$0xff]
        %v815 = vld [vmem:[#allocation5 + $0xe88] sm:$0xff]
        %v816 = vld [vmem:[#allocation5 + $0xe90] sm:$0xff]
        %v817 = vld [vmem:[#allocation5 + $0xe98] sm:$0xff]
        %v818 = vld [vmem:[#allocation5 + $0xea0] sm:$0xff]
        %v819 = vld [vmem:[#allocation5 + $0xea8] sm:$0xff]
        %v820 = vld [vmem:[#allocation5 + $0xeb0] sm:$0xff]
        %v821 = vld [vmem:[#allocation5 + $0xeb8] sm:$0xff]
        %v822 = vld [vmem:[#allocation5 + $0xec0] sm:$0xff]
        %v823 = vld [vmem:[#allocation5 + $0xec8] sm:$0xff]
        %v824 = vld [vmem:[#allocation5 + $0xed0] sm:$0xff]
        %v825 = vld [vmem:[#allocation5 + $0xed8] sm:$0xff]
        %v826 = vld [vmem:[#allocation5 + $0xee0] sm:$0xff]
        %v827 = vld [vmem:[#allocation5 + $0xee8] sm:$0xff]
        %v828 = vld [vmem:[#allocation5 + $0xef0] sm:$0xff]
        %v829 = vld [vmem:[#allocation5 + $0xef8] sm:$0xff]
        %v830 = vld [vmem:[#allocation5 + $0xf00] sm:$0xff]
        %v831 = vld [vmem:[#allocation5 + $0xf08] sm:$0xff]
        %v832 = vld [vmem:[#allocation5 + $0xf10] sm:$0xff]
        %v833 = vld [vmem:[#allocation5 + $0xf18] sm:$0xff]
        %v834 = vld [vmem:[#allocation5 + $0xf20] sm:$0xff]
        %v835 = vld [vmem:[#allocation5 + $0xf28] sm:$0xff]
        %v836 = vld [vmem:[#allocation5 + $0xf30] sm:$0xff]
        %v837 = vld [vmem:[#allocation5 + $0xf38] sm:$0xff]
        %v838 = vld [vmem:[#allocation5 + $0xf40] sm:$0xff]
        %v839 = vld [vmem:[#allocation5 + $0xf48] sm:$0xff]
        %v840 = vld [vmem:[#allocation5 + $0xf50] sm:$0xff]
        %v841 = vld [vmem:[#allocation5 + $0xf58] sm:$0xff]
        %v842 = vld [vmem:[#allocation5 + $0xf60] sm:$0xff]
        %v843 = vld [vmem:[#allocation5 + $0xf68] sm:$0xff]
        %v844 = vld [vmem:[#allocation5 + $0xf70] sm:$0xff]
        %v845 = vld [vmem:[#allocation5 + $0xf78] sm:$0xff]
        %v846 = vld [vmem:[#allocation5 + $0xf80] sm:$0xff]
        %v847 = vld [vmem:[#allocation5 + $0xf88] sm:$0xff]
        %v848 = vld [vmem:[#allocation5 + $0xf90] sm:$0xff]
        %v849 = vld [vmem:[#allocation5 + $0xf98] sm:$0xff]
        %v850 = vld [vmem:[#allocation5 + $0xfa0] sm:$0xff]
        %v851 = vld [vmem:[#allocation5 + $0xfa8] sm:$0xff]
        %v852 = vld [vmem:[#allocation5 + $0xfb0] sm:$0xff]
        %v853 = vld [vmem:[#allocation5 + $0xfb8] sm:$0xff]
        %v854 = vld [vmem:[#allocation5 + $0xfc0] sm:$0xff]
        %v855 = vld [vmem:[#allocation5 + $0xfc8] sm:$0xff]
        %v856 = vld [vmem:[#allocation5 + $0xfd0] sm:$0xff]
        %v857 = vld [vmem:[#allocation5 + $0xfd8] sm:$0xff]
        %v858 = vld [vmem:[#allocation5 + $0xfe0] sm:$0xff]
        %v859 = vld [vmem:[#allocation5 + $0xfe8] sm:$0xff]
        %v860 = vld [vmem:[#allocation5 + $0xff0] sm:$0xff]
        %v861 = vld [vmem:[#allocation5 + $0xff8] sm:$0xff]
        %v862 = vld [vmem:[#allocation7] sm:$0x3]
        %v864 = vlaneseq
        %v865 = vshrl.u32 %v864, 7
        %v866 = vsub.s32 0, %v865
        %v867 = vrot.slane %v862, %v866
        %v868 = vlaneseq
        %v869 = vshrl.u32 %v868, 7
        %v870 = vsub.s32 1, %v869
        %v871 = vrot.slane %v862, %v870
        %v890 = vunpack.c.l.b16 %v334
        %v891 = vunpack.c.h.b16 %v334
        %v892 = vunpack.c.l.b16 %v335
        %v893 = vunpack.c.h.b16 %v335
        %v894 = vunpack.c.l.b16 %v336
        %v895 = vunpack.c.h.b16 %v336
        %v896 = vunpack.c.l.b16 %v337
        %v897 = vunpack.c.h.b16 %v337
        %v898 = vunpack.c.l.b16 %v338
        %v899 = vunpack.c.h.b16 %v338
        %v900 = vunpack.c.l.b16 %v339
        %v901 = vunpack.c.h.b16 %v339
        %v902 = vunpack.c.l.b16 %v340
        %v903 = vunpack.c.h.b16 %v340
        %v904 = vunpack.c.l.b16 %v341
        %v905 = vunpack.c.h.b16 %v341
        %v906 = vunpack.c.l.b16 %v342
        %v907 = vunpack.c.h.b16 %v342
        %v908 = vunpack.c.l.b16 %v343
        %v909 = vunpack.c.h.b16 %v343
        %v910 = vunpack.c.l.b16 %v344
        %v911 = vunpack.c.h.b16 %v344
        %v912 = vunpack.c.l.b16 %v345
        %v913 = vunpack.c.h.b16 %v345
        %v914 = vunpack.c.l.b16 %v346
        %v915 = vunpack.c.h.b16 %v346
        %v916 = vunpack.c.l.b16 %v347
        %v917 = vunpack.c.h.b16 %v347
        %v918 = vunpack.c.l.b16 %v348
        %v919 = vunpack.c.h.b16 %v348
        %v920 = vunpack.c.l.b16 %v349
        %v921 = vunpack.c.h.b16 %v349
        %v922 = vpack.c.b16 %v890, %v890
        %v923 = vpack.c.b16 %v891, %v891
        %v924 = vpack.c.b16 %v892, %v892
        %v925 = vpack.c.b16 %v893, %v893
        %v926 = vpack.c.b16 %v894, %v894
        %v927 = vpack.c.b16 %v895, %v895
        %v928 = vpack.c.b16 %v896, %v896
        %v929 = vpack.c.b16 %v897, %v897
        %v930 = vpack.c.b16 %v898, %v898
        %v931 = vpack.c.b16 %v899, %v899
        %v932 = vpack.c.b16 %v900, %v900
        %v933 = vpack.c.b16 %v901, %v901
        %v934 = vpack.c.b16 %v902, %v902
        %v935 = vpack.c.b16 %v903, %v903
        %v936 = vpack.c.b16 %v904, %v904
        %v937 = vpack.c.b16 %v905, %v905
        %v938 = vpack.c.b16 %v906, %v906
        %v939 = vpack.c.b16 %v907, %v907
        %v940 = vpack.c.b16 %v908, %v908
        %v941 = vpack.c.b16 %v909, %v909
        %v942 = vpack.c.b16 %v910, %v910
        %v943 = vpack.c.b16 %v911, %v911
        %v944 = vpack.c.b16 %v912, %v912
        %v945 = vpack.c.b16 %v913, %v913
        %v946 = vpack.c.b16 %v914, %v914
        %v947 = vpack.c.b16 %v915, %v915
        %v948 = vpack.c.b16 %v916, %v916
        %v949 = vpack.c.b16 %v917, %v917
        %v950 = vpack.c.b16 %v918, %v918
        %v951 = vpack.c.b16 %v919, %v919
        %v952 = vpack.c.b16 %v920, %v920
        %v953 = vpack.c.b16 %v921, %v921
        %v1498 = vunpack.c.l.b16 %v350
        %v1499 = vunpack.c.h.b16 %v350
        %v1500 = vunpack.c.l.b16 %v351
        %v1501 = vunpack.c.h.b16 %v351
        %v1502 = vunpack.c.l.b16 %v352
        %v1503 = vunpack.c.h.b16 %v352
        %v1504 = vunpack.c.l.b16 %v353
        %v1505 = vunpack.c.h.b16 %v353
        %v1506 = vunpack.c.l.b16 %v354
        %v1507 = vunpack.c.h.b16 %v354
        %v1508 = vunpack.c.l.b16 %v355
        %v1509 = vunpack.c.h.b16 %v355
        %v1510 = vunpack.c.l.b16 %v356
        %v1511 = vunpack.c.h.b16 %v356
        %v1512 = vunpack.c.l.b16 %v357
        %v1513 = vunpack.c.h.b16 %v357
        %v1514 = vunpack.c.l.b16 %v358
        %v1515 = vunpack.c.h.b16 %v358
        %v1516 = vunpack.c.l.b16 %v359
        %v1517 = vunpack.c.h.b16 %v359
        %v1518 = vunpack.c.l.b16 %v360
        %v1519 = vunpack.c.h.b16 %v360
        %v1520 = vunpack.c.l.b16 %v361
        %v1521 = vunpack.c.h.b16 %v361
        %v1522 = vunpack.c.l.b16 %v362
        %v1523 = vunpack.c.h.b16 %v362
        %v1524 = vunpack.c.l.b16 %v363
        %v1525 = vunpack.c.h.b16 %v363
        %v1526 = vunpack.c.l.b16 %v364
        %v1527 = vunpack.c.h.b16 %v364
        %v1528 = vunpack.c.l.b16 %v365
        %v1529 = vunpack.c.h.b16 %v365
        %v1530 = vunpack.c.l.b16 %v366
        %v1531 = vunpack.c.h.b16 %v366
        %v1532 = vunpack.c.l.b16 %v367
        %v1533 = vunpack.c.h.b16 %v367
        %v1534 = vunpack.c.l.b16 %v368
        %v1535 = vunpack.c.h.b16 %v368
        %v1536 = vunpack.c.l.b16 %v369
        %v1537 = vunpack.c.h.b16 %v369
        %v1538 = vunpack.c.l.b16 %v370
        %v1539 = vunpack.c.h.b16 %v370
        %v1540 = vunpack.c.l.b16 %v371
        %v1541 = vunpack.c.h.b16 %v371
        %v1542 = vunpack.c.l.b16 %v372
        %v1543 = vunpack.c.h.b16 %v372
        %v1544 = vunpack.c.l.b16 %v373
        %v1545 = vunpack.c.h.b16 %v373
        %v1546 = vunpack.c.l.b16 %v374
        %v1547 = vunpack.c.h.b16 %v374
        %v1548 = vunpack.c.l.b16 %v375
        %v1549 = vunpack.c.h.b16 %v375
        %v1550 = vunpack.c.l.b16 %v376
        %v1551 = vunpack.c.h.b16 %v376
        %v1552 = vunpack.c.l.b16 %v377
        %v1553 = vunpack.c.h.b16 %v377
        %v1554 = vunpack.c.l.b16 %v378
        %v1555 = vunpack.c.h.b16 %v378
        %v1556 = vunpack.c.l.b16 %v379
        %v1557 = vunpack.c.h.b16 %v379
        %v1558 = vunpack.c.l.b16 %v380
        %v1559 = vunpack.c.h.b16 %v380
        %v1560 = vunpack.c.l.b16 %v381
        %v1561 = vunpack.c.h.b16 %v381
        %v1562 = vunpack.c.l.b16 %v382
        %v1563 = vunpack.c.h.b16 %v382
        %v1564 = vunpack.c.l.b16 %v383
        %v1565 = vunpack.c.h.b16 %v383
        %v1566 = vunpack.c.l.b16 %v384
        %v1567 = vunpack.c.h.b16 %v384
        %v1568 = vunpack.c.l.b16 %v385
        %v1569 = vunpack.c.h.b16 %v385
        %v1570 = vunpack.c.l.b16 %v386
        %v1571 = vunpack.c.h.b16 %v386
        %v1572 = vunpack.c.l.b16 %v387
        %v1573 = vunpack.c.h.b16 %v387
        %v1574 = vunpack.c.l.b16 %v388
        %v1575 = vunpack.c.h.b16 %v388
        %v1576 = vunpack.c.l.b16 %v389
        %v1577 = vunpack.c.h.b16 %v389
        %v1578 = vunpack.c.l.b16 %v390
        %v1579 = vunpack.c.h.b16 %v390
        %v1580 = vunpack.c.l.b16 %v391
        %v1581 = vunpack.c.h.b16 %v391
        %v1582 = vunpack.c.l.b16 %v392
        %v1583 = vunpack.c.h.b16 %v392
        %v1584 = vunpack.c.l.b16 %v393
        %v1585 = vunpack.c.h.b16 %v393
        %v1586 = vunpack.c.l.b16 %v394
        %v1587 = vunpack.c.h.b16 %v394
        %v1588 = vunpack.c.l.b16 %v395
        %v1589 = vunpack.c.h.b16 %v395
        %v1590 = vunpack.c.l.b16 %v396
        %v1591 = vunpack.c.h.b16 %v396
        %v1592 = vunpack.c.l.b16 %v397
        %v1593 = vunpack.c.h.b16 %v397
        %v1594 = vunpack.c.l.b16 %v398
        %v1595 = vunpack.c.h.b16 %v398
        %v1596 = vunpack.c.l.b16 %v399
        %v1597 = vunpack.c.h.b16 %v399
        %v1598 = vunpack.c.l.b16 %v400
        %v1599 = vunpack.c.h.b16 %v400
        %v1600 = vunpack.c.l.b16 %v401
        %v1601 = vunpack.c.h.b16 %v401
        %v1602 = vunpack.c.l.b16 %v402
        %v1603 = vunpack.c.h.b16 %v402
        %v1604 = vunpack.c.l.b16 %v403
        %v1605 = vunpack.c.h.b16 %v403
        %v1606 = vunpack.c.l.b16 %v404
        %v1607 = vunpack.c.h.b16 %v404
        %v1608 = vunpack.c.l.b16 %v405
        %v1609 = vunpack.c.h.b16 %v405
        %v1610 = vunpack.c.l.b16 %v406
        %v1611 = vunpack.c.h.b16 %v406
        %v1612 = vunpack.c.l.b16 %v407
        %v1613 = vunpack.c.h.b16 %v407
        %v1614 = vunpack.c.l.b16 %v408
        %v1615 = vunpack.c.h.b16 %v408
        %v1616 = vunpack.c.l.b16 %v409
        %v1617 = vunpack.c.h.b16 %v409
        %v1618 = vunpack.c.l.b16 %v410
        %v1619 = vunpack.c.h.b16 %v410
        %v1620 = vunpack.c.l.b16 %v411
        %v1621 = vunpack.c.h.b16 %v411
        %v1622 = vunpack.c.l.b16 %v412
        %v1623 = vunpack.c.h.b16 %v412
        %v1624 = vunpack.c.l.b16 %v413
        %v1625 = vunpack.c.h.b16 %v413
        %v1626 = vunpack.c.l.b16 %v414
        %v1627 = vunpack.c.h.b16 %v414
        %v1628 = vunpack.c.l.b16 %v415
        %v1629 = vunpack.c.h.b16 %v415
        %v1630 = vunpack.c.l.b16 %v416
        %v1631 = vunpack.c.h.b16 %v416
        %v1632 = vunpack.c.l.b16 %v417
        %v1633 = vunpack.c.h.b16 %v417
        %v1634 = vunpack.c.l.b16 %v418
        %v1635 = vunpack.c.h.b16 %v418
        %v1636 = vunpack.c.l.b16 %v419
        %v1637 = vunpack.c.h.b16 %v419
        %v1638 = vunpack.c.l.b16 %v420
        %v1639 = vunpack.c.h.b16 %v420
        %v1640 = vunpack.c.l.b16 %v421
        %v1641 = vunpack.c.h.b16 %v421
        %v1642 = vunpack.c.l.b16 %v422
        %v1643 = vunpack.c.h.b16 %v422
        %v1644 = vunpack.c.l.b16 %v423
        %v1645 = vunpack.c.h.b16 %v423
        %v1646 = vunpack.c.l.b16 %v424
        %v1647 = vunpack.c.h.b16 %v424
        %v1648 = vunpack.c.l.b16 %v425
        %v1649 = vunpack.c.h.b16 %v425
        %v1650 = vunpack.c.l.b16 %v426
        %v1651 = vunpack.c.h.b16 %v426
        %v1652 = vunpack.c.l.b16 %v427
        %v1653 = vunpack.c.h.b16 %v427
        %v1654 = vunpack.c.l.b16 %v428
        %v1655 = vunpack.c.h.b16 %v428
        %v1656 = vunpack.c.l.b16 %v429
        %v1657 = vunpack.c.h.b16 %v429
        %v1658 = vunpack.c.l.b16 %v430
        %v1659 = vunpack.c.h.b16 %v430
        %v1660 = vunpack.c.l.b16 %v431
        %v1661 = vunpack.c.h.b16 %v431
        %v1662 = vunpack.c.l.b16 %v432
        %v1663 = vunpack.c.h.b16 %v432
        %v1664 = vunpack.c.l.b16 %v433
        %v1665 = vunpack.c.h.b16 %v433
        %v1666 = vunpack.c.l.b16 %v434
        %v1667 = vunpack.c.h.b16 %v434
        %v1668 = vunpack.c.l.b16 %v435
        %v1669 = vunpack.c.h.b16 %v435
        %v1670 = vunpack.c.l.b16 %v436
        %v1671 = vunpack.c.h.b16 %v436
        %v1672 = vunpack.c.l.b16 %v437
        %v1673 = vunpack.c.h.b16 %v437
        %v1674 = vunpack.c.l.b16 %v438
        %v1675 = vunpack.c.h.b16 %v438
        %v1676 = vunpack.c.l.b16 %v439
        %v1677 = vunpack.c.h.b16 %v439
        %v1678 = vunpack.c.l.b16 %v440
        %v1679 = vunpack.c.h.b16 %v440
        %v1680 = vunpack.c.l.b16 %v441
        %v1681 = vunpack.c.h.b16 %v441
        %v1682 = vunpack.c.l.b16 %v442
        %v1683 = vunpack.c.h.b16 %v442
        %v1684 = vunpack.c.l.b16 %v443
        %v1685 = vunpack.c.h.b16 %v443
        %v1686 = vunpack.c.l.b16 %v444
        %v1687 = vunpack.c.h.b16 %v444
        %v1688 = vunpack.c.l.b16 %v445
        %v1689 = vunpack.c.h.b16 %v445
        %v1690 = vunpack.c.l.b16 %v446
        %v1691 = vunpack.c.h.b16 %v446
        %v1692 = vunpack.c.l.b16 %v447
        %v1693 = vunpack.c.h.b16 %v447
        %v1694 = vunpack.c.l.b16 %v448
        %v1695 = vunpack.c.h.b16 %v448
        %v1696 = vunpack.c.l.b16 %v449
        %v1697 = vunpack.c.h.b16 %v449
        %v1698 = vunpack.c.l.b16 %v450
        %v1699 = vunpack.c.h.b16 %v450
        %v1700 = vunpack.c.l.b16 %v451
        %v1701 = vunpack.c.h.b16 %v451
        %v1702 = vunpack.c.l.b16 %v452
        %v1703 = vunpack.c.h.b16 %v452
        %v1704 = vunpack.c.l.b16 %v453
        %v1705 = vunpack.c.h.b16 %v453
        %v1706 = vunpack.c.l.b16 %v454
        %v1707 = vunpack.c.h.b16 %v454
        %v1708 = vunpack.c.l.b16 %v455
        %v1709 = vunpack.c.h.b16 %v455
        %v1710 = vunpack.c.l.b16 %v456
        %v1711 = vunpack.c.h.b16 %v456
        %v1712 = vunpack.c.l.b16 %v457
        %v1713 = vunpack.c.h.b16 %v457
        %v1714 = vunpack.c.l.b16 %v458
        %v1715 = vunpack.c.h.b16 %v458
        %v1716 = vunpack.c.l.b16 %v459
        %v1717 = vunpack.c.h.b16 %v459
        %v1718 = vunpack.c.l.b16 %v460
        %v1719 = vunpack.c.h.b16 %v460
        %v1720 = vunpack.c.l.b16 %v461
        %v1721 = vunpack.c.h.b16 %v461
        %v1722 = vunpack.c.l.b16 %v462
        %v1723 = vunpack.c.h.b16 %v462
        %v1724 = vunpack.c.l.b16 %v463
        %v1725 = vunpack.c.h.b16 %v463
        %v1726 = vunpack.c.l.b16 %v464
        %v1727 = vunpack.c.h.b16 %v464
        %v1728 = vunpack.c.l.b16 %v465
        %v1729 = vunpack.c.h.b16 %v465
        %v1730 = vunpack.c.l.b16 %v466
        %v1731 = vunpack.c.h.b16 %v466
        %v1732 = vunpack.c.l.b16 %v467
        %v1733 = vunpack.c.h.b16 %v467
        %v1734 = vunpack.c.l.b16 %v468
        %v1735 = vunpack.c.h.b16 %v468
        %v1736 = vunpack.c.l.b16 %v469
        %v1737 = vunpack.c.h.b16 %v469
        %v1738 = vunpack.c.l.b16 %v470
        %v1739 = vunpack.c.h.b16 %v470
        %v1740 = vunpack.c.l.b16 %v471
        %v1741 = vunpack.c.h.b16 %v471
        %v1742 = vunpack.c.l.b16 %v472
        %v1743 = vunpack.c.h.b16 %v472
        %v1744 = vunpack.c.l.b16 %v473
        %v1745 = vunpack.c.h.b16 %v473
        %v1746 = vunpack.c.l.b16 %v474
        %v1747 = vunpack.c.h.b16 %v474
        %v1748 = vunpack.c.l.b16 %v475
        %v1749 = vunpack.c.h.b16 %v475
        %v1750 = vunpack.c.l.b16 %v476
        %v1751 = vunpack.c.h.b16 %v476
        %v1752 = vunpack.c.l.b16 %v477
        %v1753 = vunpack.c.h.b16 %v477
        %v1754 = vunpack.c.l.b16 %v478
        %v1755 = vunpack.c.h.b16 %v478
        %v1756 = vunpack.c.l.b16 %v479
        %v1757 = vunpack.c.h.b16 %v479
        %v1758 = vunpack.c.l.b16 %v480
        %v1759 = vunpack.c.h.b16 %v480
        %v1760 = vunpack.c.l.b16 %v481
        %v1761 = vunpack.c.h.b16 %v481
        %v1762 = vunpack.c.l.b16 %v482
        %v1763 = vunpack.c.h.b16 %v482
        %v1764 = vunpack.c.l.b16 %v483
        %v1765 = vunpack.c.h.b16 %v483
        %v1766 = vunpack.c.l.b16 %v484
        %v1767 = vunpack.c.h.b16 %v484
        %v1768 = vunpack.c.l.b16 %v485
        %v1769 = vunpack.c.h.b16 %v485
        %v1770 = vunpack.c.l.b16 %v486
        %v1771 = vunpack.c.h.b16 %v486
        %v1772 = vunpack.c.l.b16 %v487
        %v1773 = vunpack.c.h.b16 %v487
        %v1774 = vunpack.c.l.b16 %v488
        %v1775 = vunpack.c.h.b16 %v488
        %v1776 = vunpack.c.l.b16 %v489
        %v1777 = vunpack.c.h.b16 %v489
        %v1778 = vunpack.c.l.b16 %v490
        %v1779 = vunpack.c.h.b16 %v490
        %v1780 = vunpack.c.l.b16 %v491
        %v1781 = vunpack.c.h.b16 %v491
        %v1782 = vunpack.c.l.b16 %v492
        %v1783 = vunpack.c.h.b16 %v492
        %v1784 = vunpack.c.l.b16 %v493
        %v1785 = vunpack.c.h.b16 %v493
        %v1786 = vunpack.c.l.b16 %v494
        %v1787 = vunpack.c.h.b16 %v494
        %v1788 = vunpack.c.l.b16 %v495
        %v1789 = vunpack.c.h.b16 %v495
        %v1790 = vunpack.c.l.b16 %v496
        %v1791 = vunpack.c.h.b16 %v496
        %v1792 = vunpack.c.l.b16 %v497
        %v1793 = vunpack.c.h.b16 %v497
        %v1794 = vunpack.c.l.b16 %v498
        %v1795 = vunpack.c.h.b16 %v498
        %v1796 = vunpack.c.l.b16 %v499
        %v1797 = vunpack.c.h.b16 %v499
        %v1798 = vunpack.c.l.b16 %v500
        %v1799 = vunpack.c.h.b16 %v500
        %v1800 = vunpack.c.l.b16 %v501
        %v1801 = vunpack.c.h.b16 %v501
        %v1802 = vunpack.c.l.b16 %v502
        %v1803 = vunpack.c.h.b16 %v502
        %v1804 = vunpack.c.l.b16 %v503
        %v1805 = vunpack.c.h.b16 %v503
        %v1806 = vunpack.c.l.b16 %v504
        %v1807 = vunpack.c.h.b16 %v504
        %v1808 = vunpack.c.l.b16 %v505
        %v1809 = vunpack.c.h.b16 %v505
        %v1810 = vunpack.c.l.b16 %v506
        %v1811 = vunpack.c.h.b16 %v506
        %v1812 = vunpack.c.l.b16 %v507
        %v1813 = vunpack.c.h.b16 %v507
        %v1814 = vunpack.c.l.b16 %v508
        %v1815 = vunpack.c.h.b16 %v508
        %v1816 = vunpack.c.l.b16 %v509
        %v1817 = vunpack.c.h.b16 %v509
        %v1818 = vunpack.c.l.b16 %v510
        %v1819 = vunpack.c.h.b16 %v510
        %v1820 = vunpack.c.l.b16 %v511
        %v1821 = vunpack.c.h.b16 %v511
        %v1822 = vunpack.c.l.b16 %v512
        %v1823 = vunpack.c.h.b16 %v512
        %v1824 = vunpack.c.l.b16 %v513
        %v1825 = vunpack.c.h.b16 %v513
        %v1826 = vunpack.c.l.b16 %v514
        %v1827 = vunpack.c.h.b16 %v514
        %v1828 = vunpack.c.l.b16 %v515
        %v1829 = vunpack.c.h.b16 %v515
        %v1830 = vunpack.c.l.b16 %v516
        %v1831 = vunpack.c.h.b16 %v516
        %v1832 = vunpack.c.l.b16 %v517
        %v1833 = vunpack.c.h.b16 %v517
        %v1834 = vunpack.c.l.b16 %v518
        %v1835 = vunpack.c.h.b16 %v518
        %v1836 = vunpack.c.l.b16 %v519
        %v1837 = vunpack.c.h.b16 %v519
        %v1838 = vunpack.c.l.b16 %v520
        %v1839 = vunpack.c.h.b16 %v520
        %v1840 = vunpack.c.l.b16 %v521
        %v1841 = vunpack.c.h.b16 %v521
        %v1842 = vunpack.c.l.b16 %v522
        %v1843 = vunpack.c.h.b16 %v522
        %v1844 = vunpack.c.l.b16 %v523
        %v1845 = vunpack.c.h.b16 %v523
        %v1846 = vunpack.c.l.b16 %v524
        %v1847 = vunpack.c.h.b16 %v524
        %v1848 = vunpack.c.l.b16 %v525
        %v1849 = vunpack.c.h.b16 %v525
        %v1850 = vunpack.c.l.b16 %v526
        %v1851 = vunpack.c.h.b16 %v526
        %v1852 = vunpack.c.l.b16 %v527
        %v1853 = vunpack.c.h.b16 %v527
        %v1854 = vunpack.c.l.b16 %v528
        %v1855 = vunpack.c.h.b16 %v528
        %v1856 = vunpack.c.l.b16 %v529
        %v1857 = vunpack.c.h.b16 %v529
        %v1858 = vunpack.c.l.b16 %v530
        %v1859 = vunpack.c.h.b16 %v530
        %v1860 = vunpack.c.l.b16 %v531
        %v1861 = vunpack.c.h.b16 %v531
        %v1862 = vunpack.c.l.b16 %v532
        %v1863 = vunpack.c.h.b16 %v532
        %v1864 = vunpack.c.l.b16 %v533
        %v1865 = vunpack.c.h.b16 %v533
        %v1866 = vunpack.c.l.b16 %v534
        %v1867 = vunpack.c.h.b16 %v534
        %v1868 = vunpack.c.l.b16 %v535
        %v1869 = vunpack.c.h.b16 %v535
        %v1870 = vunpack.c.l.b16 %v536
        %v1871 = vunpack.c.h.b16 %v536
        %v1872 = vunpack.c.l.b16 %v537
        %v1873 = vunpack.c.h.b16 %v537
        %v1874 = vunpack.c.l.b16 %v538
        %v1875 = vunpack.c.h.b16 %v538
        %v1876 = vunpack.c.l.b16 %v539
        %v1877 = vunpack.c.h.b16 %v539
        %v1878 = vunpack.c.l.b16 %v540
        %v1879 = vunpack.c.h.b16 %v540
        %v1880 = vunpack.c.l.b16 %v541
        %v1881 = vunpack.c.h.b16 %v541
        %v1882 = vunpack.c.l.b16 %v542
        %v1883 = vunpack.c.h.b16 %v542
        %v1884 = vunpack.c.l.b16 %v543
        %v1885 = vunpack.c.h.b16 %v543
        %v1886 = vunpack.c.l.b16 %v544
        %v1887 = vunpack.c.h.b16 %v544
        %v1888 = vunpack.c.l.b16 %v545
        %v1889 = vunpack.c.h.b16 %v545
        %v1890 = vunpack.c.l.b16 %v546
        %v1891 = vunpack.c.h.b16 %v546
        %v1892 = vunpack.c.l.b16 %v547
        %v1893 = vunpack.c.h.b16 %v547
        %v1894 = vunpack.c.l.b16 %v548
        %v1895 = vunpack.c.h.b16 %v548
        %v1896 = vunpack.c.l.b16 %v549
        %v1897 = vunpack.c.h.b16 %v549
        %v1898 = vunpack.c.l.b16 %v550
        %v1899 = vunpack.c.h.b16 %v550
        %v1900 = vunpack.c.l.b16 %v551
        %v1901 = vunpack.c.h.b16 %v551
        %v1902 = vunpack.c.l.b16 %v552
        %v1903 = vunpack.c.h.b16 %v552
        %v1904 = vunpack.c.l.b16 %v553
        %v1905 = vunpack.c.h.b16 %v553
        %v1906 = vunpack.c.l.b16 %v554
        %v1907 = vunpack.c.h.b16 %v554
        %v1908 = vunpack.c.l.b16 %v555
        %v1909 = vunpack.c.h.b16 %v555
        %v1910 = vunpack.c.l.b16 %v556
        %v1911 = vunpack.c.h.b16 %v556
        %v1912 = vunpack.c.l.b16 %v557
        %v1913 = vunpack.c.h.b16 %v557
        %v1914 = vunpack.c.l.b16 %v558
        %v1915 = vunpack.c.h.b16 %v558
        %v1916 = vunpack.c.l.b16 %v559
        %v1917 = vunpack.c.h.b16 %v559
        %v1918 = vunpack.c.l.b16 %v560
        %v1919 = vunpack.c.h.b16 %v560
        %v1920 = vunpack.c.l.b16 %v561
        %v1921 = vunpack.c.h.b16 %v561
        %v1922 = vunpack.c.l.b16 %v562
        %v1923 = vunpack.c.h.b16 %v562
        %v1924 = vunpack.c.l.b16 %v563
        %v1925 = vunpack.c.h.b16 %v563
        %v1926 = vunpack.c.l.b16 %v564
        %v1927 = vunpack.c.h.b16 %v564
        %v1928 = vunpack.c.l.b16 %v565
        %v1929 = vunpack.c.h.b16 %v565
        %v1930 = vunpack.c.l.b16 %v566
        %v1931 = vunpack.c.h.b16 %v566
        %v1932 = vunpack.c.l.b16 %v567
        %v1933 = vunpack.c.h.b16 %v567
        %v1934 = vunpack.c.l.b16 %v568
        %v1935 = vunpack.c.h.b16 %v568
        %v1936 = vunpack.c.l.b16 %v569
        %v1937 = vunpack.c.h.b16 %v569
        %v1938 = vunpack.c.l.b16 %v570
        %v1939 = vunpack.c.h.b16 %v570
        %v1940 = vunpack.c.l.b16 %v571
        %v1941 = vunpack.c.h.b16 %v571
        %v1942 = vunpack.c.l.b16 %v572
        %v1943 = vunpack.c.h.b16 %v572
        %v1944 = vunpack.c.l.b16 %v573
        %v1945 = vunpack.c.h.b16 %v573
        %v1946 = vunpack.c.l.b16 %v574
        %v1947 = vunpack.c.h.b16 %v574
        %v1948 = vunpack.c.l.b16 %v575
        %v1949 = vunpack.c.h.b16 %v575
        %v1950 = vunpack.c.l.b16 %v576
        %v1951 = vunpack.c.h.b16 %v576
        %v1952 = vunpack.c.l.b16 %v577
        %v1953 = vunpack.c.h.b16 %v577
        %v1954 = vunpack.c.l.b16 %v578
        %v1955 = vunpack.c.h.b16 %v578
        %v1956 = vunpack.c.l.b16 %v579
        %v1957 = vunpack.c.h.b16 %v579
        %v1958 = vunpack.c.l.b16 %v580
        %v1959 = vunpack.c.h.b16 %v580
        %v1960 = vunpack.c.l.b16 %v581
        %v1961 = vunpack.c.h.b16 %v581
        %v1962 = vunpack.c.l.b16 %v582
        %v1963 = vunpack.c.h.b16 %v582
        %v1964 = vunpack.c.l.b16 %v583
        %v1965 = vunpack.c.h.b16 %v583
        %v1966 = vunpack.c.l.b16 %v584
        %v1967 = vunpack.c.h.b16 %v584
        %v1968 = vunpack.c.l.b16 %v585
        %v1969 = vunpack.c.h.b16 %v585
        %v1970 = vunpack.c.l.b16 %v586
        %v1971 = vunpack.c.h.b16 %v586
        %v1972 = vunpack.c.l.b16 %v587
        %v1973 = vunpack.c.h.b16 %v587
        %v1974 = vunpack.c.l.b16 %v588
        %v1975 = vunpack.c.h.b16 %v588
        %v1976 = vunpack.c.l.b16 %v589
        %v1977 = vunpack.c.h.b16 %v589
        %v1978 = vunpack.c.l.b16 %v590
        %v1979 = vunpack.c.h.b16 %v590
        %v1980 = vunpack.c.l.b16 %v591
        %v1981 = vunpack.c.h.b16 %v591
        %v1982 = vunpack.c.l.b16 %v592
        %v1983 = vunpack.c.h.b16 %v592
        %v1984 = vunpack.c.l.b16 %v593
        %v1985 = vunpack.c.h.b16 %v593
        %v1986 = vunpack.c.l.b16 %v594
        %v1987 = vunpack.c.h.b16 %v594
        %v1988 = vunpack.c.l.b16 %v595
        %v1989 = vunpack.c.h.b16 %v595
        %v1990 = vunpack.c.l.b16 %v596
        %v1991 = vunpack.c.h.b16 %v596
        %v1992 = vunpack.c.l.b16 %v597
        %v1993 = vunpack.c.h.b16 %v597
        %v1994 = vunpack.c.l.b16 %v598
        %v1995 = vunpack.c.h.b16 %v598
        %v1996 = vunpack.c.l.b16 %v599
        %v1997 = vunpack.c.h.b16 %v599
        %v1998 = vunpack.c.l.b16 %v600
        %v1999 = vunpack.c.h.b16 %v600
        %v2000 = vunpack.c.l.b16 %v601
        %v2001 = vunpack.c.h.b16 %v601
        %v2002 = vunpack.c.l.b16 %v602
        %v2003 = vunpack.c.h.b16 %v602
        %v2004 = vunpack.c.l.b16 %v603
        %v2005 = vunpack.c.h.b16 %v603
        %v2006 = vunpack.c.l.b16 %v604
        %v2007 = vunpack.c.h.b16 %v604
        %v2008 = vunpack.c.l.b16 %v605
        %v2009 = vunpack.c.h.b16 %v605
        %v2010 = vunpack.c.l.b16 %v606
        %v2011 = vunpack.c.h.b16 %v606
        %v2012 = vunpack.c.l.b16 %v607
        %v2013 = vunpack.c.h.b16 %v607
        %v2014 = vunpack.c.l.b16 %v608
        %v2015 = vunpack.c.h.b16 %v608
        %v2016 = vunpack.c.l.b16 %v609
        %v2017 = vunpack.c.h.b16 %v609
        %v2018 = vunpack.c.l.b16 %v610
        %v2019 = vunpack.c.h.b16 %v610
        %v2020 = vunpack.c.l.b16 %v611
        %v2021 = vunpack.c.h.b16 %v611
        %v2022 = vunpack.c.l.b16 %v612
        %v2023 = vunpack.c.h.b16 %v612
        %v2024 = vunpack.c.l.b16 %v613
        %v2025 = vunpack.c.h.b16 %v613
        %v2026 = vunpack.c.l.b16 %v614
        %v2027 = vunpack.c.h.b16 %v614
        %v2028 = vunpack.c.l.b16 %v615
        %v2029 = vunpack.c.h.b16 %v615
        %v2030 = vunpack.c.l.b16 %v616
        %v2031 = vunpack.c.h.b16 %v616
        %v2032 = vunpack.c.l.b16 %v617
        %v2033 = vunpack.c.h.b16 %v617
        %v2034 = vunpack.c.l.b16 %v618
        %v2035 = vunpack.c.h.b16 %v618
        %v2036 = vunpack.c.l.b16 %v619
        %v2037 = vunpack.c.h.b16 %v619
        %v2038 = vunpack.c.l.b16 %v620
        %v2039 = vunpack.c.h.b16 %v620
        %v2040 = vunpack.c.l.b16 %v621
        %v2041 = vunpack.c.h.b16 %v621
        %v2042 = vunpack.c.l.b16 %v622
        %v2043 = vunpack.c.h.b16 %v622
        %v2044 = vunpack.c.l.b16 %v623
        %v2045 = vunpack.c.h.b16 %v623
        %v2046 = vunpack.c.l.b16 %v624
        %v2047 = vunpack.c.h.b16 %v624
        %v2048 = vunpack.c.l.b16 %v625
        %v2049 = vunpack.c.h.b16 %v625
        %v2050 = vunpack.c.l.b16 %v626
        %v2051 = vunpack.c.h.b16 %v626
        %v2052 = vunpack.c.l.b16 %v627
        %v2053 = vunpack.c.h.b16 %v627
        %v2054 = vunpack.c.l.b16 %v628
        %v2055 = vunpack.c.h.b16 %v628
        %v2056 = vunpack.c.l.b16 %v629
        %v2057 = vunpack.c.h.b16 %v629
        %v2058 = vunpack.c.l.b16 %v630
        %v2059 = vunpack.c.h.b16 %v630
        %v2060 = vunpack.c.l.b16 %v631
        %v2061 = vunpack.c.h.b16 %v631
        %v2062 = vunpack.c.l.b16 %v632
        %v2063 = vunpack.c.h.b16 %v632
        %v2064 = vunpack.c.l.b16 %v633
        %v2065 = vunpack.c.h.b16 %v633
        %v2066 = vunpack.c.l.b16 %v634
        %v2067 = vunpack.c.h.b16 %v634
        %v2068 = vunpack.c.l.b16 %v635
        %v2069 = vunpack.c.h.b16 %v635
        %v2070 = vunpack.c.l.b16 %v636
        %v2071 = vunpack.c.h.b16 %v636
        %v2072 = vunpack.c.l.b16 %v637
        %v2073 = vunpack.c.h.b16 %v637
        %v2074 = vunpack.c.l.b16 %v638
        %v2075 = vunpack.c.h.b16 %v638
        %v2076 = vunpack.c.l.b16 %v639
        %v2077 = vunpack.c.h.b16 %v639
        %v2078 = vunpack.c.l.b16 %v640
        %v2079 = vunpack.c.h.b16 %v640
        %v2080 = vunpack.c.l.b16 %v641
        %v2081 = vunpack.c.h.b16 %v641
        %v2082 = vunpack.c.l.b16 %v642
        %v2083 = vunpack.c.h.b16 %v642
        %v2084 = vunpack.c.l.b16 %v643
        %v2085 = vunpack.c.h.b16 %v643
        %v2086 = vunpack.c.l.b16 %v644
        %v2087 = vunpack.c.h.b16 %v644
        %v2088 = vunpack.c.l.b16 %v645
        %v2089 = vunpack.c.h.b16 %v645
        %v2090 = vunpack.c.l.b16 %v646
        %v2091 = vunpack.c.h.b16 %v646
        %v2092 = vunpack.c.l.b16 %v647
        %v2093 = vunpack.c.h.b16 %v647
        %v2094 = vunpack.c.l.b16 %v648
        %v2095 = vunpack.c.h.b16 %v648
        %v2096 = vunpack.c.l.b16 %v649
        %v2097 = vunpack.c.h.b16 %v649
        %v2098 = vunpack.c.l.b16 %v650
        %v2099 = vunpack.c.h.b16 %v650
        %v2100 = vunpack.c.l.b16 %v651
        %v2101 = vunpack.c.h.b16 %v651
        %v2102 = vunpack.c.l.b16 %v652
        %v2103 = vunpack.c.h.b16 %v652
        %v2104 = vunpack.c.l.b16 %v653
        %v2105 = vunpack.c.h.b16 %v653
        %v2106 = vunpack.c.l.b16 %v654
        %v2107 = vunpack.c.h.b16 %v654
        %v2108 = vunpack.c.l.b16 %v655
        %v2109 = vunpack.c.h.b16 %v655
        %v2110 = vunpack.c.l.b16 %v656
        %v2111 = vunpack.c.h.b16 %v656
        %v2112 = vunpack.c.l.b16 %v657
        %v2113 = vunpack.c.h.b16 %v657
        %v2114 = vunpack.c.l.b16 %v658
        %v2115 = vunpack.c.h.b16 %v658
        %v2116 = vunpack.c.l.b16 %v659
        %v2117 = vunpack.c.h.b16 %v659
        %v2118 = vunpack.c.l.b16 %v660
        %v2119 = vunpack.c.h.b16 %v660
        %v2120 = vunpack.c.l.b16 %v661
        %v2121 = vunpack.c.h.b16 %v661
        %v2122 = vunpack.c.l.b16 %v662
        %v2123 = vunpack.c.h.b16 %v662
        %v2124 = vunpack.c.l.b16 %v663
        %v2125 = vunpack.c.h.b16 %v663
        %v2126 = vunpack.c.l.b16 %v664
        %v2127 = vunpack.c.h.b16 %v664
        %v2128 = vunpack.c.l.b16 %v665
        %v2129 = vunpack.c.h.b16 %v665
        %v2130 = vunpack.c.l.b16 %v666
        %v2131 = vunpack.c.h.b16 %v666
        %v2132 = vunpack.c.l.b16 %v667
        %v2133 = vunpack.c.h.b16 %v667
        %v2134 = vunpack.c.l.b16 %v668
        %v2135 = vunpack.c.h.b16 %v668
        %v2136 = vunpack.c.l.b16 %v669
        %v2137 = vunpack.c.h.b16 %v669
        %v2138 = vunpack.c.l.b16 %v670
        %v2139 = vunpack.c.h.b16 %v670
        %v2140 = vunpack.c.l.b16 %v671
        %v2141 = vunpack.c.h.b16 %v671
        %v2142 = vunpack.c.l.b16 %v672
        %v2143 = vunpack.c.h.b16 %v672
        %v2144 = vunpack.c.l.b16 %v673
        %v2145 = vunpack.c.h.b16 %v673
        %v2146 = vunpack.c.l.b16 %v674
        %v2147 = vunpack.c.h.b16 %v674
        %v2148 = vunpack.c.l.b16 %v675
        %v2149 = vunpack.c.h.b16 %v675
        %v2150 = vunpack.c.l.b16 %v676
        %v2151 = vunpack.c.h.b16 %v676
        %v2152 = vunpack.c.l.b16 %v677
        %v2153 = vunpack.c.h.b16 %v677
        %v2154 = vunpack.c.l.b16 %v678
        %v2155 = vunpack.c.h.b16 %v678
        %v2156 = vunpack.c.l.b16 %v679
        %v2157 = vunpack.c.h.b16 %v679
        %v2158 = vunpack.c.l.b16 %v680
        %v2159 = vunpack.c.h.b16 %v680
        %v2160 = vunpack.c.l.b16 %v681
        %v2161 = vunpack.c.h.b16 %v681
        %v2162 = vunpack.c.l.b16 %v682
        %v2163 = vunpack.c.h.b16 %v682
        %v2164 = vunpack.c.l.b16 %v683
        %v2165 = vunpack.c.h.b16 %v683
        %v2166 = vunpack.c.l.b16 %v684
        %v2167 = vunpack.c.h.b16 %v684
        %v2168 = vunpack.c.l.b16 %v685
        %v2169 = vunpack.c.h.b16 %v685
        %v2170 = vunpack.c.l.b16 %v686
        %v2171 = vunpack.c.h.b16 %v686
        %v2172 = vunpack.c.l.b16 %v687
        %v2173 = vunpack.c.h.b16 %v687
        %v2174 = vunpack.c.l.b16 %v688
        %v2175 = vunpack.c.h.b16 %v688
        %v2176 = vunpack.c.l.b16 %v689
        %v2177 = vunpack.c.h.b16 %v689
        %v2178 = vunpack.c.l.b16 %v690
        %v2179 = vunpack.c.h.b16 %v690
        %v2180 = vunpack.c.l.b16 %v691
        %v2181 = vunpack.c.h.b16 %v691
        %v2182 = vunpack.c.l.b16 %v692
        %v2183 = vunpack.c.h.b16 %v692
        %v2184 = vunpack.c.l.b16 %v693
        %v2185 = vunpack.c.h.b16 %v693
        %v2186 = vunpack.c.l.b16 %v694
        %v2187 = vunpack.c.h.b16 %v694
        %v2188 = vunpack.c.l.b16 %v695
        %v2189 = vunpack.c.h.b16 %v695
        %v2190 = vunpack.c.l.b16 %v696
        %v2191 = vunpack.c.h.b16 %v696
        %v2192 = vunpack.c.l.b16 %v697
        %v2193 = vunpack.c.h.b16 %v697
        %v2194 = vunpack.c.l.b16 %v698
        %v2195 = vunpack.c.h.b16 %v698
        %v2196 = vunpack.c.l.b16 %v699
        %v2197 = vunpack.c.h.b16 %v699
        %v2198 = vunpack.c.l.b16 %v700
        %v2199 = vunpack.c.h.b16 %v700
        %v2200 = vunpack.c.l.b16 %v701
        %v2201 = vunpack.c.h.b16 %v701
        %v2202 = vunpack.c.l.b16 %v702
        %v2203 = vunpack.c.h.b16 %v702
        %v2204 = vunpack.c.l.b16 %v703
        %v2205 = vunpack.c.h.b16 %v703
        %v2206 = vunpack.c.l.b16 %v704
        %v2207 = vunpack.c.h.b16 %v704
        %v2208 = vunpack.c.l.b16 %v705
        %v2209 = vunpack.c.h.b16 %v705
        %v2210 = vunpack.c.l.b16 %v706
        %v2211 = vunpack.c.h.b16 %v706
        %v2212 = vunpack.c.l.b16 %v707
        %v2213 = vunpack.c.h.b16 %v707
        %v2214 = vunpack.c.l.b16 %v708
        %v2215 = vunpack.c.h.b16 %v708
        %v2216 = vunpack.c.l.b16 %v709
        %v2217 = vunpack.c.h.b16 %v709
        %v2218 = vunpack.c.l.b16 %v710
        %v2219 = vunpack.c.h.b16 %v710
        %v2220 = vunpack.c.l.b16 %v711
        %v2221 = vunpack.c.h.b16 %v711
        %v2222 = vunpack.c.l.b16 %v712
        %v2223 = vunpack.c.h.b16 %v712
        %v2224 = vunpack.c.l.b16 %v713
        %v2225 = vunpack.c.h.b16 %v713
        %v2226 = vunpack.c.l.b16 %v714
        %v2227 = vunpack.c.h.b16 %v714
        %v2228 = vunpack.c.l.b16 %v715
        %v2229 = vunpack.c.h.b16 %v715
        %v2230 = vunpack.c.l.b16 %v716
        %v2231 = vunpack.c.h.b16 %v716
        %v2232 = vunpack.c.l.b16 %v717
        %v2233 = vunpack.c.h.b16 %v717
        %v2234 = vunpack.c.l.b16 %v718
        %v2235 = vunpack.c.h.b16 %v718
        %v2236 = vunpack.c.l.b16 %v719
        %v2237 = vunpack.c.h.b16 %v719
        %v2238 = vunpack.c.l.b16 %v720
        %v2239 = vunpack.c.h.b16 %v720
        %v2240 = vunpack.c.l.b16 %v721
        %v2241 = vunpack.c.h.b16 %v721
        %v2242 = vunpack.c.l.b16 %v722
        %v2243 = vunpack.c.h.b16 %v722
        %v2244 = vunpack.c.l.b16 %v723
        %v2245 = vunpack.c.h.b16 %v723
        %v2246 = vunpack.c.l.b16 %v724
        %v2247 = vunpack.c.h.b16 %v724
        %v2248 = vunpack.c.l.b16 %v725
        %v2249 = vunpack.c.h.b16 %v725
        %v2250 = vunpack.c.l.b16 %v726
        %v2251 = vunpack.c.h.b16 %v726
        %v2252 = vunpack.c.l.b16 %v727
        %v2253 = vunpack.c.h.b16 %v727
        %v2254 = vunpack.c.l.b16 %v728
        %v2255 = vunpack.c.h.b16 %v728
        %v2256 = vunpack.c.l.b16 %v729
        %v2257 = vunpack.c.h.b16 %v729
        %v2258 = vunpack.c.l.b16 %v730
        %v2259 = vunpack.c.h.b16 %v730
        %v2260 = vunpack.c.l.b16 %v731
        %v2261 = vunpack.c.h.b16 %v731
        %v2262 = vunpack.c.l.b16 %v732
        %v2263 = vunpack.c.h.b16 %v732
        %v2264 = vunpack.c.l.b16 %v733
        %v2265 = vunpack.c.h.b16 %v733
        %v2266 = vunpack.c.l.b16 %v734
        %v2267 = vunpack.c.h.b16 %v734
        %v2268 = vunpack.c.l.b16 %v735
        %v2269 = vunpack.c.h.b16 %v735
        %v2270 = vunpack.c.l.b16 %v736
        %v2271 = vunpack.c.h.b16 %v736
        %v2272 = vunpack.c.l.b16 %v737
        %v2273 = vunpack.c.h.b16 %v737
        %v2274 = vunpack.c.l.b16 %v738
        %v2275 = vunpack.c.h.b16 %v738
        %v2276 = vunpack.c.l.b16 %v739
        %v2277 = vunpack.c.h.b16 %v739
        %v2278 = vunpack.c.l.b16 %v740
        %v2279 = vunpack.c.h.b16 %v740
        %v2280 = vunpack.c.l.b16 %v741
        %v2281 = vunpack.c.h.b16 %v741
        %v2282 = vunpack.c.l.b16 %v742
        %v2283 = vunpack.c.h.b16 %v742
        %v2284 = vunpack.c.l.b16 %v743
        %v2285 = vunpack.c.h.b16 %v743
        %v2286 = vunpack.c.l.b16 %v744
        %v2287 = vunpack.c.h.b16 %v744
        %v2288 = vunpack.c.l.b16 %v745
        %v2289 = vunpack.c.h.b16 %v745
        %v2290 = vunpack.c.l.b16 %v746
        %v2291 = vunpack.c.h.b16 %v746
        %v2292 = vunpack.c.l.b16 %v747
        %v2293 = vunpack.c.h.b16 %v747
        %v2294 = vunpack.c.l.b16 %v748
        %v2295 = vunpack.c.h.b16 %v748
        %v2296 = vunpack.c.l.b16 %v749
        %v2297 = vunpack.c.h.b16 %v749
        %v2298 = vunpack.c.l.b16 %v750
        %v2299 = vunpack.c.h.b16 %v750
        %v2300 = vunpack.c.l.b16 %v751
        %v2301 = vunpack.c.h.b16 %v751
        %v2302 = vunpack.c.l.b16 %v752
        %v2303 = vunpack.c.h.b16 %v752
        %v2304 = vunpack.c.l.b16 %v753
        %v2305 = vunpack.c.h.b16 %v753
        %v2306 = vunpack.c.l.b16 %v754
        %v2307 = vunpack.c.h.b16 %v754
        %v2308 = vunpack.c.l.b16 %v755
        %v2309 = vunpack.c.h.b16 %v755
        %v2310 = vunpack.c.l.b16 %v756
        %v2311 = vunpack.c.h.b16 %v756
        %v2312 = vunpack.c.l.b16 %v757
        %v2313 = vunpack.c.h.b16 %v757
        %v2314 = vunpack.c.l.b16 %v758
        %v2315 = vunpack.c.h.b16 %v758
        %v2316 = vunpack.c.l.b16 %v759
        %v2317 = vunpack.c.h.b16 %v759
        %v2318 = vunpack.c.l.b16 %v760
        %v2319 = vunpack.c.h.b16 %v760
        %v2320 = vunpack.c.l.b16 %v761
        %v2321 = vunpack.c.h.b16 %v761
        %v2322 = vunpack.c.l.b16 %v762
        %v2323 = vunpack.c.h.b16 %v762
        %v2324 = vunpack.c.l.b16 %v763
        %v2325 = vunpack.c.h.b16 %v763
        %v2326 = vunpack.c.l.b16 %v764
        %v2327 = vunpack.c.h.b16 %v764
        %v2328 = vunpack.c.l.b16 %v765
        %v2329 = vunpack.c.h.b16 %v765
        %v2330 = vunpack.c.l.b16 %v766
        %v2331 = vunpack.c.h.b16 %v766
        %v2332 = vunpack.c.l.b16 %v767
        %v2333 = vunpack.c.h.b16 %v767
        %v2334 = vunpack.c.l.b16 %v768
        %v2335 = vunpack.c.h.b16 %v768
        %v2336 = vunpack.c.l.b16 %v769
        %v2337 = vunpack.c.h.b16 %v769
        %v2338 = vunpack.c.l.b16 %v770
        %v2339 = vunpack.c.h.b16 %v770
        %v2340 = vunpack.c.l.b16 %v771
        %v2341 = vunpack.c.h.b16 %v771
        %v2342 = vunpack.c.l.b16 %v772
        %v2343 = vunpack.c.h.b16 %v772
        %v2344 = vunpack.c.l.b16 %v773
        %v2345 = vunpack.c.h.b16 %v773
        %v2346 = vunpack.c.l.b16 %v774
        %v2347 = vunpack.c.h.b16 %v774
        %v2348 = vunpack.c.l.b16 %v775
        %v2349 = vunpack.c.h.b16 %v775
        %v2350 = vunpack.c.l.b16 %v776
        %v2351 = vunpack.c.h.b16 %v776
        %v2352 = vunpack.c.l.b16 %v777
        %v2353 = vunpack.c.h.b16 %v777
        %v2354 = vunpack.c.l.b16 %v778
        %v2355 = vunpack.c.h.b16 %v778
        %v2356 = vunpack.c.l.b16 %v779
        %v2357 = vunpack.c.h.b16 %v779
        %v2358 = vunpack.c.l.b16 %v780
        %v2359 = vunpack.c.h.b16 %v780
        %v2360 = vunpack.c.l.b16 %v781
        %v2361 = vunpack.c.h.b16 %v781
        %v2362 = vunpack.c.l.b16 %v782
        %v2363 = vunpack.c.h.b16 %v782
        %v2364 = vunpack.c.l.b16 %v783
        %v2365 = vunpack.c.h.b16 %v783
        %v2366 = vunpack.c.l.b16 %v784
        %v2367 = vunpack.c.h.b16 %v784
        %v2368 = vunpack.c.l.b16 %v785
        %v2369 = vunpack.c.h.b16 %v785
        %v2370 = vunpack.c.l.b16 %v786
        %v2371 = vunpack.c.h.b16 %v786
        %v2372 = vunpack.c.l.b16 %v787
        %v2373 = vunpack.c.h.b16 %v787
        %v2374 = vunpack.c.l.b16 %v788
        %v2375 = vunpack.c.h.b16 %v788
        %v2376 = vunpack.c.l.b16 %v789
        %v2377 = vunpack.c.h.b16 %v789
        %v2378 = vunpack.c.l.b16 %v790
        %v2379 = vunpack.c.h.b16 %v790
        %v2380 = vunpack.c.l.b16 %v791
        %v2381 = vunpack.c.h.b16 %v791
        %v2382 = vunpack.c.l.b16 %v792
        %v2383 = vunpack.c.h.b16 %v792
        %v2384 = vunpack.c.l.b16 %v793
        %v2385 = vunpack.c.h.b16 %v793
        %v2386 = vunpack.c.l.b16 %v794
        %v2387 = vunpack.c.h.b16 %v794
        %v2388 = vunpack.c.l.b16 %v795
        %v2389 = vunpack.c.h.b16 %v795
        %v2390 = vunpack.c.l.b16 %v796
        %v2391 = vunpack.c.h.b16 %v796
        %v2392 = vunpack.c.l.b16 %v797
        %v2393 = vunpack.c.h.b16 %v797
        %v2394 = vunpack.c.l.b16 %v798
        %v2395 = vunpack.c.h.b16 %v798
        %v2396 = vunpack.c.l.b16 %v799
        %v2397 = vunpack.c.h.b16 %v799
        %v2398 = vunpack.c.l.b16 %v800
        %v2399 = vunpack.c.h.b16 %v800
        %v2400 = vunpack.c.l.b16 %v801
        %v2401 = vunpack.c.h.b16 %v801
        %v2402 = vunpack.c.l.b16 %v802
        %v2403 = vunpack.c.h.b16 %v802
        %v2404 = vunpack.c.l.b16 %v803
        %v2405 = vunpack.c.h.b16 %v803
        %v2406 = vunpack.c.l.b16 %v804
        %v2407 = vunpack.c.h.b16 %v804
        %v2408 = vunpack.c.l.b16 %v805
        %v2409 = vunpack.c.h.b16 %v805
        %v2410 = vunpack.c.l.b16 %v806
        %v2411 = vunpack.c.h.b16 %v806
        %v2412 = vunpack.c.l.b16 %v807
        %v2413 = vunpack.c.h.b16 %v807
        %v2414 = vunpack.c.l.b16 %v808
        %v2415 = vunpack.c.h.b16 %v808
        %v2416 = vunpack.c.l.b16 %v809
        %v2417 = vunpack.c.h.b16 %v809
        %v2418 = vunpack.c.l.b16 %v810
        %v2419 = vunpack.c.h.b16 %v810
        %v2420 = vunpack.c.l.b16 %v811
        %v2421 = vunpack.c.h.b16 %v811
        %v2422 = vunpack.c.l.b16 %v812
        %v2423 = vunpack.c.h.b16 %v812
        %v2424 = vunpack.c.l.b16 %v813
        %v2425 = vunpack.c.h.b16 %v813
        %v2426 = vunpack.c.l.b16 %v814
        %v2427 = vunpack.c.h.b16 %v814
        %v2428 = vunpack.c.l.b16 %v815
        %v2429 = vunpack.c.h.b16 %v815
        %v2430 = vunpack.c.l.b16 %v816
        %v2431 = vunpack.c.h.b16 %v816
        %v2432 = vunpack.c.l.b16 %v817
        %v2433 = vunpack.c.h.b16 %v817
        %v2434 = vunpack.c.l.b16 %v818
        %v2435 = vunpack.c.h.b16 %v818
        %v2436 = vunpack.c.l.b16 %v819
        %v2437 = vunpack.c.h.b16 %v819
        %v2438 = vunpack.c.l.b16 %v820
        %v2439 = vunpack.c.h.b16 %v820
        %v2440 = vunpack.c.l.b16 %v821
        %v2441 = vunpack.c.h.b16 %v821
        %v2442 = vunpack.c.l.b16 %v822
        %v2443 = vunpack.c.h.b16 %v822
        %v2444 = vunpack.c.l.b16 %v823
        %v2445 = vunpack.c.h.b16 %v823
        %v2446 = vunpack.c.l.b16 %v824
        %v2447 = vunpack.c.h.b16 %v824
        %v2448 = vunpack.c.l.b16 %v825
        %v2449 = vunpack.c.h.b16 %v825
        %v2450 = vunpack.c.l.b16 %v826
        %v2451 = vunpack.c.h.b16 %v826
        %v2452 = vunpack.c.l.b16 %v827
        %v2453 = vunpack.c.h.b16 %v827
        %v2454 = vunpack.c.l.b16 %v828
        %v2455 = vunpack.c.h.b16 %v828
        %v2456 = vunpack.c.l.b16 %v829
        %v2457 = vunpack.c.h.b16 %v829
        %v2458 = vunpack.c.l.b16 %v830
        %v2459 = vunpack.c.h.b16 %v830
        %v2460 = vunpack.c.l.b16 %v831
        %v2461 = vunpack.c.h.b16 %v831
        %v2462 = vunpack.c.l.b16 %v832
        %v2463 = vunpack.c.h.b16 %v832
        %v2464 = vunpack.c.l.b16 %v833
        %v2465 = vunpack.c.h.b16 %v833
        %v2466 = vunpack.c.l.b16 %v834
        %v2467 = vunpack.c.h.b16 %v834
        %v2468 = vunpack.c.l.b16 %v835
        %v2469 = vunpack.c.h.b16 %v835
        %v2470 = vunpack.c.l.b16 %v836
        %v2471 = vunpack.c.h.b16 %v836
        %v2472 = vunpack.c.l.b16 %v837
        %v2473 = vunpack.c.h.b16 %v837
        %v2474 = vunpack.c.l.b16 %v838
        %v2475 = vunpack.c.h.b16 %v838
        %v2476 = vunpack.c.l.b16 %v839
        %v2477 = vunpack.c.h.b16 %v839
        %v2478 = vunpack.c.l.b16 %v840
        %v2479 = vunpack.c.h.b16 %v840
        %v2480 = vunpack.c.l.b16 %v841
        %v2481 = vunpack.c.h.b16 %v841
        %v2482 = vunpack.c.l.b16 %v842
        %v2483 = vunpack.c.h.b16 %v842
        %v2484 = vunpack.c.l.b16 %v843
        %v2485 = vunpack.c.h.b16 %v843
        %v2486 = vunpack.c.l.b16 %v844
        %v2487 = vunpack.c.h.b16 %v844
        %v2488 = vunpack.c.l.b16 %v845
        %v2489 = vunpack.c.h.b16 %v845
        %v2490 = vunpack.c.l.b16 %v846
        %v2491 = vunpack.c.h.b16 %v846
        %v2492 = vunpack.c.l.b16 %v847
        %v2493 = vunpack.c.h.b16 %v847
        %v2494 = vunpack.c.l.b16 %v848
        %v2495 = vunpack.c.h.b16 %v848
        %v2496 = vunpack.c.l.b16 %v849
        %v2497 = vunpack.c.h.b16 %v849
        %v2498 = vunpack.c.l.b16 %v850
        %v2499 = vunpack.c.h.b16 %v850
        %v2500 = vunpack.c.l.b16 %v851
        %v2501 = vunpack.c.h.b16 %v851
        %v2502 = vunpack.c.l.b16 %v852
        %v2503 = vunpack.c.h.b16 %v852
        %v2504 = vunpack.c.l.b16 %v853
        %v2505 = vunpack.c.h.b16 %v853
        %v2506 = vunpack.c.l.b16 %v854
        %v2507 = vunpack.c.h.b16 %v854
        %v2508 = vunpack.c.l.b16 %v855
        %v2509 = vunpack.c.h.b16 %v855
        %v2510 = vunpack.c.l.b16 %v856
        %v2511 = vunpack.c.h.b16 %v856
        %v2512 = vunpack.c.l.b16 %v857
        %v2513 = vunpack.c.h.b16 %v857
        %v2514 = vunpack.c.l.b16 %v858
        %v2515 = vunpack.c.h.b16 %v858
        %v2516 = vunpack.c.l.b16 %v859
        %v2517 = vunpack.c.h.b16 %v859
        %v2518 = vunpack.c.l.b16 %v860
        %v2519 = vunpack.c.h.b16 %v860
        %v2520 = vunpack.c.l.b16 %v861
        %v2521 = vunpack.c.h.b16 %v861
        %v2522 = vpack.c.b16 %v1500, %v1498
        %v2523 = vpack.c.b16 %v1501, %v1499
        %v2524 = vpack.c.b16 %v1504, %v1502
        %v2525 = vpack.c.b16 %v1505, %v1503
        %v2526 = vpack.c.b16 %v1508, %v1506
        %v2527 = vpack.c.b16 %v1509, %v1507
        %v2528 = vpack.c.b16 %v1512, %v1510
        %v2529 = vpack.c.b16 %v1513, %v1511
        %v2530 = vpack.c.b16 %v1516, %v1514
        %v2531 = vpack.c.b16 %v1517, %v1515
        %v2532 = vpack.c.b16 %v1520, %v1518
        %v2533 = vpack.c.b16 %v1521, %v1519
        %v2534 = vpack.c.b16 %v1524, %v1522
        %v2535 = vpack.c.b16 %v1525, %v1523
        %v2536 = vpack.c.b16 %v1528, %v1526
        %v2537 = vpack.c.b16 %v1529, %v1527
        %v2538 = vpack.c.b16 %v1532, %v1530
        %v2539 = vpack.c.b16 %v1533, %v1531
        %v2540 = vpack.c.b16 %v1536, %v1534
        %v2541 = vpack.c.b16 %v1537, %v1535
        %v2542 = vpack.c.b16 %v1540, %v1538
        %v2543 = vpack.c.b16 %v1541, %v1539
        %v2544 = vpack.c.b16 %v1544, %v1542
        %v2545 = vpack.c.b16 %v1545, %v1543
        %v2546 = vpack.c.b16 %v1548, %v1546
        %v2547 = vpack.c.b16 %v1549, %v1547
        %v2548 = vpack.c.b16 %v1552, %v1550
        %v2549 = vpack.c.b16 %v1553, %v1551
        %v2550 = vpack.c.b16 %v1556, %v1554
        %v2551 = vpack.c.b16 %v1557, %v1555
        %v2552 = vpack.c.b16 %v1560, %v1558
        %v2553 = vpack.c.b16 %v1561, %v1559
        %v2554 = vpack.c.b16 %v1564, %v1562
        %v2555 = vpack.c.b16 %v1565, %v1563
        %v2556 = vpack.c.b16 %v1568, %v1566
        %v2557 = vpack.c.b16 %v1569, %v1567
        %v2558 = vpack.c.b16 %v1572, %v1570
        %v2559 = vpack.c.b16 %v1573, %v1571
        %v2560 = vpack.c.b16 %v1576, %v1574
        %v2561 = vpack.c.b16 %v1577, %v1575
        %v2562 = vpack.c.b16 %v1580, %v1578
        %v2563 = vpack.c.b16 %v1581, %v1579
        %v2564 = vpack.c.b16 %v1584, %v1582
        %v2565 = vpack.c.b16 %v1585, %v1583
        %v2566 = vpack.c.b16 %v1588, %v1586
        %v2567 = vpack.c.b16 %v1589, %v1587
        %v2568 = vpack.c.b16 %v1592, %v1590
        %v2569 = vpack.c.b16 %v1593, %v1591
        %v2570 = vpack.c.b16 %v1596, %v1594
        %v2571 = vpack.c.b16 %v1597, %v1595
        %v2572 = vpack.c.b16 %v1600, %v1598
        %v2573 = vpack.c.b16 %v1601, %v1599
        %v2574 = vpack.c.b16 %v1604, %v1602
        %v2575 = vpack.c.b16 %v1605, %v1603
        %v2576 = vpack.c.b16 %v1608, %v1606
        %v2577 = vpack.c.b16 %v1609, %v1607
        %v2578 = vpack.c.b16 %v1612, %v1610
        %v2579 = vpack.c.b16 %v1613, %v1611
        %v2580 = vpack.c.b16 %v1616, %v1614
        %v2581 = vpack.c.b16 %v1617, %v1615
        %v2582 = vpack.c.b16 %v1620, %v1618
        %v2583 = vpack.c.b16 %v1621, %v1619
        %v2584 = vpack.c.b16 %v1624, %v1622
        %v2585 = vpack.c.b16 %v1625, %v1623
        %v2586 = vpack.c.b16 %v1628, %v1626
        %v2587 = vpack.c.b16 %v1629, %v1627
        %v2588 = vpack.c.b16 %v1632, %v1630
        %v2589 = vpack.c.b16 %v1633, %v1631
        %v2590 = vpack.c.b16 %v1636, %v1634
        %v2591 = vpack.c.b16 %v1637, %v1635
        %v2592 = vpack.c.b16 %v1640, %v1638
        %v2593 = vpack.c.b16 %v1641, %v1639
        %v2594 = vpack.c.b16 %v1644, %v1642
        %v2595 = vpack.c.b16 %v1645, %v1643
        %v2596 = vpack.c.b16 %v1648, %v1646
        %v2597 = vpack.c.b16 %v1649, %v1647
        %v2598 = vpack.c.b16 %v1652, %v1650
        %v2599 = vpack.c.b16 %v1653, %v1651
        %v2600 = vpack.c.b16 %v1656, %v1654
        %v2601 = vpack.c.b16 %v1657, %v1655
        %v2602 = vpack.c.b16 %v1660, %v1658
        %v2603 = vpack.c.b16 %v1661, %v1659
        %v2604 = vpack.c.b16 %v1664, %v1662
        %v2605 = vpack.c.b16 %v1665, %v1663
        %v2606 = vpack.c.b16 %v1668, %v1666
        %v2607 = vpack.c.b16 %v1669, %v1667
        %v2608 = vpack.c.b16 %v1672, %v1670
        %v2609 = vpack.c.b16 %v1673, %v1671
        %v2610 = vpack.c.b16 %v1676, %v1674
        %v2611 = vpack.c.b16 %v1677, %v1675
        %v2612 = vpack.c.b16 %v1680, %v1678
        %v2613 = vpack.c.b16 %v1681, %v1679
        %v2614 = vpack.c.b16 %v1684, %v1682
        %v2615 = vpack.c.b16 %v1685, %v1683
        %v2616 = vpack.c.b16 %v1688, %v1686
        %v2617 = vpack.c.b16 %v1689, %v1687
        %v2618 = vpack.c.b16 %v1692, %v1690
        %v2619 = vpack.c.b16 %v1693, %v1691
        %v2620 = vpack.c.b16 %v1696, %v1694
        %v2621 = vpack.c.b16 %v1697, %v1695
        %v2622 = vpack.c.b16 %v1700, %v1698
        %v2623 = vpack.c.b16 %v1701, %v1699
        %v2624 = vpack.c.b16 %v1704, %v1702
        %v2625 = vpack.c.b16 %v1705, %v1703
        %v2626 = vpack.c.b16 %v1708, %v1706
        %v2627 = vpack.c.b16 %v1709, %v1707
        %v2628 = vpack.c.b16 %v1712, %v1710
        %v2629 = vpack.c.b16 %v1713, %v1711
        %v2630 = vpack.c.b16 %v1716, %v1714
        %v2631 = vpack.c.b16 %v1717, %v1715
        %v2632 = vpack.c.b16 %v1720, %v1718
        %v2633 = vpack.c.b16 %v1721, %v1719
        %v2634 = vpack.c.b16 %v1724, %v1722
        %v2635 = vpack.c.b16 %v1725, %v1723
        %v2636 = vpack.c.b16 %v1728, %v1726
        %v2637 = vpack.c.b16 %v1729, %v1727
        %v2638 = vpack.c.b16 %v1732, %v1730
        %v2639 = vpack.c.b16 %v1733, %v1731
        %v2640 = vpack.c.b16 %v1736, %v1734
        %v2641 = vpack.c.b16 %v1737, %v1735
        %v2642 = vpack.c.b16 %v1740, %v1738
        %v2643 = vpack.c.b16 %v1741, %v1739
        %v2644 = vpack.c.b16 %v1744, %v1742
        %v2645 = vpack.c.b16 %v1745, %v1743
        %v2646 = vpack.c.b16 %v1748, %v1746
        %v2647 = vpack.c.b16 %v1749, %v1747
        %v2648 = vpack.c.b16 %v1752, %v1750
        %v2649 = vpack.c.b16 %v1753, %v1751
        %v2650 = vpack.c.b16 %v1756, %v1754
        %v2651 = vpack.c.b16 %v1757, %v1755
        %v2652 = vpack.c.b16 %v1760, %v1758
        %v2653 = vpack.c.b16 %v1761, %v1759
        %v2654 = vpack.c.b16 %v1764, %v1762
        %v2655 = vpack.c.b16 %v1765, %v1763
        %v2656 = vpack.c.b16 %v1768, %v1766
        %v2657 = vpack.c.b16 %v1769, %v1767
        %v2658 = vpack.c.b16 %v1772, %v1770
        %v2659 = vpack.c.b16 %v1773, %v1771
        %v2660 = vpack.c.b16 %v1776, %v1774
        %v2661 = vpack.c.b16 %v1777, %v1775
        %v2662 = vpack.c.b16 %v1780, %v1778
        %v2663 = vpack.c.b16 %v1781, %v1779
        %v2664 = vpack.c.b16 %v1784, %v1782
        %v2665 = vpack.c.b16 %v1785, %v1783
        %v2666 = vpack.c.b16 %v1788, %v1786
        %v2667 = vpack.c.b16 %v1789, %v1787
        %v2668 = vpack.c.b16 %v1792, %v1790
        %v2669 = vpack.c.b16 %v1793, %v1791
        %v2670 = vpack.c.b16 %v1796, %v1794
        %v2671 = vpack.c.b16 %v1797, %v1795
        %v2672 = vpack.c.b16 %v1800, %v1798
        %v2673 = vpack.c.b16 %v1801, %v1799
        %v2674 = vpack.c.b16 %v1804, %v1802
        %v2675 = vpack.c.b16 %v1805, %v1803
        %v2676 = vpack.c.b16 %v1808, %v1806
        %v2677 = vpack.c.b16 %v1809, %v1807
        %v2678 = vpack.c.b16 %v1812, %v1810
        %v2679 = vpack.c.b16 %v1813, %v1811
        %v2680 = vpack.c.b16 %v1816, %v1814
        %v2681 = vpack.c.b16 %v1817, %v1815
        %v2682 = vpack.c.b16 %v1820, %v1818
        %v2683 = vpack.c.b16 %v1821, %v1819
        %v2684 = vpack.c.b16 %v1824, %v1822
        %v2685 = vpack.c.b16 %v1825, %v1823
        %v2686 = vpack.c.b16 %v1828, %v1826
        %v2687 = vpack.c.b16 %v1829, %v1827
        %v2688 = vpack.c.b16 %v1832, %v1830
        %v2689 = vpack.c.b16 %v1833, %v1831
        %v2690 = vpack.c.b16 %v1836, %v1834
        %v2691 = vpack.c.b16 %v1837, %v1835
        %v2692 = vpack.c.b16 %v1840, %v1838
        %v2693 = vpack.c.b16 %v1841, %v1839
        %v2694 = vpack.c.b16 %v1844, %v1842
        %v2695 = vpack.c.b16 %v1845, %v1843
        %v2696 = vpack.c.b16 %v1848, %v1846
        %v2697 = vpack.c.b16 %v1849, %v1847
        %v2698 = vpack.c.b16 %v1852, %v1850
        %v2699 = vpack.c.b16 %v1853, %v1851
        %v2700 = vpack.c.b16 %v1856, %v1854
        %v2701 = vpack.c.b16 %v1857, %v1855
        %v2702 = vpack.c.b16 %v1860, %v1858
        %v2703 = vpack.c.b16 %v1861, %v1859
        %v2704 = vpack.c.b16 %v1864, %v1862
        %v2705 = vpack.c.b16 %v1865, %v1863
        %v2706 = vpack.c.b16 %v1868, %v1866
        %v2707 = vpack.c.b16 %v1869, %v1867
        %v2708 = vpack.c.b16 %v1872, %v1870
        %v2709 = vpack.c.b16 %v1873, %v1871
        %v2710 = vpack.c.b16 %v1876, %v1874
        %v2711 = vpack.c.b16 %v1877, %v1875
        %v2712 = vpack.c.b16 %v1880, %v1878
        %v2713 = vpack.c.b16 %v1881, %v1879
        %v2714 = vpack.c.b16 %v1884, %v1882
        %v2715 = vpack.c.b16 %v1885, %v1883
        %v2716 = vpack.c.b16 %v1888, %v1886
        %v2717 = vpack.c.b16 %v1889, %v1887
        %v2718 = vpack.c.b16 %v1892, %v1890
        %v2719 = vpack.c.b16 %v1893, %v1891
        %v2720 = vpack.c.b16 %v1896, %v1894
        %v2721 = vpack.c.b16 %v1897, %v1895
        %v2722 = vpack.c.b16 %v1900, %v1898
        %v2723 = vpack.c.b16 %v1901, %v1899
        %v2724 = vpack.c.b16 %v1904, %v1902
        %v2725 = vpack.c.b16 %v1905, %v1903
        %v2726 = vpack.c.b16 %v1908, %v1906
        %v2727 = vpack.c.b16 %v1909, %v1907
        %v2728 = vpack.c.b16 %v1912, %v1910
        %v2729 = vpack.c.b16 %v1913, %v1911
        %v2730 = vpack.c.b16 %v1916, %v1914
        %v2731 = vpack.c.b16 %v1917, %v1915
        %v2732 = vpack.c.b16 %v1920, %v1918
        %v2733 = vpack.c.b16 %v1921, %v1919
        %v2734 = vpack.c.b16 %v1924, %v1922
        %v2735 = vpack.c.b16 %v1925, %v1923
        %v2736 = vpack.c.b16 %v1928, %v1926
        %v2737 = vpack.c.b16 %v1929, %v1927
        %v2738 = vpack.c.b16 %v1932, %v1930
        %v2739 = vpack.c.b16 %v1933, %v1931
        %v2740 = vpack.c.b16 %v1936, %v1934
        %v2741 = vpack.c.b16 %v1937, %v1935
        %v2742 = vpack.c.b16 %v1940, %v1938
        %v2743 = vpack.c.b16 %v1941, %v1939
        %v2744 = vpack.c.b16 %v1944, %v1942
        %v2745 = vpack.c.b16 %v1945, %v1943
        %v2746 = vpack.c.b16 %v1948, %v1946
        %v2747 = vpack.c.b16 %v1949, %v1947
        %v2748 = vpack.c.b16 %v1952, %v1950
        %v2749 = vpack.c.b16 %v1953, %v1951
        %v2750 = vpack.c.b16 %v1956, %v1954
        %v2751 = vpack.c.b16 %v1957, %v1955
        %v2752 = vpack.c.b16 %v1960, %v1958
        %v2753 = vpack.c.b16 %v1961, %v1959
        %v2754 = vpack.c.b16 %v1964, %v1962
        %v2755 = vpack.c.b16 %v1965, %v1963
        %v2756 = vpack.c.b16 %v1968, %v1966
        %v2757 = vpack.c.b16 %v1969, %v1967
        %v2758 = vpack.c.b16 %v1972, %v1970
        %v2759 = vpack.c.b16 %v1973, %v1971
        %v2760 = vpack.c.b16 %v1976, %v1974
        %v2761 = vpack.c.b16 %v1977, %v1975
        %v2762 = vpack.c.b16 %v1980, %v1978
        %v2763 = vpack.c.b16 %v1981, %v1979
        %v2764 = vpack.c.b16 %v1984, %v1982
        %v2765 = vpack.c.b16 %v1985, %v1983
        %v2766 = vpack.c.b16 %v1988, %v1986
        %v2767 = vpack.c.b16 %v1989, %v1987
        %v2768 = vpack.c.b16 %v1992, %v1990
        %v2769 = vpack.c.b16 %v1993, %v1991
        %v2770 = vpack.c.b16 %v1996, %v1994
        %v2771 = vpack.c.b16 %v1997, %v1995
        %v2772 = vpack.c.b16 %v2000, %v1998
        %v2773 = vpack.c.b16 %v2001, %v1999
        %v2774 = vpack.c.b16 %v2004, %v2002
        %v2775 = vpack.c.b16 %v2005, %v2003
        %v2776 = vpack.c.b16 %v2008, %v2006
        %v2777 = vpack.c.b16 %v2009, %v2007
        %v2778 = vpack.c.b16 %v2012, %v2010
        %v2779 = vpack.c.b16 %v2013, %v2011
        %v2780 = vpack.c.b16 %v2016, %v2014
        %v2781 = vpack.c.b16 %v2017, %v2015
        %v2782 = vpack.c.b16 %v2020, %v2018
        %v2783 = vpack.c.b16 %v2021, %v2019
        %v2784 = vpack.c.b16 %v2024, %v2022
        %v2785 = vpack.c.b16 %v2025, %v2023
        %v2786 = vpack.c.b16 %v2028, %v2026
        %v2787 = vpack.c.b16 %v2029, %v2027
        %v2788 = vpack.c.b16 %v2032, %v2030
        %v2789 = vpack.c.b16 %v2033, %v2031
        %v2790 = vpack.c.b16 %v2036, %v2034
        %v2791 = vpack.c.b16 %v2037, %v2035
        %v2792 = vpack.c.b16 %v2040, %v2038
        %v2793 = vpack.c.b16 %v2041, %v2039
        %v2794 = vpack.c.b16 %v2044, %v2042
        %v2795 = vpack.c.b16 %v2045, %v2043
        %v2796 = vpack.c.b16 %v2048, %v2046
        %v2797 = vpack.c.b16 %v2049, %v2047
        %v2798 = vpack.c.b16 %v2052, %v2050
        %v2799 = vpack.c.b16 %v2053, %v2051
        %v2800 = vpack.c.b16 %v2056, %v2054
        %v2801 = vpack.c.b16 %v2057, %v2055
        %v2802 = vpack.c.b16 %v2060, %v2058
        %v2803 = vpack.c.b16 %v2061, %v2059
        %v2804 = vpack.c.b16 %v2064, %v2062
        %v2805 = vpack.c.b16 %v2065, %v2063
        %v2806 = vpack.c.b16 %v2068, %v2066
        %v2807 = vpack.c.b16 %v2069, %v2067
        %v2808 = vpack.c.b16 %v2072, %v2070
        %v2809 = vpack.c.b16 %v2073, %v2071
        %v2810 = vpack.c.b16 %v2076, %v2074
        %v2811 = vpack.c.b16 %v2077, %v2075
        %v2812 = vpack.c.b16 %v2080, %v2078
        %v2813 = vpack.c.b16 %v2081, %v2079
        %v2814 = vpack.c.b16 %v2084, %v2082
        %v2815 = vpack.c.b16 %v2085, %v2083
        %v2816 = vpack.c.b16 %v2088, %v2086
        %v2817 = vpack.c.b16 %v2089, %v2087
        %v2818 = vpack.c.b16 %v2092, %v2090
        %v2819 = vpack.c.b16 %v2093, %v2091
        %v2820 = vpack.c.b16 %v2096, %v2094
        %v2821 = vpack.c.b16 %v2097, %v2095
        %v2822 = vpack.c.b16 %v2100, %v2098
        %v2823 = vpack.c.b16 %v2101, %v2099
        %v2824 = vpack.c.b16 %v2104, %v2102
        %v2825 = vpack.c.b16 %v2105, %v2103
        %v2826 = vpack.c.b16 %v2108, %v2106
        %v2827 = vpack.c.b16 %v2109, %v2107
        %v2828 = vpack.c.b16 %v2112, %v2110
        %v2829 = vpack.c.b16 %v2113, %v2111
        %v2830 = vpack.c.b16 %v2116, %v2114
        %v2831 = vpack.c.b16 %v2117, %v2115
        %v2832 = vpack.c.b16 %v2120, %v2118
        %v2833 = vpack.c.b16 %v2121, %v2119
        %v2834 = vpack.c.b16 %v2124, %v2122
        %v2835 = vpack.c.b16 %v2125, %v2123
        %v2836 = vpack.c.b16 %v2128, %v2126
        %v2837 = vpack.c.b16 %v2129, %v2127
        %v2838 = vpack.c.b16 %v2132, %v2130
        %v2839 = vpack.c.b16 %v2133, %v2131
        %v2840 = vpack.c.b16 %v2136, %v2134
        %v2841 = vpack.c.b16 %v2137, %v2135
        %v2842 = vpack.c.b16 %v2140, %v2138
        %v2843 = vpack.c.b16 %v2141, %v2139
        %v2844 = vpack.c.b16 %v2144, %v2142
        %v2845 = vpack.c.b16 %v2145, %v2143
        %v2846 = vpack.c.b16 %v2148, %v2146
        %v2847 = vpack.c.b16 %v2149, %v2147
        %v2848 = vpack.c.b16 %v2152, %v2150
        %v2849 = vpack.c.b16 %v2153, %v2151
        %v2850 = vpack.c.b16 %v2156, %v2154
        %v2851 = vpack.c.b16 %v2157, %v2155
        %v2852 = vpack.c.b16 %v2160, %v2158
        %v2853 = vpack.c.b16 %v2161, %v2159
        %v2854 = vpack.c.b16 %v2164, %v2162
        %v2855 = vpack.c.b16 %v2165, %v2163
        %v2856 = vpack.c.b16 %v2168, %v2166
        %v2857 = vpack.c.b16 %v2169, %v2167
        %v2858 = vpack.c.b16 %v2172, %v2170
        %v2859 = vpack.c.b16 %v2173, %v2171
        %v2860 = vpack.c.b16 %v2176, %v2174
        %v2861 = vpack.c.b16 %v2177, %v2175
        %v2862 = vpack.c.b16 %v2180, %v2178
        %v2863 = vpack.c.b16 %v2181, %v2179
        %v2864 = vpack.c.b16 %v2184, %v2182
        %v2865 = vpack.c.b16 %v2185, %v2183
        %v2866 = vpack.c.b16 %v2188, %v2186
        %v2867 = vpack.c.b16 %v2189, %v2187
        %v2868 = vpack.c.b16 %v2192, %v2190
        %v2869 = vpack.c.b16 %v2193, %v2191
        %v2870 = vpack.c.b16 %v2196, %v2194
        %v2871 = vpack.c.b16 %v2197, %v2195
        %v2872 = vpack.c.b16 %v2200, %v2198
        %v2873 = vpack.c.b16 %v2201, %v2199
        %v2874 = vpack.c.b16 %v2204, %v2202
        %v2875 = vpack.c.b16 %v2205, %v2203
        %v2876 = vpack.c.b16 %v2208, %v2206
        %v2877 = vpack.c.b16 %v2209, %v2207
        %v2878 = vpack.c.b16 %v2212, %v2210
        %v2879 = vpack.c.b16 %v2213, %v2211
        %v2880 = vpack.c.b16 %v2216, %v2214
        %v2881 = vpack.c.b16 %v2217, %v2215
        %v2882 = vpack.c.b16 %v2220, %v2218
        %v2883 = vpack.c.b16 %v2221, %v2219
        %v2884 = vpack.c.b16 %v2224, %v2222
        %v2885 = vpack.c.b16 %v2225, %v2223
        %v2886 = vpack.c.b16 %v2228, %v2226
        %v2887 = vpack.c.b16 %v2229, %v2227
        %v2888 = vpack.c.b16 %v2232, %v2230
        %v2889 = vpack.c.b16 %v2233, %v2231
        %v2890 = vpack.c.b16 %v2236, %v2234
        %v2891 = vpack.c.b16 %v2237, %v2235
        %v2892 = vpack.c.b16 %v2240, %v2238
        %v2893 = vpack.c.b16 %v2241, %v2239
        %v2894 = vpack.c.b16 %v2244, %v2242
        %v2895 = vpack.c.b16 %v2245, %v2243
        %v2896 = vpack.c.b16 %v2248, %v2246
        %v2897 = vpack.c.b16 %v2249, %v2247
        %v2898 = vpack.c.b16 %v2252, %v2250
        %v2899 = vpack.c.b16 %v2253, %v2251
        %v2900 = vpack.c.b16 %v2256, %v2254
        %v2901 = vpack.c.b16 %v2257, %v2255
        %v2902 = vpack.c.b16 %v2260, %v2258
        %v2903 = vpack.c.b16 %v2261, %v2259
        %v2904 = vpack.c.b16 %v2264, %v2262
        %v2905 = vpack.c.b16 %v2265, %v2263
        %v2906 = vpack.c.b16 %v2268, %v2266
        %v2907 = vpack.c.b16 %v2269, %v2267
        %v2908 = vpack.c.b16 %v2272, %v2270
        %v2909 = vpack.c.b16 %v2273, %v2271
        %v2910 = vpack.c.b16 %v2276, %v2274
        %v2911 = vpack.c.b16 %v2277, %v2275
        %v2912 = vpack.c.b16 %v2280, %v2278
        %v2913 = vpack.c.b16 %v2281, %v2279
        %v2914 = vpack.c.b16 %v2284, %v2282
        %v2915 = vpack.c.b16 %v2285, %v2283
        %v2916 = vpack.c.b16 %v2288, %v2286
        %v2917 = vpack.c.b16 %v2289, %v2287
        %v2918 = vpack.c.b16 %v2292, %v2290
        %v2919 = vpack.c.b16 %v2293, %v2291
        %v2920 = vpack.c.b16 %v2296, %v2294
        %v2921 = vpack.c.b16 %v2297, %v2295
        %v2922 = vpack.c.b16 %v2300, %v2298
        %v2923 = vpack.c.b16 %v2301, %v2299
        %v2924 = vpack.c.b16 %v2304, %v2302
        %v2925 = vpack.c.b16 %v2305, %v2303
        %v2926 = vpack.c.b16 %v2308, %v2306
        %v2927 = vpack.c.b16 %v2309, %v2307
        %v2928 = vpack.c.b16 %v2312, %v2310
        %v2929 = vpack.c.b16 %v2313, %v2311
        %v2930 = vpack.c.b16 %v2316, %v2314
        %v2931 = vpack.c.b16 %v2317, %v2315
        %v2932 = vpack.c.b16 %v2320, %v2318
        %v2933 = vpack.c.b16 %v2321, %v2319
        %v2934 = vpack.c.b16 %v2324, %v2322
        %v2935 = vpack.c.b16 %v2325, %v2323
        %v2936 = vpack.c.b16 %v2328, %v2326
        %v2937 = vpack.c.b16 %v2329, %v2327
        %v2938 = vpack.c.b16 %v2332, %v2330
        %v2939 = vpack.c.b16 %v2333, %v2331
        %v2940 = vpack.c.b16 %v2336, %v2334
        %v2941 = vpack.c.b16 %v2337, %v2335
        %v2942 = vpack.c.b16 %v2340, %v2338
        %v2943 = vpack.c.b16 %v2341, %v2339
        %v2944 = vpack.c.b16 %v2344, %v2342
        %v2945 = vpack.c.b16 %v2345, %v2343
        %v2946 = vpack.c.b16 %v2348, %v2346
        %v2947 = vpack.c.b16 %v2349, %v2347
        %v2948 = vpack.c.b16 %v2352, %v2350
        %v2949 = vpack.c.b16 %v2353, %v2351
        %v2950 = vpack.c.b16 %v2356, %v2354
        %v2951 = vpack.c.b16 %v2357, %v2355
        %v2952 = vpack.c.b16 %v2360, %v2358
        %v2953 = vpack.c.b16 %v2361, %v2359
        %v2954 = vpack.c.b16 %v2364, %v2362
        %v2955 = vpack.c.b16 %v2365, %v2363
        %v2956 = vpack.c.b16 %v2368, %v2366
        %v2957 = vpack.c.b16 %v2369, %v2367
        %v2958 = vpack.c.b16 %v2372, %v2370
        %v2959 = vpack.c.b16 %v2373, %v2371
        %v2960 = vpack.c.b16 %v2376, %v2374
        %v2961 = vpack.c.b16 %v2377, %v2375
        %v2962 = vpack.c.b16 %v2380, %v2378
        %v2963 = vpack.c.b16 %v2381, %v2379
        %v2964 = vpack.c.b16 %v2384, %v2382
        %v2965 = vpack.c.b16 %v2385, %v2383
        %v2966 = vpack.c.b16 %v2388, %v2386
        %v2967 = vpack.c.b16 %v2389, %v2387
        %v2968 = vpack.c.b16 %v2392, %v2390
        %v2969 = vpack.c.b16 %v2393, %v2391
        %v2970 = vpack.c.b16 %v2396, %v2394
        %v2971 = vpack.c.b16 %v2397, %v2395
        %v2972 = vpack.c.b16 %v2400, %v2398
        %v2973 = vpack.c.b16 %v2401, %v2399
        %v2974 = vpack.c.b16 %v2404, %v2402
        %v2975 = vpack.c.b16 %v2405, %v2403
        %v2976 = vpack.c.b16 %v2408, %v2406
        %v2977 = vpack.c.b16 %v2409, %v2407
        %v2978 = vpack.c.b16 %v2412, %v2410
        %v2979 = vpack.c.b16 %v2413, %v2411
        %v2980 = vpack.c.b16 %v2416, %v2414
        %v2981 = vpack.c.b16 %v2417, %v2415
        %v2982 = vpack.c.b16 %v2420, %v2418
        %v2983 = vpack.c.b16 %v2421, %v2419
        %v2984 = vpack.c.b16 %v2424, %v2422
        %v2985 = vpack.c.b16 %v2425, %v2423
        %v2986 = vpack.c.b16 %v2428, %v2426
        %v2987 = vpack.c.b16 %v2429, %v2427
        %v2988 = vpack.c.b16 %v2432, %v2430
        %v2989 = vpack.c.b16 %v2433, %v2431
        %v2990 = vpack.c.b16 %v2436, %v2434
        %v2991 = vpack.c.b16 %v2437, %v2435
        %v2992 = vpack.c.b16 %v2440, %v2438
        %v2993 = vpack.c.b16 %v2441, %v2439
        %v2994 = vpack.c.b16 %v2444, %v2442
        %v2995 = vpack.c.b16 %v2445, %v2443
        %v2996 = vpack.c.b16 %v2448, %v2446
        %v2997 = vpack.c.b16 %v2449, %v2447
        %v2998 = vpack.c.b16 %v2452, %v2450
        %v2999 = vpack.c.b16 %v2453, %v2451
        %v3000 = vpack.c.b16 %v2456, %v2454
        %v3001 = vpack.c.b16 %v2457, %v2455
        %v3002 = vpack.c.b16 %v2460, %v2458
        %v3003 = vpack.c.b16 %v2461, %v2459
        %v3004 = vpack.c.b16 %v2464, %v2462
        %v3005 = vpack.c.b16 %v2465, %v2463
        %v3006 = vpack.c.b16 %v2468, %v2466
        %v3007 = vpack.c.b16 %v2469, %v2467
        %v3008 = vpack.c.b16 %v2472, %v2470
        %v3009 = vpack.c.b16 %v2473, %v2471
        %v3010 = vpack.c.b16 %v2476, %v2474
        %v3011 = vpack.c.b16 %v2477, %v2475
        %v3012 = vpack.c.b16 %v2480, %v2478
        %v3013 = vpack.c.b16 %v2481, %v2479
        %v3014 = vpack.c.b16 %v2484, %v2482
        %v3015 = vpack.c.b16 %v2485, %v2483
        %v3016 = vpack.c.b16 %v2488, %v2486
        %v3017 = vpack.c.b16 %v2489, %v2487
        %v3018 = vpack.c.b16 %v2492, %v2490
        %v3019 = vpack.c.b16 %v2493, %v2491
        %v3020 = vpack.c.b16 %v2496, %v2494
        %v3021 = vpack.c.b16 %v2497, %v2495
        %v3022 = vpack.c.b16 %v2500, %v2498
        %v3023 = vpack.c.b16 %v2501, %v2499
        %v3024 = vpack.c.b16 %v2504, %v2502
        %v3025 = vpack.c.b16 %v2505, %v2503
        %v3026 = vpack.c.b16 %v2508, %v2506
        %v3027 = vpack.c.b16 %v2509, %v2507
        %v3028 = vpack.c.b16 %v2512, %v2510
        %v3029 = vpack.c.b16 %v2513, %v2511
        %v3030 = vpack.c.b16 %v2516, %v2514
        %v3031 = vpack.c.b16 %v2517, %v2515
        %v3032 = vpack.c.b16 %v2520, %v2518
        %v3033 = vpack.c.b16 %v2521, %v2519
        %3546 = vmatprep.subr.bf16.mxu0 %v2523
        %3547 = vmatpush1.bf16.msra.mxu0 %v2522
        %3548 = vmatprep.subr.bf16.mxu0 %v2525
        %3549 = vmatpush1.bf16.msra.mxu0 %v2524
        %3550 = vmatprep.subr.bf16.mxu0 %v2527
        %3551 = vmatpush1.bf16.msra.mxu0 %v2526
        %3552 = vmatprep.subr.bf16.mxu0 %v2529
        %3553 = vmatpush1.bf16.msra.mxu0 %v2528
        %3554 = vmatprep.subr.bf16.mxu0 %v2531
        %3555 = vmatpush1.bf16.msra.mxu0 %v2530
        %3556 = vmatprep.subr.bf16.mxu0 %v2533
        %3557 = vmatpush1.bf16.msra.mxu0 %v2532
        %3558 = vmatprep.subr.bf16.mxu0 %v2535
        %3559 = vmatpush1.bf16.msra.mxu0 %v2534
        %3560 = vmatprep.subr.bf16.mxu0 %v2537
        %3561 = vmatpush1.bf16.msra.mxu0 %v2536
        %3562 = vmatprep.subr.bf16.mxu0 %v2539
        %3563 = vmatpush1.bf16.msra.mxu0 %v2538
        %3564 = vmatprep.subr.bf16.mxu0 %v2541
        %3565 = vmatpush1.bf16.msra.mxu0 %v2540
        %3566 = vmatprep.subr.bf16.mxu0 %v2543
        %3567 = vmatpush1.bf16.msra.mxu0 %v2542
        %3568 = vmatprep.subr.bf16.mxu0 %v2545
        %3569 = vmatpush1.bf16.msra.mxu0 %v2544
        %3570 = vmatprep.subr.bf16.mxu0 %v2547
        %3571 = vmatpush1.bf16.msra.mxu0 %v2546
        %3572 = vmatprep.subr.bf16.mxu0 %v2549
        %3573 = vmatpush1.bf16.msra.mxu0 %v2548
        %3574 = vmatprep.subr.bf16.mxu0 %v2551
        %3575 = vmatpush1.bf16.msra.mxu0 %v2550
        %3576 = vmatprep.subr.bf16.mxu0 %v2553
        %3577 = vmatpush1.bf16.msra.mxu0 %v2552
        %3578 = vmatprep.mubr.bf16.mxu0 %v923
        %3579 = vmatmul.mubr.bf16.gmra.mrb[0].mxu0 %v922
        %v3580 = vpop.f32.mrb[0].mxu0
        %v3581 = vadd.f32 %v867, %v3580
        %v3582 = vpop.f32.mrb[0].mxu0
        %v3583 = vadd.f32 %v871, %v3582
        %v3584 = vpop.f32.mrb[0].mxu0
        %v3585 = vpop.f32.mrb[0].mxu0
        %3586 = vdwg.mxu0
        %3587 = vmatprep.subr.bf16.mxu0 %v2555
        %3588 = vmatpush1.bf16.msra.mxu0 %v2554
        %3589 = vmatprep.subr.bf16.mxu0 %v2557
        %3590 = vmatpush1.bf16.msra.mxu0 %v2556
        %3591 = vmatprep.subr.bf16.mxu0 %v2559
        %3592 = vmatpush1.bf16.msra.mxu0 %v2558
        %3593 = vmatprep.subr.bf16.mxu0 %v2561
        %3594 = vmatpush1.bf16.msra.mxu0 %v2560
        %3595 = vmatprep.subr.bf16.mxu0 %v2563
        %3596 = vmatpush1.bf16.msra.mxu0 %v2562
        %3597 = vmatprep.subr.bf16.mxu0 %v2565
        %3598 = vmatpush1.bf16.msra.mxu0 %v2564
        %3599 = vmatprep.subr.bf16.mxu0 %v2567
        %3600 = vmatpush1.bf16.msra.mxu0 %v2566
        %3601 = vmatprep.subr.bf16.mxu0 %v2569
        %3602 = vmatpush1.bf16.msra.mxu0 %v2568
        %3603 = vmatprep.subr.bf16.mxu0 %v2571
        %3604 = vmatpush1.bf16.msra.mxu0 %v2570
        %3605 = vmatprep.subr.bf16.mxu0 %v2573
        %3606 = vmatpush1.bf16.msra.mxu0 %v2572
        %3607 = vmatprep.subr.bf16.mxu0 %v2575
        %3608 = vmatpush1.bf16.msra.mxu0 %v2574
        %3609 = vmatprep.subr.bf16.mxu0 %v2577
        %3610 = vmatpush1.bf16.msra.mxu0 %v2576
        %3611 = vmatprep.subr.bf16.mxu0 %v2579
        %3612 = vmatpush1.bf16.msra.mxu0 %v2578
        %3613 = vmatprep.subr.bf16.mxu0 %v2581
        %3614 = vmatpush1.bf16.msra.mxu0 %v2580
        %3615 = vmatprep.subr.bf16.mxu0 %v2583
        %3616 = vmatpush1.bf16.msra.mxu0 %v2582
        %3617 = vmatprep.subr.bf16.mxu0 %v2585
        %3618 = vmatpush1.bf16.msra.mxu0 %v2584
        %3619 = vmatprep.mubr.bf16.mxu0 %v925
        %3620 = vmatmul.mubr.bf16.gmra.mrb[0].mxu0 %v924
        %v3621 = vpop.f32.mrb[0].mxu0
        %v3622 = vadd.f32 %v3581, %v3621
        %v3623 = vpop.f32.mrb[0].mxu0
        %v3624 = vadd.f32 %v3583, %v3623
        %v3625 = vpop.f32.mrb[0].mxu0
        %v3626 = vpop.f32.mrb[0].mxu0
        %3627 = vdwg.mxu0
        %3628 = vmatprep.subr.bf16.mxu0 %v2587
        %3629 = vmatpush1.bf16.msra.mxu0 %v2586
        %3630 = vmatprep.subr.bf16.mxu0 %v2589
        %3631 = vmatpush1.bf16.msra.mxu0 %v2588
        %3632 = vmatprep.subr.bf16.mxu0 %v2591
        %3633 = vmatpush1.bf16.msra.mxu0 %v2590
        %3634 = vmatprep.subr.bf16.mxu0 %v2593
        %3635 = vmatpush1.bf16.msra.mxu0 %v2592
        %3636 = vmatprep.subr.bf16.mxu0 %v2595
        %3637 = vmatpush1.bf16.msra.mxu0 %v2594
        %3638 = vmatprep.subr.bf16.mxu0 %v2597
        %3639 = vmatpush1.bf16.msra.mxu0 %v2596
        %3640 = vmatprep.subr.bf16.mxu0 %v2599
        %3641 = vmatpush1.bf16.msra.mxu0 %v2598
        %3642 = vmatprep.subr.bf16.mxu0 %v2601
        %3643 = vmatpush1.bf16.msra.mxu0 %v2600
        %3644 = vmatprep.subr.bf16.mxu0 %v2603
        %3645 = vmatpush1.bf16.msra.mxu0 %v2602
        %3646 = vmatprep.subr.bf16.mxu0 %v2605
        %3647 = vmatpush1.bf16.msra.mxu0 %v2604
        %3648 = vmatprep.subr.bf16.mxu0 %v2607
        %3649 = vmatpush1.bf16.msra.mxu0 %v2606
        %3650 = vmatprep.subr.bf16.mxu0 %v2609
        %3651 = vmatpush1.bf16.msra.mxu0 %v2608
        %3652 = vmatprep.subr.bf16.mxu0 %v2611
        %3653 = vmatpush1.bf16.msra.mxu0 %v2610
        %3654 = vmatprep.subr.bf16.mxu0 %v2613
        %3655 = vmatpush1.bf16.msra.mxu0 %v2612
        %3656 = vmatprep.subr.bf16.mxu0 %v2615
        %3657 = vmatpush1.bf16.msra.mxu0 %v2614
        %3658 = vmatprep.subr.bf16.mxu0 %v2617
        %3659 = vmatpush1.bf16.msra.mxu0 %v2616
        %3660 = vmatprep.mubr.bf16.mxu0 %v927
        %3661 = vmatmul.mubr.bf16.gmra.mrb[0].mxu0 %v926
        %v3662 = vpop.f32.mrb[0].mxu0
        %v3663 = vadd.f32 %v3622, %v3662
        %v3664 = vpop.f32.mrb[0].mxu0
        %v3665 = vadd.f32 %v3624, %v3664
        %v3666 = vpop.f32.mrb[0].mxu0
        %v3667 = vpop.f32.mrb[0].mxu0
        %3668 = vdwg.mxu0
        %3669 = vmatprep.subr.bf16.mxu0 %v2619
        %3670 = vmatpush1.bf16.msra.mxu0 %v2618
        %3671 = vmatprep.subr.bf16.mxu0 %v2621
        %3672 = vmatpush1.bf16.msra.mxu0 %v2620
        %3673 = vmatprep.subr.bf16.mxu0 %v2623
        %3674 = vmatpush1.bf16.msra.mxu0 %v2622
        %3675 = vmatprep.subr.bf16.mxu0 %v2625
        %3676 = vmatpush1.bf16.msra.mxu0 %v2624
        %3677 = vmatprep.subr.bf16.mxu0 %v2627
        %3678 = vmatpush1.bf16.msra.mxu0 %v2626
        %3679 = vmatprep.subr.bf16.mxu0 %v2629
        %3680 = vmatpush1.bf16.msra.mxu0 %v2628
        %3681 = vmatprep.subr.bf16.mxu0 %v2631
        %3682 = vmatpush1.bf16.msra.mxu0 %v2630
        %3683 = vmatprep.subr.bf16.mxu0 %v2633
        %3684 = vmatpush1.bf16.msra.mxu0 %v2632
        %3685 = vmatprep.subr.bf16.mxu0 %v2635
        %3686 = vmatpush1.bf16.msra.mxu0 %v2634
        %3687 = vmatprep.subr.bf16.mxu0 %v2637
        %3688 = vmatpush1.bf16.msra.mxu0 %v2636
        %3689 = vmatprep.subr.bf16.mxu0 %v2639
        %3690 = vmatpush1.bf16.msra.mxu0 %v2638
        %3691 = vmatprep.subr.bf16.mxu0 %v2641
        %3692 = vmatpush1.bf16.msra.mxu0 %v2640
        %3693 = vmatprep.subr.bf16.mxu0 %v2643
        %3694 = vmatpush1.bf16.msra.mxu0 %v2642
        %3695 = vmatprep.subr.bf16.mxu0 %v2645
        %3696 = vmatpush1.bf16.msra.mxu0 %v2644
        %3697 = vmatprep.subr.bf16.mxu0 %v2647
        %3698 = vmatpush1.bf16.msra.mxu0 %v2646
        %3699 = vmatprep.subr.bf16.mxu0 %v2649
        %3700 = vmatpush1.bf16.msra.mxu0 %v2648
        %3701 = vmatprep.mubr.bf16.mxu0 %v929
        %3702 = vmatmul.mubr.bf16.gmra.mrb[0].mxu0 %v928
        %v3703 = vpop.f32.mrb[0].mxu0
        %v3704 = vadd.f32 %v3663, %v3703
        %v3705 = vpop.f32.mrb[0].mxu0
        %v3706 = vadd.f32 %v3665, %v3705
        %v3707 = vpop.f32.mrb[0].mxu0
        %v3708 = vpop.f32.mrb[0].mxu0
        %3709 = vdwg.mxu0
        %3710 = vmatprep.subr.bf16.mxu0 %v2651
        %3711 = vmatpush1.bf16.msra.mxu0 %v2650
        %3712 = vmatprep.subr.bf16.mxu0 %v2653
        %3713 = vmatpush1.bf16.msra.mxu0 %v2652
        %3714 = vmatprep.subr.bf16.mxu0 %v2655
        %3715 = vmatpush1.bf16.msra.mxu0 %v2654
        %3716 = vmatprep.subr.bf16.mxu0 %v2657
        %3717 = vmatpush1.bf16.msra.mxu0 %v2656
        %3718 = vmatprep.subr.bf16.mxu0 %v2659
        %3719 = vmatpush1.bf16.msra.mxu0 %v2658
        %3720 = vmatprep.subr.bf16.mxu0 %v2661
        %3721 = vmatpush1.bf16.msra.mxu0 %v2660
        %3722 = vmatprep.subr.bf16.mxu0 %v2663
        %3723 = vmatpush1.bf16.msra.mxu0 %v2662
        %3724 = vmatprep.subr.bf16.mxu0 %v2665
        %3725 = vmatpush1.bf16.msra.mxu0 %v2664
        %3726 = vmatprep.subr.bf16.mxu0 %v2667
        %3727 = vmatpush1.bf16.msra.mxu0 %v2666
        %3728 = vmatprep.subr.bf16.mxu0 %v2669
        %3729 = vmatpush1.bf16.msra.mxu0 %v2668
        %3730 = vmatprep.subr.bf16.mxu0 %v2671
        %3731 = vmatpush1.bf16.msra.mxu0 %v2670
        %3732 = vmatprep.subr.bf16.mxu0 %v2673
        %3733 = vmatpush1.bf16.msra.mxu0 %v2672
        %3734 = vmatprep.subr.bf16.mxu0 %v2675
        %3735 = vmatpush1.bf16.msra.mxu0 %v2674
        %3736 = vmatprep.subr.bf16.mxu0 %v2677
        %3737 = vmatpush1.bf16.msra.mxu0 %v2676
        %3738 = vmatprep.subr.bf16.mxu0 %v2679
        %3739 = vmatpush1.bf16.msra.mxu0 %v2678
        %3740 = vmatprep.subr.bf16.mxu0 %v2681
        %3741 = vmatpush1.bf16.msra.mxu0 %v2680
        %3742 = vmatprep.mubr.bf16.mxu0 %v931
        %3743 = vmatmul.mubr.bf16.gmra.mrb[0].mxu0 %v930
        %v3744 = vpop.f32.mrb[0].mxu0
        %v3745 = vadd.f32 %v3704, %v3744
        %v3746 = vpop.f32.mrb[0].mxu0
        %v3747 = vadd.f32 %v3706, %v3746
        %v3748 = vpop.f32.mrb[0].mxu0
        %v3749 = vpop.f32.mrb[0].mxu0
        %3750 = vdwg.mxu0
        %3751 = vmatprep.subr.bf16.mxu0 %v2683
        %3752 = vmatpush1.bf16.msra.mxu0 %v2682
        %3753 = vmatprep.subr.bf16.mxu0 %v2685
        %3754 = vmatpush1.bf16.msra.mxu0 %v2684
        %3755 = vmatprep.subr.bf16.mxu0 %v2687
        %3756 = vmatpush1.bf16.msra.mxu0 %v2686
        %3757 = vmatprep.subr.bf16.mxu0 %v2689
        %3758 = vmatpush1.bf16.msra.mxu0 %v2688
        %3759 = vmatprep.subr.bf16.mxu0 %v2691
        %3760 = vmatpush1.bf16.msra.mxu0 %v2690
        %3761 = vmatprep.subr.bf16.mxu0 %v2693
        %3762 = vmatpush1.bf16.msra.mxu0 %v2692
        %3763 = vmatprep.subr.bf16.mxu0 %v2695
        %3764 = vmatpush1.bf16.msra.mxu0 %v2694
        %3765 = vmatprep.subr.bf16.mxu0 %v2697
        %3766 = vmatpush1.bf16.msra.mxu0 %v2696
        %3767 = vmatprep.subr.bf16.mxu0 %v2699
        %3768 = vmatpush1.bf16.msra.mxu0 %v2698
        %3769 = vmatprep.subr.bf16.mxu0 %v2701
        %3770 = vmatpush1.bf16.msra.mxu0 %v2700
        %3771 = vmatprep.subr.bf16.mxu0 %v2703
        %3772 = vmatpush1.bf16.msra.mxu0 %v2702
        %3773 = vmatprep.subr.bf16.mxu0 %v2705
        %3774 = vmatpush1.bf16.msra.mxu0 %v2704
        %3775 = vmatprep.subr.bf16.mxu0 %v2707
        %3776 = vmatpush1.bf16.msra.mxu0 %v2706
        %3777 = vmatprep.subr.bf16.mxu0 %v2709
        %3778 = vmatpush1.bf16.msra.mxu0 %v2708
        %3779 = vmatprep.subr.bf16.mxu0 %v2711
        %3780 = vmatpush1.bf16.msra.mxu0 %v2710
        %3781 = vmatprep.subr.bf16.mxu0 %v2713
        %3782 = vmatpush1.bf16.msra.mxu0 %v2712
        %3783 = vmatprep.mubr.bf16.mxu0 %v933
        %3784 = vmatmul.mubr.bf16.gmra.mrb[0].mxu0 %v932
        %v3785 = vpop.f32.mrb[0].mxu0
        %v3786 = vadd.f32 %v3745, %v3785
        %v3787 = vpop.f32.mrb[0].mxu0
        %v3788 = vadd.f32 %v3747, %v3787
        %v3789 = vpop.f32.mrb[0].mxu0
        %v3790 = vpop.f32.mrb[0].mxu0
        %3791 = vdwg.mxu0
        %3792 = vmatprep.subr.bf16.mxu0 %v2715
        %3793 = vmatpush1.bf16.msra.mxu0 %v2714
        %3794 = vmatprep.subr.bf16.mxu0 %v2717
        %3795 = vmatpush1.bf16.msra.mxu0 %v2716
        %3796 = vmatprep.subr.bf16.mxu0 %v2719
        %3797 = vmatpush1.bf16.msra.mxu0 %v2718
        %3798 = vmatprep.subr.bf16.mxu0 %v2721
        %3799 = vmatpush1.bf16.msra.mxu0 %v2720
        %3800 = vmatprep.subr.bf16.mxu0 %v2723
        %3801 = vmatpush1.bf16.msra.mxu0 %v2722
        %3802 = vmatprep.subr.bf16.mxu0 %v2725
        %3803 = vmatpush1.bf16.msra.mxu0 %v2724
        %3804 = vmatprep.subr.bf16.mxu0 %v2727
        %3805 = vmatpush1.bf16.msra.mxu0 %v2726
        %3806 = vmatprep.subr.bf16.mxu0 %v2729
        %3807 = vmatpush1.bf16.msra.mxu0 %v2728
        %3808 = vmatprep.subr.bf16.mxu0 %v2731
        %3809 = vmatpush1.bf16.msra.mxu0 %v2730
        %3810 = vmatprep.subr.bf16.mxu0 %v2733
        %3811 = vmatpush1.bf16.msra.mxu0 %v2732
        %3812 = vmatprep.subr.bf16.mxu0 %v2735
        %3813 = vmatpush1.bf16.msra.mxu0 %v2734
        %3814 = vmatprep.subr.bf16.mxu0 %v2737
        %3815 = vmatpush1.bf16.msra.mxu0 %v2736
        %3816 = vmatprep.subr.bf16.mxu0 %v2739
        %3817 = vmatpush1.bf16.msra.mxu0 %v2738
        %3818 = vmatprep.subr.bf16.mxu0 %v2741
        %3819 = vmatpush1.bf16.msra.mxu0 %v2740
        %3820 = vmatprep.subr.bf16.mxu0 %v2743
        %3821 = vmatpush1.bf16.msra.mxu0 %v2742
        %3822 = vmatprep.subr.bf16.mxu0 %v2745
        %3823 = vmatpush1.bf16.msra.mxu0 %v2744
        %3824 = vmatprep.mubr.bf16.mxu0 %v935
        %3825 = vmatmul.mubr.bf16.gmra.mrb[0].mxu0 %v934
        %v3826 = vpop.f32.mrb[0].mxu0
        %v3827 = vadd.f32 %v3786, %v3826
        %v3828 = vpop.f32.mrb[0].mxu0
        %v3829 = vadd.f32 %v3788, %v3828
        %v3830 = vpop.f32.mrb[0].mxu0
        %v3831 = vpop.f32.mrb[0].mxu0
        %3832 = vdwg.mxu0
        %3833 = vmatprep.subr.bf16.mxu0 %v2747
        %3834 = vmatpush1.bf16.msra.mxu0 %v2746
        %3835 = vmatprep.subr.bf16.mxu0 %v2749
        %3836 = vmatpush1.bf16.msra.mxu0 %v2748
        %3837 = vmatprep.subr.bf16.mxu0 %v2751
        %3838 = vmatpush1.bf16.msra.mxu0 %v2750
        %3839 = vmatprep.subr.bf16.mxu0 %v2753
        %3840 = vmatpush1.bf16.msra.mxu0 %v2752
        %3841 = vmatprep.subr.bf16.mxu0 %v2755
        %3842 = vmatpush1.bf16.msra.mxu0 %v2754
        %3843 = vmatprep.subr.bf16.mxu0 %v2757
        %3844 = vmatpush1.bf16.msra.mxu0 %v2756
        %3845 = vmatprep.subr.bf16.mxu0 %v2759
        %3846 = vmatpush1.bf16.msra.mxu0 %v2758
        %3847 = vmatprep.subr.bf16.mxu0 %v2761
        %3848 = vmatpush1.bf16.msra.mxu0 %v2760
        %3849 = vmatprep.subr.bf16.mxu0 %v2763
        %3850 = vmatpush1.bf16.msra.mxu0 %v2762
        %3851 = vmatprep.subr.bf16.mxu0 %v2765
        %3852 = vmatpush1.bf16.msra.mxu0 %v2764
        %3853 = vmatprep.subr.bf16.mxu0 %v2767
        %3854 = vmatpush1.bf16.msra.mxu0 %v2766
        %3855 = vmatprep.subr.bf16.mxu0 %v2769
        %3856 = vmatpush1.bf16.msra.mxu0 %v2768
        %3857 = vmatprep.subr.bf16.mxu0 %v2771
        %3858 = vmatpush1.bf16.msra.mxu0 %v2770
        %3859 = vmatprep.subr.bf16.mxu0 %v2773
        %3860 = vmatpush1.bf16.msra.mxu0 %v2772
        %3861 = vmatprep.subr.bf16.mxu0 %v2775
        %3862 = vmatpush1.bf16.msra.mxu0 %v2774
        %3863 = vmatprep.subr.bf16.mxu0 %v2777
        %3864 = vmatpush1.bf16.msra.mxu0 %v2776
        %3865 = vmatprep.mubr.bf16.mxu0 %v937
        %3866 = vmatmul.mubr.bf16.gmra.mrb[0].mxu0 %v936
        %v3867 = vpop.f32.mrb[0].mxu0
        %v3868 = vadd.f32 %v3827, %v3867
        %v3869 = vpop.f32.mrb[0].mxu0
        %v3870 = vadd.f32 %v3829, %v3869
        %v3871 = vpop.f32.mrb[0].mxu0
        %v3872 = vpop.f32.mrb[0].mxu0
        %3873 = vdwg.mxu0
        %3874 = vmatprep.subr.bf16.mxu0 %v2779
        %3875 = vmatpush1.bf16.msra.mxu0 %v2778
        %3876 = vmatprep.subr.bf16.mxu0 %v2781
        %3877 = vmatpush1.bf16.msra.mxu0 %v2780
        %3878 = vmatprep.subr.bf16.mxu0 %v2783
        %3879 = vmatpush1.bf16.msra.mxu0 %v2782
        %3880 = vmatprep.subr.bf16.mxu0 %v2785
        %3881 = vmatpush1.bf16.msra.mxu0 %v2784
        %3882 = vmatprep.subr.bf16.mxu0 %v2787
        %3883 = vmatpush1.bf16.msra.mxu0 %v2786
        %3884 = vmatprep.subr.bf16.mxu0 %v2789
        %3885 = vmatpush1.bf16.msra.mxu0 %v2788
        %3886 = vmatprep.subr.bf16.mxu0 %v2791
        %3887 = vmatpush1.bf16.msra.mxu0 %v2790
        %3888 = vmatprep.subr.bf16.mxu0 %v2793
        %3889 = vmatpush1.bf16.msra.mxu0 %v2792
        %3890 = vmatprep.subr.bf16.mxu0 %v2795
        %3891 = vmatpush1.bf16.msra.mxu0 %v2794
        %3892 = vmatprep.subr.bf16.mxu0 %v2797
        %3893 = vmatpush1.bf16.msra.mxu0 %v2796
        %3894 = vmatprep.subr.bf16.mxu0 %v2799
        %3895 = vmatpush1.bf16.msra.mxu0 %v2798
        %3896 = vmatprep.subr.bf16.mxu0 %v2801
        %3897 = vmatpush1.bf16.msra.mxu0 %v2800
        %3898 = vmatprep.subr.bf16.mxu0 %v2803
        %3899 = vmatpush1.bf16.msra.mxu0 %v2802
        %3900 = vmatprep.subr.bf16.mxu0 %v2805
        %3901 = vmatpush1.bf16.msra.mxu0 %v2804
        %3902 = vmatprep.subr.bf16.mxu0 %v2807
        %3903 = vmatpush1.bf16.msra.mxu0 %v2806
        %3904 = vmatprep.subr.bf16.mxu0 %v2809
        %3905 = vmatpush1.bf16.msra.mxu0 %v2808
        %3906 = vmatprep.mubr.bf16.mxu0 %v939
        %3907 = vmatmul.mubr.bf16.gmra.mrb[0].mxu0 %v938
        %v3908 = vpop.f32.mrb[0].mxu0
        %v3909 = vadd.f32 %v3868, %v3908
        %v3910 = vpop.f32.mrb[0].mxu0
        %v3911 = vadd.f32 %v3870, %v3910
        %v3912 = vpop.f32.mrb[0].mxu0
        %v3913 = vpop.f32.mrb[0].mxu0
        %3914 = vdwg.mxu0
        %3915 = vmatprep.subr.bf16.mxu0 %v2811
        %3916 = vmatpush1.bf16.msra.mxu0 %v2810
        %3917 = vmatprep.subr.bf16.mxu0 %v2813
        %3918 = vmatpush1.bf16.msra.mxu0 %v2812
        %3919 = vmatprep.subr.bf16.mxu0 %v2815
        %3920 = vmatpush1.bf16.msra.mxu0 %v2814
        %3921 = vmatprep.subr.bf16.mxu0 %v2817
        %3922 = vmatpush1.bf16.msra.mxu0 %v2816
        %3923 = vmatprep.subr.bf16.mxu0 %v2819
        %3924 = vmatpush1.bf16.msra.mxu0 %v2818
        %3925 = vmatprep.subr.bf16.mxu0 %v2821
        %3926 = vmatpush1.bf16.msra.mxu0 %v2820
        %3927 = vmatprep.subr.bf16.mxu0 %v2823
        %3928 = vmatpush1.bf16.msra.mxu0 %v2822
        %3929 = vmatprep.subr.bf16.mxu0 %v2825
        %3930 = vmatpush1.bf16.msra.mxu0 %v2824
        %3931 = vmatprep.subr.bf16.mxu0 %v2827
        %3932 = vmatpush1.bf16.msra.mxu0 %v2826
        %3933 = vmatprep.subr.bf16.mxu0 %v2829
        %3934 = vmatpush1.bf16.msra.mxu0 %v2828
        %3935 = vmatprep.subr.bf16.mxu0 %v2831
        %3936 = vmatpush1.bf16.msra.mxu0 %v2830
        %3937 = vmatprep.subr.bf16.mxu0 %v2833
        %3938 = vmatpush1.bf16.msra.mxu0 %v2832
        %3939 = vmatprep.subr.bf16.mxu0 %v2835
        %3940 = vmatpush1.bf16.msra.mxu0 %v2834
        %3941 = vmatprep.subr.bf16.mxu0 %v2837
        %3942 = vmatpush1.bf16.msra.mxu0 %v2836
        %3943 = vmatprep.subr.bf16.mxu0 %v2839
        %3944 = vmatpush1.bf16.msra.mxu0 %v2838
        %3945 = vmatprep.subr.bf16.mxu0 %v2841
        %3946 = vmatpush1.bf16.msra.mxu0 %v2840
        %3947 = vmatprep.mubr.bf16.mxu0 %v941
        %3948 = vmatmul.mubr.bf16.gmra.mrb[0].mxu0 %v940
        %v3949 = vpop.f32.mrb[0].mxu0
        %v3950 = vadd.f32 %v3909, %v3949
        %v3951 = vpop.f32.mrb[0].mxu0
        %v3952 = vadd.f32 %v3911, %v3951
        %v3953 = vpop.f32.mrb[0].mxu0
        %v3954 = vpop.f32.mrb[0].mxu0
        %3955 = vdwg.mxu0
        %3956 = vmatprep.subr.bf16.mxu0 %v2843
        %3957 = vmatpush1.bf16.msra.mxu0 %v2842
        %3958 = vmatprep.subr.bf16.mxu0 %v2845
        %3959 = vmatpush1.bf16.msra.mxu0 %v2844
        %3960 = vmatprep.subr.bf16.mxu0 %v2847
        %3961 = vmatpush1.bf16.msra.mxu0 %v2846
        %3962 = vmatprep.subr.bf16.mxu0 %v2849
        %3963 = vmatpush1.bf16.msra.mxu0 %v2848
        %3964 = vmatprep.subr.bf16.mxu0 %v2851
        %3965 = vmatpush1.bf16.msra.mxu0 %v2850
        %3966 = vmatprep.subr.bf16.mxu0 %v2853
        %3967 = vmatpush1.bf16.msra.mxu0 %v2852
        %3968 = vmatprep.subr.bf16.mxu0 %v2855
        %3969 = vmatpush1.bf16.msra.mxu0 %v2854
        %3970 = vmatprep.subr.bf16.mxu0 %v2857
        %3971 = vmatpush1.bf16.msra.mxu0 %v2856
        %3972 = vmatprep.subr.bf16.mxu0 %v2859
        %3973 = vmatpush1.bf16.msra.mxu0 %v2858
        %3974 = vmatprep.subr.bf16.mxu0 %v2861
        %3975 = vmatpush1.bf16.msra.mxu0 %v2860
        %3976 = vmatprep.subr.bf16.mxu0 %v2863
        %3977 = vmatpush1.bf16.msra.mxu0 %v2862
        %3978 = vmatprep.subr.bf16.mxu0 %v2865
        %3979 = vmatpush1.bf16.msra.mxu0 %v2864
        %3980 = vmatprep.subr.bf16.mxu0 %v2867
        %3981 = vmatpush1.bf16.msra.mxu0 %v2866
        %3982 = vmatprep.subr.bf16.mxu0 %v2869
        %3983 = vmatpush1.bf16.msra.mxu0 %v2868
        %3984 = vmatprep.subr.bf16.mxu0 %v2871
        %3985 = vmatpush1.bf16.msra.mxu0 %v2870
        %3986 = vmatprep.subr.bf16.mxu0 %v2873
        %3987 = vmatpush1.bf16.msra.mxu0 %v2872
        %3988 = vmatprep.mubr.bf16.mxu0 %v943
        %3989 = vmatmul.mubr.bf16.gmra.mrb[0].mxu0 %v942
        %v3990 = vpop.f32.mrb[0].mxu0
        %v3991 = vadd.f32 %v3950, %v3990
        %v3992 = vpop.f32.mrb[0].mxu0
        %v3993 = vadd.f32 %v3952, %v3992
        %v3994 = vpop.f32.mrb[0].mxu0
        %v3995 = vpop.f32.mrb[0].mxu0
        %3996 = vdwg.mxu0
        %3997 = vmatprep.subr.bf16.mxu0 %v2875
        %3998 = vmatpush1.bf16.msra.mxu0 %v2874
        %3999 = vmatprep.subr.bf16.mxu0 %v2877
        %4000 = vmatpush1.bf16.msra.mxu0 %v2876
        %4001 = vmatprep.subr.bf16.mxu0 %v2879
        %4002 = vmatpush1.bf16.msra.mxu0 %v2878
        %4003 = vmatprep.subr.bf16.mxu0 %v2881
        %4004 = vmatpush1.bf16.msra.mxu0 %v2880
        %4005 = vmatprep.subr.bf16.mxu0 %v2883
        %4006 = vmatpush1.bf16.msra.mxu0 %v2882
        %4007 = vmatprep.subr.bf16.mxu0 %v2885
        %4008 = vmatpush1.bf16.msra.mxu0 %v2884
        %4009 = vmatprep.subr.bf16.mxu0 %v2887
        %4010 = vmatpush1.bf16.msra.mxu0 %v2886
        %4011 = vmatprep.subr.bf16.mxu0 %v2889
        %4012 = vmatpush1.bf16.msra.mxu0 %v2888
        %4013 = vmatprep.subr.bf16.mxu0 %v2891
        %4014 = vmatpush1.bf16.msra.mxu0 %v2890
        %4015 = vmatprep.subr.bf16.mxu0 %v2893
        %4016 = vmatpush1.bf16.msra.mxu0 %v2892
        %4017 = vmatprep.subr.bf16.mxu0 %v2895
        %4018 = vmatpush1.bf16.msra.mxu0 %v2894
        %4019 = vmatprep.subr.bf16.mxu0 %v2897
        %4020 = vmatpush1.bf16.msra.mxu0 %v2896
        %4021 = vmatprep.subr.bf16.mxu0 %v2899
        %4022 = vmatpush1.bf16.msra.mxu0 %v2898
        %4023 = vmatprep.subr.bf16.mxu0 %v2901
        %4024 = vmatpush1.bf16.msra.mxu0 %v2900
        %4025 = vmatprep.subr.bf16.mxu0 %v2903
        %4026 = vmatpush1.bf16.msra.mxu0 %v2902
        %4027 = vmatprep.subr.bf16.mxu0 %v2905
        %4028 = vmatpush1.bf16.msra.mxu0 %v2904
        %4029 = vmatprep.mubr.bf16.mxu0 %v945
        %4030 = vmatmul.mubr.bf16.gmra.mrb[0].mxu0 %v944
        %v4031 = vpop.f32.mrb[0].mxu0
        %v4032 = vadd.f32 %v3991, %v4031
        %v4033 = vpop.f32.mrb[0].mxu0
        %v4034 = vadd.f32 %v3993, %v4033
        %v4035 = vpop.f32.mrb[0].mxu0
        %v4036 = vpop.f32.mrb[0].mxu0
        %4037 = vdwg.mxu0
        %4038 = vmatprep.subr.bf16.mxu0 %v2907
        %4039 = vmatpush1.bf16.msra.mxu0 %v2906
        %4040 = vmatprep.subr.bf16.mxu0 %v2909
        %4041 = vmatpush1.bf16.msra.mxu0 %v2908
        %4042 = vmatprep.subr.bf16.mxu0 %v2911
        %4043 = vmatpush1.bf16.msra.mxu0 %v2910
        %4044 = vmatprep.subr.bf16.mxu0 %v2913
        %4045 = vmatpush1.bf16.msra.mxu0 %v2912
        %4046 = vmatprep.subr.bf16.mxu0 %v2915
        %4047 = vmatpush1.bf16.msra.mxu0 %v2914
        %4048 = vmatprep.subr.bf16.mxu0 %v2917
        %4049 = vmatpush1.bf16.msra.mxu0 %v2916
        %4050 = vmatprep.subr.bf16.mxu0 %v2919
        %4051 = vmatpush1.bf16.msra.mxu0 %v2918
        %4052 = vmatprep.subr.bf16.mxu0 %v2921
        %4053 = vmatpush1.bf16.msra.mxu0 %v2920
        %4054 = vmatprep.subr.bf16.mxu0 %v2923
        %4055 = vmatpush1.bf16.msra.mxu0 %v2922
        %4056 = vmatprep.subr.bf16.mxu0 %v2925
        %4057 = vmatpush1.bf16.msra.mxu0 %v2924
        %4058 = vmatprep.subr.bf16.mxu0 %v2927
        %4059 = vmatpush1.bf16.msra.mxu0 %v2926
        %4060 = vmatprep.subr.bf16.mxu0 %v2929
        %4061 = vmatpush1.bf16.msra.mxu0 %v2928
        %4062 = vmatprep.subr.bf16.mxu0 %v2931
        %4063 = vmatpush1.bf16.msra.mxu0 %v2930
        %4064 = vmatprep.subr.bf16.mxu0 %v2933
        %4065 = vmatpush1.bf16.msra.mxu0 %v2932
        %4066 = vmatprep.subr.bf16.mxu0 %v2935
        %4067 = vmatpush1.bf16.msra.mxu0 %v2934
        %4068 = vmatprep.subr.bf16.mxu0 %v2937
        %4069 = vmatpush1.bf16.msra.mxu0 %v2936
        %4070 = vmatprep.mubr.bf16.mxu0 %v947
        %4071 = vmatmul.mubr.bf16.gmra.mrb[0].mxu0 %v946
        %v4072 = vpop.f32.mrb[0].mxu0
        %v4073 = vadd.f32 %v4032, %v4072
        %v4074 = vpop.f32.mrb[0].mxu0
        %v4075 = vadd.f32 %v4034, %v4074
        %v4076 = vpop.f32.mrb[0].mxu0
        %v4077 = vpop.f32.mrb[0].mxu0
        %4078 = vdwg.mxu0
        %4079 = vmatprep.subr.bf16.mxu0 %v2939
        %4080 = vmatpush1.bf16.msra.mxu0 %v2938
        %4081 = vmatprep.subr.bf16.mxu0 %v2941
        %4082 = vmatpush1.bf16.msra.mxu0 %v2940
        %4083 = vmatprep.subr.bf16.mxu0 %v2943
        %4084 = vmatpush1.bf16.msra.mxu0 %v2942
        %4085 = vmatprep.subr.bf16.mxu0 %v2945
        %4086 = vmatpush1.bf16.msra.mxu0 %v2944
        %4087 = vmatprep.subr.bf16.mxu0 %v2947
        %4088 = vmatpush1.bf16.msra.mxu0 %v2946
        %4089 = vmatprep.subr.bf16.mxu0 %v2949
        %4090 = vmatpush1.bf16.msra.mxu0 %v2948
        %4091 = vmatprep.subr.bf16.mxu0 %v2951
        %4092 = vmatpush1.bf16.msra.mxu0 %v2950
        %4093 = vmatprep.subr.bf16.mxu0 %v2953
        %4094 = vmatpush1.bf16.msra.mxu0 %v2952
        %4095 = vmatprep.subr.bf16.mxu0 %v2955
        %4096 = vmatpush1.bf16.msra.mxu0 %v2954
        %4097 = vmatprep.subr.bf16.mxu0 %v2957
        %4098 = vmatpush1.bf16.msra.mxu0 %v2956
        %4099 = vmatprep.subr.bf16.mxu0 %v2959
        %4100 = vmatpush1.bf16.msra.mxu0 %v2958
        %4101 = vmatprep.subr.bf16.mxu0 %v2961
        %4102 = vmatpush1.bf16.msra.mxu0 %v2960
        %4103 = vmatprep.subr.bf16.mxu0 %v2963
        %4104 = vmatpush1.bf16.msra.mxu0 %v2962
        %4105 = vmatprep.subr.bf16.mxu0 %v2965
        %4106 = vmatpush1.bf16.msra.mxu0 %v2964
        %4107 = vmatprep.subr.bf16.mxu0 %v2967
        %4108 = vmatpush1.bf16.msra.mxu0 %v2966
        %4109 = vmatprep.subr.bf16.mxu0 %v2969
        %4110 = vmatpush1.bf16.msra.mxu0 %v2968
        %4111 = vmatprep.mubr.bf16.mxu0 %v949
        %4112 = vmatmul.mubr.bf16.gmra.mrb[0].mxu0 %v948
        %v4113 = vpop.f32.mrb[0].mxu0
        %v4114 = vadd.f32 %v4073, %v4113
        %v4115 = vpop.f32.mrb[0].mxu0
        %v4116 = vadd.f32 %v4075, %v4115
        %v4117 = vpop.f32.mrb[0].mxu0
        %v4118 = vpop.f32.mrb[0].mxu0
        %4119 = vdwg.mxu0
        %4120 = vmatprep.subr.bf16.mxu0 %v2971
        %4121 = vmatpush1.bf16.msra.mxu0 %v2970
        %4122 = vmatprep.subr.bf16.mxu0 %v2973
        %4123 = vmatpush1.bf16.msra.mxu0 %v2972
        %4124 = vmatprep.subr.bf16.mxu0 %v2975
        %4125 = vmatpush1.bf16.msra.mxu0 %v2974
        %4126 = vmatprep.subr.bf16.mxu0 %v2977
        %4127 = vmatpush1.bf16.msra.mxu0 %v2976
        %4128 = vmatprep.subr.bf16.mxu0 %v2979
        %4129 = vmatpush1.bf16.msra.mxu0 %v2978
        %4130 = vmatprep.subr.bf16.mxu0 %v2981
        %4131 = vmatpush1.bf16.msra.mxu0 %v2980
        %4132 = vmatprep.subr.bf16.mxu0 %v2983
        %4133 = vmatpush1.bf16.msra.mxu0 %v2982
        %4134 = vmatprep.subr.bf16.mxu0 %v2985
        %4135 = vmatpush1.bf16.msra.mxu0 %v2984
        %4136 = vmatprep.subr.bf16.mxu0 %v2987
        %4137 = vmatpush1.bf16.msra.mxu0 %v2986
        %4138 = vmatprep.subr.bf16.mxu0 %v2989
        %4139 = vmatpush1.bf16.msra.mxu0 %v2988
        %4140 = vmatprep.subr.bf16.mxu0 %v2991
        %4141 = vmatpush1.bf16.msra.mxu0 %v2990
        %4142 = vmatprep.subr.bf16.mxu0 %v2993
        %4143 = vmatpush1.bf16.msra.mxu0 %v2992
        %4144 = vmatprep.subr.bf16.mxu0 %v2995
        %4145 = vmatpush1.bf16.msra.mxu0 %v2994
        %4146 = vmatprep.subr.bf16.mxu0 %v2997
        %4147 = vmatpush1.bf16.msra.mxu0 %v2996
        %4148 = vmatprep.subr.bf16.mxu0 %v2999
        %4149 = vmatpush1.bf16.msra.mxu0 %v2998
        %4150 = vmatprep.subr.bf16.mxu0 %v3001
        %4151 = vmatpush1.bf16.msra.mxu0 %v3000
        %4152 = vmatprep.mubr.bf16.mxu0 %v951
        %4153 = vmatmul.mubr.bf16.gmra.mrb[0].mxu0 %v950
        %v4154 = vpop.f32.mrb[0].mxu0
        %v4155 = vadd.f32 %v4114, %v4154
        %v4156 = vpop.f32.mrb[0].mxu0
        %v4157 = vadd.f32 %v4116, %v4156
        %v4158 = vpop.f32.mrb[0].mxu0
        %v4159 = vpop.f32.mrb[0].mxu0
        %4160 = vdwg.mxu0
        %4161 = vmatprep.subr.bf16.mxu0 %v3003
        %4162 = vmatpush1.bf16.msra.mxu0 %v3002
        %4163 = vmatprep.subr.bf16.mxu0 %v3005
        %4164 = vmatpush1.bf16.msra.mxu0 %v3004
        %4165 = vmatprep.subr.bf16.mxu0 %v3007
        %4166 = vmatpush1.bf16.msra.mxu0 %v3006
        %4167 = vmatprep.subr.bf16.mxu0 %v3009
        %4168 = vmatpush1.bf16.msra.mxu0 %v3008
        %4169 = vmatprep.subr.bf16.mxu0 %v3011
        %4170 = vmatpush1.bf16.msra.mxu0 %v3010
        %4171 = vmatprep.subr.bf16.mxu0 %v3013
        %4172 = vmatpush1.bf16.msra.mxu0 %v3012
        %4173 = vmatprep.subr.bf16.mxu0 %v3015
        %4174 = vmatpush1.bf16.msra.mxu0 %v3014
        %4175 = vmatprep.subr.bf16.mxu0 %v3017
        %4176 = vmatpush1.bf16.msra.mxu0 %v3016
        %4177 = vmatprep.subr.bf16.mxu0 %v3019
        %4178 = vmatpush1.bf16.msra.mxu0 %v3018
        %4179 = vmatprep.subr.bf16.mxu0 %v3021
        %4180 = vmatpush1.bf16.msra.mxu0 %v3020
        %4181 = vmatprep.subr.bf16.mxu0 %v3023
        %4182 = vmatpush1.bf16.msra.mxu0 %v3022
        %4183 = vmatprep.subr.bf16.mxu0 %v3025
        %4184 = vmatpush1.bf16.msra.mxu0 %v3024
        %4185 = vmatprep.subr.bf16.mxu0 %v3027
        %4186 = vmatpush1.bf16.msra.mxu0 %v3026
        %4187 = vmatprep.subr.bf16.mxu0 %v3029
        %4188 = vmatpush1.bf16.msra.mxu0 %v3028
        %4189 = vmatprep.subr.bf16.mxu0 %v3031
        %4190 = vmatpush1.bf16.msra.mxu0 %v3030
        %4191 = vmatprep.subr.bf16.mxu0 %v3033
        %4192 = vmatpush1.bf16.msra.mxu0 %v3032
        %4193 = vmatprep.mubr.bf16.mxu0 %v953
        %4194 = vmatmul.mubr.bf16.gmra.mrb[0].mxu0 %v952
        %v4195 = vpop.f32.mrb[0].mxu0
        %v4196 = vadd.f32 %v4155, %v4195
        %v4197 = vpop.f32.mrb[0].mxu0
        %v4198 = vadd.f32 %v4157, %v4197
        %v4199 = vpop.f32.mrb[0].mxu0
        %v4200 = vpop.f32.mrb[0].mxu0
        %4201 = vdwg.mxu0
        %v4202 = vmax.f32 %v4196, 0.0
        %v4203 = vmax.f32 %v4198, 0.0
        %4204 = vst [vmem:[%s325] sm:$0xff] %v4202
        %4205 = vst [vmem:[%s325 + $0x8] sm:$0xff] %v4203
        %v4206 = vpack.c.bf16 %v4202, %v4202
        %v4207 = vpack.c.bf16 %v4203, %v4203
        %v4208 = vld [vmem:[#allocation8] sm:$0xf]
        %v4209 = vld [vmem:[#allocation8 + $0x4] sm:$0xf]
        %v4210 = vld [vmem:[#allocation8 + $0x8] sm:$0xf]
        %v4211 = vld [vmem:[#allocation8 + $0xc] sm:$0xf]
        %v4212 = vld [vmem:[#allocation8 + $0x10] sm:$0xf]
        %v4213 = vld [vmem:[#allocation8 + $0x14] sm:$0xf]
        %v4214 = vld [vmem:[#allocation8 + $0x18] sm:$0xf]
        %v4215 = vld [vmem:[#allocation8 + $0x1c] sm:$0xf]
        %v4216 = vld [vmem:[#allocation8 + $0x20] sm:$0xf]
        %v4217 = vld [vmem:[#allocation8 + $0x24] sm:$0xf]
        %v4218 = vld [vmem:[#allocation8 + $0x28] sm:$0xf]
        %v4219 = vld [vmem:[#allocation8 + $0x2c] sm:$0xf]
        %v4220 = vld [vmem:[#allocation8 + $0x30] sm:$0xf]
        %v4221 = vld [vmem:[#allocation8 + $0x34] sm:$0xf]
        %v4222 = vld [vmem:[#allocation8 + $0x38] sm:$0xf]
        %v4223 = vld [vmem:[#allocation8 + $0x3c] sm:$0xf]
        %v4224 = vld [vmem:[#allocation8 + $0x40] sm:$0xf]
        %v4225 = vld [vmem:[#allocation8 + $0x44] sm:$0xf]
        %v4226 = vld [vmem:[#allocation8 + $0x48] sm:$0xf]
        %v4227 = vld [vmem:[#allocation8 + $0x4c] sm:$0xf]
        %v4228 = vld [vmem:[#allocation8 + $0x50] sm:$0xf]
        %v4229 = vld [vmem:[#allocation8 + $0x54] sm:$0xf]
        %v4230 = vld [vmem:[#allocation8 + $0x58] sm:$0xf]
        %v4231 = vld [vmem:[#allocation8 + $0x5c] sm:$0xf]
        %v4232 = vld [vmem:[#allocation8 + $0x60] sm:$0xf]
        %v4233 = vld [vmem:[#allocation8 + $0x64] sm:$0xf]
        %v4234 = vld [vmem:[#allocation8 + $0x68] sm:$0xf]
        %v4235 = vld [vmem:[#allocation8 + $0x6c] sm:$0xf]
        %v4236 = vld [vmem:[#allocation8 + $0x70] sm:$0xf]
        %v4237 = vld [vmem:[#allocation8 + $0x74] sm:$0xf]
        %v4238 = vld [vmem:[#allocation8 + $0x78] sm:$0xf]
        %v4239 = vld [vmem:[#allocation8 + $0x7c] sm:$0xf]
        %v4240 = vld [vmem:[#allocation10] sm:$0x1]
        %v4242 = vlaneseq
        %v4243 = vshrl.u32 %v4242, 7
        %v4244 = vsub.s32 0, %v4243
        %v4245 = vrot.slane %v4240, %v4244
        %v4279 = vunpack.c.l.b16 %v4208
        %v4280 = vunpack.c.l.b16 %v4209
        %v4281 = vunpack.c.l.b16 %v4210
        %v4282 = vunpack.c.l.b16 %v4211
        %v4283 = vunpack.c.l.b16 %v4212
        %v4284 = vunpack.c.l.b16 %v4213
        %v4285 = vunpack.c.l.b16 %v4214
        %v4286 = vunpack.c.l.b16 %v4215
        %v4287 = vunpack.c.l.b16 %v4216
        %v4288 = vunpack.c.l.b16 %v4217
        %v4289 = vunpack.c.l.b16 %v4218
        %v4290 = vunpack.c.l.b16 %v4219
        %v4291 = vunpack.c.l.b16 %v4220
        %v4292 = vunpack.c.l.b16 %v4221
        %v4293 = vunpack.c.l.b16 %v4222
        %v4294 = vunpack.c.l.b16 %v4223
        %v4295 = vunpack.c.l.b16 %v4224
        %v4296 = vunpack.c.l.b16 %v4225
        %v4297 = vunpack.c.l.b16 %v4226
        %v4298 = vunpack.c.l.b16 %v4227
        %v4299 = vunpack.c.l.b16 %v4228
        %v4300 = vunpack.c.l.b16 %v4229
        %v4301 = vunpack.c.l.b16 %v4230
        %v4302 = vunpack.c.l.b16 %v4231
        %v4303 = vunpack.c.l.b16 %v4232
        %v4304 = vunpack.c.l.b16 %v4233
        %v4305 = vunpack.c.l.b16 %v4234
        %v4306 = vunpack.c.l.b16 %v4235
        %v4307 = vunpack.c.l.b16 %v4236
        %v4308 = vunpack.c.l.b16 %v4237
        %v4309 = vunpack.c.l.b16 %v4238
        %v4310 = vunpack.c.l.b16 %v4239
        %v4311 = vpack.c.b16 %v4280, %v4279
        %v4312 = vpack.c.b16 %v4282, %v4281
        %v4313 = vpack.c.b16 %v4284, %v4283
        %v4314 = vpack.c.b16 %v4286, %v4285
        %v4315 = vpack.c.b16 %v4288, %v4287
        %v4316 = vpack.c.b16 %v4290, %v4289
        %v4317 = vpack.c.b16 %v4292, %v4291
        %v4318 = vpack.c.b16 %v4294, %v4293
        %v4319 = vpack.c.b16 %v4296, %v4295
        %v4320 = vpack.c.b16 %v4298, %v4297
        %v4321 = vpack.c.b16 %v4300, %v4299
        %v4322 = vpack.c.b16 %v4302, %v4301
        %v4323 = vpack.c.b16 %v4304, %v4303
        %v4324 = vpack.c.b16 %v4306, %v4305
        %v4325 = vpack.c.b16 %v4308, %v4307
        %v4326 = vpack.c.b16 %v4310, %v4309
        %4343 = vmatprep.subr.bf16.mxu0 0
        %4344 = vmatpush1.bf16.msra.mxu0 %v4311
        %4345 = vmatprep.subr.bf16.mxu0 0
        %4346 = vmatpush1.bf16.msra.mxu0 %v4312
        %4347 = vmatprep.subr.bf16.mxu0 0
        %4348 = vmatpush1.bf16.msra.mxu0 %v4313
        %4349 = vmatprep.subr.bf16.mxu0 0
        %4350 = vmatpush1.bf16.msra.mxu0 %v4314
        %4351 = vmatprep.subr.bf16.mxu0 0
        %4352 = vmatpush1.bf16.msra.mxu0 %v4315
        %4353 = vmatprep.subr.bf16.mxu0 0
        %4354 = vmatpush1.bf16.msra.mxu0 %v4316
        %4355 = vmatprep.subr.bf16.mxu0 0
        %4356 = vmatpush1.bf16.msra.mxu0 %v4317
        %4357 = vmatprep.subr.bf16.mxu0 0
        %4358 = vmatpush1.bf16.msra.mxu0 %v4318
        %4359 = vmatprep.subr.bf16.mxu0 0
        %4360 = vmatpush1.bf16.msra.mxu0 %v4319
        %4361 = vmatprep.subr.bf16.mxu0 0
        %4362 = vmatpush1.bf16.msra.mxu0 %v4320
        %4363 = vmatprep.subr.bf16.mxu0 0
        %4364 = vmatpush1.bf16.msra.mxu0 %v4321
        %4365 = vmatprep.subr.bf16.mxu0 0
        %4366 = vmatpush1.bf16.msra.mxu0 %v4322
        %4367 = vmatprep.subr.bf16.mxu0 0
        %4368 = vmatpush1.bf16.msra.mxu0 %v4323
        %4369 = vmatprep.subr.bf16.mxu0 0
        %4370 = vmatpush1.bf16.msra.mxu0 %v4324
        %4371 = vmatprep.subr.bf16.mxu0 0
        %4372 = vmatpush1.bf16.msra.mxu0 %v4325
        %4373 = vmatprep.subr.bf16.mxu0 0
        %4374 = vmatpush1.bf16.msra.mxu0 %v4326
        %4375 = vmatprep.mubr.bf16.mxu0 %v4207
        %4376 = vmatmul.mubr.bf16.gmra.mrb[0].mxu0 %v4206
        %v4377 = vpop.f32.mrb[0].mxu0
        %v4378 = vadd.f32 %v4245, %v4377
        %v4379 = vpop.f32.mrb[0].mxu0
        %v4380 = vpop.f32.mrb[0].mxu0
        %v4381 = vpop.f32.mrb[0].mxu0
        %4382 = vdwg.mxu0
        %4383 = vmax.xlane.f32.xlu0 %v4378
        %v4384 = vpop.xlane.xlu0 %4383
        %v4385 = vsub.f32 %v4378, %v4384
        %v4386 = vmul.f32 %v4385, 1.442695
        %v4387 = vpow.pop %v4386
        %4388 = vadd.xlane.f32.xlu0 %v4387
        %v4389 = vpop.xlane.xlu0 %4388
        %v4390 = vlog2.pop %v4389
        %v4391 = vmul.f32 %v4390, 0.6931472
        %v4392 = vsub.f32 %v4385, %v4391
        %4393 = vst [vmem:[%s332] sm:$0xff] %v4392
        %s4394 = sand.u32 %s147, 1
        %s4395 = scalar_lea.sflag [#allocation4], %s4394
        %s4396 = sand.u32 %s147, 1
        %s4397 = smul.addr %s4396, 16
        %s4398 = scalar_lea.vmem [#allocation11], %s4397
        %s4399 = sand.u32 %s173, 1
        %s4400 = scalar_lea.sflag [#allocation13], %s4399
        %s4401 = sand.u32 %s173, 1
        %s4402 = smul.addr %s4401, 8
        %s4403 = scalar_lea.vmem [#allocation12], %s4402
        // Predicated region
        $region61: #{tpu_custom_call.1} parent=39 // pred_check
          %p4404 = pneg %p157
        $region62: #{tpu_custom_call.1} parent=39 // pred_check_branch
          %4406 = sbr.rel (%p4404) target = $region64
        $region63: #{tpu_custom_call.1} parent=39 // pred_region
          %s4408 = ssub.s32 256, 256
          %4409 = vsyncadd %s4395, %s4408
          %s4410 = smul.addr %s29, 2
          %s4411 = smul.addr %s4410, 128
          %s4412 = scalar_lea.hbm %s5, %s4411
          %s4414 = sshll.u32 %s4398, 4
          %s4415 = int_to_ptr.vmem [resolvable:$true] %s4414
          %4417 = dma.vmem_to_hbm [thread:$0]  %s4415, 256, %s4412, %s4395
        $region64: #{tpu_custom_call.1} parent=39 // pred_fallthru
          _
        // Predicated region
        $region65: #{tpu_custom_call.1} parent=39 // pred_check
          %p4418 = pneg %p183
        $region66: #{tpu_custom_call.1} parent=39 // pred_check_branch
          %4420 = sbr.rel (%p4418) target = $region68
        $region67: #{tpu_custom_call.1} parent=39 // pred_region
          %s4422 = ssub.s32 128, 128
          %4423 = vsyncadd %s4400, %s4422
          %s4424 = smul.addr %s29, 128
          %s4425 = scalar_lea.hbm %s6, %s4424
          %s4427 = sshll.u32 %s4403, 4
          %s4428 = int_to_ptr.vmem [resolvable:$true] %s4427
          %4430 = dma.vmem_to_hbm [thread:$0]  %s4428, 128, %s4425, %s4400
        $region68: #{tpu_custom_call.1} parent=39 // pred_fallthru
          _
      $region40: #{tpu_custom_call.1} parent=5 // pred_fallthru
        _
      %p4431 = scmp.le.s32.totalorder 2, %s24
      // Predicated region
      $region69: #{tpu_custom_call.1} parent=5 // pred_check
        %p4432 = pneg %p4431
      $region70: #{tpu_custom_call.1} parent=5 // pred_check_branch
        %4434 = sbr.rel (%p4432) target = $region72
      $region71: #{tpu_custom_call.1} parent=5 // pred_region
        %s4435 = ssub.s32 %s24, 2
        // Predicated region
        $region73: #{tpu_custom_call.1} parent=71 // pred_check
          %p4436 = pneg %p163
        $region74: #{tpu_custom_call.1} parent=71 // pred_check_branch
          %4438 = sbr.rel (%p4436) target = $region76
        $region75: #{tpu_custom_call.1} parent=71 // pred_region
          %s4439 = sand.u32 %s148, 1
          %s4440 = scalar_lea.sflag [#allocation4], %s4439
          %s4441 = sand.u32 %s148, 1
          %s4442 = smul.addr %s4441, 16
          %s4443 = scalar_lea.vmem [#allocation11], %s4442
          %4444 = dma.done %s4440, 256
        $region76: #{tpu_custom_call.1} parent=71 // pred_fallthru
          _
        // Predicated region
        $region77: #{tpu_custom_call.1} parent=71 // pred_check
          %p4445 = pneg %p189
        $region78: #{tpu_custom_call.1} parent=71 // pred_check_branch
          %4447 = sbr.rel (%p4445) target = $region80
        $region79: #{tpu_custom_call.1} parent=71 // pred_region
          %s4448 = sand.u32 %s174, 1
          %s4449 = scalar_lea.sflag [#allocation13], %s4448
          %s4450 = sand.u32 %s174, 1
          %s4451 = smul.addr %s4450, 8
          %s4452 = scalar_lea.vmem [#allocation12], %s4451
          %4453 = dma.done %s4449, 128
        $region80: #{tpu_custom_call.1} parent=71 // pred_fallthru
          _
      $region72: #{tpu_custom_call.1} parent=5 // pred_fallthru
        _
    $region6: #{tpu_custom_call.1} parent=1 // loop_footer
      %s28 = sadd.s32 1, %s24
    $region7: #{tpu_custom_call.1} parent=1 // loop_footer_branch
      %23 = sbr.rel target = $region3
    $region8: #{tpu_custom_call.1} parent=1 // loop_exit
      _
    %4454 = vsyncpa [#allocation3], 1
    %s4455 = scalar_lea.sflag [#allocation3], 1
    %4456 = vsyncpa %s4455, 1
    %4457 = vsyncpa [#allocation6], 1
    %4458 = vsyncpa [#allocation9], 1
    %4459 = vsyncpa [#allocation4], 1
    %s4460 = scalar_lea.sflag [#allocation4], 1
    %4461 = vsyncpa %s4460, 1
    %4462 = vsyncpa [#allocation13], 1
    %s4463 = scalar_lea.sflag [#allocation13], 1
    %4464 = vsyncpa %s4463, 1

// kernel: tpu_custom_call.1
$region0: #{tpu_custom_call.1}
  #allocation0 [shape = 'u32[]', space=smem, size = 0x4, offset = 0x4, fixed_abs, tag = 'smem constant byte address 0x4 - core index']
  #allocation1 [shape = 'u32[144,128]{1,0:T(1,128)}', space=vmem, size = 0x12000, scoped, tag = 'internal scratch']
  %s0 = inlined_call_operand.hbm [shape: bf16[20,4096], index: 0, kind: input, shape index: {}]
  %s1 = inlined_call_operand.hbm [shape: bf16[4096,256], index: 1, kind: input, shape index: {}]
  %s2 = inlined_call_operand.hbm [shape: f32[1,256], index: 2, kind: input, shape index: {}]
  %s3 = inlined_call_operand.hbm [shape: bf16[256,128], index: 3, kind: input, shape index: {}]
  %s4 = inlined_call_operand.hbm [shape: f32[1,128], index: 4, kind: input, shape index: {}]
  %s5 = inlined_call_operand.hbm [shape: f32[20,256], index: 5, kind: output, shape index: {0}]
  %s6 = inlined_call_operand.hbm [shape: f32[20,128], index: 6, kind: output, shape index: {1}]
  %7 = xla_tuple %s5, %s6
  %s8 = sld [smem:[#allocation0]]
  $region81: #{tpu_custom_call.1} parent=0
    _
  %s10 = ssub.s32 1, %s8
  %s11 = scalar_select 0, %s10, %s8
  $region1: #{tpu_custom_call.1} parent=0
    #allocation2 [shape = 'u8[131072]{0}', space=vmem, size = 0x20000, scoped, tag = 'input window, operand 0']
    #allocation3 [shape = 's32[2]{0}', space=sflag, size = 0x8, scoped, tag = 'scoped memory for tpu_custom_call.1']
    #allocation4 [shape = 's32[2]{0}', space=sflag, size = 0x8, scoped, tag = 'scoped memory for tpu_custom_call.1']
    #allocation5 [shape = 'u8[2097152]{0}', space=vmem, size = 0x200000, scoped, tag = 'input window, operand 1, single buffered']
    #allocation6 [shape = 's32[1]{0}', space=sflag, size = 0x4, scoped, tag = 'scoped memory for tpu_custom_call.1']
    #allocation7 [shape = 'u8[1024]{0}', space=vmem, size = 0x400, scoped, tag = 'input window, operand 2, single buffered']
    #allocation8 [shape = 'u8[65536]{0}', space=vmem, size = 0x10000, scoped, tag = 'input window, operand 3, single buffered']
    #allocation9 [shape = 's32[1]{0}', space=sflag, size = 0x4, scoped, tag = 'scoped memory for tpu_custom_call.1']
    #allocation10 [shape = 'u8[512]{0}', space=vmem, size = 0x400, scoped, tag = 'input window, operand 4, single buffered']
    #allocation11 [shape = 'u8[16384]{0}', space=vmem, size = 0x4000, scoped, tag = 'output window, operand 0']
    #allocation12 [shape = 'u8[8192]{0}', space=vmem, size = 0x2000, scoped, tag = 'output window, operand 1']
    #allocation13 [shape = 's32[2]{0}', space=sflag, size = 0x8, scoped, tag = 'scoped memory for tpu_custom_call.1']
    %12 = vsyncpa [#allocation3], 0
    %s13 = scalar_lea.sflag [#allocation3], 1
    %14 = vsyncpa %s13, 0
    %15 = vsyncpa [#allocation6], 0
    %16 = vsyncpa [#allocation9], 0
    %17 = vsyncpa [#allocation4], 0
    %s18 = scalar_lea.sflag [#allocation4], 1
    %19 = vsyncpa %s18, 0
    %20 = vsyncpa [#allocation13], 0
    %s21 = scalar_lea.sflag [#allocation13], 1
    %22 = vsyncpa %s21, 0
    loop: start=0, step=1, limit=5
    $region2: #{tpu_custom_call.1} parent=1 // loop_pre_header
      _
    $region3: #{tpu_custom_call.1} parent=1 // loop_header
      %s24 = sphi 0, %s28
      %p25 = scmp.ge.s32.totalorder %s24, 5
      %s34 = sphi 0, %s36
      %s37 = sphi 0, %s34
      %s38 = sphi 0, %s37
      %s54 = sphi 0, %s38
      %s58 = sphi 0, %s58
      %s60 = sphi 0, %s58
      %s61 = sphi 0, %s60
      %s75 = sphi 0, %s61
      %s79 = sphi 0, %s79
      %s81 = sphi 0, %s79
      %s82 = sphi 0, %s81
      %s96 = sphi 0, %s82
      %s100 = sphi 0, %s100
      %s102 = sphi 0, %s100
      %s103 = sphi 0, %s102
      %s117 = sphi 0, %s103
      %s121 = sphi 0, %s121
      %s123 = sphi 0, %s121
      %s124 = sphi 0, %s123
      %s138 = sphi 0, %s124
      %s144 = sphi 0, %s146
      %s147 = sphi 0, %s144
      %s148 = sphi 0, %s147
      %s164 = sphi 0, %s148
      %s170 = sphi 0, %s172
      %s173 = sphi 0, %s170
      %s174 = sphi 0, %s173
      %s190 = sphi 0, %s174
    $region4: #{tpu_custom_call.1} parent=1 // loop_header_branch
      %27 = sbr.rel (%p25) target = $region8
    $region5: #{tpu_custom_call.1} parent=1 // loop_body
      %s29 = ssub.s32 %s24, 1
      %s30 = ssub.s32 %s24, 2
      %s31 = sadd.s32 %s24, 1
      %s32 = ssub.s32 %s24, %s31
      %p33 = scmp.eq.s32.totalorder %s32, 0
      %s35 = sadd.s32 %s34, 1
      %s36 = scalar_select %p33, %s34, %s35
      %p39 = pneg %p33
      %p40 = scmp.eq.s32.totalorder %s24, 2
      %p41 = por %p39, %p40
      %p42 = scmp.ne.s32.totalorder %s34, %s37
      %p43 = scmp.eq.s32.totalorder %s24, 0
      %p44 = por %p42, %p43
      %p45 = scmp.ne.s32.totalorder %s34, %s37
      %p46 = scmp.eq.s32.totalorder %s29, 2
      %p47 = por %p45, %p46
      %p48 = scmp.ne.s32.totalorder %s37, %s38
      %p49 = scmp.eq.s32.totalorder %s29, 0
      %p50 = por %p48, %p49
      %p51 = scmp.ne.s32.totalorder %s37, %s38
      %p52 = scmp.eq.s32.totalorder %s30, 2
      %p53 = por %p51, %p52
      %p55 = scmp.ne.s32.totalorder %s38, %s54
      %p56 = scmp.eq.s32.totalorder %s30, 0
      %p57 = por %p55, %p56
      %s59 = sadd.s32 %s58, 1
      %p62 = scmp.eq.s32.totalorder %s24, 2
      %p63 = scmp.ne.s32.totalorder %s58, %s60
      %p64 = scmp.eq.s32.totalorder %s24, 0
      %p65 = por %p63, %p64
      %p66 = scmp.ne.s32.totalorder %s58, %s60
      %p67 = scmp.eq.s32.totalorder %s29, 2
      %p68 = por %p66, %p67
      %p69 = scmp.ne.s32.totalorder %s60, %s61
      %p70 = scmp.eq.s32.totalorder %s29, 0
      %p71 = por %p69, %p70
      %p72 = scmp.ne.s32.totalorder %s60, %s61
      %p73 = scmp.eq.s32.totalorder %s30, 2
      %p74 = por %p72, %p73
      %p76 = scmp.ne.s32.totalorder %s61, %s75
      %p77 = scmp.eq.s32.totalorder %s30, 0
      %p78 = por %p76, %p77
      %s80 = sadd.s32 %s79, 1
      %p83 = scmp.eq.s32.totalorder %s24, 2
      %p84 = scmp.ne.s32.totalorder %s79, %s81
      %p85 = scmp.eq.s32.totalorder %s24, 0
      %p86 = por %p84, %p85
      %p87 = scmp.ne.s32.totalorder %s79, %s81
      %p88 = scmp.eq.s32.totalorder %s29, 2
      %p89 = por %p87, %p88
      %p90 = scmp.ne.s32.totalorder %s81, %s82
      %p91 = scmp.eq.s32.totalorder %s29, 0
      %p92 = por %p90, %p91
      %p93 = scmp.ne.s32.totalorder %s81, %s82
      %p94 = scmp.eq.s32.totalorder %s30, 2
      %p95 = por %p93, %p94
      %p97 = scmp.ne.s32.totalorder %s82, %s96
      %p98 = scmp.eq.s32.totalorder %s30, 0
      %p99 = por %p97, %p98
      %s101 = sadd.s32 %s100, 1
      %p104 = scmp.eq.s32.totalorder %s24, 2
      %p105 = scmp.ne.s32.totalorder %s100, %s102
      %p106 = scmp.eq.s32.totalorder %s24, 0
      %p107 = por %p105, %p106
      %p108 = scmp.ne.s32.totalorder %s100, %s102
      %p109 = scmp.eq.s32.totalorder %s29, 2
      %p110 = por %p108, %p109
      %p111 = scmp.ne.s32.totalorder %s102, %s103
      %p112 = scmp.eq.s32.totalorder %s29, 0
      %p113 = por %p111, %p112
      %p114 = scmp.ne.s32.totalorder %s102, %s103
      %p115 = scmp.eq.s32.totalorder %s30, 2
      %p116 = por %p114, %p115
      %p118 = scmp.ne.s32.totalorder %s103, %s117
      %p119 = scmp.eq.s32.totalorder %s30, 0
      %p120 = por %p118, %p119
      %s122 = sadd.s32 %s121, 1
      %p125 = scmp.eq.s32.totalorder %s24, 2
      %p126 = scmp.ne.s32.totalorder %s121, %s123
      %p127 = scmp.eq.s32.totalorder %s24, 0
      %p128 = por %p126, %p127
      %p129 = scmp.ne.s32.totalorder %s121, %s123
      %p130 = scmp.eq.s32.totalorder %s29, 2
      %p131 = por %p129, %p130
      %p132 = scmp.ne.s32.totalorder %s123, %s124
      %p133 = scmp.eq.s32.totalorder %s29, 0
      %p134 = por %p132, %p133
      %p135 = scmp.ne.s32.totalorder %s123, %s124
      %p136 = scmp.eq.s32.totalorder %s30, 2
      %p137 = por %p135, %p136
      %p139 = scmp.ne.s32.totalorder %s124, %s138
      %p140 = scmp.eq.s32.totalorder %s30, 0
      %p141 = por %p139, %p140
      %s142 = ssub.s32 %s24, %s31
      %p143 = scmp.eq.s32.totalorder %s142, 0
      %s145 = sadd.s32 %s144, 1
      %s146 = scalar_select %p143, %s144, %s145
      %p149 = pneg %p143
      %p150 = scmp.eq.s32.totalorder %s24, 2
      %p151 = por %p149, %p150
      %p152 = scmp.ne.s32.totalorder %s144, %s147
      %p153 = scmp.eq.s32.totalorder %s24, 0
      %p154 = por %p152, %p153
      %p155 = scmp.ne.s32.totalorder %s144, %s147
      %p156 = scmp.eq.s32.totalorder %s29, 2
      %p157 = por %p155, %p156
      %p158 = scmp.ne.s32.totalorder %s147, %s148
      %p159 = scmp.eq.s32.totalorder %s29, 0
      %p160 = por %p158, %p159
      %p161 = scmp.ne.s32.totalorder %s147, %s148
      %p162 = scmp.eq.s32.totalorder %s30, 2
      %p163 = por %p161, %p162
      %p165 = scmp.ne.s32.totalorder %s148, %s164
      %p166 = scmp.eq.s32.totalorder %s30, 0
      %p167 = por %p165, %p166
      %s168 = ssub.s32 %s24, %s31
      %p169 = scmp.eq.s32.totalorder %s168, 0
      %s171 = sadd.s32 %s170, 1
      %s172 = scalar_select %p169, %s170, %s171
      %p175 = pneg %p169
      %p176 = scmp.eq.s32.totalorder %s24, 2
      %p177 = por %p175, %p176
      %p178 = scmp.ne.s32.totalorder %s170, %s173
      %p179 = scmp.eq.s32.totalorder %s24, 0
      %p180 = por %p178, %p179
      %p181 = scmp.ne.s32.totalorder %s170, %s173
      %p182 = scmp.eq.s32.totalorder %s29, 2
      %p183 = por %p181, %p182
      %p184 = scmp.ne.s32.totalorder %s173, %s174
      %p185 = scmp.eq.s32.totalorder %s29, 0
      %p186 = por %p184, %p185
      %p187 = scmp.ne.s32.totalorder %s173, %s174
      %p188 = scmp.eq.s32.totalorder %s30, 2
      %p189 = por %p187, %p188
      %p191 = scmp.ne.s32.totalorder %s174, %s190
      %p192 = scmp.eq.s32.totalorder %s30, 0
      %p193 = por %p191, %p192
      %p194 = scmp.le.s32.totalorder 1, %s24
      %p195 = scmp.lt.s32.totalorder %s24, 4
      %p196 = pnand %p194, %p195
      %p197 = pneg %p196
      // Predicated region
      $region9: #{tpu_custom_call.1} parent=5 // pred_check
        _
      $region10: #{tpu_custom_call.1} parent=5 // pred_check_branch
        %199 = sbr.rel (%p196) target = $region12
      $region11: #{tpu_custom_call.1} parent=5 // pred_region
        %s200 = ssub.s32 %s24, 1
        // Predicated region
        $region13: #{tpu_custom_call.1} parent=11 // pred_check
          %p201 = pneg %p71
        $region14: #{tpu_custom_call.1} parent=11 // pred_check_branch
          %203 = sbr.rel (%p201) target = $region16
        $region15: #{tpu_custom_call.1} parent=11 // pred_region
          %s205 = ssub.s32 65536, 65536
          %206 = vsyncadd [#allocation6], %s205
          %s207 = sshll.u32 [#allocation5], 4
          %s208 = int_to_ptr.vmem [resolvable:$true] %s207
          %213 = dma.hbm_to_vmem [thread:$0]  %s1, 65536, %s208, [#allocation6], 128, 128, 8
        $region16: #{tpu_custom_call.1} parent=11 // pred_fallthru
          _
        // Predicated region
        $region17: #{tpu_custom_call.1} parent=11 // pred_check
          %p214 = pneg %p92
        $region18: #{tpu_custom_call.1} parent=11 // pred_check_branch
          %216 = sbr.rel (%p214) target = $region20
        $region19: #{tpu_custom_call.1} parent=11 // pred_region
          %s218 = ssub.s32 32, 32
          %219 = vsyncadd [#allocation6], %s218
          %s221 = sshll.u32 [#allocation7], 4
          %s222 = int_to_ptr.vmem [resolvable:$true] %s221
          %224 = dma.hbm_to_vmem [thread:$0]  %s2, 32, %s222, [#allocation6]
        $region20: #{tpu_custom_call.1} parent=11 // pred_fallthru
          _
        // Predicated region
        $region21: #{tpu_custom_call.1} parent=11 // pred_check
          %p225 = pneg %p113
        $region22: #{tpu_custom_call.1} parent=11 // pred_check_branch
          %227 = sbr.rel (%p225) target = $region24
        $region23: #{tpu_custom_call.1} parent=11 // pred_region
          %s229 = ssub.s32 2048, 2048
          %230 = vsyncadd [#allocation9], %s229
          %s231 = sshll.u32 [#allocation8], 4
          %s232 = int_to_ptr.vmem [resolvable:$true] %s231
          %237 = dma.hbm_to_vmem [thread:$0]  %s3, 2048, %s232, [#allocation9], 64, 64, 4
        $region24: #{tpu_custom_call.1} parent=11 // pred_fallthru
          _
        // Predicated region
        $region25: #{tpu_custom_call.1} parent=11 // pred_check
          %p238 = pneg %p134
        $region26: #{tpu_custom_call.1} parent=11 // pred_check_branch
          %240 = sbr.rel (%p238) target = $region28
        $region27: #{tpu_custom_call.1} parent=11 // pred_region
          %s242 = ssub.s32 16, 16
          %243 = vsyncadd [#allocation9], %s242
          %s245 = sshll.u32 [#allocation10], 4
          %s246 = int_to_ptr.vmem [resolvable:$true] %s245
          %248 = dma.hbm_to_vmem [thread:$0]  %s4, 16, %s246, [#allocation9]
        $region28: #{tpu_custom_call.1} parent=11 // pred_fallthru
          _
      $region12: #{tpu_custom_call.1} parent=5 // pred_fallthru
        _
      %p249 = scmp.lt.s32.totalorder %s24, 3
      // Predicated region
      $region29: #{tpu_custom_call.1} parent=5 // pred_check
        %p250 = pneg %p249
      $region30: #{tpu_custom_call.1} parent=5 // pred_check_branch
        %252 = sbr.rel (%p250) target = $region32
      $region31: #{tpu_custom_call.1} parent=5 // pred_region
        // Predicated region
        $region33: #{tpu_custom_call.1} parent=31 // pred_check
          %p253 = pneg %p44
        $region34: #{tpu_custom_call.1} parent=31 // pred_check_branch
          %255 = sbr.rel (%p253) target = $region36
        $region35: #{tpu_custom_call.1} parent=31 // pred_region
          %s256 = sand.u32 %s34, 1
          %s257 = scalar_lea.sflag [#allocation3], %s256
          %s258 = sand.u32 %s34, 1
          %s259 = smul.addr %s258, 128
          %s260 = scalar_lea.vmem [#allocation2], %s259
          %s262 = ssub.s32 2048, 2048
          %263 = vsyncadd %s257, %s262
          %s264 = smul.addr %s24, 32
          %s265 = smul.addr %s264, 64
          %s266 = scalar_lea.hbm %s0, %s265
          %s268 = sshll.u32 %s260, 4
          %s269 = int_to_ptr.vmem [resolvable:$true] %s268
          %271 = dma.hbm_to_vmem [thread:$0]  %s266, 2048, %s269, %s257
        $region36: #{tpu_custom_call.1} parent=31 // pred_fallthru
          _
      $region32: #{tpu_custom_call.1} parent=5 // pred_fallthru
        _
      %p272 = scmp.le.s32.totalorder 1, %s24
      %p273 = scmp.lt.s32.totalorder %s24, 4
      %p274 = pnand %p272, %p273
      %p275 = pneg %p274
      // Predicated region
      $region37: #{tpu_custom_call.1} parent=5 // pred_check
        _
      $region38: #{tpu_custom_call.1} parent=5 // pred_check_branch
        %277 = sbr.rel (%p274) target = $region40
      $region39: #{tpu_custom_call.1} parent=5 // pred_region
        %s278 = ssub.s32 %s24, 1
        %s279 = sand.u32 %s37, 1
        %s280 = scalar_lea.sflag [#allocation3], %s279
        %s281 = sand.u32 %s37, 1
        %s282 = smul.addr %s281, 128
        %s283 = scalar_lea.vmem [#allocation2], %s282
        // Predicated region
        $region41: #{tpu_custom_call.1} parent=39 // pred_check
          %p284 = pneg %p50
        $region42: #{tpu_custom_call.1} parent=39 // pred_check_branch
          %286 = sbr.rel (%p284) target = $region44
        $region43: #{tpu_custom_call.1} parent=39 // pred_region
          %287 = dma.done %s280, 2048
        $region44: #{tpu_custom_call.1} parent=39 // pred_fallthru
          _
        // Predicated region
        $region45: #{tpu_custom_call.1} parent=39 // pred_check
          %p288 = pneg %p71
        $region46: #{tpu_custom_call.1} parent=39 // pred_check_branch
          %290 = sbr.rel (%p288) target = $region48
        $region47: #{tpu_custom_call.1} parent=39 // pred_region
          %291 = dma.done [#allocation6], 65536
        $region48: #{tpu_custom_call.1} parent=39 // pred_fallthru
          _
        // Predicated region
        $region49: #{tpu_custom_call.1} parent=39 // pred_check
          %p292 = pneg %p92
        $region50: #{tpu_custom_call.1} parent=39 // pred_check_branch
          %294 = sbr.rel (%p292) target = $region52
        $region51: #{tpu_custom_call.1} parent=39 // pred_region
          %295 = dma.done [#allocation6], 32
        $region52: #{tpu_custom_call.1} parent=39 // pred_fallthru
          _
        // Predicated region
        $region53: #{tpu_custom_call.1} parent=39 // pred_check
          %p296 = pneg %p113
        $region54: #{tpu_custom_call.1} parent=39 // pred_check_branch
          %298 = sbr.rel (%p296) target = $region56
        $region55: #{tpu_custom_call.1} parent=39 // pred_region
          %299 = dma.done [#allocation9], 2048
        $region56: #{tpu_custom_call.1} parent=39 // pred_fallthru
          _
        // Predicated region
        $region57: #{tpu_custom_call.1} parent=39 // pred_check
          %p300 = pneg %p134
        $region58: #{tpu_custom_call.1} parent=39 // pred_check_branch
          %302 = sbr.rel (%p300) target = $region60
        $region59: #{tpu_custom_call.1} parent=39 // pred_region
          %303 = dma.done [#allocation9], 16
        $region60: #{tpu_custom_call.1} parent=39 // pred_fallthru
          _
        %s304 = sand.u32 %s37, 1
        %s305 = scalar_lea.sflag [#allocation3], %s304
        %s306 = sand.u32 %s37, 1
        %s307 = smul.addr %s306, 128
        %s308 = scalar_lea.vmem [#allocation2], %s307
        %p309 = pneg %p50
        %p310 = pneg %p47
        %p311 = pneg %p71
        %p312 = pneg %p68
        %p313 = pneg %p92
        %p314 = pneg %p89
        %p315 = pneg %p113
        %p316 = pneg %p110
        %p317 = pneg %p134
        %p318 = pneg %p131
        %p319 = pneg %p160
        %p320 = pneg %p157
        %s321 = sand.u32 %s147, 1
        %s322 = scalar_lea.sflag [#allocation4], %s321
        %s323 = sand.u32 %s147, 1
        %s324 = smul.addr %s323, 16
        %s325 = scalar_lea.vmem [#allocation11], %s324
        %p326 = pneg %p186
        %p327 = pneg %p183
        %s328 = sand.u32 %s173, 1
        %s329 = scalar_lea.sflag [#allocation13], %s328
        %s330 = sand.u32 %s173, 1
        %s331 = smul.addr %s330, 8
        %s332 = scalar_lea.vmem [#allocation12], %s331
        %v334 = vld [vmem:[%s283] sm:$0xff]
        %v335 = vld [vmem:[%s283 + $0x8] sm:$0xff]
        %v336 = vld [vmem:[%s283 + $0x10] sm:$0xff]
        %v337 = vld [vmem:[%s283 + $0x18] sm:$0xff]
        %v338 = vld [vmem:[%s283 + $0x20] sm:$0xff]
        %v339 = vld [vmem:[%s283 + $0x28] sm:$0xff]
        %v340 = vld [vmem:[%s283 + $0x30] sm:$0xff]
        %v341 = vld [vmem:[%s283 + $0x38] sm:$0xff]
        %v342 = vld [vmem:[%s283 + $0x40] sm:$0xff]
        %v343 = vld [vmem:[%s283 + $0x48] sm:$0xff]
        %v344 = vld [vmem:[%s283 + $0x50] sm:$0xff]
        %v345 = vld [vmem:[%s283 + $0x58] sm:$0xff]
        %v346 = vld [vmem:[%s283 + $0x60] sm:$0xff]
        %v347 = vld [vmem:[%s283 + $0x68] sm:$0xff]
        %v348 = vld [vmem:[%s283 + $0x70] sm:$0xff]
        %v349 = vld [vmem:[%s283 + $0x78] sm:$0xff]
        %v350 = vld [vmem:[#allocation5] sm:$0xff]
        %v351 = vld [vmem:[#allocation5 + $0x8] sm:$0xff]
        %v352 = vld [vmem:[#allocation5 + $0x10] sm:$0xff]
        %v353 = vld [vmem:[#allocation5 + $0x18] sm:$0xff]
        %v354 = vld [vmem:[#allocation5 + $0x20] sm:$0xff]
        %v355 = vld [vmem:[#allocation5 + $0x28] sm:$0xff]
        %v356 = vld [vmem:[#allocation5 + $0x30] sm:$0xff]
        %v357 = vld [vmem:[#allocation5 + $0x38] sm:$0xff]
        %v358 = vld [vmem:[#allocation5 + $0x40] sm:$0xff]
        %v359 = vld [vmem:[#allocation5 + $0x48] sm:$0xff]
        %v360 = vld [vmem:[#allocation5 + $0x50] sm:$0xff]
        %v361 = vld [vmem:[#allocation5 + $0x58] sm:$0xff]
        %v362 = vld [vmem:[#allocation5 + $0x60] sm:$0xff]
        %v363 = vld [vmem:[#allocation5 + $0x68] sm:$0xff]
        %v364 = vld [vmem:[#allocation5 + $0x70] sm:$0xff]
        %v365 = vld [vmem:[#allocation5 + $0x78] sm:$0xff]
        %v366 = vld [vmem:[#allocation5 + $0x80] sm:$0xff]
        %v367 = vld [vmem:[#allocation5 + $0x88] sm:$0xff]
        %v368 = vld [vmem:[#allocation5 + $0x90] sm:$0xff]
        %v369 = vld [vmem:[#allocation5 + $0x98] sm:$0xff]
        %v370 = vld [vmem:[#allocation5 + $0xa0] sm:$0xff]
        %v371 = vld [vmem:[#allocation5 + $0xa8] sm:$0xff]
        %v372 = vld [vmem:[#allocation5 + $0xb0] sm:$0xff]
        %v373 = vld [vmem:[#allocation5 + $0xb8] sm:$0xff]
        %v374 = vld [vmem:[#allocation5 + $0xc0] sm:$0xff]
        %v375 = vld [vmem:[#allocation5 + $0xc8] sm:$0xff]
        %v376 = vld [vmem:[#allocation5 + $0xd0] sm:$0xff]
        %v377 = vld [vmem:[#allocation5 + $0xd8] sm:$0xff]
        %v378 = vld [vmem:[#allocation5 + $0xe0] sm:$0xff]
        %v379 = vld [vmem:[#allocation5 + $0xe8] sm:$0xff]
        %v380 = vld [vmem:[#allocation5 + $0xf0] sm:$0xff]
        %v381 = vld [vmem:[#allocation5 + $0xf8] sm:$0xff]
        %v382 = vld [vmem:[#allocation5 + $0x100] sm:$0xff]
        %v383 = vld [vmem:[#allocation5 + $0x108] sm:$0xff]
        %v384 = vld [vmem:[#allocation5 + $0x110] sm:$0xff]
        %v385 = vld [vmem:[#allocation5 + $0x118] sm:$0xff]
        %v386 = vld [vmem:[#allocation5 + $0x120] sm:$0xff]
        %v387 = vld [vmem:[#allocation5 + $0x128] sm:$0xff]
        %v388 = vld [vmem:[#allocation5 + $0x130] sm:$0xff]
        %v389 = vld [vmem:[#allocation5 + $0x138] sm:$0xff]
        %v390 = vld [vmem:[#allocation5 + $0x140] sm:$0xff]
        %v391 = vld [vmem:[#allocation5 + $0x148] sm:$0xff]
        %v392 = vld [vmem:[#allocation5 + $0x150] sm:$0xff]
        %v393 = vld [vmem:[#allocation5 + $0x158] sm:$0xff]
        %v394 = vld [vmem:[#allocation5 + $0x160] sm:$0xff]
        %v395 = vld [vmem:[#allocation5 + $0x168] sm:$0xff]
        %v396 = vld [vmem:[#allocation5 + $0x170] sm:$0xff]
        %v397 = vld [vmem:[#allocation5 + $0x178] sm:$0xff]
        %v398 = vld [vmem:[#allocation5 + $0x180] sm:$0xff]
        %v399 = vld [vmem:[#allocation5 + $0x188] sm:$0xff]
        %v400 = vld [vmem:[#allocation5 + $0x190] sm:$0xff]
        %v401 = vld [vmem:[#allocation5 + $0x198] sm:$0xff]
        %v402 = vld [vmem:[#allocation5 + $0x1a0] sm:$0xff]
        %v403 = vld [vmem:[#allocation5 + $0x1a8] sm:$0xff]
        %v404 = vld [vmem:[#allocation5 + $0x1b0] sm:$0xff]
        %v405 = vld [vmem:[#allocation5 + $0x1b8] sm:$0xff]
        %v406 = vld [vmem:[#allocation5 + $0x1c0] sm:$0xff]
        %v407 = vld [vmem:[#allocation5 + $0x1c8] sm:$0xff]
        %v408 = vld [vmem:[#allocation5 + $0x1d0] sm:$0xff]
        %v409 = vld [vmem:[#allocation5 + $0x1d8] sm:$0xff]
        %v410 = vld [vmem:[#allocation5 + $0x1e0] sm:$0xff]
        %v411 = vld [vmem:[#allocation5 + $0x1e8] sm:$0xff]
        %v412 = vld [vmem:[#allocation5 + $0x1f0] sm:$0xff]
        %v413 = vld [vmem:[#allocation5 + $0x1f8] sm:$0xff]
        %v414 = vld [vmem:[#allocation5 + $0x200] sm:$0xff]
        %v415 = vld [vmem:[#allocation5 + $0x208] sm:$0xff]
        %v416 = vld [vmem:[#allocation5 + $0x210] sm:$0xff]
        %v417 = vld [vmem:[#allocation5 + $0x218] sm:$0xff]
        %v418 = vld [vmem:[#allocation5 + $0x220] sm:$0xff]
        %v419 = vld [vmem:[#allocation5 + $0x228] sm:$0xff]
        %v420 = vld [vmem:[#allocation5 + $0x230] sm:$0xff]
        %v421 = vld [vmem:[#allocation5 + $0x238] sm:$0xff]
        %v422 = vld [vmem:[#allocation5 + $0x240] sm:$0xff]
        %v423 = vld [vmem:[#allocation5 + $0x248] sm:$0xff]
        %v424 = vld [vmem:[#allocation5 + $0x250] sm:$0xff]
        %v425 = vld [vmem:[#allocation5 + $0x258] sm:$0xff]
        %v426 = vld [vmem:[#allocation5 + $0x260] sm:$0xff]
        %v427 = vld [vmem:[#allocation5 + $0x268] sm:$0xff]
        %v428 = vld [vmem:[#allocation5 + $0x270] sm:$0xff]
        %v429 = vld [vmem:[#allocation5 + $0x278] sm:$0xff]
        %v430 = vld [vmem:[#allocation5 + $0x280] sm:$0xff]
        %v431 = vld [vmem:[#allocation5 + $0x288] sm:$0xff]
        %v432 = vld [vmem:[#allocation5 + $0x290] sm:$0xff]
        %v433 = vld [vmem:[#allocation5 + $0x298] sm:$0xff]
        %v434 = vld [vmem:[#allocation5 + $0x2a0] sm:$0xff]
        %v435 = vld [vmem:[#allocation5 + $0x2a8] sm:$0xff]
        %v436 = vld [vmem:[#allocation5 + $0x2b0] sm:$0xff]
        %v437 = vld [vmem:[#allocation5 + $0x2b8] sm:$0xff]
        %v438 = vld [vmem:[#allocation5 + $0x2c0] sm:$0xff]
        %v439 = vld [vmem:[#allocation5 + $0x2c8] sm:$0xff]
        %v440 = vld [vmem:[#allocation5 + $0x2d0] sm:$0xff]
        %v441 = vld [vmem:[#allocation5 + $0x2d8] sm:$0xff]
        %v442 = vld [vmem:[#allocation5 + $0x2e0] sm:$0xff]
        %v443 = vld [vmem:[#allocation5 + $0x2e8] sm:$0xff]
        %v444 = vld [vmem:[#allocation5 + $0x2f0] sm:$0xff]
        %v445 = vld [vmem:[#allocation5 + $0x2f8] sm:$0xff]
        %v446 = vld [vmem:[#allocation5 + $0x300] sm:$0xff]
        %v447 = vld [vmem:[#allocation5 + $0x308] sm:$0xff]
        %v448 = vld [vmem:[#allocation5 + $0x310] sm:$0xff]
        %v449 = vld [vmem:[#allocation5 + $0x318] sm:$0xff]
        %v450 = vld [vmem:[#allocation5 + $0x320] sm:$0xff]
        %v451 = vld [vmem:[#allocation5 + $0x328] sm:$0xff]
        %v452 = vld [vmem:[#allocation5 + $0x330] sm:$0xff]
        %v453 = vld [vmem:[#allocation5 + $0x338] sm:$0xff]
        %v454 = vld [vmem:[#allocation5 + $0x340] sm:$0xff]
        %v455 = vld [vmem:[#allocation5 + $0x348] sm:$0xff]
        %v456 = vld [vmem:[#allocation5 + $0x350] sm:$0xff]
        %v457 = vld [vmem:[#allocation5 + $0x358] sm:$0xff]
        %v458 = vld [vmem:[#allocation5 + $0x360] sm:$0xff]
        %v459 = vld [vmem:[#allocation5 + $0x368] sm:$0xff]
        %v460 = vld [vmem:[#allocation5 + $0x370] sm:$0xff]
        %v461 = vld [vmem:[#allocation5 + $0x378] sm:$0xff]
        %v462 = vld [vmem:[#allocation5 + $0x380] sm:$0xff]
        %v463 = vld [vmem:[#allocation5 + $0x388] sm:$0xff]
        %v464 = vld [vmem:[#allocation5 + $0x390] sm:$0xff]
        %v465 = vld [vmem:[#allocation5 + $0x398] sm:$0xff]
        %v466 = vld [vmem:[#allocation5 + $0x3a0] sm:$0xff]
        %v467 = vld [vmem:[#allocation5 + $0x3a8] sm:$0xff]
        %v468 = vld [vmem:[#allocation5 + $0x3b0] sm:$0xff]
        %v469 = vld [vmem:[#allocation5 + $0x3b8] sm:$0xff]
        %v470 = vld [vmem:[#allocation5 + $0x3c0] sm:$0xff]
        %v471 = vld [vmem:[#allocation5 + $0x3c8] sm:$0xff]
        %v472 = vld [vmem:[#allocation5 + $0x3d0] sm:$0xff]
        %v473 = vld [vmem:[#allocation5 + $0x3d8] sm:$0xff]
        %v474 = vld [vmem:[#allocation5 + $0x3e0] sm:$0xff]
        %v475 = vld [vmem:[#allocation5 + $0x3e8] sm:$0xff]
        %v476 = vld [vmem:[#allocation5 + $0x3f0] sm:$0xff]
        %v477 = vld [vmem:[#allocation5 + $0x3f8] sm:$0xff]
        %v478 = vld [vmem:[#allocation5 + $0x400] sm:$0xff]
        %v479 = vld [vmem:[#allocation5 + $0x408] sm:$0xff]
        %v480 = vld [vmem:[#allocation5 + $0x410] sm:$0xff]
        %v481 = vld [vmem:[#allocation5 + $0x418] sm:$0xff]
        %v482 = vld [vmem:[#allocation5 + $0x420] sm:$0xff]
        %v483 = vld [vmem:[#allocation5 + $0x428] sm:$0xff]
        %v484 = vld [vmem:[#allocation5 + $0x430] sm:$0xff]
        %v485 = vld [vmem:[#allocation5 + $0x438] sm:$0xff]
        %v486 = vld [vmem:[#allocation5 + $0x440] sm:$0xff]
        %v487 = vld [vmem:[#allocation5 + $0x448] sm:$0xff]
        %v488 = vld [vmem:[#allocation5 + $0x450] sm:$0xff]
        %v489 = vld [vmem:[#allocation5 + $0x458] sm:$0xff]
        %v490 = vld [vmem:[#allocation5 + $0x460] sm:$0xff]
        %v491 = vld [vmem:[#allocation5 + $0x468] sm:$0xff]
        %v492 = vld [vmem:[#allocation5 + $0x470] sm:$0xff]
        %v493 = vld [vmem:[#allocation5 + $0x478] sm:$0xff]
        %v494 = vld [vmem:[#allocation5 + $0x480] sm:$0xff]
        %v495 = vld [vmem:[#allocation5 + $0x488] sm:$0xff]
        %v496 = vld [vmem:[#allocation5 + $0x490] sm:$0xff]
        %v497 = vld [vmem:[#allocation5 + $0x498] sm:$0xff]
        %v498 = vld [vmem:[#allocation5 + $0x4a0] sm:$0xff]
        %v499 = vld [vmem:[#allocation5 + $0x4a8] sm:$0xff]
        %v500 = vld [vmem:[#allocation5 + $0x4b0] sm:$0xff]
        %v501 = vld [vmem:[#allocation5 + $0x4b8] sm:$0xff]
        %v502 = vld [vmem:[#allocation5 + $0x4c0] sm:$0xff]
        %v503 = vld [vmem:[#allocation5 + $0x4c8] sm:$0xff]
        %v504 = vld [vmem:[#allocation5 + $0x4d0] sm:$0xff]
        %v505 = vld [vmem:[#allocation5 + $0x4d8] sm:$0xff]
        %v506 = vld [vmem:[#allocation5 + $0x4e0] sm:$0xff]
        %v507 = vld [vmem:[#allocation5 + $0x4e8] sm:$0xff]
        %v508 = vld [vmem:[#allocation5 + $0x4f0] sm:$0xff]
        %v509 = vld [vmem:[#allocation5 + $0x4f8] sm:$0xff]
        %v510 = vld [vmem:[#allocation5 + $0x500] sm:$0xff]
        %v511 = vld [vmem:[#allocation5 + $0x508] sm:$0xff]
        %v512 = vld [vmem:[#allocation5 + $0x510] sm:$0xff]
        %v513 = vld [vmem:[#allocation5 + $0x518] sm:$0xff]
        %v514 = vld [vmem:[#allocation5 + $0x520] sm:$0xff]
        %v515 = vld [vmem:[#allocation5 + $0x528] sm:$0xff]
        %v516 = vld [vmem:[#allocation5 + $0x530] sm:$0xff]
        %v517 = vld [vmem:[#allocation5 + $0x538] sm:$0xff]
        %v518 = vld [vmem:[#allocation5 + $0x540] sm:$0xff]
        %v519 = vld [vmem:[#allocation5 + $0x548] sm:$0xff]
        %v520 = vld [vmem:[#allocation5 + $0x550] sm:$0xff]
        %v521 = vld [vmem:[#allocation5 + $0x558] sm:$0xff]
        %v522 = vld [vmem:[#allocation5 + $0x560] sm:$0xff]
        %v523 = vld [vmem:[#allocation5 + $0x568] sm:$0xff]
        %v524 = vld [vmem:[#allocation5 + $0x570] sm:$0xff]
        %v525 = vld [vmem:[#allocation5 + $0x578] sm:$0xff]
        %v526 = vld [vmem:[#allocation5 + $0x580] sm:$0xff]
        %v527 = vld [vmem:[#allocation5 + $0x588] sm:$0xff]
        %v528 = vld [vmem:[#allocation5 + $0x590] sm:$0xff]
        %v529 = vld [vmem:[#allocation5 + $0x598] sm:$0xff]
        %v530 = vld [vmem:[#allocation5 + $0x5a0] sm:$0xff]
        %v531 = vld [vmem:[#allocation5 + $0x5a8] sm:$0xff]
        %v532 = vld [vmem:[#allocation5 + $0x5b0] sm:$0xff]
        %v533 = vld [vmem:[#allocation5 + $0x5b8] sm:$0xff]
        %v534 = vld [vmem:[#allocation5 + $0x5c0] sm:$0xff]
        %v535 = vld [vmem:[#allocation5 + $0x5c8] sm:$0xff]
        %v536 = vld [vmem:[#allocation5 + $0x5d0] sm:$0xff]
        %v537 = vld [vmem:[#allocation5 + $0x5d8] sm:$0xff]
        %v538 = vld [vmem:[#allocation5 + $0x5e0] sm:$0xff]
        %v539 = vld [vmem:[#allocation5 + $0x5e8] sm:$0xff]
        %v540 = vld [vmem:[#allocation5 + $0x5f0] sm:$0xff]
        %v541 = vld [vmem:[#allocation5 + $0x5f8] sm:$0xff]
        %v542 = vld [vmem:[#allocation5 + $0x600] sm:$0xff]
        %v543 = vld [vmem:[#allocation5 + $0x608] sm:$0xff]
        %v544 = vld [vmem:[#allocation5 + $0x610] sm:$0xff]
        %v545 = vld [vmem:[#allocation5 + $0x618] sm:$0xff]
        %v546 = vld [vmem:[#allocation5 + $0x620] sm:$0xff]
        %v547 = vld [vmem:[#allocation5 + $0x628] sm:$0xff]
        %v548 = vld [vmem:[#allocation5 + $0x630] sm:$0xff]
        %v549 = vld [vmem:[#allocation5 + $0x638] sm:$0xff]
        %v550 = vld [vmem:[#allocation5 + $0x640] sm:$0xff]
        %v551 = vld [vmem:[#allocation5 + $0x648] sm:$0xff]
        %v552 = vld [vmem:[#allocation5 + $0x650] sm:$0xff]
        %v553 = vld [vmem:[#allocation5 + $0x658] sm:$0xff]
        %v554 = vld [vmem:[#allocation5 + $0x660] sm:$0xff]
        %v555 = vld [vmem:[#allocation5 + $0x668] sm:$0xff]
        %v556 = vld [vmem:[#allocation5 + $0x670] sm:$0xff]
        %v557 = vld [vmem:[#allocation5 + $0x678] sm:$0xff]
        %v558 = vld [vmem:[#allocation5 + $0x680] sm:$0xff]
        %v559 = vld [vmem:[#allocation5 + $0x688] sm:$0xff]
        %v560 = vld [vmem:[#allocation5 + $0x690] sm:$0xff]
        %v561 = vld [vmem:[#allocation5 + $0x698] sm:$0xff]
        %v562 = vld [vmem:[#allocation5 + $0x6a0] sm:$0xff]
        %v563 = vld [vmem:[#allocation5 + $0x6a8] sm:$0xff]
        %v564 = vld [vmem:[#allocation5 + $0x6b0] sm:$0xff]
        %v565 = vld [vmem:[#allocation5 + $0x6b8] sm:$0xff]
        %v566 = vld [vmem:[#allocation5 + $0x6c0] sm:$0xff]
        %v567 = vld [vmem:[#allocation5 + $0x6c8] sm:$0xff]
        %v568 = vld [vmem:[#allocation5 + $0x6d0] sm:$0xff]
        %v569 = vld [vmem:[#allocation5 + $0x6d8] sm:$0xff]
        %v570 = vld [vmem:[#allocation5 + $0x6e0] sm:$0xff]
        %v571 = vld [vmem:[#allocation5 + $0x6e8] sm:$0xff]
        %v572 = vld [vmem:[#allocation5 + $0x6f0] sm:$0xff]
        %v573 = vld [vmem:[#allocation5 + $0x6f8] sm:$0xff]
        %v574 = vld [vmem:[#allocation5 + $0x700] sm:$0xff]
        %v575 = vld [vmem:[#allocation5 + $0x708] sm:$0xff]
        %v576 = vld [vmem:[#allocation5 + $0x710] sm:$0xff]
        %v577 = vld [vmem:[#allocation5 + $0x718] sm:$0xff]
        %v578 = vld [vmem:[#allocation5 + $0x720] sm:$0xff]
        %v579 = vld [vmem:[#allocation5 + $0x728] sm:$0xff]
        %v580 = vld [vmem:[#allocation5 + $0x730] sm:$0xff]
        %v581 = vld [vmem:[#allocation5 + $0x738] sm:$0xff]
        %v582 = vld [vmem:[#allocation5 + $0x740] sm:$0xff]
        %v583 = vld [vmem:[#allocation5 + $0x748] sm:$0xff]
        %v584 = vld [vmem:[#allocation5 + $0x750] sm:$0xff]
        %v585 = vld [vmem:[#allocation5 + $0x758] sm:$0xff]
        %v586 = vld [vmem:[#allocation5 + $0x760] sm:$0xff]
        %v587 = vld [vmem:[#allocation5 + $0x768] sm:$0xff]
        %v588 = vld [vmem:[#allocation5 + $0x770] sm:$0xff]
        %v589 = vld [vmem:[#allocation5 + $0x778] sm:$0xff]
        %v590 = vld [vmem:[#allocation5 + $0x780] sm:$0xff]
        %v591 = vld [vmem:[#allocation5 + $0x788] sm:$0xff]
        %v592 = vld [vmem:[#allocation5 + $0x790] sm:$0xff]
        %v593 = vld [vmem:[#allocation5 + $0x798] sm:$0xff]
        %v594 = vld [vmem:[#allocation5 + $0x7a0] sm:$0xff]
        %v595 = vld [vmem:[#allocation5 + $0x7a8] sm:$0xff]
        %v596 = vld [vmem:[#allocation5 + $0x7b0] sm:$0xff]
        %v597 = vld [vmem:[#allocation5 + $0x7b8] sm:$0xff]
        %v598 = vld [vmem:[#allocation5 + $0x7c0] sm:$0xff]
        %v599 = vld [vmem:[#allocation5 + $0x7c8] sm:$0xff]
        %v600 = vld [vmem:[#allocation5 + $0x7d0] sm:$0xff]
        %v601 = vld [vmem:[#allocation5 + $0x7d8] sm:$0xff]
        %v602 = vld [vmem:[#allocation5 + $0x7e0] sm:$0xff]
        %v603 = vld [vmem:[#allocation5 + $0x7e8] sm:$0xff]
        %v604 = vld [vmem:[#allocation5 + $0x7f0] sm:$0xff]
        %v605 = vld [vmem:[#allocation5 + $0x7f8] sm:$0xff]
        %v606 = vld [vmem:[#allocation5 + $0x800] sm:$0xff]
        %v607 = vld [vmem:[#allocation5 + $0x808] sm:$0xff]
        %v608 = vld [vmem:[#allocation5 + $0x810] sm:$0xff]
        %v609 = vld [vmem:[#allocation5 + $0x818] sm:$0xff]
        %v610 = vld [vmem:[#allocation5 + $0x820] sm:$0xff]
        %v611 = vld [vmem:[#allocation5 + $0x828] sm:$0xff]
        %v612 = vld [vmem:[#allocation5 + $0x830] sm:$0xff]
        %v613 = vld [vmem:[#allocation5 + $0x838] sm:$0xff]
        %v614 = vld [vmem:[#allocation5 + $0x840] sm:$0xff]
        %v615 = vld [vmem:[#allocation5 + $0x848] sm:$0xff]
        %v616 = vld [vmem:[#allocation5 + $0x850] sm:$0xff]
        %v617 = vld [vmem:[#allocation5 + $0x858] sm:$0xff]
        %v618 = vld [vmem:[#allocation5 + $0x860] sm:$0xff]
        %v619 = vld [vmem:[#allocation5 + $0x868] sm:$0xff]
        %v620 = vld [vmem:[#allocation5 + $0x870] sm:$0xff]
        %v621 = vld [vmem:[#allocation5 + $0x878] sm:$0xff]
        %v622 = vld [vmem:[#allocation5 + $0x880] sm:$0xff]
        %v623 = vld [vmem:[#allocation5 + $0x888] sm:$0xff]
        %v624 = vld [vmem:[#allocation5 + $0x890] sm:$0xff]
        %v625 = vld [vmem:[#allocation5 + $0x898] sm:$0xff]
        %v626 = vld [vmem:[#allocation5 + $0x8a0] sm:$0xff]
        %v627 = vld [vmem:[#allocation5 + $0x8a8] sm:$0xff]
        %v628 = vld [vmem:[#allocation5 + $0x8b0] sm:$0xff]
        %v629 = vld [vmem:[#allocation5 + $0x8b8] sm:$0xff]
        %v630 = vld [vmem:[#allocation5 + $0x8c0] sm:$0xff]
        %v631 = vld [vmem:[#allocation5 + $0x8c8] sm:$0xff]
        %v632 = vld [vmem:[#allocation5 + $0x8d0] sm:$0xff]
        %v633 = vld [vmem:[#allocation5 + $0x8d8] sm:$0xff]
        %v634 = vld [vmem:[#allocation5 + $0x8e0] sm:$0xff]
        %v635 = vld [vmem:[#allocation5 + $0x8e8] sm:$0xff]
        %v636 = vld [vmem:[#allocation5 + $0x8f0] sm:$0xff]
        %v637 = vld [vmem:[#allocation5 + $0x8f8] sm:$0xff]
        %v638 = vld [vmem:[#allocation5 + $0x900] sm:$0xff]
        %v639 = vld [vmem:[#allocation5 + $0x908] sm:$0xff]
        %v640 = vld [vmem:[#allocation5 + $0x910] sm:$0xff]
        %v641 = vld [vmem:[#allocation5 + $0x918] sm:$0xff]
        %v642 = vld [vmem:[#allocation5 + $0x920] sm:$0xff]
        %v643 = vld [vmem:[#allocation5 + $0x928] sm:$0xff]
        %v644 = vld [vmem:[#allocation5 + $0x930] sm:$0xff]
        %v645 = vld [vmem:[#allocation5 + $0x938] sm:$0xff]
        %v646 = vld [vmem:[#allocation5 + $0x940] sm:$0xff]
        %v647 = vld [vmem:[#allocation5 + $0x948] sm:$0xff]
        %v648 = vld [vmem:[#allocation5 + $0x950] sm:$0xff]
        %v649 = vld [vmem:[#allocation5 + $0x958] sm:$0xff]
        %v650 = vld [vmem:[#allocation5 + $0x960] sm:$0xff]
        %v651 = vld [vmem:[#allocation5 + $0x968] sm:$0xff]
        %v652 = vld [vmem:[#allocation5 + $0x970] sm:$0xff]
        %v653 = vld [vmem:[#allocation5 + $0x978] sm:$0xff]
        %v654 = vld [vmem:[#allocation5 + $0x980] sm:$0xff]
        %v655 = vld [vmem:[#allocation5 + $0x988] sm:$0xff]
        %v656 = vld [vmem:[#allocation5 + $0x990] sm:$0xff]
        %v657 = vld [vmem:[#allocation5 + $0x998] sm:$0xff]
        %v658 = vld [vmem:[#allocation5 + $0x9a0] sm:$0xff]
        %v659 = vld [vmem:[#allocation5 + $0x9a8] sm:$0xff]
        %v660 = vld [vmem:[#allocation5 + $0x9b0] sm:$0xff]
        %v661 = vld [vmem:[#allocation5 + $0x9b8] sm:$0xff]
        %v662 = vld [vmem:[#allocation5 + $0x9c0] sm:$0xff]
        %v663 = vld [vmem:[#allocation5 + $0x9c8] sm:$0xff]
        %v664 = vld [vmem:[#allocation5 + $0x9d0] sm:$0xff]
        %v665 = vld [vmem:[#allocation5 + $0x9d8] sm:$0xff]
        %v666 = vld [vmem:[#allocation5 + $0x9e0] sm:$0xff]
        %v667 = vld [vmem:[#allocation5 + $0x9e8] sm:$0xff]
        %v668 = vld [vmem:[#allocation5 + $0x9f0] sm:$0xff]
        %v669 = vld [vmem:[#allocation5 + $0x9f8] sm:$0xff]
        %v670 = vld [vmem:[#allocation5 + $0xa00] sm:$0xff]
        %v671 = vld [vmem:[#allocation5 + $0xa08] sm:$0xff]
        %v672 = vld [vmem:[#allocation5 + $0xa10] sm:$0xff]
        %v673 = vld [vmem:[#allocation5 + $0xa18] sm:$0xff]
        %v674 = vld [vmem:[#allocation5 + $0xa20] sm:$0xff]
        %v675 = vld [vmem:[#allocation5 + $0xa28] sm:$0xff]
        %v676 = vld [vmem:[#allocation5 + $0xa30] sm:$0xff]
        %v677 = vld [vmem:[#allocation5 + $0xa38] sm:$0xff]
        %v678 = vld [vmem:[#allocation5 + $0xa40] sm:$0xff]
        %v679 = vld [vmem:[#allocation5 + $0xa48] sm:$0xff]
        %v680 = vld [vmem:[#allocation5 + $0xa50] sm:$0xff]
        %v681 = vld [vmem:[#allocation5 + $0xa58] sm:$0xff]
        %v682 = vld [vmem:[#allocation5 + $0xa60] sm:$0xff]
        %v683 = vld [vmem:[#allocation5 + $0xa68] sm:$0xff]
        %v684 = vld [vmem:[#allocation5 + $0xa70] sm:$0xff]
        %v685 = vld [vmem:[#allocation5 + $0xa78] sm:$0xff]
        %v686 = vld [vmem:[#allocation5 + $0xa80] sm:$0xff]
        %v687 = vld [vmem:[#allocation5 + $0xa88] sm:$0xff]
        %v688 = vld [vmem:[#allocation5 + $0xa90] sm:$0xff]
        %v689 = vld [vmem:[#allocation5 + $0xa98] sm:$0xff]
        %v690 = vld [vmem:[#allocation5 + $0xaa0] sm:$0xff]
        %v691 = vld [vmem:[#allocation5 + $0xaa8] sm:$0xff]
        %v692 = vld [vmem:[#allocation5 + $0xab0] sm:$0xff]
        %v693 = vld [vmem:[#allocation5 + $0xab8] sm:$0xff]
        %v694 = vld [vmem:[#allocation5 + $0xac0] sm:$0xff]
        %v695 = vld [vmem:[#allocation5 + $0xac8] sm:$0xff]
        %v696 = vld [vmem:[#allocation5 + $0xad0] sm:$0xff]
        %v697 = vld [vmem:[#allocation5 + $0xad8] sm:$0xff]
        %v698 = vld [vmem:[#allocation5 + $0xae0] sm:$0xff]
        %v699 = vld [vmem:[#allocation5 + $0xae8] sm:$0xff]
        %v700 = vld [vmem:[#allocation5 + $0xaf0] sm:$0xff]
        %v701 = vld [vmem:[#allocation5 + $0xaf8] sm:$0xff]
        %v702 = vld [vmem:[#allocation5 + $0xb00] sm:$0xff]
        %v703 = vld [vmem:[#allocation5 + $0xb08] sm:$0xff]
        %v704 = vld [vmem:[#allocation5 + $0xb10] sm:$0xff]
        %v705 = vld [vmem:[#allocation5 + $0xb18] sm:$0xff]
        %v706 = vld [vmem:[#allocation5 + $0xb20] sm:$0xff]
        %v707 = vld [vmem:[#allocation5 + $0xb28] sm:$0xff]
        %v708 = vld [vmem:[#allocation5 + $0xb30] sm:$0xff]
        %v709 = vld [vmem:[#allocation5 + $0xb38] sm:$0xff]
        %v710 = vld [vmem:[#allocation5 + $0xb40] sm:$0xff]
        %v711 = vld [vmem:[#allocation5 + $0xb48] sm:$0xff]
        %v712 = vld [vmem:[#allocation5 + $0xb50] sm:$0xff]
        %v713 = vld [vmem:[#allocation5 + $0xb58] sm:$0xff]
        %v714 = vld [vmem:[#allocation5 + $0xb60] sm:$0xff]
        %v715 = vld [vmem:[#allocation5 + $0xb68] sm:$0xff]
        %v716 = vld [vmem:[#allocation5 + $0xb70] sm:$0xff]
        %v717 = vld [vmem:[#allocation5 + $0xb78] sm:$0xff]
        %v718 = vld [vmem:[#allocation5 + $0xb80] sm:$0xff]
        %v719 = vld [vmem:[#allocation5 + $0xb88] sm:$0xff]
        %v720 = vld [vmem:[#allocation5 + $0xb90] sm:$0xff]
        %v721 = vld [vmem:[#allocation5 + $0xb98] sm:$0xff]
        %v722 = vld [vmem:[#allocation5 + $0xba0] sm:$0xff]
        %v723 = vld [vmem:[#allocation5 + $0xba8] sm:$0xff]
        %v724 = vld [vmem:[#allocation5 + $0xbb0] sm:$0xff]
        %v725 = vld [vmem:[#allocation5 + $0xbb8] sm:$0xff]
        %v726 = vld [vmem:[#allocation5 + $0xbc0] sm:$0xff]
        %v727 = vld [vmem:[#allocation5 + $0xbc8] sm:$0xff]
        %v728 = vld [vmem:[#allocation5 + $0xbd0] sm:$0xff]
        %v729 = vld [vmem:[#allocation5 + $0xbd8] sm:$0xff]
        %v730 = vld [vmem:[#allocation5 + $0xbe0] sm:$0xff]
        %v731 = vld [vmem:[#allocation5 + $0xbe8] sm:$0xff]
        %v732 = vld [vmem:[#allocation5 + $0xbf0] sm:$0xff]
        %v733 = vld [vmem:[#allocation5 + $0xbf8] sm:$0xff]
        %v734 = vld [vmem:[#allocation5 + $0xc00] sm:$0xff]
        %v735 = vld [vmem:[#allocation5 + $0xc08] sm:$0xff]
        %v736 = vld [vmem:[#allocation5 + $0xc10] sm:$0xff]
        %v737 = vld [vmem:[#allocation5 + $0xc18] sm:$0xff]
        %v738 = vld [vmem:[#allocation5 + $0xc20] sm:$0xff]
        %v739 = vld [vmem:[#allocation5 + $0xc28] sm:$0xff]
        %v740 = vld [vmem:[#allocation5 + $0xc30] sm:$0xff]
        %v741 = vld [vmem:[#allocation5 + $0xc38] sm:$0xff]
        %v742 = vld [vmem:[#allocation5 + $0xc40] sm:$0xff]
        %v743 = vld [vmem:[#allocation5 + $0xc48] sm:$0xff]
        %v744 = vld [vmem:[#allocation5 + $0xc50] sm:$0xff]
        %v745 = vld [vmem:[#allocation5 + $0xc58] sm:$0xff]
        %v746 = vld [vmem:[#allocation5 + $0xc60] sm:$0xff]
        %v747 = vld [vmem:[#allocation5 + $0xc68] sm:$0xff]
        %v748 = vld [vmem:[#allocation5 + $0xc70] sm:$0xff]
        %v749 = vld [vmem:[#allocation5 + $0xc78] sm:$0xff]
        %v750 = vld [vmem:[#allocation5 + $0xc80] sm:$0xff]
        %v751 = vld [vmem:[#allocation5 + $0xc88] sm:$0xff]
        %v752 = vld [vmem:[#allocation5 + $0xc90] sm:$0xff]
        %v753 = vld [vmem:[#allocation5 + $0xc98] sm:$0xff]
        %v754 = vld [vmem:[#allocation5 + $0xca0] sm:$0xff]
        %v755 = vld [vmem:[#allocation5 + $0xca8] sm:$0xff]
        %v756 = vld [vmem:[#allocation5 + $0xcb0] sm:$0xff]
        %v757 = vld [vmem:[#allocation5 + $0xcb8] sm:$0xff]
        %v758 = vld [vmem:[#allocation5 + $0xcc0] sm:$0xff]
        %v759 = vld [vmem:[#allocation5 + $0xcc8] sm:$0xff]
        %v760 = vld [vmem:[#allocation5 + $0xcd0] sm:$0xff]
        %v761 = vld [vmem:[#allocation5 + $0xcd8] sm:$0xff]
        %v762 = vld [vmem:[#allocation5 + $0xce0] sm:$0xff]
        %v763 = vld [vmem:[#allocation5 + $0xce8] sm:$0xff]
        %v764 = vld [vmem:[#allocation5 + $0xcf0] sm:$0xff]
        %v765 = vld [vmem:[#allocation5 + $0xcf8] sm:$0xff]
        %v766 = vld [vmem:[#allocation5 + $0xd00] sm:$0xff]
        %v767 = vld [vmem:[#allocation5 + $0xd08] sm:$0xff]
        %v768 = vld [vmem:[#allocation5 + $0xd10] sm:$0xff]
        %v769 = vld [vmem:[#allocation5 + $0xd18] sm:$0xff]
        %v770 = vld [vmem:[#allocation5 + $0xd20] sm:$0xff]
        %v771 = vld [vmem:[#allocation5 + $0xd28] sm:$0xff]
        %v772 = vld [vmem:[#allocation5 + $0xd30] sm:$0xff]
        %v773 = vld [vmem:[#allocation5 + $0xd38] sm:$0xff]
        %v774 = vld [vmem:[#allocation5 + $0xd40] sm:$0xff]
        %v775 = vld [vmem:[#allocation5 + $0xd48] sm:$0xff]
        %v776 = vld [vmem:[#allocation5 + $0xd50] sm:$0xff]
        %v777 = vld [vmem:[#allocation5 + $0xd58] sm:$0xff]
        %v778 = vld [vmem:[#allocation5 + $0xd60] sm:$0xff]
        %v779 = vld [vmem:[#allocation5 + $0xd68] sm:$0xff]
        %v780 = vld [vmem:[#allocation5 + $0xd70] sm:$0xff]
        %v781 = vld [vmem:[#allocation5 + $0xd78] sm:$0xff]
        %v782 = vld [vmem:[#allocation5 + $0xd80] sm:$0xff]
        %v783 = vld [vmem:[#allocation5 + $0xd88] sm:$0xff]
        %v784 = vld [vmem:[#allocation5 + $0xd90] sm:$0xff]
        %v785 = vld [vmem:[#allocation5 + $0xd98] sm:$0xff]
        %v786 = vld [vmem:[#allocation5 + $0xda0] sm:$0xff]
        %v787 = vld [vmem:[#allocation5 + $0xda8] sm:$0xff]
        %v788 = vld [vmem:[#allocation5 + $0xdb0] sm:$0xff]
        %v789 = vld [vmem:[#allocation5 + $0xdb8] sm:$0xff]
        %v790 = vld [vmem:[#allocation5 + $0xdc0] sm:$0xff]
        %v791 = vld [vmem:[#allocation5 + $0xdc8] sm:$0xff]
        %v792 = vld [vmem:[#allocation5 + $0xdd0] sm:$0xff]
        %v793 = vld [vmem:[#allocation5 + $0xdd8] sm:$0xff]
        %v794 = vld [vmem:[#allocation5 + $0xde0] sm:$0xff]
        %v795 = vld [vmem:[#allocation5 + $0xde8] sm:$0xff]
        %v796 = vld [vmem:[#allocation5 + $0xdf0] sm:$0xff]
        %v797 = vld [vmem:[#allocation5 + $0xdf8] sm:$0xff]
        %v798 = vld [vmem:[#allocation5 + $0xe00] sm:$0xff]
        %v799 = vld [vmem:[#allocation5 + $0xe08] sm:$0xff]
        %v800 = vld [vmem:[#allocation5 + $0xe10] sm:$0xff]
        %v801 = vld [vmem:[#allocation5 + $0xe18] sm:$0xff]
        %v802 = vld [vmem:[#allocation5 + $0xe20] sm:$0xff]
        %v803 = vld [vmem:[#allocation5 + $0xe28] sm:$0xff]
        %v804 = vld [vmem:[#allocation5 + $0xe30] sm:$0xff]
        %v805 = vld [vmem:[#allocation5 + $0xe38] sm:$0xff]
        %v806 = vld [vmem:[#allocation5 + $0xe40] sm:$0xff]
        %v807 = vld [vmem:[#allocation5 + $0xe48] sm:$0xff]
        %v808 = vld [vmem:[#allocation5 + $0xe50] sm:$0xff]
        %v809 = vld [vmem:[#allocation5 + $0xe58] sm:$0xff]
        %v810 = vld [vmem:[#allocation5 + $0xe60] sm:$0xff]
        %v811 = vld [vmem:[#allocation5 + $0xe68] sm:$0xff]
        %v812 = vld [vmem:[#allocation5 + $0xe70] sm:$0xff]
        %v813 = vld [vmem:[#allocation5 + $0xe78] sm:$0xff]
        %v814 = vld [vmem:[#allocation5 + $0xe80] sm:$0xff]
        %v815 = vld [vmem:[#allocation5 + $0xe88] sm:$0xff]
        %v816 = vld [vmem:[#allocation5 + $0xe90] sm:$0xff]
        %v817 = vld [vmem:[#allocation5 + $0xe98] sm:$0xff]
        %v818 = vld [vmem:[#allocation5 + $0xea0] sm:$0xff]
        %v819 = vld [vmem:[#allocation5 + $0xea8] sm:$0xff]
        %v820 = vld [vmem:[#allocation5 + $0xeb0] sm:$0xff]
        %v821 = vld [vmem:[#allocation5 + $0xeb8] sm:$0xff]
        %v822 = vld [vmem:[#allocation5 + $0xec0] sm:$0xff]
        %v823 = vld [vmem:[#allocation5 + $0xec8] sm:$0xff]
        %v824 = vld [vmem:[#allocation5 + $0xed0] sm:$0xff]
        %v825 = vld [vmem:[#allocation5 + $0xed8] sm:$0xff]
        %v826 = vld [vmem:[#allocation5 + $0xee0] sm:$0xff]
        %v827 = vld [vmem:[#allocation5 + $0xee8] sm:$0xff]
        %v828 = vld [vmem:[#allocation5 + $0xef0] sm:$0xff]
        %v829 = vld [vmem:[#allocation5 + $0xef8] sm:$0xff]
        %v830 = vld [vmem:[#allocation5 + $0xf00] sm:$0xff]
        %v831 = vld [vmem:[#allocation5 + $0xf08] sm:$0xff]
        %v832 = vld [vmem:[#allocation5 + $0xf10] sm:$0xff]
        %v833 = vld [vmem:[#allocation5 + $0xf18] sm:$0xff]
        %v834 = vld [vmem:[#allocation5 + $0xf20] sm:$0xff]
        %v835 = vld [vmem:[#allocation5 + $0xf28] sm:$0xff]
        %v836 = vld [vmem:[#allocation5 + $0xf30] sm:$0xff]
        %v837 = vld [vmem:[#allocation5 + $0xf38] sm:$0xff]
        %v838 = vld [vmem:[#allocation5 + $0xf40] sm:$0xff]
        %v839 = vld [vmem:[#allocation5 + $0xf48] sm:$0xff]
        %v840 = vld [vmem:[#allocation5 + $0xf50] sm:$0xff]
        %v841 = vld [vmem:[#allocation5 + $0xf58] sm:$0xff]
        %v842 = vld [vmem:[#allocation5 + $0xf60] sm:$0xff]
        %v843 = vld [vmem:[#allocation5 + $0xf68] sm:$0xff]
        %v844 = vld [vmem:[#allocation5 + $0xf70] sm:$0xff]
        %v845 = vld [vmem:[#allocation5 + $0xf78] sm:$0xff]
        %v846 = vld [vmem:[#allocation5 + $0xf80] sm:$0xff]
        %v847 = vld [vmem:[#allocation5 + $0xf88] sm:$0xff]
        %v848 = vld [vmem:[#allocation5 + $0xf90] sm:$0xff]
        %v849 = vld [vmem:[#allocation5 + $0xf98] sm:$0xff]
        %v850 = vld [vmem:[#allocation5 + $0xfa0] sm:$0xff]
        %v851 = vld [vmem:[#allocation5 + $0xfa8] sm:$0xff]
        %v852 = vld [vmem:[#allocation5 + $0xfb0] sm:$0xff]
        %v853 = vld [vmem:[#allocation5 + $0xfb8] sm:$0xff]
        %v854 = vld [vmem:[#allocation5 + $0xfc0] sm:$0xff]
        %v855 = vld [vmem:[#allocation5 + $0xfc8] sm:$0xff]
        %v856 = vld [vmem:[#allocation5 + $0xfd0] sm:$0xff]
        %v857 = vld [vmem:[#allocation5 + $0xfd8] sm:$0xff]
        %v858 = vld [vmem:[#allocation5 + $0xfe0] sm:$0xff]
        %v859 = vld [vmem:[#allocation5 + $0xfe8] sm:$0xff]
        %v860 = vld [vmem:[#allocation5 + $0xff0] sm:$0xff]
        %v861 = vld [vmem:[#allocation5 + $0xff8] sm:$0xff]
        %v862 = vld [vmem:[#allocation7] sm:$0x3]
        %v864 = vlaneseq
        %v865 = vshrl.u32 %v864, 7
        %v866 = vsub.s32 0, %v865
        %v867 = vrot.slane %v862, %v866
        %v868 = vlaneseq
        %v869 = vshrl.u32 %v868, 7
        %v870 = vsub.s32 1, %v869
        %v871 = vrot.slane %v862, %v870
        %v890 = vunpack.c.l.b16 %v334
        %v891 = vunpack.c.h.b16 %v334
        %v892 = vunpack.c.l.b16 %v335
        %v893 = vunpack.c.h.b16 %v335
        %v894 = vunpack.c.l.b16 %v336
        %v895 = vunpack.c.h.b16 %v336
        %v896 = vunpack.c.l.b16 %v337
        %v897 = vunpack.c.h.b16 %v337
        %v898 = vunpack.c.l.b16 %v338
        %v899 = vunpack.c.h.b16 %v338
        %v900 = vunpack.c.l.b16 %v339
        %v901 = vunpack.c.h.b16 %v339
        %v902 = vunpack.c.l.b16 %v340
        %v903 = vunpack.c.h.b16 %v340
        %v904 = vunpack.c.l.b16 %v341
        %v905 = vunpack.c.h.b16 %v341
        %v906 = vunpack.c.l.b16 %v342
        %v907 = vunpack.c.h.b16 %v342
        %v908 = vunpack.c.l.b16 %v343
        %v909 = vunpack.c.h.b16 %v343
        %v910 = vunpack.c.l.b16 %v344
        %v911 = vunpack.c.h.b16 %v344
        %v912 = vunpack.c.l.b16 %v345
        %v913 = vunpack.c.h.b16 %v345
        %v914 = vunpack.c.l.b16 %v346
        %v915 = vunpack.c.h.b16 %v346
        %v916 = vunpack.c.l.b16 %v347
        %v917 = vunpack.c.h.b16 %v347
        %v918 = vunpack.c.l.b16 %v348
        %v919 = vunpack.c.h.b16 %v348
        %v920 = vunpack.c.l.b16 %v349
        %v921 = vunpack.c.h.b16 %v349
        %v922 = vpack.c.b16 %v890, %v890
        %v923 = vpack.c.b16 %v891, %v891
        %v924 = vpack.c.b16 %v892, %v892
        %v925 = vpack.c.b16 %v893, %v893
        %v926 = vpack.c.b16 %v894, %v894
        %v927 = vpack.c.b16 %v895, %v895
        %v928 = vpack.c.b16 %v896, %v896
        %v929 = vpack.c.b16 %v897, %v897
        %v930 = vpack.c.b16 %v898, %v898
        %v931 = vpack.c.b16 %v899, %v899
        %v932 = vpack.c.b16 %v900, %v900
        %v933 = vpack.c.b16 %v901, %v901
        %v934 = vpack.c.b16 %v902, %v902
        %v935 = vpack.c.b16 %v903, %v903
        %v936 = vpack.c.b16 %v904, %v904
        %v937 = vpack.c.b16 %v905, %v905
        %v938 = vpack.c.b16 %v906, %v906
        %v939 = vpack.c.b16 %v907, %v907
        %v940 = vpack.c.b16 %v908, %v908
        %v941 = vpack.c.b16 %v909, %v909
        %v942 = vpack.c.b16 %v910, %v910
        %v943 = vpack.c.b16 %v911, %v911
        %v944 = vpack.c.b16 %v912, %v912
        %v945 = vpack.c.b16 %v913, %v913
        %v946 = vpack.c.b16 %v914, %v914
        %v947 = vpack.c.b16 %v915, %v915
        %v948 = vpack.c.b16 %v916, %v916
        %v949 = vpack.c.b16 %v917, %v917
        %v950 = vpack.c.b16 %v918, %v918
        %v951 = vpack.c.b16 %v919, %v919
        %v952 = vpack.c.b16 %v920, %v920
        %v953 = vpack.c.b16 %v921, %v921
        %v1498 = vunpack.c.l.b16 %v350
        %v1499 = vunpack.c.h.b16 %v350
        %v1500 = vunpack.c.l.b16 %v351
        %v1501 = vunpack.c.h.b16 %v351
        %v1502 = vunpack.c.l.b16 %v352
        %v1503 = vunpack.c.h.b16 %v352
        %v1504 = vunpack.c.l.b16 %v353
        %v1505 = vunpack.c.h.b16 %v353
        %v1506 = vunpack.c.l.b16 %v354
        %v1507 = vunpack.c.h.b16 %v354
        %v1508 = vunpack.c.l.b16 %v355
        %v1509 = vunpack.c.h.b16 %v355
        %v1510 = vunpack.c.l.b16 %v356
        %v1511 = vunpack.c.h.b16 %v356
        %v1512 = vunpack.c.l.b16 %v357
        %v1513 = vunpack.c.h.b16 %v357
        %v1514 = vunpack.c.l.b16 %v358
        %v1515 = vunpack.c.h.b16 %v358
        %v1516 = vunpack.c.l.b16 %v359
        %v1517 = vunpack.c.h.b16 %v359
        %v1518 = vunpack.c.l.b16 %v360
        %v1519 = vunpack.c.h.b16 %v360
        %v1520 = vunpack.c.l.b16 %v361
        %v1521 = vunpack.c.h.b16 %v361
        %v1522 = vunpack.c.l.b16 %v362
        %v1523 = vunpack.c.h.b16 %v362
        %v1524 = vunpack.c.l.b16 %v363
        %v1525 = vunpack.c.h.b16 %v363
        %v1526 = vunpack.c.l.b16 %v364
        %v1527 = vunpack.c.h.b16 %v364
        %v1528 = vunpack.c.l.b16 %v365
        %v1529 = vunpack.c.h.b16 %v365
        %v1530 = vunpack.c.l.b16 %v366
        %v1531 = vunpack.c.h.b16 %v366
        %v1532 = vunpack.c.l.b16 %v367
        %v1533 = vunpack.c.h.b16 %v367
        %v1534 = vunpack.c.l.b16 %v368
        %v1535 = vunpack.c.h.b16 %v368
        %v1536 = vunpack.c.l.b16 %v369
        %v1537 = vunpack.c.h.b16 %v369
        %v1538 = vunpack.c.l.b16 %v370
        %v1539 = vunpack.c.h.b16 %v370
        %v1540 = vunpack.c.l.b16 %v371
        %v1541 = vunpack.c.h.b16 %v371
        %v1542 = vunpack.c.l.b16 %v372
        %v1543 = vunpack.c.h.b16 %v372
        %v1544 = vunpack.c.l.b16 %v373
        %v1545 = vunpack.c.h.b16 %v373
        %v1546 = vunpack.c.l.b16 %v374
        %v1547 = vunpack.c.h.b16 %v374
        %v1548 = vunpack.c.l.b16 %v375
        %v1549 = vunpack.c.h.b16 %v375
        %v1550 = vunpack.c.l.b16 %v376
        %v1551 = vunpack.c.h.b16 %v376
        %v1552 = vunpack.c.l.b16 %v377
        %v1553 = vunpack.c.h.b16 %v377
        %v1554 = vunpack.c.l.b16 %v378
        %v1555 = vunpack.c.h.b16 %v378
        %v1556 = vunpack.c.l.b16 %v379
        %v1557 = vunpack.c.h.b16 %v379
        %v1558 = vunpack.c.l.b16 %v380
        %v1559 = vunpack.c.h.b16 %v380
        %v1560 = vunpack.c.l.b16 %v381
        %v1561 = vunpack.c.h.b16 %v381
        %v1562 = vunpack.c.l.b16 %v382
        %v1563 = vunpack.c.h.b16 %v382
        %v1564 = vunpack.c.l.b16 %v383
        %v1565 = vunpack.c.h.b16 %v383
        %v1566 = vunpack.c.l.b16 %v384
        %v1567 = vunpack.c.h.b16 %v384
        %v1568 = vunpack.c.l.b16 %v385
        %v1569 = vunpack.c.h.b16 %v385
        %v1570 = vunpack.c.l.b16 %v386
        %v1571 = vunpack.c.h.b16 %v386
        %v1572 = vunpack.c.l.b16 %v387
        %v1573 = vunpack.c.h.b16 %v387
        %v1574 = vunpack.c.l.b16 %v388
        %v1575 = vunpack.c.h.b16 %v388
        %v1576 = vunpack.c.l.b16 %v389
        %v1577 = vunpack.c.h.b16 %v389
        %v1578 = vunpack.c.l.b16 %v390
        %v1579 = vunpack.c.h.b16 %v390
        %v1580 = vunpack.c.l.b16 %v391
        %v1581 = vunpack.c.h.b16 %v391
        %v1582 = vunpack.c.l.b16 %v392
        %v1583 = vunpack.c.h.b16 %v392
        %v1584 = vunpack.c.l.b16 %v393
        %v1585 = vunpack.c.h.b16 %v393
        %v1586 = vunpack.c.l.b16 %v394
        %v1587 = vunpack.c.h.b16 %v394
        %v1588 = vunpack.c.l.b16 %v395
        %v1589 = vunpack.c.h.b16 %v395
        %v1590 = vunpack.c.l.b16 %v396
        %v1591 = vunpack.c.h.b16 %v396
        %v1592 = vunpack.c.l.b16 %v397
        %v1593 = vunpack.c.h.b16 %v397
        %v1594 = vunpack.c.l.b16 %v398
        %v1595 = vunpack.c.h.b16 %v398
        %v1596 = vunpack.c.l.b16 %v399
        %v1597 = vunpack.c.h.b16 %v399
        %v1598 = vunpack.c.l.b16 %v400
        %v1599 = vunpack.c.h.b16 %v400
        %v1600 = vunpack.c.l.b16 %v401
        %v1601 = vunpack.c.h.b16 %v401
        %v1602 = vunpack.c.l.b16 %v402
        %v1603 = vunpack.c.h.b16 %v402
        %v1604 = vunpack.c.l.b16 %v403
        %v1605 = vunpack.c.h.b16 %v403
        %v1606 = vunpack.c.l.b16 %v404
        %v1607 = vunpack.c.h.b16 %v404
        %v1608 = vunpack.c.l.b16 %v405
        %v1609 = vunpack.c.h.b16 %v405
        %v1610 = vunpack.c.l.b16 %v406
        %v1611 = vunpack.c.h.b16 %v406
        %v1612 = vunpack.c.l.b16 %v407
        %v1613 = vunpack.c.h.b16 %v407
        %v1614 = vunpack.c.l.b16 %v408
        %v1615 = vunpack.c.h.b16 %v408
        %v1616 = vunpack.c.l.b16 %v409
        %v1617 = vunpack.c.h.b16 %v409
        %v1618 = vunpack.c.l.b16 %v410
        %v1619 = vunpack.c.h.b16 %v410
        %v1620 = vunpack.c.l.b16 %v411
        %v1621 = vunpack.c.h.b16 %v411
        %v1622 = vunpack.c.l.b16 %v412
        %v1623 = vunpack.c.h.b16 %v412
        %v1624 = vunpack.c.l.b16 %v413
        %v1625 = vunpack.c.h.b16 %v413
        %v1626 = vunpack.c.l.b16 %v414
        %v1627 = vunpack.c.h.b16 %v414
        %v1628 = vunpack.c.l.b16 %v415
        %v1629 = vunpack.c.h.b16 %v415
        %v1630 = vunpack.c.l.b16 %v416
        %v1631 = vunpack.c.h.b16 %v416
        %v1632 = vunpack.c.l.b16 %v417
        %v1633 = vunpack.c.h.b16 %v417
        %v1634 = vunpack.c.l.b16 %v418
        %v1635 = vunpack.c.h.b16 %v418
        %v1636 = vunpack.c.l.b16 %v419
        %v1637 = vunpack.c.h.b16 %v419
        %v1638 = vunpack.c.l.b16 %v420
        %v1639 = vunpack.c.h.b16 %v420
        %v1640 = vunpack.c.l.b16 %v421
        %v1641 = vunpack.c.h.b16 %v421
        %v1642 = vunpack.c.l.b16 %v422
        %v1643 = vunpack.c.h.b16 %v422
        %v1644 = vunpack.c.l.b16 %v423
        %v1645 = vunpack.c.h.b16 %v423
        %v1646 = vunpack.c.l.b16 %v424
        %v1647 = vunpack.c.h.b16 %v424
        %v1648 = vunpack.c.l.b16 %v425
        %v1649 = vunpack.c.h.b16 %v425
        %v1650 = vunpack.c.l.b16 %v426
        %v1651 = vunpack.c.h.b16 %v426
        %v1652 = vunpack.c.l.b16 %v427
        %v1653 = vunpack.c.h.b16 %v427
        %v1654 = vunpack.c.l.b16 %v428
        %v1655 = vunpack.c.h.b16 %v428
        %v1656 = vunpack.c.l.b16 %v429
        %v1657 = vunpack.c.h.b16 %v429
        %v1658 = vunpack.c.l.b16 %v430
        %v1659 = vunpack.c.h.b16 %v430
        %v1660 = vunpack.c.l.b16 %v431
        %v1661 = vunpack.c.h.b16 %v431
        %v1662 = vunpack.c.l.b16 %v432
        %v1663 = vunpack.c.h.b16 %v432
        %v1664 = vunpack.c.l.b16 %v433
        %v1665 = vunpack.c.h.b16 %v433
        %v1666 = vunpack.c.l.b16 %v434
        %v1667 = vunpack.c.h.b16 %v434
        %v1668 = vunpack.c.l.b16 %v435
        %v1669 = vunpack.c.h.b16 %v435
        %v1670 = vunpack.c.l.b16 %v436
        %v1671 = vunpack.c.h.b16 %v436
        %v1672 = vunpack.c.l.b16 %v437
        %v1673 = vunpack.c.h.b16 %v437
        %v1674 = vunpack.c.l.b16 %v438
        %v1675 = vunpack.c.h.b16 %v438
        %v1676 = vunpack.c.l.b16 %v439
        %v1677 = vunpack.c.h.b16 %v439
        %v1678 = vunpack.c.l.b16 %v440
        %v1679 = vunpack.c.h.b16 %v440
        %v1680 = vunpack.c.l.b16 %v441
        %v1681 = vunpack.c.h.b16 %v441
        %v1682 = vunpack.c.l.b16 %v442
        %v1683 = vunpack.c.h.b16 %v442
        %v1684 = vunpack.c.l.b16 %v443
        %v1685 = vunpack.c.h.b16 %v443
        %v1686 = vunpack.c.l.b16 %v444
        %v1687 = vunpack.c.h.b16 %v444
        %v1688 = vunpack.c.l.b16 %v445
        %v1689 = vunpack.c.h.b16 %v445
        %v1690 = vunpack.c.l.b16 %v446
        %v1691 = vunpack.c.h.b16 %v446
        %v1692 = vunpack.c.l.b16 %v447
        %v1693 = vunpack.c.h.b16 %v447
        %v1694 = vunpack.c.l.b16 %v448
        %v1695 = vunpack.c.h.b16 %v448
        %v1696 = vunpack.c.l.b16 %v449
        %v1697 = vunpack.c.h.b16 %v449
        %v1698 = vunpack.c.l.b16 %v450
        %v1699 = vunpack.c.h.b16 %v450
        %v1700 = vunpack.c.l.b16 %v451
        %v1701 = vunpack.c.h.b16 %v451
        %v1702 = vunpack.c.l.b16 %v452
        %v1703 = vunpack.c.h.b16 %v452
        %v1704 = vunpack.c.l.b16 %v453
        %v1705 = vunpack.c.h.b16 %v453
        %v1706 = vunpack.c.l.b16 %v454
        %v1707 = vunpack.c.h.b16 %v454
        %v1708 = vunpack.c.l.b16 %v455
        %v1709 = vunpack.c.h.b16 %v455
        %v1710 = vunpack.c.l.b16 %v456
        %v1711 = vunpack.c.h.b16 %v456
        %v1712 = vunpack.c.l.b16 %v457
        %v1713 = vunpack.c.h.b16 %v457
        %v1714 = vunpack.c.l.b16 %v458
        %v1715 = vunpack.c.h.b16 %v458
        %v1716 = vunpack.c.l.b16 %v459
        %v1717 = vunpack.c.h.b16 %v459
        %v1718 = vunpack.c.l.b16 %v460
        %v1719 = vunpack.c.h.b16 %v460
        %v1720 = vunpack.c.l.b16 %v461
        %v1721 = vunpack.c.h.b16 %v461
        %v1722 = vunpack.c.l.b16 %v462
        %v1723 = vunpack.c.h.b16 %v462
        %v1724 = vunpack.c.l.b16 %v463
        %v1725 = vunpack.c.h.b16 %v463
        %v1726 = vunpack.c.l.b16 %v464
        %v1727 = vunpack.c.h.b16 %v464
        %v1728 = vunpack.c.l.b16 %v465
        %v1729 = vunpack.c.h.b16 %v465
        %v1730 = vunpack.c.l.b16 %v466
        %v1731 = vunpack.c.h.b16 %v466
        %v1732 = vunpack.c.l.b16 %v467
        %v1733 = vunpack.c.h.b16 %v467
        %v1734 = vunpack.c.l.b16 %v468
        %v1735 = vunpack.c.h.b16 %v468
        %v1736 = vunpack.c.l.b16 %v469
        %v1737 = vunpack.c.h.b16 %v469
        %v1738 = vunpack.c.l.b16 %v470
        %v1739 = vunpack.c.h.b16 %v470
        %v1740 = vunpack.c.l.b16 %v471
        %v1741 = vunpack.c.h.b16 %v471
        %v1742 = vunpack.c.l.b16 %v472
        %v1743 = vunpack.c.h.b16 %v472
        %v1744 = vunpack.c.l.b16 %v473
        %v1745 = vunpack.c.h.b16 %v473
        %v1746 = vunpack.c.l.b16 %v474
        %v1747 = vunpack.c.h.b16 %v474
        %v1748 = vunpack.c.l.b16 %v475
        %v1749 = vunpack.c.h.b16 %v475
        %v1750 = vunpack.c.l.b16 %v476
        %v1751 = vunpack.c.h.b16 %v476
        %v1752 = vunpack.c.l.b16 %v477
        %v1753 = vunpack.c.h.b16 %v477
        %v1754 = vunpack.c.l.b16 %v478
        %v1755 = vunpack.c.h.b16 %v478
        %v1756 = vunpack.c.l.b16 %v479
        %v1757 = vunpack.c.h.b16 %v479
        %v1758 = vunpack.c.l.b16 %v480
        %v1759 = vunpack.c.h.b16 %v480
        %v1760 = vunpack.c.l.b16 %v481
        %v1761 = vunpack.c.h.b16 %v481
        %v1762 = vunpack.c.l.b16 %v482
        %v1763 = vunpack.c.h.b16 %v482
        %v1764 = vunpack.c.l.b16 %v483
        %v1765 = vunpack.c.h.b16 %v483
        %v1766 = vunpack.c.l.b16 %v484
        %v1767 = vunpack.c.h.b16 %v484
        %v1768 = vunpack.c.l.b16 %v485
        %v1769 = vunpack.c.h.b16 %v485
        %v1770 = vunpack.c.l.b16 %v486
        %v1771 = vunpack.c.h.b16 %v486
        %v1772 = vunpack.c.l.b16 %v487
        %v1773 = vunpack.c.h.b16 %v487
        %v1774 = vunpack.c.l.b16 %v488
        %v1775 = vunpack.c.h.b16 %v488
        %v1776 = vunpack.c.l.b16 %v489
        %v1777 = vunpack.c.h.b16 %v489
        %v1778 = vunpack.c.l.b16 %v490
        %v1779 = vunpack.c.h.b16 %v490
        %v1780 = vunpack.c.l.b16 %v491
        %v1781 = vunpack.c.h.b16 %v491
        %v1782 = vunpack.c.l.b16 %v492
        %v1783 = vunpack.c.h.b16 %v492
        %v1784 = vunpack.c.l.b16 %v493
        %v1785 = vunpack.c.h.b16 %v493
        %v1786 = vunpack.c.l.b16 %v494
        %v1787 = vunpack.c.h.b16 %v494
        %v1788 = vunpack.c.l.b16 %v495
        %v1789 = vunpack.c.h.b16 %v495
        %v1790 = vunpack.c.l.b16 %v496
        %v1791 = vunpack.c.h.b16 %v496
        %v1792 = vunpack.c.l.b16 %v497
        %v1793 = vunpack.c.h.b16 %v497
        %v1794 = vunpack.c.l.b16 %v498
        %v1795 = vunpack.c.h.b16 %v498
        %v1796 = vunpack.c.l.b16 %v499
        %v1797 = vunpack.c.h.b16 %v499
        %v1798 = vunpack.c.l.b16 %v500
        %v1799 = vunpack.c.h.b16 %v500
        %v1800 = vunpack.c.l.b16 %v501
        %v1801 = vunpack.c.h.b16 %v501
        %v1802 = vunpack.c.l.b16 %v502
        %v1803 = vunpack.c.h.b16 %v502
        %v1804 = vunpack.c.l.b16 %v503
        %v1805 = vunpack.c.h.b16 %v503
        %v1806 = vunpack.c.l.b16 %v504
        %v1807 = vunpack.c.h.b16 %v504
        %v1808 = vunpack.c.l.b16 %v505
        %v1809 = vunpack.c.h.b16 %v505
        %v1810 = vunpack.c.l.b16 %v506
        %v1811 = vunpack.c.h.b16 %v506
        %v1812 = vunpack.c.l.b16 %v507
        %v1813 = vunpack.c.h.b16 %v507
        %v1814 = vunpack.c.l.b16 %v508
        %v1815 = vunpack.c.h.b16 %v508
        %v1816 = vunpack.c.l.b16 %v509
        %v1817 = vunpack.c.h.b16 %v509
        %v1818 = vunpack.c.l.b16 %v510
        %v1819 = vunpack.c.h.b16 %v510
        %v1820 = vunpack.c.l.b16 %v511
        %v1821 = vunpack.c.h.b16 %v511
        %v1822 = vunpack.c.l.b16 %v512
        %v1823 = vunpack.c.h.b16 %v512
        %v1824 = vunpack.c.l.b16 %v513
        %v1825 = vunpack.c.h.b16 %v513
        %v1826 = vunpack.c.l.b16 %v514
        %v1827 = vunpack.c.h.b16 %v514
        %v1828 = vunpack.c.l.b16 %v515
        %v1829 = vunpack.c.h.b16 %v515
        %v1830 = vunpack.c.l.b16 %v516
        %v1831 = vunpack.c.h.b16 %v516
        %v1832 = vunpack.c.l.b16 %v517
        %v1833 = vunpack.c.h.b16 %v517
        %v1834 = vunpack.c.l.b16 %v518
        %v1835 = vunpack.c.h.b16 %v518
        %v1836 = vunpack.c.l.b16 %v519
        %v1837 = vunpack.c.h.b16 %v519
        %v1838 = vunpack.c.l.b16 %v520
        %v1839 = vunpack.c.h.b16 %v520
        %v1840 = vunpack.c.l.b16 %v521
        %v1841 = vunpack.c.h.b16 %v521
        %v1842 = vunpack.c.l.b16 %v522
        %v1843 = vunpack.c.h.b16 %v522
        %v1844 = vunpack.c.l.b16 %v523
        %v1845 = vunpack.c.h.b16 %v523
        %v1846 = vunpack.c.l.b16 %v524
        %v1847 = vunpack.c.h.b16 %v524
        %v1848 = vunpack.c.l.b16 %v525
        %v1849 = vunpack.c.h.b16 %v525
        %v1850 = vunpack.c.l.b16 %v526
        %v1851 = vunpack.c.h.b16 %v526
        %v1852 = vunpack.c.l.b16 %v527
        %v1853 = vunpack.c.h.b16 %v527
        %v1854 = vunpack.c.l.b16 %v528
        %v1855 = vunpack.c.h.b16 %v528
        %v1856 = vunpack.c.l.b16 %v529
        %v1857 = vunpack.c.h.b16 %v529
        %v1858 = vunpack.c.l.b16 %v530
        %v1859 = vunpack.c.h.b16 %v530
        %v1860 = vunpack.c.l.b16 %v531
        %v1861 = vunpack.c.h.b16 %v531
        %v1862 = vunpack.c.l.b16 %v532
        %v1863 = vunpack.c.h.b16 %v532
        %v1864 = vunpack.c.l.b16 %v533
        %v1865 = vunpack.c.h.b16 %v533
        %v1866 = vunpack.c.l.b16 %v534
        %v1867 = vunpack.c.h.b16 %v534
        %v1868 = vunpack.c.l.b16 %v535
        %v1869 = vunpack.c.h.b16 %v535
        %v1870 = vunpack.c.l.b16 %v536
        %v1871 = vunpack.c.h.b16 %v536
        %v1872 = vunpack.c.l.b16 %v537
        %v1873 = vunpack.c.h.b16 %v537
        %v1874 = vunpack.c.l.b16 %v538
        %v1875 = vunpack.c.h.b16 %v538
        %v1876 = vunpack.c.l.b16 %v539
        %v1877 = vunpack.c.h.b16 %v539
        %v1878 = vunpack.c.l.b16 %v540
        %v1879 = vunpack.c.h.b16 %v540
        %v1880 = vunpack.c.l.b16 %v541
        %v1881 = vunpack.c.h.b16 %v541
        %v1882 = vunpack.c.l.b16 %v542
        %v1883 = vunpack.c.h.b16 %v542
        %v1884 = vunpack.c.l.b16 %v543
        %v1885 = vunpack.c.h.b16 %v543
        %v1886 = vunpack.c.l.b16 %v544
        %v1887 = vunpack.c.h.b16 %v544
        %v1888 = vunpack.c.l.b16 %v545
        %v1889 = vunpack.c.h.b16 %v545
        %v1890 = vunpack.c.l.b16 %v546
        %v1891 = vunpack.c.h.b16 %v546
        %v1892 = vunpack.c.l.b16 %v547
        %v1893 = vunpack.c.h.b16 %v547
        %v1894 = vunpack.c.l.b16 %v548
        %v1895 = vunpack.c.h.b16 %v548
        %v1896 = vunpack.c.l.b16 %v549
        %v1897 = vunpack.c.h.b16 %v549
        %v1898 = vunpack.c.l.b16 %v550
        %v1899 = vunpack.c.h.b16 %v550
        %v1900 = vunpack.c.l.b16 %v551
        %v1901 = vunpack.c.h.b16 %v551
        %v1902 = vunpack.c.l.b16 %v552
        %v1903 = vunpack.c.h.b16 %v552
        %v1904 = vunpack.c.l.b16 %v553
        %v1905 = vunpack.c.h.b16 %v553
        %v1906 = vunpack.c.l.b16 %v554
        %v1907 = vunpack.c.h.b16 %v554
        %v1908 = vunpack.c.l.b16 %v555
        %v1909 = vunpack.c.h.b16 %v555
        %v1910 = vunpack.c.l.b16 %v556
        %v1911 = vunpack.c.h.b16 %v556
        %v1912 = vunpack.c.l.b16 %v557
        %v1913 = vunpack.c.h.b16 %v557
        %v1914 = vunpack.c.l.b16 %v558
        %v1915 = vunpack.c.h.b16 %v558
        %v1916 = vunpack.c.l.b16 %v559
        %v1917 = vunpack.c.h.b16 %v559
        %v1918 = vunpack.c.l.b16 %v560
        %v1919 = vunpack.c.h.b16 %v560
        %v1920 = vunpack.c.l.b16 %v561
        %v1921 = vunpack.c.h.b16 %v561
        %v1922 = vunpack.c.l.b16 %v562
        %v1923 = vunpack.c.h.b16 %v562
        %v1924 = vunpack.c.l.b16 %v563
        %v1925 = vunpack.c.h.b16 %v563
        %v1926 = vunpack.c.l.b16 %v564
        %v1927 = vunpack.c.h.b16 %v564
        %v1928 = vunpack.c.l.b16 %v565
        %v1929 = vunpack.c.h.b16 %v565
        %v1930 = vunpack.c.l.b16 %v566
        %v1931 = vunpack.c.h.b16 %v566
        %v1932 = vunpack.c.l.b16 %v567
        %v1933 = vunpack.c.h.b16 %v567
        %v1934 = vunpack.c.l.b16 %v568
        %v1935 = vunpack.c.h.b16 %v568
        %v1936 = vunpack.c.l.b16 %v569
        %v1937 = vunpack.c.h.b16 %v569
        %v1938 = vunpack.c.l.b16 %v570
        %v1939 = vunpack.c.h.b16 %v570
        %v1940 = vunpack.c.l.b16 %v571
        %v1941 = vunpack.c.h.b16 %v571
        %v1942 = vunpack.c.l.b16 %v572
        %v1943 = vunpack.c.h.b16 %v572
        %v1944 = vunpack.c.l.b16 %v573
        %v1945 = vunpack.c.h.b16 %v573
        %v1946 = vunpack.c.l.b16 %v574
        %v1947 = vunpack.c.h.b16 %v574
        %v1948 = vunpack.c.l.b16 %v575
        %v1949 = vunpack.c.h.b16 %v575
        %v1950 = vunpack.c.l.b16 %v576
        %v1951 = vunpack.c.h.b16 %v576
        %v1952 = vunpack.c.l.b16 %v577
        %v1953 = vunpack.c.h.b16 %v577
        %v1954 = vunpack.c.l.b16 %v578
        %v1955 = vunpack.c.h.b16 %v578
        %v1956 = vunpack.c.l.b16 %v579
        %v1957 = vunpack.c.h.b16 %v579
        %v1958 = vunpack.c.l.b16 %v580
        %v1959 = vunpack.c.h.b16 %v580
        %v1960 = vunpack.c.l.b16 %v581
        %v1961 = vunpack.c.h.b16 %v581
        %v1962 = vunpack.c.l.b16 %v582
        %v1963 = vunpack.c.h.b16 %v582
        %v1964 = vunpack.c.l.b16 %v583
        %v1965 = vunpack.c.h.b16 %v583
        %v1966 = vunpack.c.l.b16 %v584
        %v1967 = vunpack.c.h.b16 %v584
        %v1968 = vunpack.c.l.b16 %v585
        %v1969 = vunpack.c.h.b16 %v585
        %v1970 = vunpack.c.l.b16 %v586
        %v1971 = vunpack.c.h.b16 %v586
        %v1972 = vunpack.c.l.b16 %v587
        %v1973 = vunpack.c.h.b16 %v587
        %v1974 = vunpack.c.l.b16 %v588
        %v1975 = vunpack.c.h.b16 %v588
        %v1976 = vunpack.c.l.b16 %v589
        %v1977 = vunpack.c.h.b16 %v589
        %v1978 = vunpack.c.l.b16 %v590
        %v1979 = vunpack.c.h.b16 %v590
        %v1980 = vunpack.c.l.b16 %v591
        %v1981 = vunpack.c.h.b16 %v591
        %v1982 = vunpack.c.l.b16 %v592
        %v1983 = vunpack.c.h.b16 %v592
        %v1984 = vunpack.c.l.b16 %v593
        %v1985 = vunpack.c.h.b16 %v593
        %v1986 = vunpack.c.l.b16 %v594
        %v1987 = vunpack.c.h.b16 %v594
        %v1988 = vunpack.c.l.b16 %v595
        %v1989 = vunpack.c.h.b16 %v595
        %v1990 = vunpack.c.l.b16 %v596
        %v1991 = vunpack.c.h.b16 %v596
        %v1992 = vunpack.c.l.b16 %v597
        %v1993 = vunpack.c.h.b16 %v597
        %v1994 = vunpack.c.l.b16 %v598
        %v1995 = vunpack.c.h.b16 %v598
        %v1996 = vunpack.c.l.b16 %v599
        %v1997 = vunpack.c.h.b16 %v599
        %v1998 = vunpack.c.l.b16 %v600
        %v1999 = vunpack.c.h.b16 %v600
        %v2000 = vunpack.c.l.b16 %v601
        %v2001 = vunpack.c.h.b16 %v601
        %v2002 = vunpack.c.l.b16 %v602
        %v2003 = vunpack.c.h.b16 %v602
        %v2004 = vunpack.c.l.b16 %v603
        %v2005 = vunpack.c.h.b16 %v603
        %v2006 = vunpack.c.l.b16 %v604
        %v2007 = vunpack.c.h.b16 %v604
        %v2008 = vunpack.c.l.b16 %v605
        %v2009 = vunpack.c.h.b16 %v605
        %v2010 = vunpack.c.l.b16 %v606
        %v2011 = vunpack.c.h.b16 %v606
        %v2012 = vunpack.c.l.b16 %v607
        %v2013 = vunpack.c.h.b16 %v607
        %v2014 = vunpack.c.l.b16 %v608
        %v2015 = vunpack.c.h.b16 %v608
        %v2016 = vunpack.c.l.b16 %v609
        %v2017 = vunpack.c.h.b16 %v609
        %v2018 = vunpack.c.l.b16 %v610
        %v2019 = vunpack.c.h.b16 %v610
        %v2020 = vunpack.c.l.b16 %v611
        %v2021 = vunpack.c.h.b16 %v611
        %v2022 = vunpack.c.l.b16 %v612
        %v2023 = vunpack.c.h.b16 %v612
        %v2024 = vunpack.c.l.b16 %v613
        %v2025 = vunpack.c.h.b16 %v613
        %v2026 = vunpack.c.l.b16 %v614
        %v2027 = vunpack.c.h.b16 %v614
        %v2028 = vunpack.c.l.b16 %v615
        %v2029 = vunpack.c.h.b16 %v615
        %v2030 = vunpack.c.l.b16 %v616
        %v2031 = vunpack.c.h.b16 %v616
        %v2032 = vunpack.c.l.b16 %v617
        %v2033 = vunpack.c.h.b16 %v617
        %v2034 = vunpack.c.l.b16 %v618
        %v2035 = vunpack.c.h.b16 %v618
        %v2036 = vunpack.c.l.b16 %v619
        %v2037 = vunpack.c.h.b16 %v619
        %v2038 = vunpack.c.l.b16 %v620
        %v2039 = vunpack.c.h.b16 %v620
        %v2040 = vunpack.c.l.b16 %v621
        %v2041 = vunpack.c.h.b16 %v621
        %v2042 = vunpack.c.l.b16 %v622
        %v2043 = vunpack.c.h.b16 %v622
        %v2044 = vunpack.c.l.b16 %v623
        %v2045 = vunpack.c.h.b16 %v623
        %v2046 = vunpack.c.l.b16 %v624
        %v2047 = vunpack.c.h.b16 %v624
        %v2048 = vunpack.c.l.b16 %v625
        %v2049 = vunpack.c.h.b16 %v625
        %v2050 = vunpack.c.l.b16 %v626
        %v2051 = vunpack.c.h.b16 %v626
        %v2052 = vunpack.c.l.b16 %v627
        %v2053 = vunpack.c.h.b16 %v627
        %v2054 = vunpack.c.l.b16 %v628
        %v2055 = vunpack.c.h.b16 %v628
        %v2056 = vunpack.c.l.b16 %v629
        %v2057 = vunpack.c.h.b16 %v629
        %v2058 = vunpack.c.l.b16 %v630
        %v2059 = vunpack.c.h.b16 %v630
        %v2060 = vunpack.c.l.b16 %v631
        %v2061 = vunpack.c.h.b16 %v631
        %v2062 = vunpack.c.l.b16 %v632
        %v2063 = vunpack.c.h.b16 %v632
        %v2064 = vunpack.c.l.b16 %v633
        %v2065 = vunpack.c.h.b16 %v633
        %v2066 = vunpack.c.l.b16 %v634
        %v2067 = vunpack.c.h.b16 %v634
        %v2068 = vunpack.c.l.b16 %v635
        %v2069 = vunpack.c.h.b16 %v635
        %v2070 = vunpack.c.l.b16 %v636
        %v2071 = vunpack.c.h.b16 %v636
        %v2072 = vunpack.c.l.b16 %v637
        %v2073 = vunpack.c.h.b16 %v637
        %v2074 = vunpack.c.l.b16 %v638
        %v2075 = vunpack.c.h.b16 %v638
        %v2076 = vunpack.c.l.b16 %v639
        %v2077 = vunpack.c.h.b16 %v639
        %v2078 = vunpack.c.l.b16 %v640
        %v2079 = vunpack.c.h.b16 %v640
        %v2080 = vunpack.c.l.b16 %v641
        %v2081 = vunpack.c.h.b16 %v641
        %v2082 = vunpack.c.l.b16 %v642
        %v2083 = vunpack.c.h.b16 %v642
        %v2084 = vunpack.c.l.b16 %v643
        %v2085 = vunpack.c.h.b16 %v643
        %v2086 = vunpack.c.l.b16 %v644
        %v2087 = vunpack.c.h.b16 %v644
        %v2088 = vunpack.c.l.b16 %v645
        %v2089 = vunpack.c.h.b16 %v645
        %v2090 = vunpack.c.l.b16 %v646
        %v2091 = vunpack.c.h.b16 %v646
        %v2092 = vunpack.c.l.b16 %v647
        %v2093 = vunpack.c.h.b16 %v647
        %v2094 = vunpack.c.l.b16 %v648
        %v2095 = vunpack.c.h.b16 %v648
        %v2096 = vunpack.c.l.b16 %v649
        %v2097 = vunpack.c.h.b16 %v649
        %v2098 = vunpack.c.l.b16 %v650
        %v2099 = vunpack.c.h.b16 %v650
        %v2100 = vunpack.c.l.b16 %v651
        %v2101 = vunpack.c.h.b16 %v651
        %v2102 = vunpack.c.l.b16 %v652
        %v2103 = vunpack.c.h.b16 %v652
        %v2104 = vunpack.c.l.b16 %v653
        %v2105 = vunpack.c.h.b16 %v653
        %v2106 = vunpack.c.l.b16 %v654
        %v2107 = vunpack.c.h.b16 %v654
        %v2108 = vunpack.c.l.b16 %v655
        %v2109 = vunpack.c.h.b16 %v655
        %v2110 = vunpack.c.l.b16 %v656
        %v2111 = vunpack.c.h.b16 %v656
        %v2112 = vunpack.c.l.b16 %v657
        %v2113 = vunpack.c.h.b16 %v657
        %v2114 = vunpack.c.l.b16 %v658
        %v2115 = vunpack.c.h.b16 %v658
        %v2116 = vunpack.c.l.b16 %v659
        %v2117 = vunpack.c.h.b16 %v659
        %v2118 = vunpack.c.l.b16 %v660
        %v2119 = vunpack.c.h.b16 %v660
        %v2120 = vunpack.c.l.b16 %v661
        %v2121 = vunpack.c.h.b16 %v661
        %v2122 = vunpack.c.l.b16 %v662
        %v2123 = vunpack.c.h.b16 %v662
        %v2124 = vunpack.c.l.b16 %v663
        %v2125 = vunpack.c.h.b16 %v663
        %v2126 = vunpack.c.l.b16 %v664
        %v2127 = vunpack.c.h.b16 %v664
        %v2128 = vunpack.c.l.b16 %v665
        %v2129 = vunpack.c.h.b16 %v665
        %v2130 = vunpack.c.l.b16 %v666
        %v2131 = vunpack.c.h.b16 %v666
        %v2132 = vunpack.c.l.b16 %v667
        %v2133 = vunpack.c.h.b16 %v667
        %v2134 = vunpack.c.l.b16 %v668
        %v2135 = vunpack.c.h.b16 %v668
        %v2136 = vunpack.c.l.b16 %v669
        %v2137 = vunpack.c.h.b16 %v669
        %v2138 = vunpack.c.l.b16 %v670
        %v2139 = vunpack.c.h.b16 %v670
        %v2140 = vunpack.c.l.b16 %v671
        %v2141 = vunpack.c.h.b16 %v671
        %v2142 = vunpack.c.l.b16 %v672
        %v2143 = vunpack.c.h.b16 %v672
        %v2144 = vunpack.c.l.b16 %v673
        %v2145 = vunpack.c.h.b16 %v673
        %v2146 = vunpack.c.l.b16 %v674
        %v2147 = vunpack.c.h.b16 %v674
        %v2148 = vunpack.c.l.b16 %v675
        %v2149 = vunpack.c.h.b16 %v675
        %v2150 = vunpack.c.l.b16 %v676
        %v2151 = vunpack.c.h.b16 %v676
        %v2152 = vunpack.c.l.b16 %v677
        %v2153 = vunpack.c.h.b16 %v677
        %v2154 = vunpack.c.l.b16 %v678
        %v2155 = vunpack.c.h.b16 %v678
        %v2156 = vunpack.c.l.b16 %v679
        %v2157 = vunpack.c.h.b16 %v679
        %v2158 = vunpack.c.l.b16 %v680
        %v2159 = vunpack.c.h.b16 %v680
        %v2160 = vunpack.c.l.b16 %v681
        %v2161 = vunpack.c.h.b16 %v681
        %v2162 = vunpack.c.l.b16 %v682
        %v2163 = vunpack.c.h.b16 %v682
        %v2164 = vunpack.c.l.b16 %v683
        %v2165 = vunpack.c.h.b16 %v683
        %v2166 = vunpack.c.l.b16 %v684
        %v2167 = vunpack.c.h.b16 %v684
        %v2168 = vunpack.c.l.b16 %v685
        %v2169 = vunpack.c.h.b16 %v685
        %v2170 = vunpack.c.l.b16 %v686
        %v2171 = vunpack.c.h.b16 %v686
        %v2172 = vunpack.c.l.b16 %v687
        %v2173 = vunpack.c.h.b16 %v687
        %v2174 = vunpack.c.l.b16 %v688
        %v2175 = vunpack.c.h.b16 %v688
        %v2176 = vunpack.c.l.b16 %v689
        %v2177 = vunpack.c.h.b16 %v689
        %v2178 = vunpack.c.l.b16 %v690
        %v2179 = vunpack.c.h.b16 %v690
        %v2180 = vunpack.c.l.b16 %v691
        %v2181 = vunpack.c.h.b16 %v691
        %v2182 = vunpack.c.l.b16 %v692
        %v2183 = vunpack.c.h.b16 %v692
        %v2184 = vunpack.c.l.b16 %v693
        %v2185 = vunpack.c.h.b16 %v693
        %v2186 = vunpack.c.l.b16 %v694
        %v2187 = vunpack.c.h.b16 %v694
        %v2188 = vunpack.c.l.b16 %v695
        %v2189 = vunpack.c.h.b16 %v695
        %v2190 = vunpack.c.l.b16 %v696
        %v2191 = vunpack.c.h.b16 %v696
        %v2192 = vunpack.c.l.b16 %v697
        %v2193 = vunpack.c.h.b16 %v697
        %v2194 = vunpack.c.l.b16 %v698
        %v2195 = vunpack.c.h.b16 %v698
        %v2196 = vunpack.c.l.b16 %v699
        %v2197 = vunpack.c.h.b16 %v699
        %v2198 = vunpack.c.l.b16 %v700
        %v2199 = vunpack.c.h.b16 %v700
        %v2200 = vunpack.c.l.b16 %v701
        %v2201 = vunpack.c.h.b16 %v701
        %v2202 = vunpack.c.l.b16 %v702
        %v2203 = vunpack.c.h.b16 %v702
        %v2204 = vunpack.c.l.b16 %v703
        %v2205 = vunpack.c.h.b16 %v703
        %v2206 = vunpack.c.l.b16 %v704
        %v2207 = vunpack.c.h.b16 %v704
        %v2208 = vunpack.c.l.b16 %v705
        %v2209 = vunpack.c.h.b16 %v705
        %v2210 = vunpack.c.l.b16 %v706
        %v2211 = vunpack.c.h.b16 %v706
        %v2212 = vunpack.c.l.b16 %v707
        %v2213 = vunpack.c.h.b16 %v707
        %v2214 = vunpack.c.l.b16 %v708
        %v2215 = vunpack.c.h.b16 %v708
        %v2216 = vunpack.c.l.b16 %v709
        %v2217 = vunpack.c.h.b16 %v709
        %v2218 = vunpack.c.l.b16 %v710
        %v2219 = vunpack.c.h.b16 %v710
        %v2220 = vunpack.c.l.b16 %v711
        %v2221 = vunpack.c.h.b16 %v711
        %v2222 = vunpack.c.l.b16 %v712
        %v2223 = vunpack.c.h.b16 %v712
        %v2224 = vunpack.c.l.b16 %v713
        %v2225 = vunpack.c.h.b16 %v713
        %v2226 = vunpack.c.l.b16 %v714
        %v2227 = vunpack.c.h.b16 %v714
        %v2228 = vunpack.c.l.b16 %v715
        %v2229 = vunpack.c.h.b16 %v715
        %v2230 = vunpack.c.l.b16 %v716
        %v2231 = vunpack.c.h.b16 %v716
        %v2232 = vunpack.c.l.b16 %v717
        %v2233 = vunpack.c.h.b16 %v717
        %v2234 = vunpack.c.l.b16 %v718
        %v2235 = vunpack.c.h.b16 %v718
        %v2236 = vunpack.c.l.b16 %v719
        %v2237 = vunpack.c.h.b16 %v719
        %v2238 = vunpack.c.l.b16 %v720
        %v2239 = vunpack.c.h.b16 %v720
        %v2240 = vunpack.c.l.b16 %v721
        %v2241 = vunpack.c.h.b16 %v721
        %v2242 = vunpack.c.l.b16 %v722
        %v2243 = vunpack.c.h.b16 %v722
        %v2244 = vunpack.c.l.b16 %v723
        %v2245 = vunpack.c.h.b16 %v723
        %v2246 = vunpack.c.l.b16 %v724
        %v2247 = vunpack.c.h.b16 %v724
        %v2248 = vunpack.c.l.b16 %v725
        %v2249 = vunpack.c.h.b16 %v725
        %v2250 = vunpack.c.l.b16 %v726
        %v2251 = vunpack.c.h.b16 %v726
        %v2252 = vunpack.c.l.b16 %v727
        %v2253 = vunpack.c.h.b16 %v727
        %v2254 = vunpack.c.l.b16 %v728
        %v2255 = vunpack.c.h.b16 %v728
        %v2256 = vunpack.c.l.b16 %v729
        %v2257 = vunpack.c.h.b16 %v729
        %v2258 = vunpack.c.l.b16 %v730
        %v2259 = vunpack.c.h.b16 %v730
        %v2260 = vunpack.c.l.b16 %v731
        %v2261 = vunpack.c.h.b16 %v731
        %v2262 = vunpack.c.l.b16 %v732
        %v2263 = vunpack.c.h.b16 %v732
        %v2264 = vunpack.c.l.b16 %v733
        %v2265 = vunpack.c.h.b16 %v733
        %v2266 = vunpack.c.l.b16 %v734
        %v2267 = vunpack.c.h.b16 %v734
        %v2268 = vunpack.c.l.b16 %v735
        %v2269 = vunpack.c.h.b16 %v735
        %v2270 = vunpack.c.l.b16 %v736
        %v2271 = vunpack.c.h.b16 %v736
        %v2272 = vunpack.c.l.b16 %v737
        %v2273 = vunpack.c.h.b16 %v737
        %v2274 = vunpack.c.l.b16 %v738
        %v2275 = vunpack.c.h.b16 %v738
        %v2276 = vunpack.c.l.b16 %v739
        %v2277 = vunpack.c.h.b16 %v739
        %v2278 = vunpack.c.l.b16 %v740
        %v2279 = vunpack.c.h.b16 %v740
        %v2280 = vunpack.c.l.b16 %v741
        %v2281 = vunpack.c.h.b16 %v741
        %v2282 = vunpack.c.l.b16 %v742
        %v2283 = vunpack.c.h.b16 %v742
        %v2284 = vunpack.c.l.b16 %v743
        %v2285 = vunpack.c.h.b16 %v743
        %v2286 = vunpack.c.l.b16 %v744
        %v2287 = vunpack.c.h.b16 %v744
        %v2288 = vunpack.c.l.b16 %v745
        %v2289 = vunpack.c.h.b16 %v745
        %v2290 = vunpack.c.l.b16 %v746
        %v2291 = vunpack.c.h.b16 %v746
        %v2292 = vunpack.c.l.b16 %v747
        %v2293 = vunpack.c.h.b16 %v747
        %v2294 = vunpack.c.l.b16 %v748
        %v2295 = vunpack.c.h.b16 %v748
        %v2296 = vunpack.c.l.b16 %v749
        %v2297 = vunpack.c.h.b16 %v749
        %v2298 = vunpack.c.l.b16 %v750
        %v2299 = vunpack.c.h.b16 %v750
        %v2300 = vunpack.c.l.b16 %v751
        %v2301 = vunpack.c.h.b16 %v751
        %v2302 = vunpack.c.l.b16 %v752
        %v2303 = vunpack.c.h.b16 %v752
        %v2304 = vunpack.c.l.b16 %v753
        %v2305 = vunpack.c.h.b16 %v753
        %v2306 = vunpack.c.l.b16 %v754
        %v2307 = vunpack.c.h.b16 %v754
        %v2308 = vunpack.c.l.b16 %v755
        %v2309 = vunpack.c.h.b16 %v755
        %v2310 = vunpack.c.l.b16 %v756
        %v2311 = vunpack.c.h.b16 %v756
        %v2312 = vunpack.c.l.b16 %v757
        %v2313 = vunpack.c.h.b16 %v757
        %v2314 = vunpack.c.l.b16 %v758
        %v2315 = vunpack.c.h.b16 %v758
        %v2316 = vunpack.c.l.b16 %v759
        %v2317 = vunpack.c.h.b16 %v759
        %v2318 = vunpack.c.l.b16 %v760
        %v2319 = vunpack.c.h.b16 %v760
        %v2320 = vunpack.c.l.b16 %v761
        %v2321 = vunpack.c.h.b16 %v761
        %v2322 = vunpack.c.l.b16 %v762
        %v2323 = vunpack.c.h.b16 %v762
        %v2324 = vunpack.c.l.b16 %v763
        %v2325 = vunpack.c.h.b16 %v763
        %v2326 = vunpack.c.l.b16 %v764
        %v2327 = vunpack.c.h.b16 %v764
        %v2328 = vunpack.c.l.b16 %v765
        %v2329 = vunpack.c.h.b16 %v765
        %v2330 = vunpack.c.l.b16 %v766
        %v2331 = vunpack.c.h.b16 %v766
        %v2332 = vunpack.c.l.b16 %v767
        %v2333 = vunpack.c.h.b16 %v767
        %v2334 = vunpack.c.l.b16 %v768
        %v2335 = vunpack.c.h.b16 %v768
        %v2336 = vunpack.c.l.b16 %v769
        %v2337 = vunpack.c.h.b16 %v769
        %v2338 = vunpack.c.l.b16 %v770
        %v2339 = vunpack.c.h.b16 %v770
        %v2340 = vunpack.c.l.b16 %v771
        %v2341 = vunpack.c.h.b16 %v771
        %v2342 = vunpack.c.l.b16 %v772
        %v2343 = vunpack.c.h.b16 %v772
        %v2344 = vunpack.c.l.b16 %v773
        %v2345 = vunpack.c.h.b16 %v773
        %v2346 = vunpack.c.l.b16 %v774
        %v2347 = vunpack.c.h.b16 %v774
        %v2348 = vunpack.c.l.b16 %v775
        %v2349 = vunpack.c.h.b16 %v775
        %v2350 = vunpack.c.l.b16 %v776
        %v2351 = vunpack.c.h.b16 %v776
        %v2352 = vunpack.c.l.b16 %v777
        %v2353 = vunpack.c.h.b16 %v777
        %v2354 = vunpack.c.l.b16 %v778
        %v2355 = vunpack.c.h.b16 %v778
        %v2356 = vunpack.c.l.b16 %v779
        %v2357 = vunpack.c.h.b16 %v779
        %v2358 = vunpack.c.l.b16 %v780
        %v2359 = vunpack.c.h.b16 %v780
        %v2360 = vunpack.c.l.b16 %v781
        %v2361 = vunpack.c.h.b16 %v781
        %v2362 = vunpack.c.l.b16 %v782
        %v2363 = vunpack.c.h.b16 %v782
        %v2364 = vunpack.c.l.b16 %v783
        %v2365 = vunpack.c.h.b16 %v783
        %v2366 = vunpack.c.l.b16 %v784
        %v2367 = vunpack.c.h.b16 %v784
        %v2368 = vunpack.c.l.b16 %v785
        %v2369 = vunpack.c.h.b16 %v785
        %v2370 = vunpack.c.l.b16 %v786
        %v2371 = vunpack.c.h.b16 %v786
        %v2372 = vunpack.c.l.b16 %v787
        %v2373 = vunpack.c.h.b16 %v787
        %v2374 = vunpack.c.l.b16 %v788
        %v2375 = vunpack.c.h.b16 %v788
        %v2376 = vunpack.c.l.b16 %v789
        %v2377 = vunpack.c.h.b16 %v789
        %v2378 = vunpack.c.l.b16 %v790
        %v2379 = vunpack.c.h.b16 %v790
        %v2380 = vunpack.c.l.b16 %v791
        %v2381 = vunpack.c.h.b16 %v791
        %v2382 = vunpack.c.l.b16 %v792
        %v2383 = vunpack.c.h.b16 %v792
        %v2384 = vunpack.c.l.b16 %v793
        %v2385 = vunpack.c.h.b16 %v793
        %v2386 = vunpack.c.l.b16 %v794
        %v2387 = vunpack.c.h.b16 %v794
        %v2388 = vunpack.c.l.b16 %v795
        %v2389 = vunpack.c.h.b16 %v795
        %v2390 = vunpack.c.l.b16 %v796
        %v2391 = vunpack.c.h.b16 %v796
        %v2392 = vunpack.c.l.b16 %v797
        %v2393 = vunpack.c.h.b16 %v797
        %v2394 = vunpack.c.l.b16 %v798
        %v2395 = vunpack.c.h.b16 %v798
        %v2396 = vunpack.c.l.b16 %v799
        %v2397 = vunpack.c.h.b16 %v799
        %v2398 = vunpack.c.l.b16 %v800
        %v2399 = vunpack.c.h.b16 %v800
        %v2400 = vunpack.c.l.b16 %v801
        %v2401 = vunpack.c.h.b16 %v801
        %v2402 = vunpack.c.l.b16 %v802
        %v2403 = vunpack.c.h.b16 %v802
        %v2404 = vunpack.c.l.b16 %v803
        %v2405 = vunpack.c.h.b16 %v803
        %v2406 = vunpack.c.l.b16 %v804
        %v2407 = vunpack.c.h.b16 %v804
        %v2408 = vunpack.c.l.b16 %v805
        %v2409 = vunpack.c.h.b16 %v805
        %v2410 = vunpack.c.l.b16 %v806
        %v2411 = vunpack.c.h.b16 %v806
        %v2412 = vunpack.c.l.b16 %v807
        %v2413 = vunpack.c.h.b16 %v807
        %v2414 = vunpack.c.l.b16 %v808
        %v2415 = vunpack.c.h.b16 %v808
        %v2416 = vunpack.c.l.b16 %v809
        %v2417 = vunpack.c.h.b16 %v809
        %v2418 = vunpack.c.l.b16 %v810
        %v2419 = vunpack.c.h.b16 %v810
        %v2420 = vunpack.c.l.b16 %v811
        %v2421 = vunpack.c.h.b16 %v811
        %v2422 = vunpack.c.l.b16 %v812
        %v2423 = vunpack.c.h.b16 %v812
        %v2424 = vunpack.c.l.b16 %v813
        %v2425 = vunpack.c.h.b16 %v813
        %v2426 = vunpack.c.l.b16 %v814
        %v2427 = vunpack.c.h.b16 %v814
        %v2428 = vunpack.c.l.b16 %v815
        %v2429 = vunpack.c.h.b16 %v815
        %v2430 = vunpack.c.l.b16 %v816
        %v2431 = vunpack.c.h.b16 %v816
        %v2432 = vunpack.c.l.b16 %v817
        %v2433 = vunpack.c.h.b16 %v817
        %v2434 = vunpack.c.l.b16 %v818
        %v2435 = vunpack.c.h.b16 %v818
        %v2436 = vunpack.c.l.b16 %v819
        %v2437 = vunpack.c.h.b16 %v819
        %v2438 = vunpack.c.l.b16 %v820
        %v2439 = vunpack.c.h.b16 %v820
        %v2440 = vunpack.c.l.b16 %v821
        %v2441 = vunpack.c.h.b16 %v821
        %v2442 = vunpack.c.l.b16 %v822
        %v2443 = vunpack.c.h.b16 %v822
        %v2444 = vunpack.c.l.b16 %v823
        %v2445 = vunpack.c.h.b16 %v823
        %v2446 = vunpack.c.l.b16 %v824
        %v2447 = vunpack.c.h.b16 %v824
        %v2448 = vunpack.c.l.b16 %v825
        %v2449 = vunpack.c.h.b16 %v825
        %v2450 = vunpack.c.l.b16 %v826
        %v2451 = vunpack.c.h.b16 %v826
        %v2452 = vunpack.c.l.b16 %v827
        %v2453 = vunpack.c.h.b16 %v827
        %v2454 = vunpack.c.l.b16 %v828
        %v2455 = vunpack.c.h.b16 %v828
        %v2456 = vunpack.c.l.b16 %v829
        %v2457 = vunpack.c.h.b16 %v829
        %v2458 = vunpack.c.l.b16 %v830
        %v2459 = vunpack.c.h.b16 %v830
        %v2460 = vunpack.c.l.b16 %v831
        %v2461 = vunpack.c.h.b16 %v831
        %v2462 = vunpack.c.l.b16 %v832
        %v2463 = vunpack.c.h.b16 %v832
        %v2464 = vunpack.c.l.b16 %v833
        %v2465 = vunpack.c.h.b16 %v833
        %v2466 = vunpack.c.l.b16 %v834
        %v2467 = vunpack.c.h.b16 %v834
        %v2468 = vunpack.c.l.b16 %v835
        %v2469 = vunpack.c.h.b16 %v835
        %v2470 = vunpack.c.l.b16 %v836
        %v2471 = vunpack.c.h.b16 %v836
        %v2472 = vunpack.c.l.b16 %v837
        %v2473 = vunpack.c.h.b16 %v837
        %v2474 = vunpack.c.l.b16 %v838
        %v2475 = vunpack.c.h.b16 %v838
        %v2476 = vunpack.c.l.b16 %v839
        %v2477 = vunpack.c.h.b16 %v839
        %v2478 = vunpack.c.l.b16 %v840
        %v2479 = vunpack.c.h.b16 %v840
        %v2480 = vunpack.c.l.b16 %v841
        %v2481 = vunpack.c.h.b16 %v841
        %v2482 = vunpack.c.l.b16 %v842
        %v2483 = vunpack.c.h.b16 %v842
        %v2484 = vunpack.c.l.b16 %v843
        %v2485 = vunpack.c.h.b16 %v843
        %v2486 = vunpack.c.l.b16 %v844
        %v2487 = vunpack.c.h.b16 %v844
        %v2488 = vunpack.c.l.b16 %v845
        %v2489 = vunpack.c.h.b16 %v845
        %v2490 = vunpack.c.l.b16 %v846
        %v2491 = vunpack.c.h.b16 %v846
        %v2492 = vunpack.c.l.b16 %v847
        %v2493 = vunpack.c.h.b16 %v847
        %v2494 = vunpack.c.l.b16 %v848
        %v2495 = vunpack.c.h.b16 %v848
        %v2496 = vunpack.c.l.b16 %v849
        %v2497 = vunpack.c.h.b16 %v849
        %v2498 = vunpack.c.l.b16 %v850
        %v2499 = vunpack.c.h.b16 %v850
        %v2500 = vunpack.c.l.b16 %v851
        %v2501 = vunpack.c.h.b16 %v851
        %v2502 = vunpack.c.l.b16 %v852
        %v2503 = vunpack.c.h.b16 %v852
        %v2504 = vunpack.c.l.b16 %v853
        %v2505 = vunpack.c.h.b16 %v853
        %v2506 = vunpack.c.l.b16 %v854
        %v2507 = vunpack.c.h.b16 %v854
        %v2508 = vunpack.c.l.b16 %v855
        %v2509 = vunpack.c.h.b16 %v855
        %v2510 = vunpack.c.l.b16 %v856
        %v2511 = vunpack.c.h.b16 %v856
        %v2512 = vunpack.c.l.b16 %v857
        %v2513 = vunpack.c.h.b16 %v857
        %v2514 = vunpack.c.l.b16 %v858
        %v2515 = vunpack.c.h.b16 %v858
        %v2516 = vunpack.c.l.b16 %v859
        %v2517 = vunpack.c.h.b16 %v859
        %v2518 = vunpack.c.l.b16 %v860
        %v2519 = vunpack.c.h.b16 %v860
        %v2520 = vunpack.c.l.b16 %v861
        %v2521 = vunpack.c.h.b16 %v861
        %v2522 = vpack.c.b16 %v1500, %v1498
        %v2523 = vpack.c.b16 %v1501, %v1499
        %v2524 = vpack.c.b16 %v1504, %v1502
        %v2525 = vpack.c.b16 %v1505, %v1503
        %v2526 = vpack.c.b16 %v1508, %v1506
        %v2527 = vpack.c.b16 %v1509, %v1507
        %v2528 = vpack.c.b16 %v1512, %v1510
        %v2529 = vpack.c.b16 %v1513, %v1511
        %v2530 = vpack.c.b16 %v1516, %v1514
        %v2531 = vpack.c.b16 %v1517, %v1515
        %v2532 = vpack.c.b16 %v1520, %v1518
        %v2533 = vpack.c.b16 %v1521, %v1519
        %v2534 = vpack.c.b16 %v1524, %v1522
        %v2535 = vpack.c.b16 %v1525, %v1523
        %v2536 = vpack.c.b16 %v1528, %v1526
        %v2537 = vpack.c.b16 %v1529, %v1527
        %v2538 = vpack.c.b16 %v1532, %v1530
        %v2539 = vpack.c.b16 %v1533, %v1531
        %v2540 = vpack.c.b16 %v1536, %v1534
        %v2541 = vpack.c.b16 %v1537, %v1535
        %v2542 = vpack.c.b16 %v1540, %v1538
        %v2543 = vpack.c.b16 %v1541, %v1539
        %v2544 = vpack.c.b16 %v1544, %v1542
        %v2545 = vpack.c.b16 %v1545, %v1543
        %v2546 = vpack.c.b16 %v1548, %v1546
        %v2547 = vpack.c.b16 %v1549, %v1547
        %v2548 = vpack.c.b16 %v1552, %v1550
        %v2549 = vpack.c.b16 %v1553, %v1551
        %v2550 = vpack.c.b16 %v1556, %v1554
        %v2551 = vpack.c.b16 %v1557, %v1555
        %v2552 = vpack.c.b16 %v1560, %v1558
        %v2553 = vpack.c.b16 %v1561, %v1559
        %v2554 = vpack.c.b16 %v1564, %v1562
        %v2555 = vpack.c.b16 %v1565, %v1563
        %v2556 = vpack.c.b16 %v1568, %v1566
        %v2557 = vpack.c.b16 %v1569, %v1567
        %v2558 = vpack.c.b16 %v1572, %v1570
        %v2559 = vpack.c.b16 %v1573, %v1571
        %v2560 = vpack.c.b16 %v1576, %v1574
        %v2561 = vpack.c.b16 %v1577, %v1575
        %v2562 = vpack.c.b16 %v1580, %v1578
        %v2563 = vpack.c.b16 %v1581, %v1579
        %v2564 = vpack.c.b16 %v1584, %v1582
        %v2565 = vpack.c.b16 %v1585, %v1583
        %v2566 = vpack.c.b16 %v1588, %v1586
        %v2567 = vpack.c.b16 %v1589, %v1587
        %v2568 = vpack.c.b16 %v1592, %v1590
        %v2569 = vpack.c.b16 %v1593, %v1591
        %v2570 = vpack.c.b16 %v1596, %v1594
        %v2571 = vpack.c.b16 %v1597, %v1595
        %v2572 = vpack.c.b16 %v1600, %v1598
        %v2573 = vpack.c.b16 %v1601, %v1599
        %v2574 = vpack.c.b16 %v1604, %v1602
        %v2575 = vpack.c.b16 %v1605, %v1603
        %v2576 = vpack.c.b16 %v1608, %v1606
        %v2577 = vpack.c.b16 %v1609, %v1607
        %v2578 = vpack.c.b16 %v1612, %v1610
        %v2579 = vpack.c.b16 %v1613, %v1611
        %v2580 = vpack.c.b16 %v1616, %v1614
        %v2581 = vpack.c.b16 %v1617, %v1615
        %v2582 = vpack.c.b16 %v1620, %v1618
        %v2583 = vpack.c.b16 %v1621, %v1619
        %v2584 = vpack.c.b16 %v1624, %v1622
        %v2585 = vpack.c.b16 %v1625, %v1623
        %v2586 = vpack.c.b16 %v1628, %v1626
        %v2587 = vpack.c.b16 %v1629, %v1627
        %v2588 = vpack.c.b16 %v1632, %v1630
        %v2589 = vpack.c.b16 %v1633, %v1631
        %v2590 = vpack.c.b16 %v1636, %v1634
        %v2591 = vpack.c.b16 %v1637, %v1635
        %v2592 = vpack.c.b16 %v1640, %v1638
        %v2593 = vpack.c.b16 %v1641, %v1639
        %v2594 = vpack.c.b16 %v1644, %v1642
        %v2595 = vpack.c.b16 %v1645, %v1643
        %v2596 = vpack.c.b16 %v1648, %v1646
        %v2597 = vpack.c.b16 %v1649, %v1647
        %v2598 = vpack.c.b16 %v1652, %v1650
        %v2599 = vpack.c.b16 %v1653, %v1651
        %v2600 = vpack.c.b16 %v1656, %v1654
        %v2601 = vpack.c.b16 %v1657, %v1655
        %v2602 = vpack.c.b16 %v1660, %v1658
        %v2603 = vpack.c.b16 %v1661, %v1659
        %v2604 = vpack.c.b16 %v1664, %v1662
        %v2605 = vpack.c.b16 %v1665, %v1663
        %v2606 = vpack.c.b16 %v1668, %v1666
        %v2607 = vpack.c.b16 %v1669, %v1667
        %v2608 = vpack.c.b16 %v1672, %v1670
        %v2609 = vpack.c.b16 %v1673, %v1671
        %v2610 = vpack.c.b16 %v1676, %v1674
        %v2611 = vpack.c.b16 %v1677, %v1675
        %v2612 = vpack.c.b16 %v1680, %v1678
        %v2613 = vpack.c.b16 %v1681, %v1679
        %v2614 = vpack.c.b16 %v1684, %v1682
        %v2615 = vpack.c.b16 %v1685, %v1683
        %v2616 = vpack.c.b16 %v1688, %v1686
        %v2617 = vpack.c.b16 %v1689, %v1687
        %v2618 = vpack.c.b16 %v1692, %v1690
        %v2619 = vpack.c.b16 %v1693, %v1691
        %v2620 = vpack.c.b16 %v1696, %v1694
        %v2621 = vpack.c.b16 %v1697, %v1695
        %v2622 = vpack.c.b16 %v1700, %v1698
        %v2623 = vpack.c.b16 %v1701, %v1699
        %v2624 = vpack.c.b16 %v1704, %v1702
        %v2625 = vpack.c.b16 %v1705, %v1703
        %v2626 = vpack.c.b16 %v1708, %v1706
        %v2627 = vpack.c.b16 %v1709, %v1707
        %v2628 = vpack.c.b16 %v1712, %v1710
        %v2629 = vpack.c.b16 %v1713, %v1711
        %v2630 = vpack.c.b16 %v1716, %v1714
        %v2631 = vpack.c.b16 %v1717, %v1715
        %v2632 = vpack.c.b16 %v1720, %v1718
        %v2633 = vpack.c.b16 %v1721, %v1719
        %v2634 = vpack.c.b16 %v1724, %v1722
        %v2635 = vpack.c.b16 %v1725, %v1723
        %v2636 = vpack.c.b16 %v1728, %v1726
        %v2637 = vpack.c.b16 %v1729, %v1727
        %v2638 = vpack.c.b16 %v1732, %v1730
        %v2639 = vpack.c.b16 %v1733, %v1731
        %v2640 = vpack.c.b16 %v1736, %v1734
        %v2641 = vpack.c.b16 %v1737, %v1735
        %v2642 = vpack.c.b16 %v1740, %v1738
        %v2643 = vpack.c.b16 %v1741, %v1739
        %v2644 = vpack.c.b16 %v1744, %v1742
        %v2645 = vpack.c.b16 %v1745, %v1743
        %v2646 = vpack.c.b16 %v1748, %v1746
        %v2647 = vpack.c.b16 %v1749, %v1747
        %v2648 = vpack.c.b16 %v1752, %v1750
        %v2649 = vpack.c.b16 %v1753, %v1751
        %v2650 = vpack.c.b16 %v1756, %v1754
        %v2651 = vpack.c.b16 %v1757, %v1755
        %v2652 = vpack.c.b16 %v1760, %v1758
        %v2653 = vpack.c.b16 %v1761, %v1759
        %v2654 = vpack.c.b16 %v1764, %v1762
        %v2655 = vpack.c.b16 %v1765, %v1763
        %v2656 = vpack.c.b16 %v1768, %v1766
        %v2657 = vpack.c.b16 %v1769, %v1767
        %v2658 = vpack.c.b16 %v1772, %v1770
        %v2659 = vpack.c.b16 %v1773, %v1771
        %v2660 = vpack.c.b16 %v1776, %v1774
        %v2661 = vpack.c.b16 %v1777, %v1775
        %v2662 = vpack.c.b16 %v1780, %v1778
        %v2663 = vpack.c.b16 %v1781, %v1779
        %v2664 = vpack.c.b16 %v1784, %v1782
        %v2665 = vpack.c.b16 %v1785, %v1783
        %v2666 = vpack.c.b16 %v1788, %v1786
        %v2667 = vpack.c.b16 %v1789, %v1787
        %v2668 = vpack.c.b16 %v1792, %v1790
        %v2669 = vpack.c.b16 %v1793, %v1791
        %v2670 = vpack.c.b16 %v1796, %v1794
        %v2671 = vpack.c.b16 %v1797, %v1795
        %v2672 = vpack.c.b16 %v1800, %v1798
        %v2673 = vpack.c.b16 %v1801, %v1799
        %v2674 = vpack.c.b16 %v1804, %v1802
        %v2675 = vpack.c.b16 %v1805, %v1803
        %v2676 = vpack.c.b16 %v1808, %v1806
        %v2677 = vpack.c.b16 %v1809, %v1807
        %v2678 = vpack.c.b16 %v1812, %v1810
        %v2679 = vpack.c.b16 %v1813, %v1811
        %v2680 = vpack.c.b16 %v1816, %v1814
        %v2681 = vpack.c.b16 %v1817, %v1815
        %v2682 = vpack.c.b16 %v1820, %v1818
        %v2683 = vpack.c.b16 %v1821, %v1819
        %v2684 = vpack.c.b16 %v1824, %v1822
        %v2685 = vpack.c.b16 %v1825, %v1823
        %v2686 = vpack.c.b16 %v1828, %v1826
        %v2687 = vpack.c.b16 %v1829, %v1827
        %v2688 = vpack.c.b16 %v1832, %v1830
        %v2689 = vpack.c.b16 %v1833, %v1831
        %v2690 = vpack.c.b16 %v1836, %v1834
        %v2691 = vpack.c.b16 %v1837, %v1835
        %v2692 = vpack.c.b16 %v1840, %v1838
        %v2693 = vpack.c.b16 %v1841, %v1839
        %v2694 = vpack.c.b16 %v1844, %v1842
        %v2695 = vpack.c.b16 %v1845, %v1843
        %v2696 = vpack.c.b16 %v1848, %v1846
        %v2697 = vpack.c.b16 %v1849, %v1847
        %v2698 = vpack.c.b16 %v1852, %v1850
        %v2699 = vpack.c.b16 %v1853, %v1851
        %v2700 = vpack.c.b16 %v1856, %v1854
        %v2701 = vpack.c.b16 %v1857, %v1855
        %v2702 = vpack.c.b16 %v1860, %v1858
        %v2703 = vpack.c.b16 %v1861, %v1859
        %v2704 = vpack.c.b16 %v1864, %v1862
        %v2705 = vpack.c.b16 %v1865, %v1863
        %v2706 = vpack.c.b16 %v1868, %v1866
        %v2707 = vpack.c.b16 %v1869, %v1867
        %v2708 = vpack.c.b16 %v1872, %v1870
        %v2709 = vpack.c.b16 %v1873, %v1871
        %v2710 = vpack.c.b16 %v1876, %v1874
        %v2711 = vpack.c.b16 %v1877, %v1875
        %v2712 = vpack.c.b16 %v1880, %v1878
        %v2713 = vpack.c.b16 %v1881, %v1879
        %v2714 = vpack.c.b16 %v1884, %v1882
        %v2715 = vpack.c.b16 %v1885, %v1883
        %v2716 = vpack.c.b16 %v1888, %v1886
        %v2717 = vpack.c.b16 %v1889, %v1887
        %v2718 = vpack.c.b16 %v1892, %v1890
        %v2719 = vpack.c.b16 %v1893, %v1891
        %v2720 = vpack.c.b16 %v1896, %v1894
        %v2721 = vpack.c.b16 %v1897, %v1895
        %v2722 = vpack.c.b16 %v1900, %v1898
        %v2723 = vpack.c.b16 %v1901, %v1899
        %v2724 = vpack.c.b16 %v1904, %v1902
        %v2725 = vpack.c.b16 %v1905, %v1903
        %v2726 = vpack.c.b16 %v1908, %v1906
        %v2727 = vpack.c.b16 %v1909, %v1907
        %v2728 = vpack.c.b16 %v1912, %v1910
        %v2729 = vpack.c.b16 %v1913, %v1911
        %v2730 = vpack.c.b16 %v1916, %v1914
        %v2731 = vpack.c.b16 %v1917, %v1915
        %v2732 = vpack.c.b16 %v1920, %v1918
        %v2733 = vpack.c.b16 %v1921, %v1919
        %v2734 = vpack.c.b16 %v1924, %v1922
        %v2735 = vpack.c.b16 %v1925, %v1923
        %v2736 = vpack.c.b16 %v1928, %v1926
        %v2737 = vpack.c.b16 %v1929, %v1927
        %v2738 = vpack.c.b16 %v1932, %v1930
        %v2739 = vpack.c.b16 %v1933, %v1931
        %v2740 = vpack.c.b16 %v1936, %v1934
        %v2741 = vpack.c.b16 %v1937, %v1935
        %v2742 = vpack.c.b16 %v1940, %v1938
        %v2743 = vpack.c.b16 %v1941, %v1939
        %v2744 = vpack.c.b16 %v1944, %v1942
        %v2745 = vpack.c.b16 %v1945, %v1943
        %v2746 = vpack.c.b16 %v1948, %v1946
        %v2747 = vpack.c.b16 %v1949, %v1947
        %v2748 = vpack.c.b16 %v1952, %v1950
        %v2749 = vpack.c.b16 %v1953, %v1951
        %v2750 = vpack.c.b16 %v1956, %v1954
        %v2751 = vpack.c.b16 %v1957, %v1955
        %v2752 = vpack.c.b16 %v1960, %v1958
        %v2753 = vpack.c.b16 %v1961, %v1959
        %v2754 = vpack.c.b16 %v1964, %v1962
        %v2755 = vpack.c.b16 %v1965, %v1963
        %v2756 = vpack.c.b16 %v1968, %v1966
        %v2757 = vpack.c.b16 %v1969, %v1967
        %v2758 = vpack.c.b16 %v1972, %v1970
        %v2759 = vpack.c.b16 %v1973, %v1971
        %v2760 = vpack.c.b16 %v1976, %v1974
        %v2761 = vpack.c.b16 %v1977, %v1975
        %v2762 = vpack.c.b16 %v1980, %v1978
        %v2763 = vpack.c.b16 %v1981, %v1979
        %v2764 = vpack.c.b16 %v1984, %v1982
        %v2765 = vpack.c.b16 %v1985, %v1983
        %v2766 = vpack.c.b16 %v1988, %v1986
        %v2767 = vpack.c.b16 %v1989, %v1987
        %v2768 = vpack.c.b16 %v1992, %v1990
        %v2769 = vpack.c.b16 %v1993, %v1991
        %v2770 = vpack.c.b16 %v1996, %v1994
        %v2771 = vpack.c.b16 %v1997, %v1995
        %v2772 = vpack.c.b16 %v2000, %v1998
        %v2773 = vpack.c.b16 %v2001, %v1999
        %v2774 = vpack.c.b16 %v2004, %v2002
        %v2775 = vpack.c.b16 %v2005, %v2003
        %v2776 = vpack.c.b16 %v2008, %v2006
        %v2777 = vpack.c.b16 %v2009, %v2007
        %v2778 = vpack.c.b16 %v2012, %v2010
        %v2779 = vpack.c.b16 %v2013, %v2011
        %v2780 = vpack.c.b16 %v2016, %v2014
        %v2781 = vpack.c.b16 %v2017, %v2015
        %v2782 = vpack.c.b16 %v2020, %v2018
        %v2783 = vpack.c.b16 %v2021, %v2019
        %v2784 = vpack.c.b16 %v2024, %v2022
        %v2785 = vpack.c.b16 %v2025, %v2023
        %v2786 = vpack.c.b16 %v2028, %v2026
        %v2787 = vpack.c.b16 %v2029, %v2027
        %v2788 = vpack.c.b16 %v2032, %v2030
        %v2789 = vpack.c.b16 %v2033, %v2031
        %v2790 = vpack.c.b16 %v2036, %v2034
        %v2791 = vpack.c.b16 %v2037, %v2035
        %v2792 = vpack.c.b16 %v2040, %v2038
        %v2793 = vpack.c.b16 %v2041, %v2039
        %v2794 = vpack.c.b16 %v2044, %v2042
        %v2795 = vpack.c.b16 %v2045, %v2043
        %v2796 = vpack.c.b16 %v2048, %v2046
        %v2797 = vpack.c.b16 %v2049, %v2047
        %v2798 = vpack.c.b16 %v2052, %v2050
        %v2799 = vpack.c.b16 %v2053, %v2051
        %v2800 = vpack.c.b16 %v2056, %v2054
        %v2801 = vpack.c.b16 %v2057, %v2055
        %v2802 = vpack.c.b16 %v2060, %v2058
        %v2803 = vpack.c.b16 %v2061, %v2059
        %v2804 = vpack.c.b16 %v2064, %v2062
        %v2805 = vpack.c.b16 %v2065, %v2063
        %v2806 = vpack.c.b16 %v2068, %v2066
        %v2807 = vpack.c.b16 %v2069, %v2067
        %v2808 = vpack.c.b16 %v2072, %v2070
        %v2809 = vpack.c.b16 %v2073, %v2071
        %v2810 = vpack.c.b16 %v2076, %v2074
        %v2811 = vpack.c.b16 %v2077, %v2075
        %v2812 = vpack.c.b16 %v2080, %v2078
        %v2813 = vpack.c.b16 %v2081, %v2079
        %v2814 = vpack.c.b16 %v2084, %v2082
        %v2815 = vpack.c.b16 %v2085, %v2083
        %v2816 = vpack.c.b16 %v2088, %v2086
        %v2817 = vpack.c.b16 %v2089, %v2087
        %v2818 = vpack.c.b16 %v2092, %v2090
        %v2819 = vpack.c.b16 %v2093, %v2091
        %v2820 = vpack.c.b16 %v2096, %v2094
        %v2821 = vpack.c.b16 %v2097, %v2095
        %v2822 = vpack.c.b16 %v2100, %v2098
        %v2823 = vpack.c.b16 %v2101, %v2099
        %v2824 = vpack.c.b16 %v2104, %v2102
        %v2825 = vpack.c.b16 %v2105, %v2103
        %v2826 = vpack.c.b16 %v2108, %v2106
        %v2827 = vpack.c.b16 %v2109, %v2107
        %v2828 = vpack.c.b16 %v2112, %v2110
        %v2829 = vpack.c.b16 %v2113, %v2111
        %v2830 = vpack.c.b16 %v2116, %v2114
        %v2831 = vpack.c.b16 %v2117, %v2115
        %v2832 = vpack.c.b16 %v2120, %v2118
        %v2833 = vpack.c.b16 %v2121, %v2119
        %v2834 = vpack.c.b16 %v2124, %v2122
        %v2835 = vpack.c.b16 %v2125, %v2123
        %v2836 = vpack.c.b16 %v2128, %v2126
        %v2837 = vpack.c.b16 %v2129, %v2127
        %v2838 = vpack.c.b16 %v2132, %v2130
        %v2839 = vpack.c.b16 %v2133, %v2131
        %v2840 = vpack.c.b16 %v2136, %v2134
        %v2841 = vpack.c.b16 %v2137, %v2135
        %v2842 = vpack.c.b16 %v2140, %v2138
        %v2843 = vpack.c.b16 %v2141, %v2139
        %v2844 = vpack.c.b16 %v2144, %v2142
        %v2845 = vpack.c.b16 %v2145, %v2143
        %v2846 = vpack.c.b16 %v2148, %v2146
        %v2847 = vpack.c.b16 %v2149, %v2147
        %v2848 = vpack.c.b16 %v2152, %v2150
        %v2849 = vpack.c.b16 %v2153, %v2151
        %v2850 = vpack.c.b16 %v2156, %v2154
        %v2851 = vpack.c.b16 %v2157, %v2155
        %v2852 = vpack.c.b16 %v2160, %v2158
        %v2853 = vpack.c.b16 %v2161, %v2159
        %v2854 = vpack.c.b16 %v2164, %v2162
        %v2855 = vpack.c.b16 %v2165, %v2163
        %v2856 = vpack.c.b16 %v2168, %v2166
        %v2857 = vpack.c.b16 %v2169, %v2167
        %v2858 = vpack.c.b16 %v2172, %v2170
        %v2859 = vpack.c.b16 %v2173, %v2171
        %v2860 = vpack.c.b16 %v2176, %v2174
        %v2861 = vpack.c.b16 %v2177, %v2175
        %v2862 = vpack.c.b16 %v2180, %v2178
        %v2863 = vpack.c.b16 %v2181, %v2179
        %v2864 = vpack.c.b16 %v2184, %v2182
        %v2865 = vpack.c.b16 %v2185, %v2183
        %v2866 = vpack.c.b16 %v2188, %v2186
        %v2867 = vpack.c.b16 %v2189, %v2187
        %v2868 = vpack.c.b16 %v2192, %v2190
        %v2869 = vpack.c.b16 %v2193, %v2191
        %v2870 = vpack.c.b16 %v2196, %v2194
        %v2871 = vpack.c.b16 %v2197, %v2195
        %v2872 = vpack.c.b16 %v2200, %v2198
        %v2873 = vpack.c.b16 %v2201, %v2199
        %v2874 = vpack.c.b16 %v2204, %v2202
        %v2875 = vpack.c.b16 %v2205, %v2203
        %v2876 = vpack.c.b16 %v2208, %v2206
        %v2877 = vpack.c.b16 %v2209, %v2207
        %v2878 = vpack.c.b16 %v2212, %v2210
        %v2879 = vpack.c.b16 %v2213, %v2211
        %v2880 = vpack.c.b16 %v2216, %v2214
        %v2881 = vpack.c.b16 %v2217, %v2215
        %v2882 = vpack.c.b16 %v2220, %v2218
        %v2883 = vpack.c.b16 %v2221, %v2219
        %v2884 = vpack.c.b16 %v2224, %v2222
        %v2885 = vpack.c.b16 %v2225, %v2223
        %v2886 = vpack.c.b16 %v2228, %v2226
        %v2887 = vpack.c.b16 %v2229, %v2227
        %v2888 = vpack.c.b16 %v2232, %v2230
        %v2889 = vpack.c.b16 %v2233, %v2231
        %v2890 = vpack.c.b16 %v2236, %v2234
        %v2891 = vpack.c.b16 %v2237, %v2235
        %v2892 = vpack.c.b16 %v2240, %v2238
        %v2893 = vpack.c.b16 %v2241, %v2239
        %v2894 = vpack.c.b16 %v2244, %v2242
        %v2895 = vpack.c.b16 %v2245, %v2243
        %v2896 = vpack.c.b16 %v2248, %v2246
        %v2897 = vpack.c.b16 %v2249, %v2247
        %v2898 = vpack.c.b16 %v2252, %v2250
        %v2899 = vpack.c.b16 %v2253, %v2251
        %v2900 = vpack.c.b16 %v2256, %v2254
        %v2901 = vpack.c.b16 %v2257, %v2255
        %v2902 = vpack.c.b16 %v2260, %v2258
        %v2903 = vpack.c.b16 %v2261, %v2259
        %v2904 = vpack.c.b16 %v2264, %v2262
        %v2905 = vpack.c.b16 %v2265, %v2263
        %v2906 = vpack.c.b16 %v2268, %v2266
        %v2907 = vpack.c.b16 %v2269, %v2267
        %v2908 = vpack.c.b16 %v2272, %v2270
        %v2909 = vpack.c.b16 %v2273, %v2271
        %v2910 = vpack.c.b16 %v2276, %v2274
        %v2911 = vpack.c.b16 %v2277, %v2275
        %v2912 = vpack.c.b16 %v2280, %v2278
        %v2913 = vpack.c.b16 %v2281, %v2279
        %v2914 = vpack.c.b16 %v2284, %v2282
        %v2915 = vpack.c.b16 %v2285, %v2283
        %v2916 = vpack.c.b16 %v2288, %v2286
        %v2917 = vpack.c.b16 %v2289, %v2287
        %v2918 = vpack.c.b16 %v2292, %v2290
        %v2919 = vpack.c.b16 %v2293, %v2291
        %v2920 = vpack.c.b16 %v2296, %v2294
        %v2921 = vpack.c.b16 %v2297, %v2295
        %v2922 = vpack.c.b16 %v2300, %v2298
        %v2923 = vpack.c.b16 %v2301, %v2299
        %v2924 = vpack.c.b16 %v2304, %v2302
        %v2925 = vpack.c.b16 %v2305, %v2303
        %v2926 = vpack.c.b16 %v2308, %v2306
        %v2927 = vpack.c.b16 %v2309, %v2307
        %v2928 = vpack.c.b16 %v2312, %v2310
        %v2929 = vpack.c.b16 %v2313, %v2311
        %v2930 = vpack.c.b16 %v2316, %v2314
        %v2931 = vpack.c.b16 %v2317, %v2315
        %v2932 = vpack.c.b16 %v2320, %v2318
        %v2933 = vpack.c.b16 %v2321, %v2319
        %v2934 = vpack.c.b16 %v2324, %v2322
        %v2935 = vpack.c.b16 %v2325, %v2323
        %v2936 = vpack.c.b16 %v2328, %v2326
        %v2937 = vpack.c.b16 %v2329, %v2327
        %v2938 = vpack.c.b16 %v2332, %v2330
        %v2939 = vpack.c.b16 %v2333, %v2331
        %v2940 = vpack.c.b16 %v2336, %v2334
        %v2941 = vpack.c.b16 %v2337, %v2335
        %v2942 = vpack.c.b16 %v2340, %v2338
        %v2943 = vpack.c.b16 %v2341, %v2339
        %v2944 = vpack.c.b16 %v2344, %v2342
        %v2945 = vpack.c.b16 %v2345, %v2343
        %v2946 = vpack.c.b16 %v2348, %v2346
        %v2947 = vpack.c.b16 %v2349, %v2347
        %v2948 = vpack.c.b16 %v2352, %v2350
        %v2949 = vpack.c.b16 %v2353, %v2351
        %v2950 = vpack.c.b16 %v2356, %v2354
        %v2951 = vpack.c.b16 %v2357, %v2355
        %v2952 = vpack.c.b16 %v2360, %v2358
        %v2953 = vpack.c.b16 %v2361, %v2359
        %v2954 = vpack.c.b16 %v2364, %v2362
        %v2955 = vpack.c.b16 %v2365, %v2363
        %v2956 = vpack.c.b16 %v2368, %v2366
        %v2957 = vpack.c.b16 %v2369, %v2367
        %v2958 = vpack.c.b16 %v2372, %v2370
        %v2959 = vpack.c.b16 %v2373, %v2371
        %v2960 = vpack.c.b16 %v2376, %v2374
        %v2961 = vpack.c.b16 %v2377, %v2375
        %v2962 = vpack.c.b16 %v2380, %v2378
        %v2963 = vpack.c.b16 %v2381, %v2379
        %v2964 = vpack.c.b16 %v2384, %v2382
        %v2965 = vpack.c.b16 %v2385, %v2383
        %v2966 = vpack.c.b16 %v2388, %v2386
        %v2967 = vpack.c.b16 %v2389, %v2387
        %v2968 = vpack.c.b16 %v2392, %v2390
        %v2969 = vpack.c.b16 %v2393, %v2391
        %v2970 = vpack.c.b16 %v2396, %v2394
        %v2971 = vpack.c.b16 %v2397, %v2395
        %v2972 = vpack.c.b16 %v2400, %v2398
        %v2973 = vpack.c.b16 %v2401, %v2399
        %v2974 = vpack.c.b16 %v2404, %v2402
        %v2975 = vpack.c.b16 %v2405, %v2403
        %v2976 = vpack.c.b16 %v2408, %v2406
        %v2977 = vpack.c.b16 %v2409, %v2407
        %v2978 = vpack.c.b16 %v2412, %v2410
        %v2979 = vpack.c.b16 %v2413, %v2411
        %v2980 = vpack.c.b16 %v2416, %v2414
        %v2981 = vpack.c.b16 %v2417, %v2415
        %v2982 = vpack.c.b16 %v2420, %v2418
        %v2983 = vpack.c.b16 %v2421, %v2419
        %v2984 = vpack.c.b16 %v2424, %v2422
        %v2985 = vpack.c.b16 %v2425, %v2423
        %v2986 = vpack.c.b16 %v2428, %v2426
        %v2987 = vpack.c.b16 %v2429, %v2427
        %v2988 = vpack.c.b16 %v2432, %v2430
        %v2989 = vpack.c.b16 %v2433, %v2431
        %v2990 = vpack.c.b16 %v2436, %v2434
        %v2991 = vpack.c.b16 %v2437, %v2435
        %v2992 = vpack.c.b16 %v2440, %v2438
        %v2993 = vpack.c.b16 %v2441, %v2439
        %v2994 = vpack.c.b16 %v2444, %v2442
        %v2995 = vpack.c.b16 %v2445, %v2443
        %v2996 = vpack.c.b16 %v2448, %v2446
        %v2997 = vpack.c.b16 %v2449, %v2447
        %v2998 = vpack.c.b16 %v2452, %v2450
        %v2999 = vpack.c.b16 %v2453, %v2451
        %v3000 = vpack.c.b16 %v2456, %v2454
        %v3001 = vpack.c.b16 %v2457, %v2455
        %v3002 = vpack.c.b16 %v2460, %v2458
        %v3003 = vpack.c.b16 %v2461, %v2459
        %v3004 = vpack.c.b16 %v2464, %v2462
        %v3005 = vpack.c.b16 %v2465, %v2463
        %v3006 = vpack.c.b16 %v2468, %v2466
        %v3007 = vpack.c.b16 %v2469, %v2467
        %v3008 = vpack.c.b16 %v2472, %v2470
        %v3009 = vpack.c.b16 %v2473, %v2471
        %v3010 = vpack.c.b16 %v2476, %v2474
        %v3011 = vpack.c.b16 %v2477, %v2475
        %v3012 = vpack.c.b16 %v2480, %v2478
        %v3013 = vpack.c.b16 %v2481, %v2479
        %v3014 = vpack.c.b16 %v2484, %v2482
        %v3015 = vpack.c.b16 %v2485, %v2483
        %v3016 = vpack.c.b16 %v2488, %v2486
        %v3017 = vpack.c.b16 %v2489, %v2487
        %v3018 = vpack.c.b16 %v2492, %v2490
        %v3019 = vpack.c.b16 %v2493, %v2491
        %v3020 = vpack.c.b16 %v2496, %v2494
        %v3021 = vpack.c.b16 %v2497, %v2495
        %v3022 = vpack.c.b16 %v2500, %v2498
        %v3023 = vpack.c.b16 %v2501, %v2499
        %v3024 = vpack.c.b16 %v2504, %v2502
        %v3025 = vpack.c.b16 %v2505, %v2503
        %v3026 = vpack.c.b16 %v2508, %v2506
        %v3027 = vpack.c.b16 %v2509, %v2507
        %v3028 = vpack.c.b16 %v2512, %v2510
        %v3029 = vpack.c.b16 %v2513, %v2511
        %v3030 = vpack.c.b16 %v2516, %v2514
        %v3031 = vpack.c.b16 %v2517, %v2515
        %v3032 = vpack.c.b16 %v2520, %v2518
        %v3033 = vpack.c.b16 %v2521, %v2519
        %3546 = vmatprep.subr.bf16.mxu0 %v2523
        %3547 = vmatpush1.bf16.msra.mxu0 %v2522
        %3548 = vmatprep.subr.bf16.mxu0 %v2525
        %3549 = vmatpush1.bf16.msra.mxu0 %v2524
        %3550 = vmatprep.subr.bf16.mxu0 %v2527
        %3551 = vmatpush1.bf16.msra.mxu0 %v2526
        %3552 = vmatprep.subr.bf16.mxu0 %v2529
        %3553 = vmatpush1.bf16.msra.mxu0 %v2528
        %3554 = vmatprep.subr.bf16.mxu0 %v2531
        %3555 = vmatpush1.bf16.msra.mxu0 %v2530
        %3556 = vmatprep.subr.bf16.mxu0 %v2533
        %3557 = vmatpush1.bf16.msra.mxu0 %v2532
        %3558 = vmatprep.subr.bf16.mxu0 %v2535
        %3559 = vmatpush1.bf16.msra.mxu0 %v2534
        %3560 = vmatprep.subr.bf16.mxu0 %v2537
        %3561 = vmatpush1.bf16.msra.mxu0 %v2536
        %3562 = vmatprep.subr.bf16.mxu0 %v2539
        %3563 = vmatpush1.bf16.msra.mxu0 %v2538
        %3564 = vmatprep.subr.bf16.mxu0 %v2541
        %3565 = vmatpush1.bf16.msra.mxu0 %v2540
        %3566 = vmatprep.subr.bf16.mxu0 %v2543
        %3567 = vmatpush1.bf16.msra.mxu0 %v2542
        %3568 = vmatprep.subr.bf16.mxu0 %v2545
        %3569 = vmatpush1.bf16.msra.mxu0 %v2544
        %3570 = vmatprep.subr.bf16.mxu0 %v2547
        %3571 = vmatpush1.bf16.msra.mxu0 %v2546
        %3572 = vmatprep.subr.bf16.mxu0 %v2549
        %3573 = vmatpush1.bf16.msra.mxu0 %v2548
        %3574 = vmatprep.subr.bf16.mxu0 %v2551
        %3575 = vmatpush1.bf16.msra.mxu0 %v2550
        %3576 = vmatprep.subr.bf16.mxu0 %v2553
        %3577 = vmatpush1.bf16.msra.mxu0 %v2552
        %3578 = vmatprep.mubr.bf16.mxu0 %v923
        %3579 = vmatmul.mubr.bf16.gmra.mrb[0].mxu0 %v922
        %v3580 = vpop.f32.mrb[0].mxu0
        %v3581 = vadd.f32 %v867, %v3580
        %v3582 = vpop.f32.mrb[0].mxu0
        %v3583 = vadd.f32 %v871, %v3582
        %v3584 = vpop.f32.mrb[0].mxu0
        %v3585 = vpop.f32.mrb[0].mxu0
        %3586 = vdwg.mxu0
        %3587 = vmatprep.subr.bf16.mxu0 %v2555
        %3588 = vmatpush1.bf16.msra.mxu0 %v2554
        %3589 = vmatprep.subr.bf16.mxu0 %v2557
        %3590 = vmatpush1.bf16.msra.mxu0 %v2556
        %3591 = vmatprep.subr.bf16.mxu0 %v2559
        %3592 = vmatpush1.bf16.msra.mxu0 %v2558
        %3593 = vmatprep.subr.bf16.mxu0 %v2561
        %3594 = vmatpush1.bf16.msra.mxu0 %v2560
        %3595 = vmatprep.subr.bf16.mxu0 %v2563
        %3596 = vmatpush1.bf16.msra.mxu0 %v2562
        %3597 = vmatprep.subr.bf16.mxu0 %v2565
        %3598 = vmatpush1.bf16.msra.mxu0 %v2564
        %3599 = vmatprep.subr.bf16.mxu0 %v2567
        %3600 = vmatpush1.bf16.msra.mxu0 %v2566
        %3601 = vmatprep.subr.bf16.mxu0 %v2569
        %3602 = vmatpush1.bf16.msra.mxu0 %v2568
        %3603 = vmatprep.subr.bf16.mxu0 %v2571
        %3604 = vmatpush1.bf16.msra.mxu0 %v2570
        %3605 = vmatprep.subr.bf16.mxu0 %v2573
        %3606 = vmatpush1.bf16.msra.mxu0 %v2572
        %3607 = vmatprep.subr.bf16.mxu0 %v2575
        %3608 = vmatpush1.bf16.msra.mxu0 %v2574
        %3609 = vmatprep.subr.bf16.mxu0 %v2577
        %3610 = vmatpush1.bf16.msra.mxu0 %v2576
        %3611 = vmatprep.subr.bf16.mxu0 %v2579
        %3612 = vmatpush1.bf16.msra.mxu0 %v2578
        %3613 = vmatprep.subr.bf16.mxu0 %v2581
        %3614 = vmatpush1.bf16.msra.mxu0 %v2580
        %3615 = vmatprep.subr.bf16.mxu0 %v2583
        %3616 = vmatpush1.bf16.msra.mxu0 %v2582
        %3617 = vmatprep.subr.bf16.mxu0 %v2585
        %3618 = vmatpush1.bf16.msra.mxu0 %v2584
        %3619 = vmatprep.mubr.bf16.mxu0 %v925
        %3620 = vmatmul.mubr.bf16.gmra.mrb[0].mxu0 %v924
        %v3621 = vpop.f32.mrb[0].mxu0
        %v3622 = vadd.f32 %v3581, %v3621
        %v3623 = vpop.f32.mrb[0].mxu0
        %v3624 = vadd.f32 %v3583, %v3623
        %v3625 = vpop.f32.mrb[0].mxu0
        %v3626 = vpop.f32.mrb[0].mxu0
        %3627 = vdwg.mxu0
        %3628 = vmatprep.subr.bf16.mxu0 %v2587
        %3629 = vmatpush1.bf16.msra.mxu0 %v2586
        %3630 = vmatprep.subr.bf16.mxu0 %v2589
        %3631 = vmatpush1.bf16.msra.mxu0 %v2588
        %3632 = vmatprep.subr.bf16.mxu0 %v2591
        %3633 = vmatpush1.bf16.msra.mxu0 %v2590
        %3634 = vmatprep.subr.bf16.mxu0 %v2593
        %3635 = vmatpush1.bf16.msra.mxu0 %v2592
        %3636 = vmatprep.subr.bf16.mxu0 %v2595
        %3637 = vmatpush1.bf16.msra.mxu0 %v2594
        %3638 = vmatprep.subr.bf16.mxu0 %v2597
        %3639 = vmatpush1.bf16.msra.mxu0 %v2596
        %3640 = vmatprep.subr.bf16.mxu0 %v2599
        %3641 = vmatpush1.bf16.msra.mxu0 %v2598
        %3642 = vmatprep.subr.bf16.mxu0 %v2601
        %3643 = vmatpush1.bf16.msra.mxu0 %v2600
        %3644 = vmatprep.subr.bf16.mxu0 %v2603
        %3645 = vmatpush1.bf16.msra.mxu0 %v2602
        %3646 = vmatprep.subr.bf16.mxu0 %v2605
        %3647 = vmatpush1.bf16.msra.mxu0 %v2604
        %3648 = vmatprep.subr.bf16.mxu0 %v2607
        %3649 = vmatpush1.bf16.msra.mxu0 %v2606
        %3650 = vmatprep.subr.bf16.mxu0 %v2609
        %3651 = vmatpush1.bf16.msra.mxu0 %v2608
        %3652 = vmatprep.subr.bf16.mxu0 %v2611
        %3653 = vmatpush1.bf16.msra.mxu0 %v2610
        %3654 = vmatprep.subr.bf16.mxu0 %v2613
        %3655 = vmatpush1.bf16.msra.mxu0 %v2612
        %3656 = vmatprep.subr.bf16.mxu0 %v2615
        %3657 = vmatpush1.bf16.msra.mxu0 %v2614
        %3658 = vmatprep.subr.bf16.mxu0 %v2617
        %3659 = vmatpush1.bf16.msra.mxu0 %v2616
        %3660 = vmatprep.mubr.bf16.mxu0 %v927
        %3661 = vmatmul.mubr.bf16.gmra.mrb[0].mxu0 %v926
        %v3662 = vpop.f32.mrb[0].mxu0
        %v3663 = vadd.f32 %v3622, %v3662
        %v3664 = vpop.f32.mrb[0].mxu0
        %v3665 = vadd.f32 %v3624, %v3664
        %v3666 = vpop.f32.mrb[0].mxu0
        %v3667 = vpop.f32.mrb[0].mxu0
        %3668 = vdwg.mxu0
        %3669 = vmatprep.subr.bf16.mxu0 %v2619
        %3670 = vmatpush1.bf16.msra.mxu0 %v2618
        %3671 = vmatprep.subr.bf16.mxu0 %v2621
        %3672 = vmatpush1.bf16.msra.mxu0 %v2620
        %3673 = vmatprep.subr.bf16.mxu0 %v2623
        %3674 = vmatpush1.bf16.msra.mxu0 %v2622
        %3675 = vmatprep.subr.bf16.mxu0 %v2625
        %3676 = vmatpush1.bf16.msra.mxu0 %v2624
        %3677 = vmatprep.subr.bf16.mxu0 %v2627
        %3678 = vmatpush1.bf16.msra.mxu0 %v2626
        %3679 = vmatprep.subr.bf16.mxu0 %v2629
        %3680 = vmatpush1.bf16.msra.mxu0 %v2628
        %3681 = vmatprep.subr.bf16.mxu0 %v2631
        %3682 = vmatpush1.bf16.msra.mxu0 %v2630
        %3683 = vmatprep.subr.bf16.mxu0 %v2633
        %3684 = vmatpush1.bf16.msra.mxu0 %v2632
        %3685 = vmatprep.subr.bf16.mxu0 %v2635
        %3686 = vmatpush1.bf16.msra.mxu0 %v2634
        %3687 = vmatprep.subr.bf16.mxu0 %v2637
        %3688 = vmatpush1.bf16.msra.mxu0 %v2636
        %3689 = vmatprep.subr.bf16.mxu0 %v2639
        %3690 = vmatpush1.bf16.msra.mxu0 %v2638
        %3691 = vmatprep.subr.bf16.mxu0 %v2641
        %3692 = vmatpush1.bf16.msra.mxu0 %v2640
        %3693 = vmatprep.subr.bf16.mxu0 %v2643
        %3694 = vmatpush1.bf16.msra.mxu0 %v2642
        %3695 = vmatprep.subr.bf16.mxu0 %v2645
        %3696 = vmatpush1.bf16.msra.mxu0 %v2644
        %3697 = vmatprep.subr.bf16.mxu0 %v2647
        %3698 = vmatpush1.bf16.msra.mxu0 %v2646
        %3699 = vmatprep.subr.bf16.mxu0 %v2649
        %3700 = vmatpush1.bf16.msra.mxu0 %v2648
        %3701 = vmatprep.mubr.bf16.mxu0 %v929
        %3702 = vmatmul.mubr.bf16.gmra.mrb[0].mxu0 %v928
        %v3703 = vpop.f32.mrb[0].mxu0
        %v3704 = vadd.f32 %v3663, %v3703
        %v3705 = vpop.f32.mrb[0].mxu0
        %v3706 = vadd.f32 %v3665, %v3705
        %v3707 = vpop.f32.mrb[0].mxu0
        %v3708 = vpop.f32.mrb[0].mxu0
        %3709 = vdwg.mxu0
        %3710 = vmatprep.subr.bf16.mxu0 %v2651
        %3711 = vmatpush1.bf16.msra.mxu0 %v2650
        %3712 = vmatprep.subr.bf16.mxu0 %v2653
        %3713 = vmatpush1.bf16.msra.mxu0 %v2652
        %3714 = vmatprep.subr.bf16.mxu0 %v2655
        %3715 = vmatpush1.bf16.msra.mxu0 %v2654
        %3716 = vmatprep.subr.bf16.mxu0 %v2657
        %3717 = vmatpush1.bf16.msra.mxu0 %v2656
        %3718 = vmatprep.subr.bf16.mxu0 %v2659
        %3719 = vmatpush1.bf16.msra.mxu0 %v2658
        %3720 = vmatprep.subr.bf16.mxu0 %v2661
        %3721 = vmatpush1.bf16.msra.mxu0 %v2660
        %3722 = vmatprep.subr.bf16.mxu0 %v2663
        %3723 = vmatpush1.bf16.msra.mxu0 %v2662
        %3724 = vmatprep.subr.bf16.mxu0 %v2665
        %3725 = vmatpush1.bf16.msra.mxu0 %v2664
        %3726 = vmatprep.subr.bf16.mxu0 %v2667
        %3727 = vmatpush1.bf16.msra.mxu0 %v2666
        %3728 = vmatprep.subr.bf16.mxu0 %v2669
        %3729 = vmatpush1.bf16.msra.mxu0 %v2668
        %3730 = vmatprep.subr.bf16.mxu0 %v2671
        %3731 = vmatpush1.bf16.msra.mxu0 %v2670
        %3732 = vmatprep.subr.bf16.mxu0 %v2673
        %3733 = vmatpush1.bf16.msra.mxu0 %v2672
        %3734 = vmatprep.subr.bf16.mxu0 %v2675
        %3735 = vmatpush1.bf16.msra.mxu0 %v2674
        %3736 = vmatprep.subr.bf16.mxu0 %v2677
        %3737 = vmatpush1.bf16.msra.mxu0 %v2676
        %3738 = vmatprep.subr.bf16.mxu0 %v2679
        %3739 = vmatpush1.bf16.msra.mxu0 %v2678
        %3740 = vmatprep.subr.bf16.mxu0 %v2681
        %3741 = vmatpush1.bf16.msra.mxu0 %v2680
        %3742 = vmatprep.mubr.bf16.mxu0 %v931
        %3743 = vmatmul.mubr.bf16.gmra.mrb[0].mxu0 %v930
        %v3744 = vpop.f32.mrb[0].mxu0
        %v3745 = vadd.f32 %v3704, %v3744
        %v3746 = vpop.f32.mrb[0].mxu0
        %v3747 = vadd.f32 %v3706, %v3746
        %v3748 = vpop.f32.mrb[0].mxu0
        %v3749 = vpop.f32.mrb[0].mxu0
        %3750 = vdwg.mxu0
        %3751 = vmatprep.subr.bf16.mxu0 %v2683
        %3752 = vmatpush1.bf16.msra.mxu0 %v2682
        %3753 = vmatprep.subr.bf16.mxu0 %v2685
        %3754 = vmatpush1.bf16.msra.mxu0 %v2684
        %3755 = vmatprep.subr.bf16.mxu0 %v2687
        %3756 = vmatpush1.bf16.msra.mxu0 %v2686
        %3757 = vmatprep.subr.bf16.mxu0 %v2689
        %3758 = vmatpush1.bf16.msra.mxu0 %v2688
        %3759 = vmatprep.subr.bf16.mxu0 %v2691
        %3760 = vmatpush1.bf16.msra.mxu0 %v2690
        %3761 = vmatprep.subr.bf16.mxu0 %v2693
        %3762 = vmatpush1.bf16.msra.mxu0 %v2692
        %3763 = vmatprep.subr.bf16.mxu0 %v2695
        %3764 = vmatpush1.bf16.msra.mxu0 %v2694
        %3765 = vmatprep.subr.bf16.mxu0 %v2697
        %3766 = vmatpush1.bf16.msra.mxu0 %v2696
        %3767 = vmatprep.subr.bf16.mxu0 %v2699
        %3768 = vmatpush1.bf16.msra.mxu0 %v2698
        %3769 = vmatprep.subr.bf16.mxu0 %v2701
        %3770 = vmatpush1.bf16.msra.mxu0 %v2700
        %3771 = vmatprep.subr.bf16.mxu0 %v2703
        %3772 = vmatpush1.bf16.msra.mxu0 %v2702
        %3773 = vmatprep.subr.bf16.mxu0 %v2705
        %3774 = vmatpush1.bf16.msra.mxu0 %v2704
        %3775 = vmatprep.subr.bf16.mxu0 %v2707
        %3776 = vmatpush1.bf16.msra.mxu0 %v2706
        %3777 = vmatprep.subr.bf16.mxu0 %v2709
        %3778 = vmatpush1.bf16.msra.mxu0 %v2708
        %3779 = vmatprep.subr.bf16.mxu0 %v2711
        %3780 = vmatpush1.bf16.msra.mxu0 %v2710
        %3781 = vmatprep.subr.bf16.mxu0 %v2713
        %3782 = vmatpush1.bf16.msra.mxu0 %v2712
        %3783 = vmatprep.mubr.bf16.mxu0 %v933
        %3784 = vmatmul.mubr.bf16.gmra.mrb[0].mxu0 %v932
        %v3785 = vpop.f32.mrb[0].mxu0
        %v3786 = vadd.f32 %v3745, %v3785
        %v3787 = vpop.f32.mrb[0].mxu0
        %v3788 = vadd.f32 %v3747, %v3787
        %v3789 = vpop.f32.mrb[0].mxu0
        %v3790 = vpop.f32.mrb[0].mxu0
        %3791 = vdwg.mxu0
        %3792 = vmatprep.subr.bf16.mxu0 %v2715
        %3793 = vmatpush1.bf16.msra.mxu0 %v2714
        %3794 = vmatprep.subr.bf16.mxu0 %v2717
        %3795 = vmatpush1.bf16.msra.mxu0 %v2716
        %3796 = vmatprep.subr.bf16.mxu0 %v2719
        %3797 = vmatpush1.bf16.msra.mxu0 %v2718
        %3798 = vmatprep.subr.bf16.mxu0 %v2721
        %3799 = vmatpush1.bf16.msra.mxu0 %v2720
        %3800 = vmatprep.subr.bf16.mxu0 %v2723
        %3801 = vmatpush1.bf16.msra.mxu0 %v2722
        %3802 = vmatprep.subr.bf16.mxu0 %v2725
        %3803 = vmatpush1.bf16.msra.mxu0 %v2724
        %3804 = vmatprep.subr.bf16.mxu0 %v2727
        %3805 = vmatpush1.bf16.msra.mxu0 %v2726
        %3806 = vmatprep.subr.bf16.mxu0 %v2729
        %3807 = vmatpush1.bf16.msra.mxu0 %v2728
        %3808 = vmatprep.subr.bf16.mxu0 %v2731
        %3809 = vmatpush1.bf16.msra.mxu0 %v2730
        %3810 = vmatprep.subr.bf16.mxu0 %v2733
        %3811 = vmatpush1.bf16.msra.mxu0 %v2732
        %3812 = vmatprep.subr.bf16.mxu0 %v2735
        %3813 = vmatpush1.bf16.msra.mxu0 %v2734
        %3814 = vmatprep.subr.bf16.mxu0 %v2737
        %3815 = vmatpush1.bf16.msra.mxu0 %v2736
        %3816 = vmatprep.subr.bf16.mxu0 %v2739
        %3817 = vmatpush1.bf16.msra.mxu0 %v2738
        %3818 = vmatprep.subr.bf16.mxu0 %v2741
        %3819 = vmatpush1.bf16.msra.mxu0 %v2740
        %3820 = vmatprep.subr.bf16.mxu0 %v2743
        %3821 = vmatpush1.bf16.msra.mxu0 %v2742
        %3822 = vmatprep.subr.bf16.mxu0 %v2745
        %3823 = vmatpush1.bf16.msra.mxu0 %v2744
        %3824 = vmatprep.mubr.bf16.mxu0 %v935
        %3825 = vmatmul.mubr.bf16.gmra.mrb[0].mxu0 %v934
        %v3826 = vpop.f32.mrb[0].mxu0
        %v3827 = vadd.f32 %v3786, %v3826
        %v3828 = vpop.f32.mrb[0].mxu0
        %v3829 = vadd.f32 %v3788, %v3828
        %v3830 = vpop.f32.mrb[0].mxu0
        %v3831 = vpop.f32.mrb[0].mxu0
        %3832 = vdwg.mxu0
        %3833 = vmatprep.subr.bf16.mxu0 %v2747
        %3834 = vmatpush1.bf16.msra.mxu0 %v2746
        %3835 = vmatprep.subr.bf16.mxu0 %v2749
        %3836 = vmatpush1.bf16.msra.mxu0 %v2748
        %3837 = vmatprep.subr.bf16.mxu0 %v2751
        %3838 = vmatpush1.bf16.msra.mxu0 %v2750
        %3839 = vmatprep.subr.bf16.mxu0 %v2753
        %3840 = vmatpush1.bf16.msra.mxu0 %v2752
        %3841 = vmatprep.subr.bf16.mxu0 %v2755
        %3842 = vmatpush1.bf16.msra.mxu0 %v2754
        %3843 = vmatprep.subr.bf16.mxu0 %v2757
        %3844 = vmatpush1.bf16.msra.mxu0 %v2756
        %3845 = vmatprep.subr.bf16.mxu0 %v2759
        %3846 = vmatpush1.bf16.msra.mxu0 %v2758
        %3847 = vmatprep.subr.bf16.mxu0 %v2761
        %3848 = vmatpush1.bf16.msra.mxu0 %v2760
        %3849 = vmatprep.subr.bf16.mxu0 %v2763
        %3850 = vmatpush1.bf16.msra.mxu0 %v2762
        %3851 = vmatprep.subr.bf16.mxu0 %v2765
        %3852 = vmatpush1.bf16.msra.mxu0 %v2764
        %3853 = vmatprep.subr.bf16.mxu0 %v2767
        %3854 = vmatpush1.bf16.msra.mxu0 %v2766
        %3855 = vmatprep.subr.bf16.mxu0 %v2769
        %3856 = vmatpush1.bf16.msra.mxu0 %v2768
        %3857 = vmatprep.subr.bf16.mxu0 %v2771
        %3858 = vmatpush1.bf16.msra.mxu0 %v2770
        %3859 = vmatprep.subr.bf16.mxu0 %v2773
        %3860 = vmatpush1.bf16.msra.mxu0 %v2772
        %3861 = vmatprep.subr.bf16.mxu0 %v2775
        %3862 = vmatpush1.bf16.msra.mxu0 %v2774
        %3863 = vmatprep.subr.bf16.mxu0 %v2777
        %3864 = vmatpush1.bf16.msra.mxu0 %v2776
        %3865 = vmatprep.mubr.bf16.mxu0 %v937
        %3866 = vmatmul.mubr.bf16.gmra.mrb[0].mxu0 %v936
        %v3867 = vpop.f32.mrb[0].mxu0
        %v3868 = vadd.f32 %v3827, %v3867
        %v3869 = vpop.f32.mrb[0].mxu0
        %v3870 = vadd.f32 %v3829, %v3869
        %v3871 = vpop.f32.mrb[0].mxu0
        %v3872 = vpop.f32.mrb[0].mxu0
        %3873 = vdwg.mxu0
        %3874 = vmatprep.subr.bf16.mxu0 %v2779
        %3875 = vmatpush1.bf16.msra.mxu0 %v2778
        %3876 = vmatprep.subr.bf16.mxu0 %v2781
        %3877 = vmatpush1.bf16.msra.mxu0 %v2780
        %3878 = vmatprep.subr.bf16.mxu0 %v2783
        %3879 = vmatpush1.bf16.msra.mxu0 %v2782
        %3880 = vmatprep.subr.bf16.mxu0 %v2785
        %3881 = vmatpush1.bf16.msra.mxu0 %v2784
        %3882 = vmatprep.subr.bf16.mxu0 %v2787
        %3883 = vmatpush1.bf16.msra.mxu0 %v2786
        %3884 = vmatprep.subr.bf16.mxu0 %v2789
        %3885 = vmatpush1.bf16.msra.mxu0 %v2788
        %3886 = vmatprep.subr.bf16.mxu0 %v2791
        %3887 = vmatpush1.bf16.msra.mxu0 %v2790
        %3888 = vmatprep.subr.bf16.mxu0 %v2793
        %3889 = vmatpush1.bf16.msra.mxu0 %v2792
        %3890 = vmatprep.subr.bf16.mxu0 %v2795
        %3891 = vmatpush1.bf16.msra.mxu0 %v2794
        %3892 = vmatprep.subr.bf16.mxu0 %v2797
        %3893 = vmatpush1.bf16.msra.mxu0 %v2796
        %3894 = vmatprep.subr.bf16.mxu0 %v2799
        %3895 = vmatpush1.bf16.msra.mxu0 %v2798
        %3896 = vmatprep.subr.bf16.mxu0 %v2801
        %3897 = vmatpush1.bf16.msra.mxu0 %v2800
        %3898 = vmatprep.subr.bf16.mxu0 %v2803
        %3899 = vmatpush1.bf16.msra.mxu0 %v2802
        %3900 = vmatprep.subr.bf16.mxu0 %v2805
        %3901 = vmatpush1.bf16.msra.mxu0 %v2804
        %3902 = vmatprep.subr.bf16.mxu0 %v2807
        %3903 = vmatpush1.bf16.msra.mxu0 %v2806
        %3904 = vmatprep.subr.bf16.mxu0 %v2809
        %3905 = vmatpush1.bf16.msra.mxu0 %v2808
        %3906 = vmatprep.mubr.bf16.mxu0 %v939
        %3907 = vmatmul.mubr.bf16.gmra.mrb[0].mxu0 %v938
        %v3908 = vpop.f32.mrb[0].mxu0
        %v3909 = vadd.f32 %v3868, %v3908
        %v3910 = vpop.f32.mrb[0].mxu0
        %v3911 = vadd.f32 %v3870, %v3910
        %v3912 = vpop.f32.mrb[0].mxu0
        %v3913 = vpop.f32.mrb[0].mxu0
        %3914 = vdwg.mxu0
        %3915 = vmatprep.subr.bf16.mxu0 %v2811
        %3916 = vmatpush1.bf16.msra.mxu0 %v2810
        %3917 = vmatprep.subr.bf16.mxu0 %v2813
        %3918 = vmatpush1.bf16.msra.mxu0 %v2812
        %3919 = vmatprep.subr.bf16.mxu0 %v2815
        %3920 = vmatpush1.bf16.msra.mxu0 %v2814
        %3921 = vmatprep.subr.bf16.mxu0 %v2817
        %3922 = vmatpush1.bf16.msra.mxu0 %v2816
        %3923 = vmatprep.subr.bf16.mxu0 %v2819
        %3924 = vmatpush1.bf16.msra.mxu0 %v2818
        %3925 = vmatprep.subr.bf16.mxu0 %v2821
        %3926 = vmatpush1.bf16.msra.mxu0 %v2820
        %3927 = vmatprep.subr.bf16.mxu0 %v2823
        %3928 = vmatpush1.bf16.msra.mxu0 %v2822
        %3929 = vmatprep.subr.bf16.mxu0 %v2825
        %3930 = vmatpush1.bf16.msra.mxu0 %v2824
        %3931 = vmatprep.subr.bf16.mxu0 %v2827
        %3932 = vmatpush1.bf16.msra.mxu0 %v2826
        %3933 = vmatprep.subr.bf16.mxu0 %v2829
        %3934 = vmatpush1.bf16.msra.mxu0 %v2828
        %3935 = vmatprep.subr.bf16.mxu0 %v2831
        %3936 = vmatpush1.bf16.msra.mxu0 %v2830
        %3937 = vmatprep.subr.bf16.mxu0 %v2833
        %3938 = vmatpush1.bf16.msra.mxu0 %v2832
        %3939 = vmatprep.subr.bf16.mxu0 %v2835
        %3940 = vmatpush1.bf16.msra.mxu0 %v2834
        %3941 = vmatprep.subr.bf16.mxu0 %v2837
        %3942 = vmatpush1.bf16.msra.mxu0 %v2836
        %3943 = vmatprep.subr.bf16.mxu0 %v2839
        %3944 = vmatpush1.bf16.msra.mxu0 %v2838
        %3945 = vmatprep.subr.bf16.mxu0 %v2841
        %3946 = vmatpush1.bf16.msra.mxu0 %v2840
        %3947 = vmatprep.mubr.bf16.mxu0 %v941
        %3948 = vmatmul.mubr.bf16.gmra.mrb[0].mxu0 %v940
        %v3949 = vpop.f32.mrb[0].mxu0
        %v3950 = vadd.f32 %v3909, %v3949
        %v3951 = vpop.f32.mrb[0].mxu0
        %v3952 = vadd.f32 %v3911, %v3951
        %v3953 = vpop.f32.mrb[0].mxu0
        %v3954 = vpop.f32.mrb[0].mxu0
        %3955 = vdwg.mxu0
        %3956 = vmatprep.subr.bf16.mxu0 %v2843
        %3957 = vmatpush1.bf16.msra.mxu0 %v2842
        %3958 = vmatprep.subr.bf16.mxu0 %v2845
        %3959 = vmatpush1.bf16.msra.mxu0 %v2844
        %3960 = vmatprep.subr.bf16.mxu0 %v2847
        %3961 = vmatpush1.bf16.msra.mxu0 %v2846
        %3962 = vmatprep.subr.bf16.mxu0 %v2849
        %3963 = vmatpush1.bf16.msra.mxu0 %v2848
        %3964 = vmatprep.subr.bf16.mxu0 %v2851
        %3965 = vmatpush1.bf16.msra.mxu0 %v2850
        %3966 = vmatprep.subr.bf16.mxu0 %v2853
        %3967 = vmatpush1.bf16.msra.mxu0 %v2852
        %3968 = vmatprep.subr.bf16.mxu0 %v2855
        %3969 = vmatpush1.bf16.msra.mxu0 %v2854
        %3970 = vmatprep.subr.bf16.mxu0 %v2857
        %3971 = vmatpush1.bf16.msra.mxu0 %v2856
        %3972 = vmatprep.subr.bf16.mxu0 %v2859
        %3973 = vmatpush1.bf16.msra.mxu0 %v2858
        %3974 = vmatprep.subr.bf16.mxu0 %v2861
        %3975 = vmatpush1.bf16.msra.mxu0 %v2860
        %3976 = vmatprep.subr.bf16.mxu0 %v2863
        %3977 = vmatpush1.bf16.msra.mxu0 %v2862
        %3978 = vmatprep.subr.bf16.mxu0 %v2865
        %3979 = vmatpush1.bf16.msra.mxu0 %v2864
        %3980 = vmatprep.subr.bf16.mxu0 %v2867
        %3981 = vmatpush1.bf16.msra.mxu0 %v2866
        %3982 = vmatprep.subr.bf16.mxu0 %v2869
        %3983 = vmatpush1.bf16.msra.mxu0 %v2868
        %3984 = vmatprep.subr.bf16.mxu0 %v2871
        %3985 = vmatpush1.bf16.msra.mxu0 %v2870
        %3986 = vmatprep.subr.bf16.mxu0 %v2873
        %3987 = vmatpush1.bf16.msra.mxu0 %v2872
        %3988 = vmatprep.mubr.bf16.mxu0 %v943
        %3989 = vmatmul.mubr.bf16.gmra.mrb[0].mxu0 %v942
        %v3990 = vpop.f32.mrb[0].mxu0
        %v3991 = vadd.f32 %v3950, %v3990
        %v3992 = vpop.f32.mrb[0].mxu0
        %v3993 = vadd.f32 %v3952, %v3992
        %v3994 = vpop.f32.mrb[0].mxu0
        %v3995 = vpop.f32.mrb[0].mxu0
        %3996 = vdwg.mxu0
        %3997 = vmatprep.subr.bf16.mxu0 %v2875
        %3998 = vmatpush1.bf16.msra.mxu0 %v2874
        %3999 = vmatprep.subr.bf16.mxu0 %v2877
        %4000 = vmatpush1.bf16.msra.mxu0 %v2876
        %4001 = vmatprep.subr.bf16.mxu0 %v2879
        %4002 = vmatpush1.bf16.msra.mxu0 %v2878
        %4003 = vmatprep.subr.bf16.mxu0 %v2881
        %4004 = vmatpush1.bf16.msra.mxu0 %v2880
        %4005 = vmatprep.subr.bf16.mxu0 %v2883
        %4006 = vmatpush1.bf16.msra.mxu0 %v2882
        %4007 = vmatprep.subr.bf16.mxu0 %v2885
        %4008 = vmatpush1.bf16.msra.mxu0 %v2884
        %4009 = vmatprep.subr.bf16.mxu0 %v2887
        %4010 = vmatpush1.bf16.msra.mxu0 %v2886
        %4011 = vmatprep.subr.bf16.mxu0 %v2889
        %4012 = vmatpush1.bf16.msra.mxu0 %v2888
        %4013 = vmatprep.subr.bf16.mxu0 %v2891
        %4014 = vmatpush1.bf16.msra.mxu0 %v2890
        %4015 = vmatprep.subr.bf16.mxu0 %v2893
        %4016 = vmatpush1.bf16.msra.mxu0 %v2892
        %4017 = vmatprep.subr.bf16.mxu0 %v2895
        %4018 = vmatpush1.bf16.msra.mxu0 %v2894
        %4019 = vmatprep.subr.bf16.mxu0 %v2897
        %4020 = vmatpush1.bf16.msra.mxu0 %v2896
        %4021 = vmatprep.subr.bf16.mxu0 %v2899
        %4022 = vmatpush1.bf16.msra.mxu0 %v2898
        %4023 = vmatprep.subr.bf16.mxu0 %v2901
        %4024 = vmatpush1.bf16.msra.mxu0 %v2900
        %4025 = vmatprep.subr.bf16.mxu0 %v2903
        %4026 = vmatpush1.bf16.msra.mxu0 %v2902
        %4027 = vmatprep.subr.bf16.mxu0 %v2905
        %4028 = vmatpush1.bf16.msra.mxu0 %v2904
        %4029 = vmatprep.mubr.bf16.mxu0 %v945
        %4030 = vmatmul.mubr.bf16.gmra.mrb[0].mxu0 %v944
        %v4031 = vpop.f32.mrb[0].mxu0
        %v4032 = vadd.f32 %v3991, %v4031
        %v4033 = vpop.f32.mrb[0].mxu0
        %v4034 = vadd.f32 %v3993, %v4033
        %v4035 = vpop.f32.mrb[0].mxu0
        %v4036 = vpop.f32.mrb[0].mxu0
        %4037 = vdwg.mxu0
        %4038 = vmatprep.subr.bf16.mxu0 %v2907
        %4039 = vmatpush1.bf16.msra.mxu0 %v2906
        %4040 = vmatprep.subr.bf16.mxu0 %v2909
        %4041 = vmatpush1.bf16.msra.mxu0 %v2908
        %4042 = vmatprep.subr.bf16.mxu0 %v2911
        %4043 = vmatpush1.bf16.msra.mxu0 %v2910
        %4044 = vmatprep.subr.bf16.mxu0 %v2913
        %4045 = vmatpush1.bf16.msra.mxu0 %v2912
        %4046 = vmatprep.subr.bf16.mxu0 %v2915
        %4047 = vmatpush1.bf16.msra.mxu0 %v2914
        %4048 = vmatprep.subr.bf16.mxu0 %v2917
        %4049 = vmatpush1.bf16.msra.mxu0 %v2916
        %4050 = vmatprep.subr.bf16.mxu0 %v2919
        %4051 = vmatpush1.bf16.msra.mxu0 %v2918
        %4052 = vmatprep.subr.bf16.mxu0 %v2921
        %4053 = vmatpush1.bf16.msra.mxu0 %v2920
        %4054 = vmatprep.subr.bf16.mxu0 %v2923
        %4055 = vmatpush1.bf16.msra.mxu0 %v2922
        %4056 = vmatprep.subr.bf16.mxu0 %v2925
        %4057 = vmatpush1.bf16.msra.mxu0 %v2924
        %4058 = vmatprep.subr.bf16.mxu0 %v2927
        %4059 = vmatpush1.bf16.msra.mxu0 %v2926
        %4060 = vmatprep.subr.bf16.mxu0 %v2929
        %4061 = vmatpush1.bf16.msra.mxu0 %v2928
        %4062 = vmatprep.subr.bf16.mxu0 %v2931
        %4063 = vmatpush1.bf16.msra.mxu0 %v2930
        %4064 = vmatprep.subr.bf16.mxu0 %v2933
        %4065 = vmatpush1.bf16.msra.mxu0 %v2932
        %4066 = vmatprep.subr.bf16.mxu0 %v2935
        %4067 = vmatpush1.bf16.msra.mxu0 %v2934
        %4068 = vmatprep.subr.bf16.mxu0 %v2937
        %4069 = vmatpush1.bf16.msra.mxu0 %v2936
        %4070 = vmatprep.mubr.bf16.mxu0 %v947
        %4071 = vmatmul.mubr.bf16.gmra.mrb[0].mxu0 %v946
        %v4072 = vpop.f32.mrb[0].mxu0
        %v4073 = vadd.f32 %v4032, %v4072
        %v4074 = vpop.f32.mrb[0].mxu0
        %v4075 = vadd.f32 %v4034, %v4074
        %v4076 = vpop.f32.mrb[0].mxu0
        %v4077 = vpop.f32.mrb[0].mxu0
        %4078 = vdwg.mxu0
        %4079 = vmatprep.subr.bf16.mxu0 %v2939
        %4080 = vmatpush1.bf16.msra.mxu0 %v2938
        %4081 = vmatprep.subr.bf16.mxu0 %v2941
        %4082 = vmatpush1.bf16.msra.mxu0 %v2940
        %4083 = vmatprep.subr.bf16.mxu0 %v2943
        %4084 = vmatpush1.bf16.msra.mxu0 %v2942
        %4085 = vmatprep.subr.bf16.mxu0 %v2945
        %4086 = vmatpush1.bf16.msra.mxu0 %v2944
        %4087 = vmatprep.subr.bf16.mxu0 %v2947
        %4088 = vmatpush1.bf16.msra.mxu0 %v2946
        %4089 = vmatprep.subr.bf16.mxu0 %v2949
        %4090 = vmatpush1.bf16.msra.mxu0 %v2948
        %4091 = vmatprep.subr.bf16.mxu0 %v2951
        %4092 = vmatpush1.bf16.msra.mxu0 %v2950
        %4093 = vmatprep.subr.bf16.mxu0 %v2953
        %4094 = vmatpush1.bf16.msra.mxu0 %v2952
        %4095 = vmatprep.subr.bf16.mxu0 %v2955
        %4096 = vmatpush1.bf16.msra.mxu0 %v2954
        %4097 = vmatprep.subr.bf16.mxu0 %v2957
        %4098 = vmatpush1.bf16.msra.mxu0 %v2956
        %4099 = vmatprep.subr.bf16.mxu0 %v2959
        %4100 = vmatpush1.bf16.msra.mxu0 %v2958
        %4101 = vmatprep.subr.bf16.mxu0 %v2961
        %4102 = vmatpush1.bf16.msra.mxu0 %v2960
        %4103 = vmatprep.subr.bf16.mxu0 %v2963
        %4104 = vmatpush1.bf16.msra.mxu0 %v2962
        %4105 = vmatprep.subr.bf16.mxu0 %v2965
        %4106 = vmatpush1.bf16.msra.mxu0 %v2964
        %4107 = vmatprep.subr.bf16.mxu0 %v2967
        %4108 = vmatpush1.bf16.msra.mxu0 %v2966
        %4109 = vmatprep.subr.bf16.mxu0 %v2969
        %4110 = vmatpush1.bf16.msra.mxu0 %v2968
        %4111 = vmatprep.mubr.bf16.mxu0 %v949
        %4112 = vmatmul.mubr.bf16.gmra.mrb[0].mxu0 %v948
        %v4113 = vpop.f32.mrb[0].mxu0
        %v4114 = vadd.f32 %v4073, %v4113
        %v4115 = vpop.f32.mrb[0].mxu0
        %v4116 = vadd.f32 %v4075, %v4115
        %v4117 = vpop.f32.mrb[0].mxu0
        %v4118 = vpop.f32.mrb[0].mxu0
        %4119 = vdwg.mxu0
        %4120 = vmatprep.subr.bf16.mxu0 %v2971
        %4121 = vmatpush1.bf16.msra.mxu0 %v2970
        %4122 = vmatprep.subr.bf16.mxu0 %v2973
        %4123 = vmatpush1.bf16.msra.mxu0 %v2972
        %4124 = vmatprep.subr.bf16.mxu0 %v2975
        %4125 = vmatpush1.bf16.msra.mxu0 %v2974
        %4126 = vmatprep.subr.bf16.mxu0 %v2977
        %4127 = vmatpush1.bf16.msra.mxu0 %v2976
        %4128 = vmatprep.subr.bf16.mxu0 %v2979
        %4129 = vmatpush1.bf16.msra.mxu0 %v2978
        %4130 = vmatprep.subr.bf16.mxu0 %v2981
        %4131 = vmatpush1.bf16.msra.mxu0 %v2980
        %4132 = vmatprep.subr.bf16.mxu0 %v2983
        %4133 = vmatpush1.bf16.msra.mxu0 %v2982
        %4134 = vmatprep.subr.bf16.mxu0 %v2985
        %4135 = vmatpush1.bf16.msra.mxu0 %v2984
        %4136 = vmatprep.subr.bf16.mxu0 %v2987
        %4137 = vmatpush1.bf16.msra.mxu0 %v2986
        %4138 = vmatprep.subr.bf16.mxu0 %v2989
        %4139 = vmatpush1.bf16.msra.mxu0 %v2988
        %4140 = vmatprep.subr.bf16.mxu0 %v2991
        %4141 = vmatpush1.bf16.msra.mxu0 %v2990
        %4142 = vmatprep.subr.bf16.mxu0 %v2993
        %4143 = vmatpush1.bf16.msra.mxu0 %v2992
        %4144 = vmatprep.subr.bf16.mxu0 %v2995
        %4145 = vmatpush1.bf16.msra.mxu0 %v2994
        %4146 = vmatprep.subr.bf16.mxu0 %v2997
        %4147 = vmatpush1.bf16.msra.mxu0 %v2996
        %4148 = vmatprep.subr.bf16.mxu0 %v2999
        %4149 = vmatpush1.bf16.msra.mxu0 %v2998
        %4150 = vmatprep.subr.bf16.mxu0 %v3001
        %4151 = vmatpush1.bf16.msra.mxu0 %v3000
        %4152 = vmatprep.mubr.bf16.mxu0 %v951
        %4153 = vmatmul.mubr.bf16.gmra.mrb[0].mxu0 %v950
        %v4154 = vpop.f32.mrb[0].mxu0
        %v4155 = vadd.f32 %v4114, %v4154
        %v4156 = vpop.f32.mrb[0].mxu0
        %v4157 = vadd.f32 %v4116, %v4156
        %v4158 = vpop.f32.mrb[0].mxu0
        %v4159 = vpop.f32.mrb[0].mxu0
        %4160 = vdwg.mxu0
        %4161 = vmatprep.subr.bf16.mxu0 %v3003
        %4162 = vmatpush1.bf16.msra.mxu0 %v3002
        %4163 = vmatprep.subr.bf16.mxu0 %v3005
        %4164 = vmatpush1.bf16.msra.mxu0 %v3004
        %4165 = vmatprep.subr.bf16.mxu0 %v3007
        %4166 = vmatpush1.bf16.msra.mxu0 %v3006
        %4167 = vmatprep.subr.bf16.mxu0 %v3009
        %4168 = vmatpush1.bf16.msra.mxu0 %v3008
        %4169 = vmatprep.subr.bf16.mxu0 %v3011
        %4170 = vmatpush1.bf16.msra.mxu0 %v3010
        %4171 = vmatprep.subr.bf16.mxu0 %v3013
        %4172 = vmatpush1.bf16.msra.mxu0 %v3012
        %4173 = vmatprep.subr.bf16.mxu0 %v3015
        %4174 = vmatpush1.bf16.msra.mxu0 %v3014
        %4175 = vmatprep.subr.bf16.mxu0 %v3017
        %4176 = vmatpush1.bf16.msra.mxu0 %v3016
        %4177 = vmatprep.subr.bf16.mxu0 %v3019
        %4178 = vmatpush1.bf16.msra.mxu0 %v3018
        %4179 = vmatprep.subr.bf16.mxu0 %v3021
        %4180 = vmatpush1.bf16.msra.mxu0 %v3020
        %4181 = vmatprep.subr.bf16.mxu0 %v3023
        %4182 = vmatpush1.bf16.msra.mxu0 %v3022
        %4183 = vmatprep.subr.bf16.mxu0 %v3025
        %4184 = vmatpush1.bf16.msra.mxu0 %v3024
        %4185 = vmatprep.subr.bf16.mxu0 %v3027
        %4186 = vmatpush1.bf16.msra.mxu0 %v3026
        %4187 = vmatprep.subr.bf16.mxu0 %v3029
        %4188 = vmatpush1.bf16.msra.mxu0 %v3028
        %4189 = vmatprep.subr.bf16.mxu0 %v3031
        %4190 = vmatpush1.bf16.msra.mxu0 %v3030
        %4191 = vmatprep.subr.bf16.mxu0 %v3033
        %4192 = vmatpush1.bf16.msra.mxu0 %v3032
        %4193 = vmatprep.mubr.bf16.mxu0 %v953
        %4194 = vmatmul.mubr.bf16.gmra.mrb[0].mxu0 %v952
        %v4195 = vpop.f32.mrb[0].mxu0
        %v4196 = vadd.f32 %v4155, %v4195
        %v4197 = vpop.f32.mrb[0].mxu0
        %v4198 = vadd.f32 %v4157, %v4197
        %v4199 = vpop.f32.mrb[0].mxu0
        %v4200 = vpop.f32.mrb[0].mxu0
        %4201 = vdwg.mxu0
        %v4202 = vmax.f32 %v4196, 0.0
        %v4203 = vmax.f32 %v4198, 0.0
        %4204 = vst [vmem:[%s325] sm:$0xff] %v4202
        %4205 = vst [vmem:[%s325 + $0x8] sm:$0xff] %v4203
        %v4206 = vpack.c.bf16 %v4202, %v4202
        %v4207 = vpack.c.bf16 %v4203, %v4203
        %v4208 = vld [vmem:[#allocation8] sm:$0xf]
        %v4209 = vld [vmem:[#allocation8 + $0x4] sm:$0xf]
        %v4210 = vld [vmem:[#allocation8 + $0x8] sm:$0xf]
        %v4211 = vld [vmem:[#allocation8 + $0xc] sm:$0xf]
        %v4212 = vld [vmem:[#allocation8 + $0x10] sm:$0xf]
        %v4213 = vld [vmem:[#allocation8 + $0x14] sm:$0xf]
        %v4214 = vld [vmem:[#allocation8 + $0x18] sm:$0xf]
        %v4215 = vld [vmem:[#allocation8 + $0x1c] sm:$0xf]
        %v4216 = vld [vmem:[#allocation8 + $0x20] sm:$0xf]
        %v4217 = vld [vmem:[#allocation8 + $0x24] sm:$0xf]
        %v4218 = vld [vmem:[#allocation8 + $0x28] sm:$0xf]
        %v4219 = vld [vmem:[#allocation8 + $0x2c] sm:$0xf]
        %v4220 = vld [vmem:[#allocation8 + $0x30] sm:$0xf]
        %v4221 = vld [vmem:[#allocation8 + $0x34] sm:$0xf]
        %v4222 = vld [vmem:[#allocation8 + $0x38] sm:$0xf]
        %v4223 = vld [vmem:[#allocation8 + $0x3c] sm:$0xf]
        %v4224 = vld [vmem:[#allocation8 + $0x40] sm:$0xf]
        %v4225 = vld [vmem:[#allocation8 + $0x44] sm:$0xf]
        %v4226 = vld [vmem:[#allocation8 + $0x48] sm:$0xf]
        %v4227 = vld [vmem:[#allocation8 + $0x4c] sm:$0xf]
        %v4228 = vld [vmem:[#allocation8 + $0x50] sm:$0xf]
        %v4229 = vld [vmem:[#allocation8 + $0x54] sm:$0xf]
        %v4230 = vld [vmem:[#allocation8 + $0x58] sm:$0xf]
        %v4231 = vld [vmem:[#allocation8 + $0x5c] sm:$0xf]
        %v4232 = vld [vmem:[#allocation8 + $0x60] sm:$0xf]
        %v4233 = vld [vmem:[#allocation8 + $0x64] sm:$0xf]
        %v4234 = vld [vmem:[#allocation8 + $0x68] sm:$0xf]
        %v4235 = vld [vmem:[#allocation8 + $0x6c] sm:$0xf]
        %v4236 = vld [vmem:[#allocation8 + $0x70] sm:$0xf]
        %v4237 = vld [vmem:[#allocation8 + $0x74] sm:$0xf]
        %v4238 = vld [vmem:[#allocation8 + $0x78] sm:$0xf]
        %v4239 = vld [vmem:[#allocation8 + $0x7c] sm:$0xf]
        %v4240 = vld [vmem:[#allocation10] sm:$0x1]
        %v4242 = vlaneseq
        %v4243 = vshrl.u32 %v4242, 7
        %v4244 = vsub.s32 0, %v4243
        %v4245 = vrot.slane %v4240, %v4244
        %v4279 = vunpack.c.l.b16 %v4208
        %v4280 = vunpack.c.l.b16 %v4209
        %v4281 = vunpack.c.l.b16 %v4210
        %v4282 = vunpack.c.l.b16 %v4211
        %v4283 = vunpack.c.l.b16 %v4212
        %v4284 = vunpack.c.l.b16 %v4213
        %v4285 = vunpack.c.l.b16 %v4214
        %v4286 = vunpack.c.l.b16 %v4215
        %v4287 = vunpack.c.l.b16 %v4216
        %v4288 = vunpack.c.l.b16 %v4217
        %v4289 = vunpack.c.l.b16 %v4218
        %v4290 = vunpack.c.l.b16 %v4219
        %v4291 = vunpack.c.l.b16 %v4220
        %v4292 = vunpack.c.l.b16 %v4221
        %v4293 = vunpack.c.l.b16 %v4222
        %v4294 = vunpack.c.l.b16 %v4223
        %v4295 = vunpack.c.l.b16 %v4224
        %v4296 = vunpack.c.l.b16 %v4225
        %v4297 = vunpack.c.l.b16 %v4226
        %v4298 = vunpack.c.l.b16 %v4227
        %v4299 = vunpack.c.l.b16 %v4228
        %v4300 = vunpack.c.l.b16 %v4229
        %v4301 = vunpack.c.l.b16 %v4230
        %v4302 = vunpack.c.l.b16 %v4231
        %v4303 = vunpack.c.l.b16 %v4232
        %v4304 = vunpack.c.l.b16 %v4233
        %v4305 = vunpack.c.l.b16 %v4234
        %v4306 = vunpack.c.l.b16 %v4235
        %v4307 = vunpack.c.l.b16 %v4236
        %v4308 = vunpack.c.l.b16 %v4237
        %v4309 = vunpack.c.l.b16 %v4238
        %v4310 = vunpack.c.l.b16 %v4239
        %v4311 = vpack.c.b16 %v4280, %v4279
        %v4312 = vpack.c.b16 %v4282, %v4281
        %v4313 = vpack.c.b16 %v4284, %v4283
        %v4314 = vpack.c.b16 %v4286, %v4285
        %v4315 = vpack.c.b16 %v4288, %v4287
        %v4316 = vpack.c.b16 %v4290, %v4289
        %v4317 = vpack.c.b16 %v4292, %v4291
        %v4318 = vpack.c.b16 %v4294, %v4293
        %v4319 = vpack.c.b16 %v4296, %v4295
        %v4320 = vpack.c.b16 %v4298, %v4297
        %v4321 = vpack.c.b16 %v4300, %v4299
        %v4322 = vpack.c.b16 %v4302, %v4301
        %v4323 = vpack.c.b16 %v4304, %v4303
        %v4324 = vpack.c.b16 %v4306, %v4305
        %v4325 = vpack.c.b16 %v4308, %v4307
        %v4326 = vpack.c.b16 %v4310, %v4309
        %4343 = vmatprep.subr.bf16.mxu0 0
        %4344 = vmatpush1.bf16.msra.mxu0 %v4311
        %4345 = vmatprep.subr.bf16.mxu0 0
        %4346 = vmatpush1.bf16.msra.mxu0 %v4312
        %4347 = vmatprep.subr.bf16.mxu0 0
        %4348 = vmatpush1.bf16.msra.mxu0 %v4313
        %4349 = vmatprep.subr.bf16.mxu0 0
        %4350 = vmatpush1.bf16.msra.mxu0 %v4314
        %4351 = vmatprep.subr.bf16.mxu0 0
        %4352 = vmatpush1.bf16.msra.mxu0 %v4315
        %4353 = vmatprep.subr.bf16.mxu0 0
        %4354 = vmatpush1.bf16.msra.mxu0 %v4316
        %4355 = vmatprep.subr.bf16.mxu0 0
        %4356 = vmatpush1.bf16.msra.mxu0 %v4317
        %4357 = vmatprep.subr.bf16.mxu0 0
        %4358 = vmatpush1.bf16.msra.mxu0 %v4318
        %4359 = vmatprep.subr.bf16.mxu0 0
        %4360 = vmatpush1.bf16.msra.mxu0 %v4319
        %4361 = vmatprep.subr.bf16.mxu0 0
        %4362 = vmatpush1.bf16.msra.mxu0 %v4320
        %4363 = vmatprep.subr.bf16.mxu0 0
        %4364 = vmatpush1.bf16.msra.mxu0 %v4321
        %4365 = vmatprep.subr.bf16.mxu0 0
        %4366 = vmatpush1.bf16.msra.mxu0 %v4322
        %4367 = vmatprep.subr.bf16.mxu0 0
        %4368 = vmatpush1.bf16.msra.mxu0 %v4323
        %4369 = vmatprep.subr.bf16.mxu0 0
        %4370 = vmatpush1.bf16.msra.mxu0 %v4324
        %4371 = vmatprep.subr.bf16.mxu0 0
        %4372 = vmatpush1.bf16.msra.mxu0 %v4325
        %4373 = vmatprep.subr.bf16.mxu0 0
        %4374 = vmatpush1.bf16.msra.mxu0 %v4326
        %4375 = vmatprep.mubr.bf16.mxu0 %v4207
        %4376 = vmatmul.mubr.bf16.gmra.mrb[0].mxu0 %v4206
        %v4377 = vpop.f32.mrb[0].mxu0
        %v4378 = vadd.f32 %v4245, %v4377
        %v4379 = vpop.f32.mrb[0].mxu0
        %v4380 = vpop.f32.mrb[0].mxu0
        %v4381 = vpop.f32.mrb[0].mxu0
        %4382 = vdwg.mxu0
        %4383 = vmax.xlane.f32.xlu0 %v4378
        %v4384 = vpop.xlane.xlu0 %4383
        %v4385 = vsub.f32 %v4378, %v4384
        %v4386 = vmul.f32 %v4385, 1.442695
        %v4387 = vpow.pop %v4386
        %4388 = vadd.xlane.f32.xlu0 %v4387
        %v4389 = vpop.xlane.xlu0 %4388
        %v4390 = vlog2.pop %v4389
        %v4391 = vmul.f32 %v4390, 0.6931472
        %v4392 = vsub.f32 %v4385, %v4391
        %4393 = vst [vmem:[%s332] sm:$0xff] %v4392
        %s4394 = sand.u32 %s147, 1
        %s4395 = scalar_lea.sflag [#allocation4], %s4394
        %s4396 = sand.u32 %s147, 1
        %s4397 = smul.addr %s4396, 16
        %s4398 = scalar_lea.vmem [#allocation11], %s4397
        %s4399 = sand.u32 %s173, 1
        %s4400 = scalar_lea.sflag [#allocation13], %s4399
        %s4401 = sand.u32 %s173, 1
        %s4402 = smul.addr %s4401, 8
        %s4403 = scalar_lea.vmem [#allocation12], %s4402
        // Predicated region
        $region61: #{tpu_custom_call.1} parent=39 // pred_check
          %p4404 = pneg %p157
        $region62: #{tpu_custom_call.1} parent=39 // pred_check_branch
          %4406 = sbr.rel (%p4404) target = $region64
        $region63: #{tpu_custom_call.1} parent=39 // pred_region
          %s4408 = ssub.s32 256, 256
          %4409 = vsyncadd %s4395, %s4408
          %s4410 = smul.addr %s29, 2
          %s4411 = smul.addr %s4410, 128
          %s4412 = scalar_lea.hbm %s5, %s4411
          %s4414 = sshll.u32 %s4398, 4
          %s4415 = int_to_ptr.vmem [resolvable:$true] %s4414
          %4417 = dma.vmem_to_hbm [thread:$0]  %s4415, 256, %s4412, %s4395
        $region64: #{tpu_custom_call.1} parent=39 // pred_fallthru
          _
        // Predicated region
        $region65: #{tpu_custom_call.1} parent=39 // pred_check
          %p4418 = pneg %p183
        $region66: #{tpu_custom_call.1} parent=39 // pred_check_branch
          %4420 = sbr.rel (%p4418) target = $region68
        $region67: #{tpu_custom_call.1} parent=39 // pred_region
          %s4422 = ssub.s32 128, 128
          %4423 = vsyncadd %s4400, %s4422
          %s4424 = smul.addr %s29, 128
          %s4425 = scalar_lea.hbm %s6, %s4424
          %s4427 = sshll.u32 %s4403, 4
          %s4428 = int_to_ptr.vmem [resolvable:$true] %s4427
          %4430 = dma.vmem_to_hbm [thread:$0]  %s4428, 128, %s4425, %s4400
        $region68: #{tpu_custom_call.1} parent=39 // pred_fallthru
          _
      $region40: #{tpu_custom_call.1} parent=5 // pred_fallthru
        _
      %p4431 = scmp.le.s32.totalorder 2, %s24
      // Predicated region
      $region69: #{tpu_custom_call.1} parent=5 // pred_check
        %p4432 = pneg %p4431
      $region70: #{tpu_custom_call.1} parent=5 // pred_check_branch
        %4434 = sbr.rel (%p4432) target = $region72
      $region71: #{tpu_custom_call.1} parent=5 // pred_region
        %s4435 = ssub.s32 %s24, 2
        // Predicated region
        $region73: #{tpu_custom_call.1} parent=71 // pred_check
          %p4436 = pneg %p163
        $region74: #{tpu_custom_call.1} parent=71 // pred_check_branch
          %4438 = sbr.rel (%p4436) target = $region76
        $region75: #{tpu_custom_call.1} parent=71 // pred_region
          %s4439 = sand.u32 %s148, 1
          %s4440 = scalar_lea.sflag [#allocation4], %s4439
          %s4441 = sand.u32 %s148, 1
          %s4442 = smul.addr %s4441, 16
          %s4443 = scalar_lea.vmem [#allocation11], %s4442
          %4444 = dma.done %s4440, 256
        $region76: #{tpu_custom_call.1} parent=71 // pred_fallthru
          _
        // Predicated region
        $region77: #{tpu_custom_call.1} parent=71 // pred_check
          %p4445 = pneg %p189
        $region78: #{tpu_custom_call.1} parent=71 // pred_check_branch
          %4447 = sbr.rel (%p4445) target = $region80
        $region79: #{tpu_custom_call.1} parent=71 // pred_region
          %s4448 = sand.u32 %s174, 1
          %s4449 = scalar_lea.sflag [#allocation13], %s4448
          %s4450 = sand.u32 %s174, 1
          %s4451 = smul.addr %s4450, 8
          %s4452 = scalar_lea.vmem [#allocation12], %s4451
          %4453 = dma.done %s4449, 128
        $region80: #{tpu_custom_call.1} parent=71 // pred_fallthru
          _
      $region72: #{tpu_custom_call.1} parent=5 // pred_fallthru
        _
    $region6: #{tpu_custom_call.1} parent=1 // loop_footer
      %s28 = sadd.s32 1, %s24
    $region7: #{tpu_custom_call.1} parent=1 // loop_footer_branch
      %23 = sbr.rel target = $region3
    $region8: #{tpu_custom_call.1} parent=1 // loop_exit
      _
    %4454 = vsyncpa [#allocation3], 1
    %s4455 = scalar_lea.sflag [#allocation3], 1
    %4456 = vsyncpa %s4455, 1
    %4457 = vsyncpa [#allocation6], 1
    %4458 = vsyncpa [#allocation9], 1
    %4459 = vsyncpa [#allocation4], 1
    %s4460 = scalar_lea.sflag [#allocation4], 1
    %4461 = vsyncpa %s4460, 1
    %4462 = vsyncpa [#allocation13], 1
    %s4463 = scalar_lea.sflag [#allocation13], 1
    %4464 = vsyncpa %s4463, 1

</llo_original>
